<compile_context>
chip_gen: v7x
topology: tpu7x:2x2x1
jax: 0.10.0
libtpu: 0.0.40
codegen_flags: <defaults>
</compile_context>

<pallas_src>
import functools

import jax
import jax.numpy as jnp
import numpy as np
from jax.experimental import pallas as pl
from jax.experimental.pallas import tpu as pltpu

TIMEDIM = 33


# --------------------------------------------------------------------------- #
# Kernel
# --------------------------------------------------------------------------- #
def ed_kernel(idx_ref, dense_ref, w_cu_ref, w_dense_ref, w_ub_ref, out_ref,
              *, n_tok, vocab, enc_dim, seq_col):
    f32 = jnp.float32
    VU = w_cu_ref.shape[0]                      # V + U

    idx = idx_ref[...]                          # (BT, n_tok + 1) int32
    dense = dense_ref[...]                      # (BT, DD) f32

    # ---- fused gathers: token counts + user one-hot in ONE (BT, V+U) operand.
    # Token ids live in columns [0, V); the user id is shifted by V so it can
    # only hit columns [V, V+U).  Built with cheap VPU compares, reduced on the
    # MXU.  Values are small integers, so the bf16 cast below is exact.
    vu_iota = jax.lax.broadcasted_iota(jnp.int32, (1, VU), 1)           # (1, VU)
    oh = (idx[:, 0:1] == vu_iota).astype(f32)
    for l in range(1, n_tok):                                           # small static L
        oh = oh + (idx[:, l:l + 1] == vu_iota).astype(f32)
    oh = oh + ((idx[:, n_tok:n_tok + 1] + vocab) == vu_iota).astype(f32)
    oh_bf16 = oh.astype(jnp.bfloat16)

    # ---- matmul 1: fused gathers -> [enc partial | logits partial]  (bf16 MXU)
    g = jnp.dot(oh_bf16, w_cu_ref[...], preferred_element_type=f32)     # (BT, enc+9)
    # ---- matmul 2: packed dense features (+ folded biases) -> same layout
    d = jnp.dot(dense, w_dense_ref[...], preferred_element_type=f32)    # (BT, enc+9)

    # 1/seq_len on the EUP; must be applied AFTER the counts @ W_vt matmul.
    inv_len = pl.reciprocal(dense[:, seq_col:seq_col + 1], approx=True)  # (BT, 1)

    # enc = ReLU(user_emb @ W_enc_u + num4 @ W_enc_n + b_enc)
    enc = jnp.maximum(g[:, 0:enc_dim] + d[:, 0:enc_dim], 0.0)           # (BT, enc)

    # logits = textnum@W_tn + sen_avg@W_sen + time_embeds@W_tm + b_text
    logits = g[:, enc_dim:] * inv_len + d[:, enc_dim:]                  # (BT, 9)
    out_text = 1.0 / (1.0 + jnp.exp(-logits))                           # sigmoid (EUP exp)

    # ---- matmul 3: out_user = ReLU(enc @ W_user + b_user) / 3  (/3 pre-folded)
    w_ub = w_ub_ref[...]                                                # (enc+1, 3)
    out_user = jnp.maximum(
        jnp.dot(enc, w_ub[0:enc_dim, :], preferred_element_type=f32)
        + w_ub[enc_dim:enc_dim + 1, :], 0.0)                            # (BT, 3)

    # label3[b, j] = sum_i out_text.view(B,3,3)[b,i,j] * out_user[b,j] / 3
    sum_text = out_text[:, 0:3] + out_text[:, 3:6] + out_text[:, 6:9]   # (BT, 3)
    out_ref[...] = sum_text * out_user


# --------------------------------------------------------------------------- #
# Host-side parameter folding / packing (done once, in float64 numpy)
# --------------------------------------------------------------------------- #
def fold_ed_params(w2vdict, user_table, params):
    f64 = np.float64
    w2v = np.asarray(w2vdict, f64)                      # (V, E)
    utab = np.asarray(user_table, f64)                  # (U, E)
    w_time = np.asarray(params["w_time"], f64)          # (33, TD)
    b_time = np.asarray(params["b_time"], f64)          # (1, TD)
    w_enc_u = np.asarray(params["w_enc_u"], f64)        # (E, ENC)
    w_enc_n = np.asarray(params["w_enc_n"], f64)        # (17, ENC)
    b_enc = np.asarray(params["b_enc"], f64)            # (1, ENC)
    w_user = np.asarray(params["w_user"], f64)          # (ENC, 3)
    b_user = np.asarray(params["b_user"], f64)          # (1, 3)
    w_text_tn = np.asarray(params["w_text_tn"], f64)    # (5, 9)
    w_text_sen = np.asarray(params["w_text_sen"], f64)  # (E, 9)
    w_text_tm = np.asarray(params["w_text_tm"], f64)    # (TD, 9)
    b_text = np.asarray(params["b_text"], f64)          # (1, 9)

    V, _ = w2v.shape
    U = utab.shape[0]
    ENC = w_enc_u.shape[1]
    NUMD = w_enc_n.shape[0]
    TND = w_text_tn.shape[0]
    TIMED = w_time.shape[0]
    OUTW = ENC + 9

    # --- (V+U, enc+9) slab for the fused one-hot/counts matmul (bf16, exact LHS)
    w_cu = np.zeros((V + U, OUTW), f64)
    w_cu[:V, ENC:] = w2v @ w_text_sen                   # W_vt: tokens -> logits
    w_cu[V:, :ENC] = utab @ w_enc_u                     # W_ue: user   -> enc

    # --- (57, enc+9) slab for the packed dense features (f32), biases on a ones row
    DD = TIMED + NUMD + TND + 2                          # +seq_len col, +ones col
    SEQ_COL = TIMED + NUMD + TND
    w_dense = np.zeros((DD, OUTW), f64)
    r = 0
    w_dense[r:r + TIMED, ENC:] = w_time @ w_text_tm      # time    -> logits (W_tt)
    r += TIMED
    w_dense[r:r + NUMD, :ENC] = w_enc_n                  # num4    -> enc
    r += NUMD
    w_dense[r:r + TND, ENC:] = w_text_tn                 # textnum -> logits
    r += TND
    r += 1                                               # seq_len column: zero row
    w_dense[r, :ENC] = b_enc[0]                          # ones column -> biases
    w_dense[r, ENC:] = b_text[0] + (b_time @ w_text_tm)[0]

    # --- mlpuser head with label3's /3 folded in (ReLU(x)/3 == ReLU(x/3))
    w_user_b = np.zeros((ENC + 1, 3), f64)
    w_user_b[:ENC] = w_user / 3.0
    w_user_b[ENC] = b_user[0] / 3.0

    return dict(
        w_cu=jnp.asarray(w_cu, jnp.bfloat16),
        w_dense=jnp.asarray(w_dense, jnp.float32),
        w_user_b=jnp.asarray(w_user_b, jnp.float32),
        dims=dict(V=V, U=U, ENC=ENC, DD=DD, seq_col=SEQ_COL, out_w=OUTW),
    )


def _pad_rows(x, rows, value=0):
    pad = rows - x.shape[0]
    if pad == 0:
        return x
    return jnp.pad(x, ((0, pad), (0, 0)), constant_values=value)


def _tile_bytes(rows, cols, itemsize, sub=8):
    return (-(-rows // sub) * sub) * (-(-cols // 128) * 128) * itemsize


# --------------------------------------------------------------------------- #
# Wrapper
# --------------------------------------------------------------------------- #
def ed_forward_pallas(sen, user, seq_len, time_x, num4, textnum, folded,
                      block_rows=None, target_block=1024):
    """sen (B,L) i32, user (B,1) i32, seq_len (B,1) i32, time (B,33) f32,
    num4 (B,17) f32, textnum (B,5) f32 -> (B,3) f32."""
    B, L = sen.shape
    dims = folded["dims"]
    V, U, ENC = dims["V"], dims["U"], dims["ENC"]
    DD, SEQ_COL, OUTW = dims["DD"], dims["seq_col"], dims["out_w"]
    VU = V + U

    # batch tile: big enough to amortise per-step overhead, rows multiple of 8,
    # derived from B so padding stays < 8 rows, and >= 2 grid steps (v7x megacore).
    if block_rows is None:
        steps = max(2, (B + target_block - 1) // target_block)
        block_rows = ((B + steps - 1) // steps + 7) // 8 * 8
    block_rows = max(8, (int(block_rows) + 7) // 8 * 8)
    Bp = ((B + block_rows - 1) // block_rows) * block_rows
    grid = (Bp // block_rows,)

    # ---- pack per-row inputs: 6 arrays -> 2 slabs
    idx = jnp.concatenate([sen.astype(jnp.int32), user.astype(jnp.int32)], axis=1)
    dense = jnp.concatenate(
        [time_x.astype(jnp.float32), num4.astype(jnp.float32),
         textnum.astype(jnp.float32), seq_len.astype(jnp.float32),
         jnp.ones((B, 1), jnp.float32)], axis=1)
    assert dense.shape[1] == DD and idx.shape[1] == L + 1

    idx_p = _pad_rows(idx, Bp, 0)
    dense_p = _pad_rows(dense, Bp, 0)
    if Bp != B:  # keep 1/seq_len finite on padded rows
        dense_p = dense_p.at[B:, SEQ_COL].set(1.0)

    # ---- VMEM budget from actual (lane-padded) slab sizes
    est = (2 * (_tile_bytes(block_rows, L + 1, 4)
                + _tile_bytes(block_rows, DD, 4)
                + _tile_bytes(block_rows, 3, 4))
           + 2 * (_tile_bytes(VU, OUTW, 2, sub=16)
                  + _tile_bytes(DD, OUTW, 4)
                  + _tile_bytes(ENC + 1, 3, 4))
           + 8 * _tile_bytes(block_rows, max(VU, 128), 4))   # in-kernel temporaries
    if est > 48 * 1024 * 1024:
        # TODO(synk): large-vocab fallback (scalar-prefetch DMA row-gather of
        # w2vdict) once block_rows*(V+U) no longer fits v7x's 64 MiB VMEM.
        raise NotImplementedError("vocabulary too large for fused one-hot gather path")
    vmem_limit = int(min(max(2 * est, 16 * 1024 * 1024), 64 * 1024 * 1024))

    in_specs = [
        pl.BlockSpec((block_rows, L + 1), lambda i: (i, 0)),     # idx slab
        pl.BlockSpec((block_rows, DD), lambda i: (i, 0)),        # dense slab
        pl.BlockSpec((VU, OUTW), lambda i: (0, 0)),              # grid-invariant weights
        pl.BlockSpec((DD, OUTW), lambda i: (0, 0)),
        pl.BlockSpec((ENC + 1, 3), lambda i: (0, 0)),
    ]
    out_specs = pl.BlockSpec((block_rows, 3), lambda i: (i, 0))

    flops_per_row = 2 * (VU * OUTW + DD * OUTW + ENC * 3)
    bytes_per_row = (L + 1) * 4 + DD * 4 + 3 * 4
    const_bytes = (folded["w_cu"].size * 2 + folded["w_dense"].size * 4
                   + folded["w_user_b"].size * 4)
    cost = pl.CostEstimate(flops=int(Bp * flops_per_row),
                           transcendentals=int(Bp * 10),
                           bytes_accessed=int(Bp * bytes_per_row + const_bytes))

    out = pl.pallas_call(
        functools.partial(ed_kernel, n_tok=L, vocab=V, enc_dim=ENC, seq_col=SEQ_COL),
        out_shape=jax.ShapeDtypeStruct((Bp, 3), jnp.float32),
        grid_spec=pltpu.PrefetchScalarGridSpec(
            num_scalar_prefetch=0,
            grid=grid,
            in_specs=in_specs,
            out_specs=out_specs,
        ),
        compiler_params=pltpu.CompilerParams(
            dimension_semantics=("parallel",),   # megacore sharding on v7x
            vmem_limit_bytes=vmem_limit,
        ),
        cost_estimate=cost,
    )(idx_p, dense_p, folded["w_cu"], folded["w_dense"], folded["w_user_b"])
    return out[:B]


# --------------------------------------------------------------------------- #
# Pure-JAX reference mirroring the PyTorch forward (eval mode)
# --------------------------------------------------------------------------- #
def ed_forward_ref(sen, user, seq_len, time_x, num4, textnum,
                   w2vdict, user_table, params):
    user_embeds = user_table[user[:, 0]]                              # (B, 50)
    time_embeds = time_x @ params["w_time"] + params["b_time"]        # (B, 10)
    enc = user_embeds @ params["w_enc_u"] + num4 @ params["w_enc_n"] + params["b_enc"]
    enc_embeds = jnp.maximum(enc, 0.0)
    text_embeds = w2vdict[sen]                                        # (B, L, 50)
    sen_avg = jnp.sum(text_embeds, axis=1) / seq_len.astype(jnp.float32)
    out_user = jnp.maximum(enc_embeds @ params["w_user"] + params["b_user"], 0.0)
    logits = (textnum @ params["w_text_tn"] + sen_avg @ params["w_text_sen"]
              + time_embeds @ params["w_text_tm"] + params["b_text"])
    out_text = jax.nn.sigmoid(logits)
    out_text3 = out_text.reshape(out_text.shape[0], 3, 3)
    all_out = out_text3 * out_user[:, None, :]
    return jnp.sum(all_out, axis=1) / 3.0


if __name__ == "__main__":
    # ---- small, deterministic synthetic configuration ----
    B, L = 1024, 8                # grid of 2 steps x 512-row tiles
    len_userdic, len_textdic = 20, 100
    user_embedding_dim = 50
    text_embedding_dim = 50
    time_embedding_dim = 10
    enc_dim = 40

    key = jax.random.PRNGKey(0)
    keys = jax.random.split(key, 16)

    # ---- deterministic "parameters" (synthetic; no checkpoint loading) ----
    w2vdict = 0.1 * jax.random.normal(keys[0], (len_textdic, text_embedding_dim), jnp.float32)
    user_table = 0.1 * jax.random.normal(keys[1], (len_userdic, user_embedding_dim), jnp.float32)
    user_table = user_table.at[0].set(0.0)   # nn.Embedding padding_idx=0 init

    def lin(k, fan_in, fan_out):
        wk, bk = jax.random.split(k)
        bound = 1.0 / np.sqrt(fan_in)
        w = jax.random.uniform(wk, (fan_in, fan_out), jnp.float32, -bound, bound)
        b = jax.random.uniform(bk, (1, fan_out), jnp.float32, -bound, bound)
        return w, b

    w_time, b_time = lin(keys[2], TIMEDIM, time_embedding_dim)
    w_enc, b_enc = lin(keys[3], user_embedding_dim + 17, enc_dim)
    w_user, b_user = lin(keys[4], enc_dim, 3)
    w_text, b_text = lin(keys[5], text_embedding_dim + time_embedding_dim + 5, 9)

    params = dict(
        w_time=w_time, b_time=b_time,
        # enc_mlp weight split along the concat axis: [user_embeds | num4]
        w_enc_u=w_enc[:user_embedding_dim], w_enc_n=w_enc[user_embedding_dim:], b_enc=b_enc,
        w_user=w_user, b_user=b_user,
        # mlptext weight split along the concat axis: [textnum | sen_avg | time_embeds]
        w_text_tn=w_text[:5],
        w_text_sen=w_text[5:5 + text_embedding_dim],
        w_text_tm=w_text[5 + text_embedding_dim:],
        b_text=b_text,
    )

    # ---- deterministic example inputs (int32 indices go straight to the kernel) ----
    sen = jax.random.randint(keys[6], (B, L), 0, len_textdic, jnp.int32)
    user = jax.random.randint(keys[7], (B, 1), 1, len_userdic, jnp.int32)
    time_x = jax.random.normal(keys[8], (B, TIMEDIM), jnp.float32)
    seq_lengths = jax.random.randint(keys[9], (B, 1), 1, L + 1, jnp.int32)
    num4 = jax.random.normal(keys[10], (B, 17), jnp.float32)
    textnum = jax.random.normal(keys[11], (B, 5), jnp.float32)

    folded = fold_ed_params(w2vdict, user_table, params)
    out = ed_forward_pallas(sen, user, seq_lengths, time_x, num4, textnum, folded,
                            target_block=512)
    out = jax.block_until_ready(out)

    ref = ed_forward_ref(sen, user, seq_lengths, time_x, num4, textnum,
                         w2vdict, user_table, params)
    # 2e-3: the folded gather weights feed the MXU in bf16 and the kernel uses
    # the approximate EUP reciprocal, while the reference does exact f32 gathers
    # (and its own default-precision matmuls); observed error is a few 1e-4.
    np.testing.assert_allclose(np.asarray(out), np.asarray(ref), rtol=2e-3, atol=2e-3)

    print("KERNEL_OK")
</pallas_src>

<mosaic_0001>
module attributes {stable_mosaic.version = 11 : i64} {
  func.func @ed_kernel(%arg0: i32, %arg1: memref<512x9xi32, #tpu.memory_space<vmem>>, %arg2: memref<512x57xf32, #tpu.memory_space<vmem>>, %arg3: memref<120x49xbf16, #tpu.memory_space<vmem>>, %arg4: memref<57x49xf32, #tpu.memory_space<vmem>>, %arg5: memref<41x3xf32, #tpu.memory_space<vmem>>, %arg6: memref<512x3xf32, #tpu.memory_space<vmem>>) attributes {dimension_semantics = [#tpu.dimension_semantics<parallel>], iteration_bounds = array<i64: 2>, scalar_prefetch = 0 : i64, scratch_operands = 0 : i64, tpu.core_type = #tpu.core_type<tc>, window_params = [{transform_indices = @transform_0, window_bounds = array<i64: 512, 9>}, {transform_indices = @transform_1, window_bounds = array<i64: 512, 57>}, {pipeline_mode = #tpu.pipeline_mode<synchronous>, transform_indices = @transform_2, window_bounds = array<i64: 120, 49>}, {pipeline_mode = #tpu.pipeline_mode<synchronous>, transform_indices = @transform_3, window_bounds = array<i64: 57, 49>}, {pipeline_mode = #tpu.pipeline_mode<synchronous>, transform_indices = @transform_4, window_bounds = array<i64: 41, 3>}, {transform_indices = @transform_5, window_bounds = array<i64: 512, 3>}]} {
    %c0 = arith.constant 0 : index
    %c0_0 = arith.constant 0 : index
    %0 = vector.load %arg1[%c0, %c0_0] : memref<512x9xi32, #tpu.memory_space<vmem>>, vector<512x9xi32>
    %c0_1 = arith.constant 0 : index
    %c0_2 = arith.constant 0 : index
    %1 = vector.load %arg2[%c0_1, %c0_2] : memref<512x57xf32, #tpu.memory_space<vmem>>, vector<512x57xf32>
    %2 = tpu.iota {dimensions = array<i32: 1>} : vector<1x120xi32>
    %3 = vector.extract_strided_slice %0 {offsets = [0, 0], sizes = [512, 1], strides = [1, 1]} : vector<512x9xi32> to vector<512x1xi32>
    %4 = vector.broadcast %3 : vector<512x1xi32> to vector<512x120xi32>
    %5 = vector.broadcast %2 : vector<1x120xi32> to vector<512x120xi32>
    %6 = arith.cmpi eq, %4, %5 : vector<512x120xi32>
    %7 = arith.extui %6 : vector<512x120xi1> to vector<512x120xi32>
    %8 = arith.sitofp %7 : vector<512x120xi32> to vector<512x120xf32>
    %9 = vector.extract_strided_slice %0 {offsets = [0, 1], sizes = [512, 1], strides = [1, 1]} : vector<512x9xi32> to vector<512x1xi32>
    %10 = vector.broadcast %9 : vector<512x1xi32> to vector<512x120xi32>
    %11 = vector.broadcast %2 : vector<1x120xi32> to vector<512x120xi32>
    %12 = arith.cmpi eq, %10, %11 : vector<512x120xi32>
    %13 = arith.extui %12 : vector<512x120xi1> to vector<512x120xi32>
    %14 = arith.sitofp %13 : vector<512x120xi32> to vector<512x120xf32>
    %15 = arith.addf %8, %14 : vector<512x120xf32>
    %16 = vector.extract_strided_slice %0 {offsets = [0, 2], sizes = [512, 1], strides = [1, 1]} : vector<512x9xi32> to vector<512x1xi32>
    %17 = vector.broadcast %16 : vector<512x1xi32> to vector<512x120xi32>
    %18 = vector.broadcast %2 : vector<1x120xi32> to vector<512x120xi32>
    %19 = arith.cmpi eq, %17, %18 : vector<512x120xi32>
    %20 = arith.extui %19 : vector<512x120xi1> to vector<512x120xi32>
    %21 = arith.sitofp %20 : vector<512x120xi32> to vector<512x120xf32>
    %22 = arith.addf %15, %21 : vector<512x120xf32>
    %23 = vector.extract_strided_slice %0 {offsets = [0, 3], sizes = [512, 1], strides = [1, 1]} : vector<512x9xi32> to vector<512x1xi32>
    %24 = vector.broadcast %23 : vector<512x1xi32> to vector<512x120xi32>
    %25 = vector.broadcast %2 : vector<1x120xi32> to vector<512x120xi32>
    %26 = arith.cmpi eq, %24, %25 : vector<512x120xi32>
    %27 = arith.extui %26 : vector<512x120xi1> to vector<512x120xi32>
    %28 = arith.sitofp %27 : vector<512x120xi32> to vector<512x120xf32>
    %29 = arith.addf %22, %28 : vector<512x120xf32>
    %30 = vector.extract_strided_slice %0 {offsets = [0, 4], sizes = [512, 1], strides = [1, 1]} : vector<512x9xi32> to vector<512x1xi32>
    %31 = vector.broadcast %30 : vector<512x1xi32> to vector<512x120xi32>
    %32 = vector.broadcast %2 : vector<1x120xi32> to vector<512x120xi32>
    %33 = arith.cmpi eq, %31, %32 : vector<512x120xi32>
    %34 = arith.extui %33 : vector<512x120xi1> to vector<512x120xi32>
    %35 = arith.sitofp %34 : vector<512x120xi32> to vector<512x120xf32>
    %36 = arith.addf %29, %35 : vector<512x120xf32>
    %37 = vector.extract_strided_slice %0 {offsets = [0, 5], sizes = [512, 1], strides = [1, 1]} : vector<512x9xi32> to vector<512x1xi32>
    %38 = vector.broadcast %37 : vector<512x1xi32> to vector<512x120xi32>
    %39 = vector.broadcast %2 : vector<1x120xi32> to vector<512x120xi32>
    %40 = arith.cmpi eq, %38, %39 : vector<512x120xi32>
    %41 = arith.extui %40 : vector<512x120xi1> to vector<512x120xi32>
    %42 = arith.sitofp %41 : vector<512x120xi32> to vector<512x120xf32>
    %43 = arith.addf %36, %42 : vector<512x120xf32>
    %44 = vector.extract_strided_slice %0 {offsets = [0, 6], sizes = [512, 1], strides = [1, 1]} : vector<512x9xi32> to vector<512x1xi32>
    %45 = vector.broadcast %44 : vector<512x1xi32> to vector<512x120xi32>
    %46 = vector.broadcast %2 : vector<1x120xi32> to vector<512x120xi32>
    %47 = arith.cmpi eq, %45, %46 : vector<512x120xi32>
    %48 = arith.extui %47 : vector<512x120xi1> to vector<512x120xi32>
    %49 = arith.sitofp %48 : vector<512x120xi32> to vector<512x120xf32>
    %50 = arith.addf %43, %49 : vector<512x120xf32>
    %51 = vector.extract_strided_slice %0 {offsets = [0, 7], sizes = [512, 1], strides = [1, 1]} : vector<512x9xi32> to vector<512x1xi32>
    %52 = vector.broadcast %51 : vector<512x1xi32> to vector<512x120xi32>
    %53 = vector.broadcast %2 : vector<1x120xi32> to vector<512x120xi32>
    %54 = arith.cmpi eq, %52, %53 : vector<512x120xi32>
    %55 = arith.extui %54 : vector<512x120xi1> to vector<512x120xi32>
    %56 = arith.sitofp %55 : vector<512x120xi32> to vector<512x120xf32>
    %57 = arith.addf %50, %56 : vector<512x120xf32>
    %58 = vector.extract_strided_slice %0 {offsets = [0, 8], sizes = [512, 1], strides = [1, 1]} : vector<512x9xi32> to vector<512x1xi32>
    %c100_i32 = arith.constant 100 : i32
    %59 = vector.broadcast %c100_i32 : i32 to vector<512x1xi32>
    %60 = arith.addi %58, %59 : vector<512x1xi32>
    %61 = vector.broadcast %60 : vector<512x1xi32> to vector<512x120xi32>
    %62 = vector.broadcast %2 : vector<1x120xi32> to vector<512x120xi32>
    %63 = arith.cmpi eq, %61, %62 : vector<512x120xi32>
    %64 = arith.extui %63 : vector<512x120xi1> to vector<512x120xi32>
    %65 = arith.sitofp %64 : vector<512x120xi32> to vector<512x120xf32>
    %66 = arith.addf %57, %65 : vector<512x120xf32>
    %67 = arith.truncf %66 : vector<512x120xf32> to vector<512x120xbf16>
    %c0_3 = arith.constant 0 : index
    %c0_4 = arith.constant 0 : index
    %68 = vector.load %arg3[%c0_3, %c0_4] : memref<120x49xbf16, #tpu.memory_space<vmem>>, vector<120x49xbf16>
    %cst = arith.constant dense<0.000000e+00> : vector<512x49xf32>
    %69 = tpu.matmul %67, %68, %cst {dimension_numbers = #tpu.dot_dimension_numbers<[1], [0], [0], [1], [0, 0, 1, 1], [], []>} : vector<512x120xbf16>, vector<120x49xbf16>, vector<512x49xf32> -> vector<512x49xf32>
    %c0_5 = arith.constant 0 : index
    %c0_6 = arith.constant 0 : index
    %70 = vector.load %arg4[%c0_5, %c0_6] : memref<57x49xf32, #tpu.memory_space<vmem>>, vector<57x49xf32>
    %cst_7 = arith.constant dense<0.000000e+00> : vector<512x49xf32>
    %71 = tpu.matmul %1, %70, %cst_7 {dimension_numbers = #tpu.dot_dimension_numbers<[1], [0], [0], [1], [0, 0, 1, 1], [], []>} : vector<512x57xf32>, vector<57x49xf32>, vector<512x49xf32> -> vector<512x49xf32>
    %72 = vector.extract_strided_slice %1 {offsets = [0, 55], sizes = [512, 1], strides = [1, 1]} : vector<512x57xf32> to vector<512x1xf32>
    %73 = tpu.reciprocal %72 {approx = true} : vector<512x1xf32> -> vector<512x1xf32>
    %74 = vector.extract_strided_slice %69 {offsets = [0, 0], sizes = [512, 40], strides = [1, 1]} : vector<512x49xf32> to vector<512x40xf32>
    %75 = vector.extract_strided_slice %71 {offsets = [0, 0], sizes = [512, 40], strides = [1, 1]} : vector<512x49xf32> to vector<512x40xf32>
    %76 = arith.addf %74, %75 : vector<512x40xf32>
    %cst_8 = arith.constant 0.000000e+00 : f32
    %77 = vector.broadcast %cst_8 : f32 to vector<512x40xf32>
    %78 = arith.maximumf %76, %77 : vector<512x40xf32>
    %79 = vector.extract_strided_slice %69 {offsets = [0, 40], sizes = [512, 9], strides = [1, 1]} : vector<512x49xf32> to vector<512x9xf32>
    %80 = vector.broadcast %73 : vector<512x1xf32> to vector<512x9xf32>
    %81 = arith.mulf %79, %80 : vector<512x9xf32>
    %82 = vector.extract_strided_slice %71 {offsets = [0, 40], sizes = [512, 9], strides = [1, 1]} : vector<512x49xf32> to vector<512x9xf32>
    %83 = arith.addf %81, %82 : vector<512x9xf32>
    %cst_9 = arith.constant 0.000000e+00 : f32
    %84 = vector.broadcast %cst_9 : f32 to vector<512x9xf32>
    %85 = arith.subf %84, %83 : vector<512x9xf32>
    %86 = math.exp %85 : vector<512x9xf32>
    %cst_10 = arith.constant 1.000000e+00 : f32
    %87 = vector.broadcast %cst_10 : f32 to vector<512x9xf32>
    %88 = arith.addf %87, %86 : vector<512x9xf32>
    %cst_11 = arith.constant 1.000000e+00 : f32
    %89 = vector.broadcast %cst_11 : f32 to vector<512x9xf32>
    %90 = arith.divf %89, %88 : vector<512x9xf32>
    %c0_12 = arith.constant 0 : index
    %c0_13 = arith.constant 0 : index
    %91 = vector.load %arg5[%c0_12, %c0_13] : memref<41x3xf32, #tpu.memory_space<vmem>>, vector<41x3xf32>
    %92 = vector.extract_strided_slice %91 {offsets = [0, 0], sizes = [40, 3], strides = [1, 1]} : vector<41x3xf32> to vector<40x3xf32>
    %cst_14 = arith.constant dense<0.000000e+00> : vector<512x3xf32>
    %93 = tpu.matmul %78, %92, %cst_14 {dimension_numbers = #tpu.dot_dimension_numbers<[1], [0], [0], [1], [0, 0, 1, 1], [], []>} : vector<512x40xf32>, vector<40x3xf32>, vector<512x3xf32> -> vector<512x3xf32>
    %94 = vector.extract_strided_slice %91 {offsets = [40, 0], sizes = [1, 3], strides = [1, 1]} : vector<41x3xf32> to vector<1x3xf32>
    %95 = vector.broadcast %94 : vector<1x3xf32> to vector<512x3xf32>
    %96 = arith.addf %93, %95 : vector<512x3xf32>
    %cst_15 = arith.constant 0.000000e+00 : f32
    %97 = vector.broadcast %cst_15 : f32 to vector<512x3xf32>
    %98 = arith.maximumf %96, %97 : vector<512x3xf32>
    %99 = vector.extract_strided_slice %90 {offsets = [0, 0], sizes = [512, 3], strides = [1, 1]} : vector<512x9xf32> to vector<512x3xf32>
    %100 = vector.extract_strided_slice %90 {offsets = [0, 3], sizes = [512, 3], strides = [1, 1]} : vector<512x9xf32> to vector<512x3xf32>
    %101 = arith.addf %99, %100 : vector<512x3xf32>
    %102 = vector.extract_strided_slice %90 {offsets = [0, 6], sizes = [512, 3], strides = [1, 1]} : vector<512x9xf32> to vector<512x3xf32>
    %103 = arith.addf %101, %102 : vector<512x3xf32>
    %104 = arith.mulf %103, %98 : vector<512x3xf32>
    %c0_16 = arith.constant 0 : index
    %c0_17 = arith.constant 0 : index
    %105 = vector.load %arg6[%c0_16, %c0_17] : memref<512x3xf32, #tpu.memory_space<vmem>>, vector<512x3xf32>
    tpu.vector_store %arg6[%c0_16, %c0_17], %104 {strides = array<i32>} : memref<512x3xf32, #tpu.memory_space<vmem>>, vector<512x3xf32>,
    return
  }
  func.func @transform_0(%arg0: i32) -> (i32, i32) {
    %c0_i32 = arith.constant 0 : i32
    %c0_i32_0 = arith.constant 0 : i32
    return %arg0, %c0_i32 : i32, i32
  }
  func.func @transform_1(%arg0: i32) -> (i32, i32) {
    %c0_i32 = arith.constant 0 : i32
    %c0_i32_0 = arith.constant 0 : i32
    return %arg0, %c0_i32 : i32, i32
  }
  func.func @transform_2(%arg0: i32) -> (i32, i32) {
    %c0_i32 = arith.constant 0 : i32
    %c0_i32_0 = arith.constant 0 : i32
    %c0_i32_1 = arith.constant 0 : i32
    return %c0_i32, %c0_i32_0 : i32, i32
  }
  func.func @transform_3(%arg0: i32) -> (i32, i32) {
    %c0_i32 = arith.constant 0 : i32
    %c0_i32_0 = arith.constant 0 : i32
    %c0_i32_1 = arith.constant 0 : i32
    return %c0_i32, %c0_i32_0 : i32, i32
  }
  func.func @transform_4(%arg0: i32) -> (i32, i32) {
    %c0_i32 = arith.constant 0 : i32
    %c0_i32_0 = arith.constant 0 : i32
    %c0_i32_1 = arith.constant 0 : i32
    return %c0_i32, %c0_i32_0 : i32, i32
  }
  func.func @transform_5(%arg0: i32) -> (i32, i32) {
    %c0_i32 = arith.constant 0 : i32
    %c0_i32_0 = arith.constant 0 : i32
    return %arg0, %c0_i32 : i32, i32
  }
}

</mosaic_0001>

<llo_original>
// kernel: tpu_custom_call.1
$region0: #{tpu_custom_call.1}
  #allocation0 [shape = 'u32[]', space=smem, size = 0x4, offset = 0x4, fixed_abs, tag = 'smem constant byte address 0x4 - core index']
  #allocation1 [shape = 'u32[144,128]{1,0:T(1,128)}', space=vmem, size = 0x12000, scoped, tag = 'internal scratch']
  %s0 = inlined_call_operand.vmem [shape: s32[1024,9], index: 0, kind: input, shape index: {}]
  %s1 = inlined_call_operand.vmem [shape: f32[1024,57], index: 1, kind: input, shape index: {}]
  %s2 = inlined_call_operand.vmem [shape: bf16[120,49], index: 2, kind: input, shape index: {}]
  %s3 = inlined_call_operand.vmem [shape: f32[57,49], index: 3, kind: input, shape index: {}]
  %s4 = inlined_call_operand.vmem [shape: f32[41,3], index: 4, kind: input, shape index: {}]
  %s5 = inlined_call_operand.vmem [shape: f32[1024,3], index: 5, kind: output, shape index: {}]
  %s6 = sld [smem:[#allocation0]]
  $region53: #{tpu_custom_call.1} parent=0
    _
  %s8 = ssub.s32 1, %s6
  %s9 = scalar_select 0, %s8, %s6
  loop: start=0, step=1, limit=4
  $region2: #{tpu_custom_call.1} parent=0 // loop_pre_header
    _
  $region3: #{tpu_custom_call.1} parent=0 // loop_header
    %s11 = sphi 0, %s15
    %p12 = scmp.ge.s32.totalorder %s11, 4
    %s21 = sphi 0, %s23
    %s24 = sphi 0, %s21
    %s25 = sphi 0, %s24
    %s41 = sphi 0, %s25
    %s47 = sphi 0, %s49
    %s50 = sphi 0, %s47
    %s51 = sphi 0, %s50
    %s67 = sphi 0, %s51
    %s71 = sphi 0, %s71
    %s73 = sphi 0, %s71
    %s74 = sphi 0, %s73
    %s88 = sphi 0, %s74
    %s92 = sphi 0, %s92
    %s94 = sphi 0, %s92
    %s95 = sphi 0, %s94
    %s109 = sphi 0, %s95
    %s113 = sphi 0, %s113
    %s115 = sphi 0, %s113
    %s116 = sphi 0, %s115
    %s130 = sphi 0, %s116
    %s136 = sphi 0, %s138
    %s139 = sphi 0, %s136
    %s140 = sphi 0, %s139
    %s156 = sphi 0, %s140
  $region4: #{tpu_custom_call.1} parent=0 // loop_header_branch
    %14 = sbr.rel (%p12) target = $region8
  $region5: #{tpu_custom_call.1} parent=0 // loop_body
    %s16 = ssub.s32 %s11, 1
    %s17 = ssub.s32 %s11, 2
    %s18 = sadd.s32 %s11, 1
    %s19 = ssub.s32 %s11, %s18
    %p20 = scmp.eq.s32.totalorder %s19, 0
    %s22 = sadd.s32 %s21, 1
    %s23 = scalar_select %p20, %s21, %s22
    %p26 = pneg %p20
    %p27 = scmp.eq.s32.totalorder %s11, 1
    %p28 = por %p26, %p27
    %p29 = scmp.ne.s32.totalorder %s21, %s24
    %p30 = scmp.eq.s32.totalorder %s11, 0
    %p31 = por %p29, %p30
    %p32 = scmp.ne.s32.totalorder %s21, %s24
    %p33 = scmp.eq.s32.totalorder %s16, 1
    %p34 = por %p32, %p33
    %p35 = scmp.ne.s32.totalorder %s24, %s25
    %p36 = scmp.eq.s32.totalorder %s16, 0
    %p37 = por %p35, %p36
    %p38 = scmp.ne.s32.totalorder %s24, %s25
    %p39 = scmp.eq.s32.totalorder %s17, 1
    %p40 = por %p38, %p39
    %p42 = scmp.ne.s32.totalorder %s25, %s41
    %p43 = scmp.eq.s32.totalorder %s17, 0
    %p44 = por %p42, %p43
    %s45 = ssub.s32 %s11, %s18
    %p46 = scmp.eq.s32.totalorder %s45, 0
    %s48 = sadd.s32 %s47, 1
    %s49 = scalar_select %p46, %s47, %s48
    %p52 = pneg %p46
    %p53 = scmp.eq.s32.totalorder %s11, 1
    %p54 = por %p52, %p53
    %p55 = scmp.ne.s32.totalorder %s47, %s50
    %p56 = scmp.eq.s32.totalorder %s11, 0
    %p57 = por %p55, %p56
    %p58 = scmp.ne.s32.totalorder %s47, %s50
    %p59 = scmp.eq.s32.totalorder %s16, 1
    %p60 = por %p58, %p59
    %p61 = scmp.ne.s32.totalorder %s50, %s51
    %p62 = scmp.eq.s32.totalorder %s16, 0
    %p63 = por %p61, %p62
    %p64 = scmp.ne.s32.totalorder %s50, %s51
    %p65 = scmp.eq.s32.totalorder %s17, 1
    %p66 = por %p64, %p65
    %p68 = scmp.ne.s32.totalorder %s51, %s67
    %p69 = scmp.eq.s32.totalorder %s17, 0
    %p70 = por %p68, %p69
    %s72 = sadd.s32 %s71, 1
    %p75 = scmp.eq.s32.totalorder %s11, 1
    %p76 = scmp.ne.s32.totalorder %s71, %s73
    %p77 = scmp.eq.s32.totalorder %s11, 0
    %p78 = por %p76, %p77
    %p79 = scmp.ne.s32.totalorder %s71, %s73
    %p80 = scmp.eq.s32.totalorder %s16, 1
    %p81 = por %p79, %p80
    %p82 = scmp.ne.s32.totalorder %s73, %s74
    %p83 = scmp.eq.s32.totalorder %s16, 0
    %p84 = por %p82, %p83
    %p85 = scmp.ne.s32.totalorder %s73, %s74
    %p86 = scmp.eq.s32.totalorder %s17, 1
    %p87 = por %p85, %p86
    %p89 = scmp.ne.s32.totalorder %s74, %s88
    %p90 = scmp.eq.s32.totalorder %s17, 0
    %p91 = por %p89, %p90
    %s93 = sadd.s32 %s92, 1
    %p96 = scmp.eq.s32.totalorder %s11, 1
    %p97 = scmp.ne.s32.totalorder %s92, %s94
    %p98 = scmp.eq.s32.totalorder %s11, 0
    %p99 = por %p97, %p98
    %p100 = scmp.ne.s32.totalorder %s92, %s94
    %p101 = scmp.eq.s32.totalorder %s16, 1
    %p102 = por %p100, %p101
    %p103 = scmp.ne.s32.totalorder %s94, %s95
    %p104 = scmp.eq.s32.totalorder %s16, 0
    %p105 = por %p103, %p104
    %p106 = scmp.ne.s32.totalorder %s94, %s95
    %p107 = scmp.eq.s32.totalorder %s17, 1
    %p108 = por %p106, %p107
    %p110 = scmp.ne.s32.totalorder %s95, %s109
    %p111 = scmp.eq.s32.totalorder %s17, 0
    %p112 = por %p110, %p111
    %s114 = sadd.s32 %s113, 1
    %p117 = scmp.eq.s32.totalorder %s11, 1
    %p118 = scmp.ne.s32.totalorder %s113, %s115
    %p119 = scmp.eq.s32.totalorder %s11, 0
    %p120 = por %p118, %p119
    %p121 = scmp.ne.s32.totalorder %s113, %s115
    %p122 = scmp.eq.s32.totalorder %s16, 1
    %p123 = por %p121, %p122
    %p124 = scmp.ne.s32.totalorder %s115, %s116
    %p125 = scmp.eq.s32.totalorder %s16, 0
    %p126 = por %p124, %p125
    %p127 = scmp.ne.s32.totalorder %s115, %s116
    %p128 = scmp.eq.s32.totalorder %s17, 1
    %p129 = por %p127, %p128
    %p131 = scmp.ne.s32.totalorder %s116, %s130
    %p132 = scmp.eq.s32.totalorder %s17, 0
    %p133 = por %p131, %p132
    %s134 = ssub.s32 %s11, %s18
    %p135 = scmp.eq.s32.totalorder %s134, 0
    %s137 = sadd.s32 %s136, 1
    %s138 = scalar_select %p135, %s136, %s137
    %p141 = pneg %p135
    %p142 = scmp.eq.s32.totalorder %s11, 1
    %p143 = por %p141, %p142
    %p144 = scmp.ne.s32.totalorder %s136, %s139
    %p145 = scmp.eq.s32.totalorder %s11, 0
    %p146 = por %p144, %p145
    %p147 = scmp.ne.s32.totalorder %s136, %s139
    %p148 = scmp.eq.s32.totalorder %s16, 1
    %p149 = por %p147, %p148
    %p150 = scmp.ne.s32.totalorder %s139, %s140
    %p151 = scmp.eq.s32.totalorder %s16, 0
    %p152 = por %p150, %p151
    %p153 = scmp.ne.s32.totalorder %s139, %s140
    %p154 = scmp.eq.s32.totalorder %s17, 1
    %p155 = por %p153, %p154
    %p157 = scmp.ne.s32.totalorder %s140, %s156
    %p158 = scmp.eq.s32.totalorder %s17, 0
    %p159 = por %p157, %p158
    %p160 = scmp.le.s32.totalorder 1, %s11
    %p161 = scmp.lt.s32.totalorder %s11, 3
    %p162 = pnand %p160, %p161
    %p163 = pneg %p162
    // Predicated region
    $region9: #{tpu_custom_call.1} parent=5 // pred_check
      _
    $region10: #{tpu_custom_call.1} parent=5 // pred_check_branch
      %165 = sbr.rel (%p162) target = $region12
    $region11: #{tpu_custom_call.1} parent=5 // pred_region
      %s166 = ssub.s32 %s11, 1
      // Predicated region
      $region13: #{tpu_custom_call.1} parent=11 // pred_check
        %p167 = pneg %p84
      $region14: #{tpu_custom_call.1} parent=11 // pred_check_branch
        %169 = sbr.rel (%p167) target = $region16
      $region15: #{tpu_custom_call.1} parent=11 // pred_region
        _
      $region16: #{tpu_custom_call.1} parent=11 // pred_fallthru
        _
      // Predicated region
      $region17: #{tpu_custom_call.1} parent=11 // pred_check
        %p170 = pneg %p105
      $region18: #{tpu_custom_call.1} parent=11 // pred_check_branch
        %172 = sbr.rel (%p170) target = $region20
      $region19: #{tpu_custom_call.1} parent=11 // pred_region
        _
      $region20: #{tpu_custom_call.1} parent=11 // pred_fallthru
        _
      // Predicated region
      $region21: #{tpu_custom_call.1} parent=11 // pred_check
        %p173 = pneg %p126
      $region22: #{tpu_custom_call.1} parent=11 // pred_check_branch
        %175 = sbr.rel (%p173) target = $region24
      $region23: #{tpu_custom_call.1} parent=11 // pred_region
        _
      $region24: #{tpu_custom_call.1} parent=11 // pred_fallthru
        _
    $region12: #{tpu_custom_call.1} parent=5 // pred_fallthru
      _
    %p176 = scmp.lt.s32.totalorder %s11, 2
    // Predicated region
    $region25: #{tpu_custom_call.1} parent=5 // pred_check
      %p177 = pneg %p176
    $region26: #{tpu_custom_call.1} parent=5 // pred_check_branch
      %179 = sbr.rel (%p177) target = $region28
    $region27: #{tpu_custom_call.1} parent=5 // pred_region
      // Predicated region
      $region29: #{tpu_custom_call.1} parent=27 // pred_check
        %p180 = pneg %p31
      $region30: #{tpu_custom_call.1} parent=27 // pred_check_branch
        %182 = sbr.rel (%p180) target = $region32
      $region31: #{tpu_custom_call.1} parent=27 // pred_region
        %s183 = smul.u32 64, %s11
        %p184 = scmp.lt.s32.totalorder %s183, 127
        %s185 = scalar_select %p184, %s183, 127
        %s186 = smul.addr %s185, 8
        %s187 = scalar_lea.vmem %s0, %s186
        %s188 = smul.u32 64, %s11
      $region32: #{tpu_custom_call.1} parent=27 // pred_fallthru
        _
      // Predicated region
      $region33: #{tpu_custom_call.1} parent=27 // pred_check
        %p189 = pneg %p57
      $region34: #{tpu_custom_call.1} parent=27 // pred_check_branch
        %191 = sbr.rel (%p189) target = $region36
      $region35: #{tpu_custom_call.1} parent=27 // pred_region
        %s192 = smul.u32 64, %s11
        %p193 = scmp.lt.s32.totalorder %s192, 127
        %s194 = scalar_select %p193, %s192, 127
        %s195 = smul.addr %s194, 8
        %s196 = scalar_lea.vmem %s1, %s195
        %s197 = smul.u32 64, %s11
      $region36: #{tpu_custom_call.1} parent=27 // pred_fallthru
        _
    $region28: #{tpu_custom_call.1} parent=5 // pred_fallthru
      _
    %p198 = scmp.le.s32.totalorder 1, %s11
    %p199 = scmp.lt.s32.totalorder %s11, 3
    %p200 = pnand %p198, %p199
    %p201 = pneg %p200
    // Predicated region
    $region37: #{tpu_custom_call.1} parent=5 // pred_check
      _
    $region38: #{tpu_custom_call.1} parent=5 // pred_check_branch
      %203 = sbr.rel (%p200) target = $region40
    $region39: #{tpu_custom_call.1} parent=5 // pred_region
      %s204 = ssub.s32 %s11, 1
      %s205 = smul.u32 64, %s16
      %p206 = scmp.lt.s32.totalorder %s205, 127
      %s207 = scalar_select %p206, %s205, 127
      %s208 = smul.addr %s207, 8
      %s209 = scalar_lea.vmem %s0, %s208
      %p210 = pneg %p37
      %p211 = pneg %p34
      %s212 = smul.u32 64, %s16
      %p213 = scmp.lt.s32.totalorder %s212, 127
      %s214 = scalar_select %p213, %s212, 127
      %s215 = smul.addr %s214, 8
      %s216 = scalar_lea.vmem %s1, %s215
      %p217 = pneg %p63
      %p218 = pneg %p60
      %p219 = pneg %p84
      %p220 = pneg %p81
      %p221 = pneg %p105
      %p222 = pneg %p102
      %p223 = pneg %p126
      %p224 = pneg %p123
      %p225 = pneg %p152
      %p226 = pneg %p149
      %s227 = smul.u32 64, %s16
      %p228 = scmp.lt.s32.totalorder %s227, 127
      %s229 = scalar_select %p228, %s227, 127
      %s230 = smul.addr %s229, 8
      %s231 = scalar_lea.vmem %s5, %s230
      %s232 = smul.u32 64, %s16
      %p233 = scmp.lt.s32.totalorder %s232, 127
      %s234 = scalar_select %p233, %s232, 127
      %s235 = smul.addr %s234, 8
      %s236 = scalar_lea.vmem %s0, %s235
      %s237 = smul.u32 64, %s16
      %s238 = smul.u32 64, %s16
      %p239 = scmp.lt.s32.totalorder %s238, 127
      %s240 = scalar_select %p239, %s238, 127
      %s241 = smul.addr %s240, 8
      %s242 = scalar_lea.vmem %s1, %s241
      %s243 = smul.u32 64, %s16
      %s244 = smul.u32 64, %s16
      %p245 = scmp.lt.s32.totalorder %s244, 127
      %s246 = scalar_select %p245, %s244, 127
      %s247 = smul.addr %s246, 8
      %s248 = scalar_lea.vmem %s5, %s247
      %s249 = smul.u32 64, %s16
      %v251 = vld [vmem:[%s236] sm:$0xff]
      %v252 = vld [vmem:[%s236 + $0x8] sm:$0xff]
      %v253 = vld [vmem:[%s236 + $0x10] sm:$0xff]
      %v254 = vld [vmem:[%s236 + $0x18] sm:$0xff]
      %v255 = vld [vmem:[%s236 + $0x20] sm:$0xff]
      %v256 = vld [vmem:[%s236 + $0x28] sm:$0xff]
      %v257 = vld [vmem:[%s236 + $0x30] sm:$0xff]
      %v258 = vld [vmem:[%s236 + $0x38] sm:$0xff]
      %v259 = vld [vmem:[%s236 + $0x40] sm:$0xff]
      %v260 = vld [vmem:[%s236 + $0x48] sm:$0xff]
      %v261 = vld [vmem:[%s236 + $0x50] sm:$0xff]
      %v262 = vld [vmem:[%s236 + $0x58] sm:$0xff]
      %v263 = vld [vmem:[%s236 + $0x60] sm:$0xff]
      %v264 = vld [vmem:[%s236 + $0x68] sm:$0xff]
      %v265 = vld [vmem:[%s236 + $0x70] sm:$0xff]
      %v266 = vld [vmem:[%s236 + $0x78] sm:$0xff]
      %v267 = vld [vmem:[%s236 + $0x80] sm:$0xff]
      %v268 = vld [vmem:[%s236 + $0x88] sm:$0xff]
      %v269 = vld [vmem:[%s236 + $0x90] sm:$0xff]
      %v270 = vld [vmem:[%s236 + $0x98] sm:$0xff]
      %v271 = vld [vmem:[%s236 + $0xa0] sm:$0xff]
      %v272 = vld [vmem:[%s236 + $0xa8] sm:$0xff]
      %v273 = vld [vmem:[%s236 + $0xb0] sm:$0xff]
      %v274 = vld [vmem:[%s236 + $0xb8] sm:$0xff]
      %v275 = vld [vmem:[%s236 + $0xc0] sm:$0xff]
      %v276 = vld [vmem:[%s236 + $0xc8] sm:$0xff]
      %v277 = vld [vmem:[%s236 + $0xd0] sm:$0xff]
      %v278 = vld [vmem:[%s236 + $0xd8] sm:$0xff]
      %v279 = vld [vmem:[%s236 + $0xe0] sm:$0xff]
      %v280 = vld [vmem:[%s236 + $0xe8] sm:$0xff]
      %v281 = vld [vmem:[%s236 + $0xf0] sm:$0xff]
      %v282 = vld [vmem:[%s236 + $0xf8] sm:$0xff]
      %v283 = vld [vmem:[%s236 + $0x100] sm:$0xff]
      %v284 = vld [vmem:[%s236 + $0x108] sm:$0xff]
      %v285 = vld [vmem:[%s236 + $0x110] sm:$0xff]
      %v286 = vld [vmem:[%s236 + $0x118] sm:$0xff]
      %v287 = vld [vmem:[%s236 + $0x120] sm:$0xff]
      %v288 = vld [vmem:[%s236 + $0x128] sm:$0xff]
      %v289 = vld [vmem:[%s236 + $0x130] sm:$0xff]
      %v290 = vld [vmem:[%s236 + $0x138] sm:$0xff]
      %v291 = vld [vmem:[%s236 + $0x140] sm:$0xff]
      %v292 = vld [vmem:[%s236 + $0x148] sm:$0xff]
      %v293 = vld [vmem:[%s236 + $0x150] sm:$0xff]
      %v294 = vld [vmem:[%s236 + $0x158] sm:$0xff]
      %v295 = vld [vmem:[%s236 + $0x160] sm:$0xff]
      %v296 = vld [vmem:[%s236 + $0x168] sm:$0xff]
      %v297 = vld [vmem:[%s236 + $0x170] sm:$0xff]
      %v298 = vld [vmem:[%s236 + $0x178] sm:$0xff]
      %v299 = vld [vmem:[%s236 + $0x180] sm:$0xff]
      %v300 = vld [vmem:[%s236 + $0x188] sm:$0xff]
      %v301 = vld [vmem:[%s236 + $0x190] sm:$0xff]
      %v302 = vld [vmem:[%s236 + $0x198] sm:$0xff]
      %v303 = vld [vmem:[%s236 + $0x1a0] sm:$0xff]
      %v304 = vld [vmem:[%s236 + $0x1a8] sm:$0xff]
      %v305 = vld [vmem:[%s236 + $0x1b0] sm:$0xff]
      %v306 = vld [vmem:[%s236 + $0x1b8] sm:$0xff]
      %v307 = vld [vmem:[%s236 + $0x1c0] sm:$0xff]
      %v308 = vld [vmem:[%s236 + $0x1c8] sm:$0xff]
      %v309 = vld [vmem:[%s236 + $0x1d0] sm:$0xff]
      %v310 = vld [vmem:[%s236 + $0x1d8] sm:$0xff]
      %v311 = vld [vmem:[%s236 + $0x1e0] sm:$0xff]
      %v312 = vld [vmem:[%s236 + $0x1e8] sm:$0xff]
      %v313 = vld [vmem:[%s236 + $0x1f0] sm:$0xff]
      %v314 = vld [vmem:[%s236 + $0x1f8] sm:$0xff]
      %v315 = vld [vmem:[%s242] sm:$0xff]
      %v316 = vld [vmem:[%s242 + $0x8] sm:$0xff]
      %v317 = vld [vmem:[%s242 + $0x10] sm:$0xff]
      %v318 = vld [vmem:[%s242 + $0x18] sm:$0xff]
      %v319 = vld [vmem:[%s242 + $0x20] sm:$0xff]
      %v320 = vld [vmem:[%s242 + $0x28] sm:$0xff]
      %v321 = vld [vmem:[%s242 + $0x30] sm:$0xff]
      %v322 = vld [vmem:[%s242 + $0x38] sm:$0xff]
      %v323 = vld [vmem:[%s242 + $0x40] sm:$0xff]
      %v324 = vld [vmem:[%s242 + $0x48] sm:$0xff]
      %v325 = vld [vmem:[%s242 + $0x50] sm:$0xff]
      %v326 = vld [vmem:[%s242 + $0x58] sm:$0xff]
      %v327 = vld [vmem:[%s242 + $0x60] sm:$0xff]
      %v328 = vld [vmem:[%s242 + $0x68] sm:$0xff]
      %v329 = vld [vmem:[%s242 + $0x70] sm:$0xff]
      %v330 = vld [vmem:[%s242 + $0x78] sm:$0xff]
      %v331 = vld [vmem:[%s242 + $0x80] sm:$0xff]
      %v332 = vld [vmem:[%s242 + $0x88] sm:$0xff]
      %v333 = vld [vmem:[%s242 + $0x90] sm:$0xff]
      %v334 = vld [vmem:[%s242 + $0x98] sm:$0xff]
      %v335 = vld [vmem:[%s242 + $0xa0] sm:$0xff]
      %v336 = vld [vmem:[%s242 + $0xa8] sm:$0xff]
      %v337 = vld [vmem:[%s242 + $0xb0] sm:$0xff]
      %v338 = vld [vmem:[%s242 + $0xb8] sm:$0xff]
      %v339 = vld [vmem:[%s242 + $0xc0] sm:$0xff]
      %v340 = vld [vmem:[%s242 + $0xc8] sm:$0xff]
      %v341 = vld [vmem:[%s242 + $0xd0] sm:$0xff]
      %v342 = vld [vmem:[%s242 + $0xd8] sm:$0xff]
      %v343 = vld [vmem:[%s242 + $0xe0] sm:$0xff]
      %v344 = vld [vmem:[%s242 + $0xe8] sm:$0xff]
      %v345 = vld [vmem:[%s242 + $0xf0] sm:$0xff]
      %v346 = vld [vmem:[%s242 + $0xf8] sm:$0xff]
      %v347 = vld [vmem:[%s242 + $0x100] sm:$0xff]
      %v348 = vld [vmem:[%s242 + $0x108] sm:$0xff]
      %v349 = vld [vmem:[%s242 + $0x110] sm:$0xff]
      %v350 = vld [vmem:[%s242 + $0x118] sm:$0xff]
      %v351 = vld [vmem:[%s242 + $0x120] sm:$0xff]
      %v352 = vld [vmem:[%s242 + $0x128] sm:$0xff]
      %v353 = vld [vmem:[%s242 + $0x130] sm:$0xff]
      %v354 = vld [vmem:[%s242 + $0x138] sm:$0xff]
      %v355 = vld [vmem:[%s242 + $0x140] sm:$0xff]
      %v356 = vld [vmem:[%s242 + $0x148] sm:$0xff]
      %v357 = vld [vmem:[%s242 + $0x150] sm:$0xff]
      %v358 = vld [vmem:[%s242 + $0x158] sm:$0xff]
      %v359 = vld [vmem:[%s242 + $0x160] sm:$0xff]
      %v360 = vld [vmem:[%s242 + $0x168] sm:$0xff]
      %v361 = vld [vmem:[%s242 + $0x170] sm:$0xff]
      %v362 = vld [vmem:[%s242 + $0x178] sm:$0xff]
      %v363 = vld [vmem:[%s242 + $0x180] sm:$0xff]
      %v364 = vld [vmem:[%s242 + $0x188] sm:$0xff]
      %v365 = vld [vmem:[%s242 + $0x190] sm:$0xff]
      %v366 = vld [vmem:[%s242 + $0x198] sm:$0xff]
      %v367 = vld [vmem:[%s242 + $0x1a0] sm:$0xff]
      %v368 = vld [vmem:[%s242 + $0x1a8] sm:$0xff]
      %v369 = vld [vmem:[%s242 + $0x1b0] sm:$0xff]
      %v370 = vld [vmem:[%s242 + $0x1b8] sm:$0xff]
      %v371 = vld [vmem:[%s242 + $0x1c0] sm:$0xff]
      %v372 = vld [vmem:[%s242 + $0x1c8] sm:$0xff]
      %v373 = vld [vmem:[%s242 + $0x1d0] sm:$0xff]
      %v374 = vld [vmem:[%s242 + $0x1d8] sm:$0xff]
      %v375 = vld [vmem:[%s242 + $0x1e0] sm:$0xff]
      %v376 = vld [vmem:[%s242 + $0x1e8] sm:$0xff]
      %v377 = vld [vmem:[%s242 + $0x1f0] sm:$0xff]
      %v378 = vld [vmem:[%s242 + $0x1f8] sm:$0xff]
      %v379 = vlaneseq
      %v380 = vand.u32 %v379, 127
      %381 = vset.pattern.permute.xlu0 0
      %382 = vperm.xlu0 %381, %v251
      %v383 = vpop.permute.xlu0 %382
      %384 = vset.pattern.permute.xlu0 0
      %385 = vperm.xlu0 %384, %v252
      %v386 = vpop.permute.xlu0 %385
      %387 = vset.pattern.permute.xlu0 0
      %388 = vperm.xlu0 %387, %v253
      %v389 = vpop.permute.xlu0 %388
      %390 = vset.pattern.permute.xlu0 0
      %391 = vperm.xlu0 %390, %v254
      %v392 = vpop.permute.xlu0 %391
      %393 = vset.pattern.permute.xlu0 0
      %394 = vperm.xlu0 %393, %v255
      %v395 = vpop.permute.xlu0 %394
      %396 = vset.pattern.permute.xlu0 0
      %397 = vperm.xlu0 %396, %v256
      %v398 = vpop.permute.xlu0 %397
      %399 = vset.pattern.permute.xlu0 0
      %400 = vperm.xlu0 %399, %v257
      %v401 = vpop.permute.xlu0 %400
      %402 = vset.pattern.permute.xlu0 0
      %403 = vperm.xlu0 %402, %v258
      %v404 = vpop.permute.xlu0 %403
      %405 = vset.pattern.permute.xlu0 0
      %406 = vperm.xlu0 %405, %v259
      %v407 = vpop.permute.xlu0 %406
      %408 = vset.pattern.permute.xlu0 0
      %409 = vperm.xlu0 %408, %v260
      %v410 = vpop.permute.xlu0 %409
      %411 = vset.pattern.permute.xlu0 0
      %412 = vperm.xlu0 %411, %v261
      %v413 = vpop.permute.xlu0 %412
      %414 = vset.pattern.permute.xlu0 0
      %415 = vperm.xlu0 %414, %v262
      %v416 = vpop.permute.xlu0 %415
      %417 = vset.pattern.permute.xlu0 0
      %418 = vperm.xlu0 %417, %v263
      %v419 = vpop.permute.xlu0 %418
      %420 = vset.pattern.permute.xlu0 0
      %421 = vperm.xlu0 %420, %v264
      %v422 = vpop.permute.xlu0 %421
      %423 = vset.pattern.permute.xlu0 0
      %424 = vperm.xlu0 %423, %v265
      %v425 = vpop.permute.xlu0 %424
      %426 = vset.pattern.permute.xlu0 0
      %427 = vperm.xlu0 %426, %v266
      %v428 = vpop.permute.xlu0 %427
      %429 = vset.pattern.permute.xlu0 0
      %430 = vperm.xlu0 %429, %v267
      %v431 = vpop.permute.xlu0 %430
      %432 = vset.pattern.permute.xlu0 0
      %433 = vperm.xlu0 %432, %v268
      %v434 = vpop.permute.xlu0 %433
      %435 = vset.pattern.permute.xlu0 0
      %436 = vperm.xlu0 %435, %v269
      %v437 = vpop.permute.xlu0 %436
      %438 = vset.pattern.permute.xlu0 0
      %439 = vperm.xlu0 %438, %v270
      %v440 = vpop.permute.xlu0 %439
      %441 = vset.pattern.permute.xlu0 0
      %442 = vperm.xlu0 %441, %v271
      %v443 = vpop.permute.xlu0 %442
      %444 = vset.pattern.permute.xlu0 0
      %445 = vperm.xlu0 %444, %v272
      %v446 = vpop.permute.xlu0 %445
      %447 = vset.pattern.permute.xlu0 0
      %448 = vperm.xlu0 %447, %v273
      %v449 = vpop.permute.xlu0 %448
      %450 = vset.pattern.permute.xlu0 0
      %451 = vperm.xlu0 %450, %v274
      %v452 = vpop.permute.xlu0 %451
      %453 = vset.pattern.permute.xlu0 0
      %454 = vperm.xlu0 %453, %v275
      %v455 = vpop.permute.xlu0 %454
      %456 = vset.pattern.permute.xlu0 0
      %457 = vperm.xlu0 %456, %v276
      %v458 = vpop.permute.xlu0 %457
      %459 = vset.pattern.permute.xlu0 0
      %460 = vperm.xlu0 %459, %v277
      %v461 = vpop.permute.xlu0 %460
      %462 = vset.pattern.permute.xlu0 0
      %463 = vperm.xlu0 %462, %v278
      %v464 = vpop.permute.xlu0 %463
      %465 = vset.pattern.permute.xlu0 0
      %466 = vperm.xlu0 %465, %v279
      %v467 = vpop.permute.xlu0 %466
      %468 = vset.pattern.permute.xlu0 0
      %469 = vperm.xlu0 %468, %v280
      %v470 = vpop.permute.xlu0 %469
      %471 = vset.pattern.permute.xlu0 0
      %472 = vperm.xlu0 %471, %v281
      %v473 = vpop.permute.xlu0 %472
      %474 = vset.pattern.permute.xlu0 0
      %475 = vperm.xlu0 %474, %v282
      %v476 = vpop.permute.xlu0 %475
      %477 = vset.pattern.permute.xlu0 0
      %478 = vperm.xlu0 %477, %v283
      %v479 = vpop.permute.xlu0 %478
      %480 = vset.pattern.permute.xlu0 0
      %481 = vperm.xlu0 %480, %v284
      %v482 = vpop.permute.xlu0 %481
      %483 = vset.pattern.permute.xlu0 0
      %484 = vperm.xlu0 %483, %v285
      %v485 = vpop.permute.xlu0 %484
      %486 = vset.pattern.permute.xlu0 0
      %487 = vperm.xlu0 %486, %v286
      %v488 = vpop.permute.xlu0 %487
      %489 = vset.pattern.permute.xlu0 0
      %490 = vperm.xlu0 %489, %v287
      %v491 = vpop.permute.xlu0 %490
      %492 = vset.pattern.permute.xlu0 0
      %493 = vperm.xlu0 %492, %v288
      %v494 = vpop.permute.xlu0 %493
      %495 = vset.pattern.permute.xlu0 0
      %496 = vperm.xlu0 %495, %v289
      %v497 = vpop.permute.xlu0 %496
      %498 = vset.pattern.permute.xlu0 0
      %499 = vperm.xlu0 %498, %v290
      %v500 = vpop.permute.xlu0 %499
      %501 = vset.pattern.permute.xlu0 0
      %502 = vperm.xlu0 %501, %v291
      %v503 = vpop.permute.xlu0 %502
      %504 = vset.pattern.permute.xlu0 0
      %505 = vperm.xlu0 %504, %v292
      %v506 = vpop.permute.xlu0 %505
      %507 = vset.pattern.permute.xlu0 0
      %508 = vperm.xlu0 %507, %v293
      %v509 = vpop.permute.xlu0 %508
      %510 = vset.pattern.permute.xlu0 0
      %511 = vperm.xlu0 %510, %v294
      %v512 = vpop.permute.xlu0 %511
      %513 = vset.pattern.permute.xlu0 0
      %514 = vperm.xlu0 %513, %v295
      %v515 = vpop.permute.xlu0 %514
      %516 = vset.pattern.permute.xlu0 0
      %517 = vperm.xlu0 %516, %v296
      %v518 = vpop.permute.xlu0 %517
      %519 = vset.pattern.permute.xlu0 0
      %520 = vperm.xlu0 %519, %v297
      %v521 = vpop.permute.xlu0 %520
      %522 = vset.pattern.permute.xlu0 0
      %523 = vperm.xlu0 %522, %v298
      %v524 = vpop.permute.xlu0 %523
      %525 = vset.pattern.permute.xlu0 0
      %526 = vperm.xlu0 %525, %v299
      %v527 = vpop.permute.xlu0 %526
      %528 = vset.pattern.permute.xlu0 0
      %529 = vperm.xlu0 %528, %v300
      %v530 = vpop.permute.xlu0 %529
      %531 = vset.pattern.permute.xlu0 0
      %532 = vperm.xlu0 %531, %v301
      %v533 = vpop.permute.xlu0 %532
      %534 = vset.pattern.permute.xlu0 0
      %535 = vperm.xlu0 %534, %v302
      %v536 = vpop.permute.xlu0 %535
      %537 = vset.pattern.permute.xlu0 0
      %538 = vperm.xlu0 %537, %v303
      %v539 = vpop.permute.xlu0 %538
      %540 = vset.pattern.permute.xlu0 0
      %541 = vperm.xlu0 %540, %v304
      %v542 = vpop.permute.xlu0 %541
      %543 = vset.pattern.permute.xlu0 0
      %544 = vperm.xlu0 %543, %v305
      %v545 = vpop.permute.xlu0 %544
      %546 = vset.pattern.permute.xlu0 0
      %547 = vperm.xlu0 %546, %v306
      %v548 = vpop.permute.xlu0 %547
      %549 = vset.pattern.permute.xlu0 0
      %550 = vperm.xlu0 %549, %v307
      %v551 = vpop.permute.xlu0 %550
      %552 = vset.pattern.permute.xlu0 0
      %553 = vperm.xlu0 %552, %v308
      %v554 = vpop.permute.xlu0 %553
      %555 = vset.pattern.permute.xlu0 0
      %556 = vperm.xlu0 %555, %v309
      %v557 = vpop.permute.xlu0 %556
      %558 = vset.pattern.permute.xlu0 0
      %559 = vperm.xlu0 %558, %v310
      %v560 = vpop.permute.xlu0 %559
      %561 = vset.pattern.permute.xlu0 0
      %562 = vperm.xlu0 %561, %v311
      %v563 = vpop.permute.xlu0 %562
      %564 = vset.pattern.permute.xlu0 0
      %565 = vperm.xlu0 %564, %v312
      %v566 = vpop.permute.xlu0 %565
      %567 = vset.pattern.permute.xlu0 0
      %568 = vperm.xlu0 %567, %v313
      %v569 = vpop.permute.xlu0 %568
      %570 = vset.pattern.permute.xlu0 0
      %571 = vperm.xlu0 %570, %v314
      %v572 = vpop.permute.xlu0 %571
      %vm573 = vcmp.eq.s32.totalorder %v383, %v380
      %vm574 = vcmp.eq.s32.totalorder %v386, %v380
      %vm575 = vcmp.eq.s32.totalorder %v389, %v380
      %vm576 = vcmp.eq.s32.totalorder %v392, %v380
      %vm577 = vcmp.eq.s32.totalorder %v395, %v380
      %vm578 = vcmp.eq.s32.totalorder %v398, %v380
      %vm579 = vcmp.eq.s32.totalorder %v401, %v380
      %vm580 = vcmp.eq.s32.totalorder %v404, %v380
      %vm581 = vcmp.eq.s32.totalorder %v407, %v380
      %vm582 = vcmp.eq.s32.totalorder %v410, %v380
      %vm583 = vcmp.eq.s32.totalorder %v413, %v380
      %vm584 = vcmp.eq.s32.totalorder %v416, %v380
      %vm585 = vcmp.eq.s32.totalorder %v419, %v380
      %vm586 = vcmp.eq.s32.totalorder %v422, %v380
      %vm587 = vcmp.eq.s32.totalorder %v425, %v380
      %vm588 = vcmp.eq.s32.totalorder %v428, %v380
      %vm589 = vcmp.eq.s32.totalorder %v431, %v380
      %vm590 = vcmp.eq.s32.totalorder %v434, %v380
      %vm591 = vcmp.eq.s32.totalorder %v437, %v380
      %vm592 = vcmp.eq.s32.totalorder %v440, %v380
      %vm593 = vcmp.eq.s32.totalorder %v443, %v380
      %vm594 = vcmp.eq.s32.totalorder %v446, %v380
      %vm595 = vcmp.eq.s32.totalorder %v449, %v380
      %vm596 = vcmp.eq.s32.totalorder %v452, %v380
      %vm597 = vcmp.eq.s32.totalorder %v455, %v380
      %vm598 = vcmp.eq.s32.totalorder %v458, %v380
      %vm599 = vcmp.eq.s32.totalorder %v461, %v380
      %vm600 = vcmp.eq.s32.totalorder %v464, %v380
      %vm601 = vcmp.eq.s32.totalorder %v467, %v380
      %vm602 = vcmp.eq.s32.totalorder %v470, %v380
      %vm603 = vcmp.eq.s32.totalorder %v473, %v380
      %vm604 = vcmp.eq.s32.totalorder %v476, %v380
      %vm605 = vcmp.eq.s32.totalorder %v479, %v380
      %vm606 = vcmp.eq.s32.totalorder %v482, %v380
      %vm607 = vcmp.eq.s32.totalorder %v485, %v380
      %vm608 = vcmp.eq.s32.totalorder %v488, %v380
      %vm609 = vcmp.eq.s32.totalorder %v491, %v380
      %vm610 = vcmp.eq.s32.totalorder %v494, %v380
      %vm611 = vcmp.eq.s32.totalorder %v497, %v380
      %vm612 = vcmp.eq.s32.totalorder %v500, %v380
      %vm613 = vcmp.eq.s32.totalorder %v503, %v380
      %vm614 = vcmp.eq.s32.totalorder %v506, %v380
      %vm615 = vcmp.eq.s32.totalorder %v509, %v380
      %vm616 = vcmp.eq.s32.totalorder %v512, %v380
      %vm617 = vcmp.eq.s32.totalorder %v515, %v380
      %vm618 = vcmp.eq.s32.totalorder %v518, %v380
      %vm619 = vcmp.eq.s32.totalorder %v521, %v380
      %vm620 = vcmp.eq.s32.totalorder %v524, %v380
      %vm621 = vcmp.eq.s32.totalorder %v527, %v380
      %vm622 = vcmp.eq.s32.totalorder %v530, %v380
      %vm623 = vcmp.eq.s32.totalorder %v533, %v380
      %vm624 = vcmp.eq.s32.totalorder %v536, %v380
      %vm625 = vcmp.eq.s32.totalorder %v539, %v380
      %vm626 = vcmp.eq.s32.totalorder %v542, %v380
      %vm627 = vcmp.eq.s32.totalorder %v545, %v380
      %vm628 = vcmp.eq.s32.totalorder %v548, %v380
      %vm629 = vcmp.eq.s32.totalorder %v551, %v380
      %vm630 = vcmp.eq.s32.totalorder %v554, %v380
      %vm631 = vcmp.eq.s32.totalorder %v557, %v380
      %vm632 = vcmp.eq.s32.totalorder %v560, %v380
      %vm633 = vcmp.eq.s32.totalorder %v563, %v380
      %vm634 = vcmp.eq.s32.totalorder %v566, %v380
      %vm635 = vcmp.eq.s32.totalorder %v569, %v380
      %vm636 = vcmp.eq.s32.totalorder %v572, %v380
      %v637 = vsel %vm573, 1, 0
      %v638 = vsel %vm574, 1, 0
      %v639 = vsel %vm575, 1, 0
      %v640 = vsel %vm576, 1, 0
      %v641 = vsel %vm577, 1, 0
      %v642 = vsel %vm578, 1, 0
      %v643 = vsel %vm579, 1, 0
      %v644 = vsel %vm580, 1, 0
      %v645 = vsel %vm581, 1, 0
      %v646 = vsel %vm582, 1, 0
      %v647 = vsel %vm583, 1, 0
      %v648 = vsel %vm584, 1, 0
      %v649 = vsel %vm585, 1, 0
      %v650 = vsel %vm586, 1, 0
      %v651 = vsel %vm587, 1, 0
      %v652 = vsel %vm588, 1, 0
      %v653 = vsel %vm589, 1, 0
      %v654 = vsel %vm590, 1, 0
      %v655 = vsel %vm591, 1, 0
      %v656 = vsel %vm592, 1, 0
      %v657 = vsel %vm593, 1, 0
      %v658 = vsel %vm594, 1, 0
      %v659 = vsel %vm595, 1, 0
      %v660 = vsel %vm596, 1, 0
      %v661 = vsel %vm597, 1, 0
      %v662 = vsel %vm598, 1, 0
      %v663 = vsel %vm599, 1, 0
      %v664 = vsel %vm600, 1, 0
      %v665 = vsel %vm601, 1, 0
      %v666 = vsel %vm602, 1, 0
      %v667 = vsel %vm603, 1, 0
      %v668 = vsel %vm604, 1, 0
      %v669 = vsel %vm605, 1, 0
      %v670 = vsel %vm606, 1, 0
      %v671 = vsel %vm607, 1, 0
      %v672 = vsel %vm608, 1, 0
      %v673 = vsel %vm609, 1, 0
      %v674 = vsel %vm610, 1, 0
      %v675 = vsel %vm611, 1, 0
      %v676 = vsel %vm612, 1, 0
      %v677 = vsel %vm613, 1, 0
      %v678 = vsel %vm614, 1, 0
      %v679 = vsel %vm615, 1, 0
      %v680 = vsel %vm616, 1, 0
      %v681 = vsel %vm617, 1, 0
      %v682 = vsel %vm618, 1, 0
      %v683 = vsel %vm619, 1, 0
      %v684 = vsel %vm620, 1, 0
      %v685 = vsel %vm621, 1, 0
      %v686 = vsel %vm622, 1, 0
      %v687 = vsel %vm623, 1, 0
      %v688 = vsel %vm624, 1, 0
      %v689 = vsel %vm625, 1, 0
      %v690 = vsel %vm626, 1, 0
      %v691 = vsel %vm627, 1, 0
      %v692 = vsel %vm628, 1, 0
      %v693 = vsel %vm629, 1, 0
      %v694 = vsel %vm630, 1, 0
      %v695 = vsel %vm631, 1, 0
      %v696 = vsel %vm632, 1, 0
      %v697 = vsel %vm633, 1, 0
      %v698 = vsel %vm634, 1, 0
      %v699 = vsel %vm635, 1, 0
      %v700 = vsel %vm636, 1, 0
      %v701 = vcvt.s32.f32 %v637
      %v702 = vcvt.s32.f32 %v638
      %v703 = vcvt.s32.f32 %v639
      %v704 = vcvt.s32.f32 %v640
      %v705 = vcvt.s32.f32 %v641
      %v706 = vcvt.s32.f32 %v642
      %v707 = vcvt.s32.f32 %v643
      %v708 = vcvt.s32.f32 %v644
      %v709 = vcvt.s32.f32 %v645
      %v710 = vcvt.s32.f32 %v646
      %v711 = vcvt.s32.f32 %v647
      %v712 = vcvt.s32.f32 %v648
      %v713 = vcvt.s32.f32 %v649
      %v714 = vcvt.s32.f32 %v650
      %v715 = vcvt.s32.f32 %v651
      %v716 = vcvt.s32.f32 %v652
      %v717 = vcvt.s32.f32 %v653
      %v718 = vcvt.s32.f32 %v654
      %v719 = vcvt.s32.f32 %v655
      %v720 = vcvt.s32.f32 %v656
      %v721 = vcvt.s32.f32 %v657
      %v722 = vcvt.s32.f32 %v658
      %v723 = vcvt.s32.f32 %v659
      %v724 = vcvt.s32.f32 %v660
      %v725 = vcvt.s32.f32 %v661
      %v726 = vcvt.s32.f32 %v662
      %v727 = vcvt.s32.f32 %v663
      %v728 = vcvt.s32.f32 %v664
      %v729 = vcvt.s32.f32 %v665
      %v730 = vcvt.s32.f32 %v666
      %v731 = vcvt.s32.f32 %v667
      %v732 = vcvt.s32.f32 %v668
      %v733 = vcvt.s32.f32 %v669
      %v734 = vcvt.s32.f32 %v670
      %v735 = vcvt.s32.f32 %v671
      %v736 = vcvt.s32.f32 %v672
      %v737 = vcvt.s32.f32 %v673
      %v738 = vcvt.s32.f32 %v674
      %v739 = vcvt.s32.f32 %v675
      %v740 = vcvt.s32.f32 %v676
      %v741 = vcvt.s32.f32 %v677
      %v742 = vcvt.s32.f32 %v678
      %v743 = vcvt.s32.f32 %v679
      %v744 = vcvt.s32.f32 %v680
      %v745 = vcvt.s32.f32 %v681
      %v746 = vcvt.s32.f32 %v682
      %v747 = vcvt.s32.f32 %v683
      %v748 = vcvt.s32.f32 %v684
      %v749 = vcvt.s32.f32 %v685
      %v750 = vcvt.s32.f32 %v686
      %v751 = vcvt.s32.f32 %v687
      %v752 = vcvt.s32.f32 %v688
      %v753 = vcvt.s32.f32 %v689
      %v754 = vcvt.s32.f32 %v690
      %v755 = vcvt.s32.f32 %v691
      %v756 = vcvt.s32.f32 %v692
      %v757 = vcvt.s32.f32 %v693
      %v758 = vcvt.s32.f32 %v694
      %v759 = vcvt.s32.f32 %v695
      %v760 = vcvt.s32.f32 %v696
      %v761 = vcvt.s32.f32 %v697
      %v762 = vcvt.s32.f32 %v698
      %v763 = vcvt.s32.f32 %v699
      %v764 = vcvt.s32.f32 %v700
      %765 = vset.pattern.permute.xlu0 1
      %766 = vperm.xlu0 %765, %v251
      %v767 = vpop.permute.xlu0 %766
      %768 = vset.pattern.permute.xlu0 1
      %769 = vperm.xlu0 %768, %v252
      %v770 = vpop.permute.xlu0 %769
      %771 = vset.pattern.permute.xlu0 1
      %772 = vperm.xlu0 %771, %v253
      %v773 = vpop.permute.xlu0 %772
      %774 = vset.pattern.permute.xlu0 1
      %775 = vperm.xlu0 %774, %v254
      %v776 = vpop.permute.xlu0 %775
      %777 = vset.pattern.permute.xlu0 1
      %778 = vperm.xlu0 %777, %v255
      %v779 = vpop.permute.xlu0 %778
      %780 = vset.pattern.permute.xlu0 1
      %781 = vperm.xlu0 %780, %v256
      %v782 = vpop.permute.xlu0 %781
      %783 = vset.pattern.permute.xlu0 1
      %784 = vperm.xlu0 %783, %v257
      %v785 = vpop.permute.xlu0 %784
      %786 = vset.pattern.permute.xlu0 1
      %787 = vperm.xlu0 %786, %v258
      %v788 = vpop.permute.xlu0 %787
      %789 = vset.pattern.permute.xlu0 1
      %790 = vperm.xlu0 %789, %v259
      %v791 = vpop.permute.xlu0 %790
      %792 = vset.pattern.permute.xlu0 1
      %793 = vperm.xlu0 %792, %v260
      %v794 = vpop.permute.xlu0 %793
      %795 = vset.pattern.permute.xlu0 1
      %796 = vperm.xlu0 %795, %v261
      %v797 = vpop.permute.xlu0 %796
      %798 = vset.pattern.permute.xlu0 1
      %799 = vperm.xlu0 %798, %v262
      %v800 = vpop.permute.xlu0 %799
      %801 = vset.pattern.permute.xlu0 1
      %802 = vperm.xlu0 %801, %v263
      %v803 = vpop.permute.xlu0 %802
      %804 = vset.pattern.permute.xlu0 1
      %805 = vperm.xlu0 %804, %v264
      %v806 = vpop.permute.xlu0 %805
      %807 = vset.pattern.permute.xlu0 1
      %808 = vperm.xlu0 %807, %v265
      %v809 = vpop.permute.xlu0 %808
      %810 = vset.pattern.permute.xlu0 1
      %811 = vperm.xlu0 %810, %v266
      %v812 = vpop.permute.xlu0 %811
      %813 = vset.pattern.permute.xlu0 1
      %814 = vperm.xlu0 %813, %v267
      %v815 = vpop.permute.xlu0 %814
      %816 = vset.pattern.permute.xlu0 1
      %817 = vperm.xlu0 %816, %v268
      %v818 = vpop.permute.xlu0 %817
      %819 = vset.pattern.permute.xlu0 1
      %820 = vperm.xlu0 %819, %v269
      %v821 = vpop.permute.xlu0 %820
      %822 = vset.pattern.permute.xlu0 1
      %823 = vperm.xlu0 %822, %v270
      %v824 = vpop.permute.xlu0 %823
      %825 = vset.pattern.permute.xlu0 1
      %826 = vperm.xlu0 %825, %v271
      %v827 = vpop.permute.xlu0 %826
      %828 = vset.pattern.permute.xlu0 1
      %829 = vperm.xlu0 %828, %v272
      %v830 = vpop.permute.xlu0 %829
      %831 = vset.pattern.permute.xlu0 1
      %832 = vperm.xlu0 %831, %v273
      %v833 = vpop.permute.xlu0 %832
      %834 = vset.pattern.permute.xlu0 1
      %835 = vperm.xlu0 %834, %v274
      %v836 = vpop.permute.xlu0 %835
      %837 = vset.pattern.permute.xlu0 1
      %838 = vperm.xlu0 %837, %v275
      %v839 = vpop.permute.xlu0 %838
      %840 = vset.pattern.permute.xlu0 1
      %841 = vperm.xlu0 %840, %v276
      %v842 = vpop.permute.xlu0 %841
      %843 = vset.pattern.permute.xlu0 1
      %844 = vperm.xlu0 %843, %v277
      %v845 = vpop.permute.xlu0 %844
      %846 = vset.pattern.permute.xlu0 1
      %847 = vperm.xlu0 %846, %v278
      %v848 = vpop.permute.xlu0 %847
      %849 = vset.pattern.permute.xlu0 1
      %850 = vperm.xlu0 %849, %v279
      %v851 = vpop.permute.xlu0 %850
      %852 = vset.pattern.permute.xlu0 1
      %853 = vperm.xlu0 %852, %v280
      %v854 = vpop.permute.xlu0 %853
      %855 = vset.pattern.permute.xlu0 1
      %856 = vperm.xlu0 %855, %v281
      %v857 = vpop.permute.xlu0 %856
      %858 = vset.pattern.permute.xlu0 1
      %859 = vperm.xlu0 %858, %v282
      %v860 = vpop.permute.xlu0 %859
      %861 = vset.pattern.permute.xlu0 1
      %862 = vperm.xlu0 %861, %v283
      %v863 = vpop.permute.xlu0 %862
      %864 = vset.pattern.permute.xlu0 1
      %865 = vperm.xlu0 %864, %v284
      %v866 = vpop.permute.xlu0 %865
      %867 = vset.pattern.permute.xlu0 1
      %868 = vperm.xlu0 %867, %v285
      %v869 = vpop.permute.xlu0 %868
      %870 = vset.pattern.permute.xlu0 1
      %871 = vperm.xlu0 %870, %v286
      %v872 = vpop.permute.xlu0 %871
      %873 = vset.pattern.permute.xlu0 1
      %874 = vperm.xlu0 %873, %v287
      %v875 = vpop.permute.xlu0 %874
      %876 = vset.pattern.permute.xlu0 1
      %877 = vperm.xlu0 %876, %v288
      %v878 = vpop.permute.xlu0 %877
      %879 = vset.pattern.permute.xlu0 1
      %880 = vperm.xlu0 %879, %v289
      %v881 = vpop.permute.xlu0 %880
      %882 = vset.pattern.permute.xlu0 1
      %883 = vperm.xlu0 %882, %v290
      %v884 = vpop.permute.xlu0 %883
      %885 = vset.pattern.permute.xlu0 1
      %886 = vperm.xlu0 %885, %v291
      %v887 = vpop.permute.xlu0 %886
      %888 = vset.pattern.permute.xlu0 1
      %889 = vperm.xlu0 %888, %v292
      %v890 = vpop.permute.xlu0 %889
      %891 = vset.pattern.permute.xlu0 1
      %892 = vperm.xlu0 %891, %v293
      %v893 = vpop.permute.xlu0 %892
      %894 = vset.pattern.permute.xlu0 1
      %895 = vperm.xlu0 %894, %v294
      %v896 = vpop.permute.xlu0 %895
      %897 = vset.pattern.permute.xlu0 1
      %898 = vperm.xlu0 %897, %v295
      %v899 = vpop.permute.xlu0 %898
      %900 = vset.pattern.permute.xlu0 1
      %901 = vperm.xlu0 %900, %v296
      %v902 = vpop.permute.xlu0 %901
      %903 = vset.pattern.permute.xlu0 1
      %904 = vperm.xlu0 %903, %v297
      %v905 = vpop.permute.xlu0 %904
      %906 = vset.pattern.permute.xlu0 1
      %907 = vperm.xlu0 %906, %v298
      %v908 = vpop.permute.xlu0 %907
      %909 = vset.pattern.permute.xlu0 1
      %910 = vperm.xlu0 %909, %v299
      %v911 = vpop.permute.xlu0 %910
      %912 = vset.pattern.permute.xlu0 1
      %913 = vperm.xlu0 %912, %v300
      %v914 = vpop.permute.xlu0 %913
      %915 = vset.pattern.permute.xlu0 1
      %916 = vperm.xlu0 %915, %v301
      %v917 = vpop.permute.xlu0 %916
      %918 = vset.pattern.permute.xlu0 1
      %919 = vperm.xlu0 %918, %v302
      %v920 = vpop.permute.xlu0 %919
      %921 = vset.pattern.permute.xlu0 1
      %922 = vperm.xlu0 %921, %v303
      %v923 = vpop.permute.xlu0 %922
      %924 = vset.pattern.permute.xlu0 1
      %925 = vperm.xlu0 %924, %v304
      %v926 = vpop.permute.xlu0 %925
      %927 = vset.pattern.permute.xlu0 1
      %928 = vperm.xlu0 %927, %v305
      %v929 = vpop.permute.xlu0 %928
      %930 = vset.pattern.permute.xlu0 1
      %931 = vperm.xlu0 %930, %v306
      %v932 = vpop.permute.xlu0 %931
      %933 = vset.pattern.permute.xlu0 1
      %934 = vperm.xlu0 %933, %v307
      %v935 = vpop.permute.xlu0 %934
      %936 = vset.pattern.permute.xlu0 1
      %937 = vperm.xlu0 %936, %v308
      %v938 = vpop.permute.xlu0 %937
      %939 = vset.pattern.permute.xlu0 1
      %940 = vperm.xlu0 %939, %v309
      %v941 = vpop.permute.xlu0 %940
      %942 = vset.pattern.permute.xlu0 1
      %943 = vperm.xlu0 %942, %v310
      %v944 = vpop.permute.xlu0 %943
      %945 = vset.pattern.permute.xlu0 1
      %946 = vperm.xlu0 %945, %v311
      %v947 = vpop.permute.xlu0 %946
      %948 = vset.pattern.permute.xlu0 1
      %949 = vperm.xlu0 %948, %v312
      %v950 = vpop.permute.xlu0 %949
      %951 = vset.pattern.permute.xlu0 1
      %952 = vperm.xlu0 %951, %v313
      %v953 = vpop.permute.xlu0 %952
      %954 = vset.pattern.permute.xlu0 1
      %955 = vperm.xlu0 %954, %v314
      %v956 = vpop.permute.xlu0 %955
      %vm957 = vcmp.eq.s32.totalorder %v767, %v380
      %vm958 = vcmp.eq.s32.totalorder %v770, %v380
      %vm959 = vcmp.eq.s32.totalorder %v773, %v380
      %vm960 = vcmp.eq.s32.totalorder %v776, %v380
      %vm961 = vcmp.eq.s32.totalorder %v779, %v380
      %vm962 = vcmp.eq.s32.totalorder %v782, %v380
      %vm963 = vcmp.eq.s32.totalorder %v785, %v380
      %vm964 = vcmp.eq.s32.totalorder %v788, %v380
      %vm965 = vcmp.eq.s32.totalorder %v791, %v380
      %vm966 = vcmp.eq.s32.totalorder %v794, %v380
      %vm967 = vcmp.eq.s32.totalorder %v797, %v380
      %vm968 = vcmp.eq.s32.totalorder %v800, %v380
      %vm969 = vcmp.eq.s32.totalorder %v803, %v380
      %vm970 = vcmp.eq.s32.totalorder %v806, %v380
      %vm971 = vcmp.eq.s32.totalorder %v809, %v380
      %vm972 = vcmp.eq.s32.totalorder %v812, %v380
      %vm973 = vcmp.eq.s32.totalorder %v815, %v380
      %vm974 = vcmp.eq.s32.totalorder %v818, %v380
      %vm975 = vcmp.eq.s32.totalorder %v821, %v380
      %vm976 = vcmp.eq.s32.totalorder %v824, %v380
      %vm977 = vcmp.eq.s32.totalorder %v827, %v380
      %vm978 = vcmp.eq.s32.totalorder %v830, %v380
      %vm979 = vcmp.eq.s32.totalorder %v833, %v380
      %vm980 = vcmp.eq.s32.totalorder %v836, %v380
      %vm981 = vcmp.eq.s32.totalorder %v839, %v380
      %vm982 = vcmp.eq.s32.totalorder %v842, %v380
      %vm983 = vcmp.eq.s32.totalorder %v845, %v380
      %vm984 = vcmp.eq.s32.totalorder %v848, %v380
      %vm985 = vcmp.eq.s32.totalorder %v851, %v380
      %vm986 = vcmp.eq.s32.totalorder %v854, %v380
      %vm987 = vcmp.eq.s32.totalorder %v857, %v380
      %vm988 = vcmp.eq.s32.totalorder %v860, %v380
      %vm989 = vcmp.eq.s32.totalorder %v863, %v380
      %vm990 = vcmp.eq.s32.totalorder %v866, %v380
      %vm991 = vcmp.eq.s32.totalorder %v869, %v380
      %vm992 = vcmp.eq.s32.totalorder %v872, %v380
      %vm993 = vcmp.eq.s32.totalorder %v875, %v380
      %vm994 = vcmp.eq.s32.totalorder %v878, %v380
      %vm995 = vcmp.eq.s32.totalorder %v881, %v380
      %vm996 = vcmp.eq.s32.totalorder %v884, %v380
      %vm997 = vcmp.eq.s32.totalorder %v887, %v380
      %vm998 = vcmp.eq.s32.totalorder %v890, %v380
      %vm999 = vcmp.eq.s32.totalorder %v893, %v380
      %vm1000 = vcmp.eq.s32.totalorder %v896, %v380
      %vm1001 = vcmp.eq.s32.totalorder %v899, %v380
      %vm1002 = vcmp.eq.s32.totalorder %v902, %v380
      %vm1003 = vcmp.eq.s32.totalorder %v905, %v380
      %vm1004 = vcmp.eq.s32.totalorder %v908, %v380
      %vm1005 = vcmp.eq.s32.totalorder %v911, %v380
      %vm1006 = vcmp.eq.s32.totalorder %v914, %v380
      %vm1007 = vcmp.eq.s32.totalorder %v917, %v380
      %vm1008 = vcmp.eq.s32.totalorder %v920, %v380
      %vm1009 = vcmp.eq.s32.totalorder %v923, %v380
      %vm1010 = vcmp.eq.s32.totalorder %v926, %v380
      %vm1011 = vcmp.eq.s32.totalorder %v929, %v380
      %vm1012 = vcmp.eq.s32.totalorder %v932, %v380
      %vm1013 = vcmp.eq.s32.totalorder %v935, %v380
      %vm1014 = vcmp.eq.s32.totalorder %v938, %v380
      %vm1015 = vcmp.eq.s32.totalorder %v941, %v380
      %vm1016 = vcmp.eq.s32.totalorder %v944, %v380
      %vm1017 = vcmp.eq.s32.totalorder %v947, %v380
      %vm1018 = vcmp.eq.s32.totalorder %v950, %v380
      %vm1019 = vcmp.eq.s32.totalorder %v953, %v380
      %vm1020 = vcmp.eq.s32.totalorder %v956, %v380
      %v1021 = vsel %vm957, 1, 0
      %v1022 = vsel %vm958, 1, 0
      %v1023 = vsel %vm959, 1, 0
      %v1024 = vsel %vm960, 1, 0
      %v1025 = vsel %vm961, 1, 0
      %v1026 = vsel %vm962, 1, 0
      %v1027 = vsel %vm963, 1, 0
      %v1028 = vsel %vm964, 1, 0
      %v1029 = vsel %vm965, 1, 0
      %v1030 = vsel %vm966, 1, 0
      %v1031 = vsel %vm967, 1, 0
      %v1032 = vsel %vm968, 1, 0
      %v1033 = vsel %vm969, 1, 0
      %v1034 = vsel %vm970, 1, 0
      %v1035 = vsel %vm971, 1, 0
      %v1036 = vsel %vm972, 1, 0
      %v1037 = vsel %vm973, 1, 0
      %v1038 = vsel %vm974, 1, 0
      %v1039 = vsel %vm975, 1, 0
      %v1040 = vsel %vm976, 1, 0
      %v1041 = vsel %vm977, 1, 0
      %v1042 = vsel %vm978, 1, 0
      %v1043 = vsel %vm979, 1, 0
      %v1044 = vsel %vm980, 1, 0
      %v1045 = vsel %vm981, 1, 0
      %v1046 = vsel %vm982, 1, 0
      %v1047 = vsel %vm983, 1, 0
      %v1048 = vsel %vm984, 1, 0
      %v1049 = vsel %vm985, 1, 0
      %v1050 = vsel %vm986, 1, 0
      %v1051 = vsel %vm987, 1, 0
      %v1052 = vsel %vm988, 1, 0
      %v1053 = vsel %vm989, 1, 0
      %v1054 = vsel %vm990, 1, 0
      %v1055 = vsel %vm991, 1, 0
      %v1056 = vsel %vm992, 1, 0
      %v1057 = vsel %vm993, 1, 0
      %v1058 = vsel %vm994, 1, 0
      %v1059 = vsel %vm995, 1, 0
      %v1060 = vsel %vm996, 1, 0
      %v1061 = vsel %vm997, 1, 0
      %v1062 = vsel %vm998, 1, 0
      %v1063 = vsel %vm999, 1, 0
      %v1064 = vsel %vm1000, 1, 0
      %v1065 = vsel %vm1001, 1, 0
      %v1066 = vsel %vm1002, 1, 0
      %v1067 = vsel %vm1003, 1, 0
      %v1068 = vsel %vm1004, 1, 0
      %v1069 = vsel %vm1005, 1, 0
      %v1070 = vsel %vm1006, 1, 0
      %v1071 = vsel %vm1007, 1, 0
      %v1072 = vsel %vm1008, 1, 0
      %v1073 = vsel %vm1009, 1, 0
      %v1074 = vsel %vm1010, 1, 0
      %v1075 = vsel %vm1011, 1, 0
      %v1076 = vsel %vm1012, 1, 0
      %v1077 = vsel %vm1013, 1, 0
      %v1078 = vsel %vm1014, 1, 0
      %v1079 = vsel %vm1015, 1, 0
      %v1080 = vsel %vm1016, 1, 0
      %v1081 = vsel %vm1017, 1, 0
      %v1082 = vsel %vm1018, 1, 0
      %v1083 = vsel %vm1019, 1, 0
      %v1084 = vsel %vm1020, 1, 0
      %v1085 = vcvt.s32.f32 %v1021
      %v1086 = vcvt.s32.f32 %v1022
      %v1087 = vcvt.s32.f32 %v1023
      %v1088 = vcvt.s32.f32 %v1024
      %v1089 = vcvt.s32.f32 %v1025
      %v1090 = vcvt.s32.f32 %v1026
      %v1091 = vcvt.s32.f32 %v1027
      %v1092 = vcvt.s32.f32 %v1028
      %v1093 = vcvt.s32.f32 %v1029
      %v1094 = vcvt.s32.f32 %v1030
      %v1095 = vcvt.s32.f32 %v1031
      %v1096 = vcvt.s32.f32 %v1032
      %v1097 = vcvt.s32.f32 %v1033
      %v1098 = vcvt.s32.f32 %v1034
      %v1099 = vcvt.s32.f32 %v1035
      %v1100 = vcvt.s32.f32 %v1036
      %v1101 = vcvt.s32.f32 %v1037
      %v1102 = vcvt.s32.f32 %v1038
      %v1103 = vcvt.s32.f32 %v1039
      %v1104 = vcvt.s32.f32 %v1040
      %v1105 = vcvt.s32.f32 %v1041
      %v1106 = vcvt.s32.f32 %v1042
      %v1107 = vcvt.s32.f32 %v1043
      %v1108 = vcvt.s32.f32 %v1044
      %v1109 = vcvt.s32.f32 %v1045
      %v1110 = vcvt.s32.f32 %v1046
      %v1111 = vcvt.s32.f32 %v1047
      %v1112 = vcvt.s32.f32 %v1048
      %v1113 = vcvt.s32.f32 %v1049
      %v1114 = vcvt.s32.f32 %v1050
      %v1115 = vcvt.s32.f32 %v1051
      %v1116 = vcvt.s32.f32 %v1052
      %v1117 = vcvt.s32.f32 %v1053
      %v1118 = vcvt.s32.f32 %v1054
      %v1119 = vcvt.s32.f32 %v1055
      %v1120 = vcvt.s32.f32 %v1056
      %v1121 = vcvt.s32.f32 %v1057
      %v1122 = vcvt.s32.f32 %v1058
      %v1123 = vcvt.s32.f32 %v1059
      %v1124 = vcvt.s32.f32 %v1060
      %v1125 = vcvt.s32.f32 %v1061
      %v1126 = vcvt.s32.f32 %v1062
      %v1127 = vcvt.s32.f32 %v1063
      %v1128 = vcvt.s32.f32 %v1064
      %v1129 = vcvt.s32.f32 %v1065
      %v1130 = vcvt.s32.f32 %v1066
      %v1131 = vcvt.s32.f32 %v1067
      %v1132 = vcvt.s32.f32 %v1068
      %v1133 = vcvt.s32.f32 %v1069
      %v1134 = vcvt.s32.f32 %v1070
      %v1135 = vcvt.s32.f32 %v1071
      %v1136 = vcvt.s32.f32 %v1072
      %v1137 = vcvt.s32.f32 %v1073
      %v1138 = vcvt.s32.f32 %v1074
      %v1139 = vcvt.s32.f32 %v1075
      %v1140 = vcvt.s32.f32 %v1076
      %v1141 = vcvt.s32.f32 %v1077
      %v1142 = vcvt.s32.f32 %v1078
      %v1143 = vcvt.s32.f32 %v1079
      %v1144 = vcvt.s32.f32 %v1080
      %v1145 = vcvt.s32.f32 %v1081
      %v1146 = vcvt.s32.f32 %v1082
      %v1147 = vcvt.s32.f32 %v1083
      %v1148 = vcvt.s32.f32 %v1084
      %v1149 = vadd.f32 %v701, %v1085
      %v1150 = vadd.f32 %v702, %v1086
      %v1151 = vadd.f32 %v703, %v1087
      %v1152 = vadd.f32 %v704, %v1088
      %v1153 = vadd.f32 %v705, %v1089
      %v1154 = vadd.f32 %v706, %v1090
      %v1155 = vadd.f32 %v707, %v1091
      %v1156 = vadd.f32 %v708, %v1092
      %v1157 = vadd.f32 %v709, %v1093
      %v1158 = vadd.f32 %v710, %v1094
      %v1159 = vadd.f32 %v711, %v1095
      %v1160 = vadd.f32 %v712, %v1096
      %v1161 = vadd.f32 %v713, %v1097
      %v1162 = vadd.f32 %v714, %v1098
      %v1163 = vadd.f32 %v715, %v1099
      %v1164 = vadd.f32 %v716, %v1100
      %v1165 = vadd.f32 %v717, %v1101
      %v1166 = vadd.f32 %v718, %v1102
      %v1167 = vadd.f32 %v719, %v1103
      %v1168 = vadd.f32 %v720, %v1104
      %v1169 = vadd.f32 %v721, %v1105
      %v1170 = vadd.f32 %v722, %v1106
      %v1171 = vadd.f32 %v723, %v1107
      %v1172 = vadd.f32 %v724, %v1108
      %v1173 = vadd.f32 %v725, %v1109
      %v1174 = vadd.f32 %v726, %v1110
      %v1175 = vadd.f32 %v727, %v1111
      %v1176 = vadd.f32 %v728, %v1112
      %v1177 = vadd.f32 %v729, %v1113
      %v1178 = vadd.f32 %v730, %v1114
      %v1179 = vadd.f32 %v731, %v1115
      %v1180 = vadd.f32 %v732, %v1116
      %v1181 = vadd.f32 %v733, %v1117
      %v1182 = vadd.f32 %v734, %v1118
      %v1183 = vadd.f32 %v735, %v1119
      %v1184 = vadd.f32 %v736, %v1120
      %v1185 = vadd.f32 %v737, %v1121
      %v1186 = vadd.f32 %v738, %v1122
      %v1187 = vadd.f32 %v739, %v1123
      %v1188 = vadd.f32 %v740, %v1124
      %v1189 = vadd.f32 %v741, %v1125
      %v1190 = vadd.f32 %v742, %v1126
      %v1191 = vadd.f32 %v743, %v1127
      %v1192 = vadd.f32 %v744, %v1128
      %v1193 = vadd.f32 %v745, %v1129
      %v1194 = vadd.f32 %v746, %v1130
      %v1195 = vadd.f32 %v747, %v1131
      %v1196 = vadd.f32 %v748, %v1132
      %v1197 = vadd.f32 %v749, %v1133
      %v1198 = vadd.f32 %v750, %v1134
      %v1199 = vadd.f32 %v751, %v1135
      %v1200 = vadd.f32 %v752, %v1136
      %v1201 = vadd.f32 %v753, %v1137
      %v1202 = vadd.f32 %v754, %v1138
      %v1203 = vadd.f32 %v755, %v1139
      %v1204 = vadd.f32 %v756, %v1140
      %v1205 = vadd.f32 %v757, %v1141
      %v1206 = vadd.f32 %v758, %v1142
      %v1207 = vadd.f32 %v759, %v1143
      %v1208 = vadd.f32 %v760, %v1144
      %v1209 = vadd.f32 %v761, %v1145
      %v1210 = vadd.f32 %v762, %v1146
      %v1211 = vadd.f32 %v763, %v1147
      %v1212 = vadd.f32 %v764, %v1148
      %1213 = vset.pattern.permute.xlu0 2
      %1214 = vperm.xlu0 %1213, %v251
      %v1215 = vpop.permute.xlu0 %1214
      %1216 = vset.pattern.permute.xlu0 2
      %1217 = vperm.xlu0 %1216, %v252
      %v1218 = vpop.permute.xlu0 %1217
      %1219 = vset.pattern.permute.xlu0 2
      %1220 = vperm.xlu0 %1219, %v253
      %v1221 = vpop.permute.xlu0 %1220
      %1222 = vset.pattern.permute.xlu0 2
      %1223 = vperm.xlu0 %1222, %v254
      %v1224 = vpop.permute.xlu0 %1223
      %1225 = vset.pattern.permute.xlu0 2
      %1226 = vperm.xlu0 %1225, %v255
      %v1227 = vpop.permute.xlu0 %1226
      %1228 = vset.pattern.permute.xlu0 2
      %1229 = vperm.xlu0 %1228, %v256
      %v1230 = vpop.permute.xlu0 %1229
      %1231 = vset.pattern.permute.xlu0 2
      %1232 = vperm.xlu0 %1231, %v257
      %v1233 = vpop.permute.xlu0 %1232
      %1234 = vset.pattern.permute.xlu0 2
      %1235 = vperm.xlu0 %1234, %v258
      %v1236 = vpop.permute.xlu0 %1235
      %1237 = vset.pattern.permute.xlu0 2
      %1238 = vperm.xlu0 %1237, %v259
      %v1239 = vpop.permute.xlu0 %1238
      %1240 = vset.pattern.permute.xlu0 2
      %1241 = vperm.xlu0 %1240, %v260
      %v1242 = vpop.permute.xlu0 %1241
      %1243 = vset.pattern.permute.xlu0 2
      %1244 = vperm.xlu0 %1243, %v261
      %v1245 = vpop.permute.xlu0 %1244
      %1246 = vset.pattern.permute.xlu0 2
      %1247 = vperm.xlu0 %1246, %v262
      %v1248 = vpop.permute.xlu0 %1247
      %1249 = vset.pattern.permute.xlu0 2
      %1250 = vperm.xlu0 %1249, %v263
      %v1251 = vpop.permute.xlu0 %1250
      %1252 = vset.pattern.permute.xlu0 2
      %1253 = vperm.xlu0 %1252, %v264
      %v1254 = vpop.permute.xlu0 %1253
      %1255 = vset.pattern.permute.xlu0 2
      %1256 = vperm.xlu0 %1255, %v265
      %v1257 = vpop.permute.xlu0 %1256
      %1258 = vset.pattern.permute.xlu0 2
      %1259 = vperm.xlu0 %1258, %v266
      %v1260 = vpop.permute.xlu0 %1259
      %1261 = vset.pattern.permute.xlu0 2
      %1262 = vperm.xlu0 %1261, %v267
      %v1263 = vpop.permute.xlu0 %1262
      %1264 = vset.pattern.permute.xlu0 2
      %1265 = vperm.xlu0 %1264, %v268
      %v1266 = vpop.permute.xlu0 %1265
      %1267 = vset.pattern.permute.xlu0 2
      %1268 = vperm.xlu0 %1267, %v269
      %v1269 = vpop.permute.xlu0 %1268
      %1270 = vset.pattern.permute.xlu0 2
      %1271 = vperm.xlu0 %1270, %v270
      %v1272 = vpop.permute.xlu0 %1271
      %1273 = vset.pattern.permute.xlu0 2
      %1274 = vperm.xlu0 %1273, %v271
      %v1275 = vpop.permute.xlu0 %1274
      %1276 = vset.pattern.permute.xlu0 2
      %1277 = vperm.xlu0 %1276, %v272
      %v1278 = vpop.permute.xlu0 %1277
      %1279 = vset.pattern.permute.xlu0 2
      %1280 = vperm.xlu0 %1279, %v273
      %v1281 = vpop.permute.xlu0 %1280
      %1282 = vset.pattern.permute.xlu0 2
      %1283 = vperm.xlu0 %1282, %v274
      %v1284 = vpop.permute.xlu0 %1283
      %1285 = vset.pattern.permute.xlu0 2
      %1286 = vperm.xlu0 %1285, %v275
      %v1287 = vpop.permute.xlu0 %1286
      %1288 = vset.pattern.permute.xlu0 2
      %1289 = vperm.xlu0 %1288, %v276
      %v1290 = vpop.permute.xlu0 %1289
      %1291 = vset.pattern.permute.xlu0 2
      %1292 = vperm.xlu0 %1291, %v277
      %v1293 = vpop.permute.xlu0 %1292
      %1294 = vset.pattern.permute.xlu0 2
      %1295 = vperm.xlu0 %1294, %v278
      %v1296 = vpop.permute.xlu0 %1295
      %1297 = vset.pattern.permute.xlu0 2
      %1298 = vperm.xlu0 %1297, %v279
      %v1299 = vpop.permute.xlu0 %1298
      %1300 = vset.pattern.permute.xlu0 2
      %1301 = vperm.xlu0 %1300, %v280
      %v1302 = vpop.permute.xlu0 %1301
      %1303 = vset.pattern.permute.xlu0 2
      %1304 = vperm.xlu0 %1303, %v281
      %v1305 = vpop.permute.xlu0 %1304
      %1306 = vset.pattern.permute.xlu0 2
      %1307 = vperm.xlu0 %1306, %v282
      %v1308 = vpop.permute.xlu0 %1307
      %1309 = vset.pattern.permute.xlu0 2
      %1310 = vperm.xlu0 %1309, %v283
      %v1311 = vpop.permute.xlu0 %1310
      %1312 = vset.pattern.permute.xlu0 2
      %1313 = vperm.xlu0 %1312, %v284
      %v1314 = vpop.permute.xlu0 %1313
      %1315 = vset.pattern.permute.xlu0 2
      %1316 = vperm.xlu0 %1315, %v285
      %v1317 = vpop.permute.xlu0 %1316
      %1318 = vset.pattern.permute.xlu0 2
      %1319 = vperm.xlu0 %1318, %v286
      %v1320 = vpop.permute.xlu0 %1319
      %1321 = vset.pattern.permute.xlu0 2
      %1322 = vperm.xlu0 %1321, %v287
      %v1323 = vpop.permute.xlu0 %1322
      %1324 = vset.pattern.permute.xlu0 2
      %1325 = vperm.xlu0 %1324, %v288
      %v1326 = vpop.permute.xlu0 %1325
      %1327 = vset.pattern.permute.xlu0 2
      %1328 = vperm.xlu0 %1327, %v289
      %v1329 = vpop.permute.xlu0 %1328
      %1330 = vset.pattern.permute.xlu0 2
      %1331 = vperm.xlu0 %1330, %v290
      %v1332 = vpop.permute.xlu0 %1331
      %1333 = vset.pattern.permute.xlu0 2
      %1334 = vperm.xlu0 %1333, %v291
      %v1335 = vpop.permute.xlu0 %1334
      %1336 = vset.pattern.permute.xlu0 2
      %1337 = vperm.xlu0 %1336, %v292
      %v1338 = vpop.permute.xlu0 %1337
      %1339 = vset.pattern.permute.xlu0 2
      %1340 = vperm.xlu0 %1339, %v293
      %v1341 = vpop.permute.xlu0 %1340
      %1342 = vset.pattern.permute.xlu0 2
      %1343 = vperm.xlu0 %1342, %v294
      %v1344 = vpop.permute.xlu0 %1343
      %1345 = vset.pattern.permute.xlu0 2
      %1346 = vperm.xlu0 %1345, %v295
      %v1347 = vpop.permute.xlu0 %1346
      %1348 = vset.pattern.permute.xlu0 2
      %1349 = vperm.xlu0 %1348, %v296
      %v1350 = vpop.permute.xlu0 %1349
      %1351 = vset.pattern.permute.xlu0 2
      %1352 = vperm.xlu0 %1351, %v297
      %v1353 = vpop.permute.xlu0 %1352
      %1354 = vset.pattern.permute.xlu0 2
      %1355 = vperm.xlu0 %1354, %v298
      %v1356 = vpop.permute.xlu0 %1355
      %1357 = vset.pattern.permute.xlu0 2
      %1358 = vperm.xlu0 %1357, %v299
      %v1359 = vpop.permute.xlu0 %1358
      %1360 = vset.pattern.permute.xlu0 2
      %1361 = vperm.xlu0 %1360, %v300
      %v1362 = vpop.permute.xlu0 %1361
      %1363 = vset.pattern.permute.xlu0 2
      %1364 = vperm.xlu0 %1363, %v301
      %v1365 = vpop.permute.xlu0 %1364
      %1366 = vset.pattern.permute.xlu0 2
      %1367 = vperm.xlu0 %1366, %v302
      %v1368 = vpop.permute.xlu0 %1367
      %1369 = vset.pattern.permute.xlu0 2
      %1370 = vperm.xlu0 %1369, %v303
      %v1371 = vpop.permute.xlu0 %1370
      %1372 = vset.pattern.permute.xlu0 2
      %1373 = vperm.xlu0 %1372, %v304
      %v1374 = vpop.permute.xlu0 %1373
      %1375 = vset.pattern.permute.xlu0 2
      %1376 = vperm.xlu0 %1375, %v305
      %v1377 = vpop.permute.xlu0 %1376
      %1378 = vset.pattern.permute.xlu0 2
      %1379 = vperm.xlu0 %1378, %v306
      %v1380 = vpop.permute.xlu0 %1379
      %1381 = vset.pattern.permute.xlu0 2
      %1382 = vperm.xlu0 %1381, %v307
      %v1383 = vpop.permute.xlu0 %1382
      %1384 = vset.pattern.permute.xlu0 2
      %1385 = vperm.xlu0 %1384, %v308
      %v1386 = vpop.permute.xlu0 %1385
      %1387 = vset.pattern.permute.xlu0 2
      %1388 = vperm.xlu0 %1387, %v309
      %v1389 = vpop.permute.xlu0 %1388
      %1390 = vset.pattern.permute.xlu0 2
      %1391 = vperm.xlu0 %1390, %v310
      %v1392 = vpop.permute.xlu0 %1391
      %1393 = vset.pattern.permute.xlu0 2
      %1394 = vperm.xlu0 %1393, %v311
      %v1395 = vpop.permute.xlu0 %1394
      %1396 = vset.pattern.permute.xlu0 2
      %1397 = vperm.xlu0 %1396, %v312
      %v1398 = vpop.permute.xlu0 %1397
      %1399 = vset.pattern.permute.xlu0 2
      %1400 = vperm.xlu0 %1399, %v313
      %v1401 = vpop.permute.xlu0 %1400
      %1402 = vset.pattern.permute.xlu0 2
      %1403 = vperm.xlu0 %1402, %v314
      %v1404 = vpop.permute.xlu0 %1403
      %vm1405 = vcmp.eq.s32.totalorder %v1215, %v380
      %vm1406 = vcmp.eq.s32.totalorder %v1218, %v380
      %vm1407 = vcmp.eq.s32.totalorder %v1221, %v380
      %vm1408 = vcmp.eq.s32.totalorder %v1224, %v380
      %vm1409 = vcmp.eq.s32.totalorder %v1227, %v380
      %vm1410 = vcmp.eq.s32.totalorder %v1230, %v380
      %vm1411 = vcmp.eq.s32.totalorder %v1233, %v380
      %vm1412 = vcmp.eq.s32.totalorder %v1236, %v380
      %vm1413 = vcmp.eq.s32.totalorder %v1239, %v380
      %vm1414 = vcmp.eq.s32.totalorder %v1242, %v380
      %vm1415 = vcmp.eq.s32.totalorder %v1245, %v380
      %vm1416 = vcmp.eq.s32.totalorder %v1248, %v380
      %vm1417 = vcmp.eq.s32.totalorder %v1251, %v380
      %vm1418 = vcmp.eq.s32.totalorder %v1254, %v380
      %vm1419 = vcmp.eq.s32.totalorder %v1257, %v380
      %vm1420 = vcmp.eq.s32.totalorder %v1260, %v380
      %vm1421 = vcmp.eq.s32.totalorder %v1263, %v380
      %vm1422 = vcmp.eq.s32.totalorder %v1266, %v380
      %vm1423 = vcmp.eq.s32.totalorder %v1269, %v380
      %vm1424 = vcmp.eq.s32.totalorder %v1272, %v380
      %vm1425 = vcmp.eq.s32.totalorder %v1275, %v380
      %vm1426 = vcmp.eq.s32.totalorder %v1278, %v380
      %vm1427 = vcmp.eq.s32.totalorder %v1281, %v380
      %vm1428 = vcmp.eq.s32.totalorder %v1284, %v380
      %vm1429 = vcmp.eq.s32.totalorder %v1287, %v380
      %vm1430 = vcmp.eq.s32.totalorder %v1290, %v380
      %vm1431 = vcmp.eq.s32.totalorder %v1293, %v380
      %vm1432 = vcmp.eq.s32.totalorder %v1296, %v380
      %vm1433 = vcmp.eq.s32.totalorder %v1299, %v380
      %vm1434 = vcmp.eq.s32.totalorder %v1302, %v380
      %vm1435 = vcmp.eq.s32.totalorder %v1305, %v380
      %vm1436 = vcmp.eq.s32.totalorder %v1308, %v380
      %vm1437 = vcmp.eq.s32.totalorder %v1311, %v380
      %vm1438 = vcmp.eq.s32.totalorder %v1314, %v380
      %vm1439 = vcmp.eq.s32.totalorder %v1317, %v380
      %vm1440 = vcmp.eq.s32.totalorder %v1320, %v380
      %vm1441 = vcmp.eq.s32.totalorder %v1323, %v380
      %vm1442 = vcmp.eq.s32.totalorder %v1326, %v380
      %vm1443 = vcmp.eq.s32.totalorder %v1329, %v380
      %vm1444 = vcmp.eq.s32.totalorder %v1332, %v380
      %vm1445 = vcmp.eq.s32.totalorder %v1335, %v380
      %vm1446 = vcmp.eq.s32.totalorder %v1338, %v380
      %vm1447 = vcmp.eq.s32.totalorder %v1341, %v380
      %vm1448 = vcmp.eq.s32.totalorder %v1344, %v380
      %vm1449 = vcmp.eq.s32.totalorder %v1347, %v380
      %vm1450 = vcmp.eq.s32.totalorder %v1350, %v380
      %vm1451 = vcmp.eq.s32.totalorder %v1353, %v380
      %vm1452 = vcmp.eq.s32.totalorder %v1356, %v380
      %vm1453 = vcmp.eq.s32.totalorder %v1359, %v380
      %vm1454 = vcmp.eq.s32.totalorder %v1362, %v380
      %vm1455 = vcmp.eq.s32.totalorder %v1365, %v380
      %vm1456 = vcmp.eq.s32.totalorder %v1368, %v380
      %vm1457 = vcmp.eq.s32.totalorder %v1371, %v380
      %vm1458 = vcmp.eq.s32.totalorder %v1374, %v380
      %vm1459 = vcmp.eq.s32.totalorder %v1377, %v380
      %vm1460 = vcmp.eq.s32.totalorder %v1380, %v380
      %vm1461 = vcmp.eq.s32.totalorder %v1383, %v380
      %vm1462 = vcmp.eq.s32.totalorder %v1386, %v380
      %vm1463 = vcmp.eq.s32.totalorder %v1389, %v380
      %vm1464 = vcmp.eq.s32.totalorder %v1392, %v380
      %vm1465 = vcmp.eq.s32.totalorder %v1395, %v380
      %vm1466 = vcmp.eq.s32.totalorder %v1398, %v380
      %vm1467 = vcmp.eq.s32.totalorder %v1401, %v380
      %vm1468 = vcmp.eq.s32.totalorder %v1404, %v380
      %v1469 = vsel %vm1405, 1, 0
      %v1470 = vsel %vm1406, 1, 0
      %v1471 = vsel %vm1407, 1, 0
      %v1472 = vsel %vm1408, 1, 0
      %v1473 = vsel %vm1409, 1, 0
      %v1474 = vsel %vm1410, 1, 0
      %v1475 = vsel %vm1411, 1, 0
      %v1476 = vsel %vm1412, 1, 0
      %v1477 = vsel %vm1413, 1, 0
      %v1478 = vsel %vm1414, 1, 0
      %v1479 = vsel %vm1415, 1, 0
      %v1480 = vsel %vm1416, 1, 0
      %v1481 = vsel %vm1417, 1, 0
      %v1482 = vsel %vm1418, 1, 0
      %v1483 = vsel %vm1419, 1, 0
      %v1484 = vsel %vm1420, 1, 0
      %v1485 = vsel %vm1421, 1, 0
      %v1486 = vsel %vm1422, 1, 0
      %v1487 = vsel %vm1423, 1, 0
      %v1488 = vsel %vm1424, 1, 0
      %v1489 = vsel %vm1425, 1, 0
      %v1490 = vsel %vm1426, 1, 0
      %v1491 = vsel %vm1427, 1, 0
      %v1492 = vsel %vm1428, 1, 0
      %v1493 = vsel %vm1429, 1, 0
      %v1494 = vsel %vm1430, 1, 0
      %v1495 = vsel %vm1431, 1, 0
      %v1496 = vsel %vm1432, 1, 0
      %v1497 = vsel %vm1433, 1, 0
      %v1498 = vsel %vm1434, 1, 0
      %v1499 = vsel %vm1435, 1, 0
      %v1500 = vsel %vm1436, 1, 0
      %v1501 = vsel %vm1437, 1, 0
      %v1502 = vsel %vm1438, 1, 0
      %v1503 = vsel %vm1439, 1, 0
      %v1504 = vsel %vm1440, 1, 0
      %v1505 = vsel %vm1441, 1, 0
      %v1506 = vsel %vm1442, 1, 0
      %v1507 = vsel %vm1443, 1, 0
      %v1508 = vsel %vm1444, 1, 0
      %v1509 = vsel %vm1445, 1, 0
      %v1510 = vsel %vm1446, 1, 0
      %v1511 = vsel %vm1447, 1, 0
      %v1512 = vsel %vm1448, 1, 0
      %v1513 = vsel %vm1449, 1, 0
      %v1514 = vsel %vm1450, 1, 0
      %v1515 = vsel %vm1451, 1, 0
      %v1516 = vsel %vm1452, 1, 0
      %v1517 = vsel %vm1453, 1, 0
      %v1518 = vsel %vm1454, 1, 0
      %v1519 = vsel %vm1455, 1, 0
      %v1520 = vsel %vm1456, 1, 0
      %v1521 = vsel %vm1457, 1, 0
      %v1522 = vsel %vm1458, 1, 0
      %v1523 = vsel %vm1459, 1, 0
      %v1524 = vsel %vm1460, 1, 0
      %v1525 = vsel %vm1461, 1, 0
      %v1526 = vsel %vm1462, 1, 0
      %v1527 = vsel %vm1463, 1, 0
      %v1528 = vsel %vm1464, 1, 0
      %v1529 = vsel %vm1465, 1, 0
      %v1530 = vsel %vm1466, 1, 0
      %v1531 = vsel %vm1467, 1, 0
      %v1532 = vsel %vm1468, 1, 0
      %v1533 = vcvt.s32.f32 %v1469
      %v1534 = vcvt.s32.f32 %v1470
      %v1535 = vcvt.s32.f32 %v1471
      %v1536 = vcvt.s32.f32 %v1472
      %v1537 = vcvt.s32.f32 %v1473
      %v1538 = vcvt.s32.f32 %v1474
      %v1539 = vcvt.s32.f32 %v1475
      %v1540 = vcvt.s32.f32 %v1476
      %v1541 = vcvt.s32.f32 %v1477
      %v1542 = vcvt.s32.f32 %v1478
      %v1543 = vcvt.s32.f32 %v1479
      %v1544 = vcvt.s32.f32 %v1480
      %v1545 = vcvt.s32.f32 %v1481
      %v1546 = vcvt.s32.f32 %v1482
      %v1547 = vcvt.s32.f32 %v1483
      %v1548 = vcvt.s32.f32 %v1484
      %v1549 = vcvt.s32.f32 %v1485
      %v1550 = vcvt.s32.f32 %v1486
      %v1551 = vcvt.s32.f32 %v1487
      %v1552 = vcvt.s32.f32 %v1488
      %v1553 = vcvt.s32.f32 %v1489
      %v1554 = vcvt.s32.f32 %v1490
      %v1555 = vcvt.s32.f32 %v1491
      %v1556 = vcvt.s32.f32 %v1492
      %v1557 = vcvt.s32.f32 %v1493
      %v1558 = vcvt.s32.f32 %v1494
      %v1559 = vcvt.s32.f32 %v1495
      %v1560 = vcvt.s32.f32 %v1496
      %v1561 = vcvt.s32.f32 %v1497
      %v1562 = vcvt.s32.f32 %v1498
      %v1563 = vcvt.s32.f32 %v1499
      %v1564 = vcvt.s32.f32 %v1500
      %v1565 = vcvt.s32.f32 %v1501
      %v1566 = vcvt.s32.f32 %v1502
      %v1567 = vcvt.s32.f32 %v1503
      %v1568 = vcvt.s32.f32 %v1504
      %v1569 = vcvt.s32.f32 %v1505
      %v1570 = vcvt.s32.f32 %v1506
      %v1571 = vcvt.s32.f32 %v1507
      %v1572 = vcvt.s32.f32 %v1508
      %v1573 = vcvt.s32.f32 %v1509
      %v1574 = vcvt.s32.f32 %v1510
      %v1575 = vcvt.s32.f32 %v1511
      %v1576 = vcvt.s32.f32 %v1512
      %v1577 = vcvt.s32.f32 %v1513
      %v1578 = vcvt.s32.f32 %v1514
      %v1579 = vcvt.s32.f32 %v1515
      %v1580 = vcvt.s32.f32 %v1516
      %v1581 = vcvt.s32.f32 %v1517
      %v1582 = vcvt.s32.f32 %v1518
      %v1583 = vcvt.s32.f32 %v1519
      %v1584 = vcvt.s32.f32 %v1520
      %v1585 = vcvt.s32.f32 %v1521
      %v1586 = vcvt.s32.f32 %v1522
      %v1587 = vcvt.s32.f32 %v1523
      %v1588 = vcvt.s32.f32 %v1524
      %v1589 = vcvt.s32.f32 %v1525
      %v1590 = vcvt.s32.f32 %v1526
      %v1591 = vcvt.s32.f32 %v1527
      %v1592 = vcvt.s32.f32 %v1528
      %v1593 = vcvt.s32.f32 %v1529
      %v1594 = vcvt.s32.f32 %v1530
      %v1595 = vcvt.s32.f32 %v1531
      %v1596 = vcvt.s32.f32 %v1532
      %v1597 = vadd.f32 %v1149, %v1533
      %v1598 = vadd.f32 %v1150, %v1534
      %v1599 = vadd.f32 %v1151, %v1535
      %v1600 = vadd.f32 %v1152, %v1536
      %v1601 = vadd.f32 %v1153, %v1537
      %v1602 = vadd.f32 %v1154, %v1538
      %v1603 = vadd.f32 %v1155, %v1539
      %v1604 = vadd.f32 %v1156, %v1540
      %v1605 = vadd.f32 %v1157, %v1541
      %v1606 = vadd.f32 %v1158, %v1542
      %v1607 = vadd.f32 %v1159, %v1543
      %v1608 = vadd.f32 %v1160, %v1544
      %v1609 = vadd.f32 %v1161, %v1545
      %v1610 = vadd.f32 %v1162, %v1546
      %v1611 = vadd.f32 %v1163, %v1547
      %v1612 = vadd.f32 %v1164, %v1548
      %v1613 = vadd.f32 %v1165, %v1549
      %v1614 = vadd.f32 %v1166, %v1550
      %v1615 = vadd.f32 %v1167, %v1551
      %v1616 = vadd.f32 %v1168, %v1552
      %v1617 = vadd.f32 %v1169, %v1553
      %v1618 = vadd.f32 %v1170, %v1554
      %v1619 = vadd.f32 %v1171, %v1555
      %v1620 = vadd.f32 %v1172, %v1556
      %v1621 = vadd.f32 %v1173, %v1557
      %v1622 = vadd.f32 %v1174, %v1558
      %v1623 = vadd.f32 %v1175, %v1559
      %v1624 = vadd.f32 %v1176, %v1560
      %v1625 = vadd.f32 %v1177, %v1561
      %v1626 = vadd.f32 %v1178, %v1562
      %v1627 = vadd.f32 %v1179, %v1563
      %v1628 = vadd.f32 %v1180, %v1564
      %v1629 = vadd.f32 %v1181, %v1565
      %v1630 = vadd.f32 %v1182, %v1566
      %v1631 = vadd.f32 %v1183, %v1567
      %v1632 = vadd.f32 %v1184, %v1568
      %v1633 = vadd.f32 %v1185, %v1569
      %v1634 = vadd.f32 %v1186, %v1570
      %v1635 = vadd.f32 %v1187, %v1571
      %v1636 = vadd.f32 %v1188, %v1572
      %v1637 = vadd.f32 %v1189, %v1573
      %v1638 = vadd.f32 %v1190, %v1574
      %v1639 = vadd.f32 %v1191, %v1575
      %v1640 = vadd.f32 %v1192, %v1576
      %v1641 = vadd.f32 %v1193, %v1577
      %v1642 = vadd.f32 %v1194, %v1578
      %v1643 = vadd.f32 %v1195, %v1579
      %v1644 = vadd.f32 %v1196, %v1580
      %v1645 = vadd.f32 %v1197, %v1581
      %v1646 = vadd.f32 %v1198, %v1582
      %v1647 = vadd.f32 %v1199, %v1583
      %v1648 = vadd.f32 %v1200, %v1584
      %v1649 = vadd.f32 %v1201, %v1585
      %v1650 = vadd.f32 %v1202, %v1586
      %v1651 = vadd.f32 %v1203, %v1587
      %v1652 = vadd.f32 %v1204, %v1588
      %v1653 = vadd.f32 %v1205, %v1589
      %v1654 = vadd.f32 %v1206, %v1590
      %v1655 = vadd.f32 %v1207, %v1591
      %v1656 = vadd.f32 %v1208, %v1592
      %v1657 = vadd.f32 %v1209, %v1593
      %v1658 = vadd.f32 %v1210, %v1594
      %v1659 = vadd.f32 %v1211, %v1595
      %v1660 = vadd.f32 %v1212, %v1596
      %1661 = vset.pattern.permute.xlu0 3
      %1662 = vperm.xlu0 %1661, %v251
      %v1663 = vpop.permute.xlu0 %1662
      %1664 = vset.pattern.permute.xlu0 3
      %1665 = vperm.xlu0 %1664, %v252
      %v1666 = vpop.permute.xlu0 %1665
      %1667 = vset.pattern.permute.xlu0 3
      %1668 = vperm.xlu0 %1667, %v253
      %v1669 = vpop.permute.xlu0 %1668
      %1670 = vset.pattern.permute.xlu0 3
      %1671 = vperm.xlu0 %1670, %v254
      %v1672 = vpop.permute.xlu0 %1671
      %1673 = vset.pattern.permute.xlu0 3
      %1674 = vperm.xlu0 %1673, %v255
      %v1675 = vpop.permute.xlu0 %1674
      %1676 = vset.pattern.permute.xlu0 3
      %1677 = vperm.xlu0 %1676, %v256
      %v1678 = vpop.permute.xlu0 %1677
      %1679 = vset.pattern.permute.xlu0 3
      %1680 = vperm.xlu0 %1679, %v257
      %v1681 = vpop.permute.xlu0 %1680
      %1682 = vset.pattern.permute.xlu0 3
      %1683 = vperm.xlu0 %1682, %v258
      %v1684 = vpop.permute.xlu0 %1683
      %1685 = vset.pattern.permute.xlu0 3
      %1686 = vperm.xlu0 %1685, %v259
      %v1687 = vpop.permute.xlu0 %1686
      %1688 = vset.pattern.permute.xlu0 3
      %1689 = vperm.xlu0 %1688, %v260
      %v1690 = vpop.permute.xlu0 %1689
      %1691 = vset.pattern.permute.xlu0 3
      %1692 = vperm.xlu0 %1691, %v261
      %v1693 = vpop.permute.xlu0 %1692
      %1694 = vset.pattern.permute.xlu0 3
      %1695 = vperm.xlu0 %1694, %v262
      %v1696 = vpop.permute.xlu0 %1695
      %1697 = vset.pattern.permute.xlu0 3
      %1698 = vperm.xlu0 %1697, %v263
      %v1699 = vpop.permute.xlu0 %1698
      %1700 = vset.pattern.permute.xlu0 3
      %1701 = vperm.xlu0 %1700, %v264
      %v1702 = vpop.permute.xlu0 %1701
      %1703 = vset.pattern.permute.xlu0 3
      %1704 = vperm.xlu0 %1703, %v265
      %v1705 = vpop.permute.xlu0 %1704
      %1706 = vset.pattern.permute.xlu0 3
      %1707 = vperm.xlu0 %1706, %v266
      %v1708 = vpop.permute.xlu0 %1707
      %1709 = vset.pattern.permute.xlu0 3
      %1710 = vperm.xlu0 %1709, %v267
      %v1711 = vpop.permute.xlu0 %1710
      %1712 = vset.pattern.permute.xlu0 3
      %1713 = vperm.xlu0 %1712, %v268
      %v1714 = vpop.permute.xlu0 %1713
      %1715 = vset.pattern.permute.xlu0 3
      %1716 = vperm.xlu0 %1715, %v269
      %v1717 = vpop.permute.xlu0 %1716
      %1718 = vset.pattern.permute.xlu0 3
      %1719 = vperm.xlu0 %1718, %v270
      %v1720 = vpop.permute.xlu0 %1719
      %1721 = vset.pattern.permute.xlu0 3
      %1722 = vperm.xlu0 %1721, %v271
      %v1723 = vpop.permute.xlu0 %1722
      %1724 = vset.pattern.permute.xlu0 3
      %1725 = vperm.xlu0 %1724, %v272
      %v1726 = vpop.permute.xlu0 %1725
      %1727 = vset.pattern.permute.xlu0 3
      %1728 = vperm.xlu0 %1727, %v273
      %v1729 = vpop.permute.xlu0 %1728
      %1730 = vset.pattern.permute.xlu0 3
      %1731 = vperm.xlu0 %1730, %v274
      %v1732 = vpop.permute.xlu0 %1731
      %1733 = vset.pattern.permute.xlu0 3
      %1734 = vperm.xlu0 %1733, %v275
      %v1735 = vpop.permute.xlu0 %1734
      %1736 = vset.pattern.permute.xlu0 3
      %1737 = vperm.xlu0 %1736, %v276
      %v1738 = vpop.permute.xlu0 %1737
      %1739 = vset.pattern.permute.xlu0 3
      %1740 = vperm.xlu0 %1739, %v277
      %v1741 = vpop.permute.xlu0 %1740
      %1742 = vset.pattern.permute.xlu0 3
      %1743 = vperm.xlu0 %1742, %v278
      %v1744 = vpop.permute.xlu0 %1743
      %1745 = vset.pattern.permute.xlu0 3
      %1746 = vperm.xlu0 %1745, %v279
      %v1747 = vpop.permute.xlu0 %1746
      %1748 = vset.pattern.permute.xlu0 3
      %1749 = vperm.xlu0 %1748, %v280
      %v1750 = vpop.permute.xlu0 %1749
      %1751 = vset.pattern.permute.xlu0 3
      %1752 = vperm.xlu0 %1751, %v281
      %v1753 = vpop.permute.xlu0 %1752
      %1754 = vset.pattern.permute.xlu0 3
      %1755 = vperm.xlu0 %1754, %v282
      %v1756 = vpop.permute.xlu0 %1755
      %1757 = vset.pattern.permute.xlu0 3
      %1758 = vperm.xlu0 %1757, %v283
      %v1759 = vpop.permute.xlu0 %1758
      %1760 = vset.pattern.permute.xlu0 3
      %1761 = vperm.xlu0 %1760, %v284
      %v1762 = vpop.permute.xlu0 %1761
      %1763 = vset.pattern.permute.xlu0 3
      %1764 = vperm.xlu0 %1763, %v285
      %v1765 = vpop.permute.xlu0 %1764
      %1766 = vset.pattern.permute.xlu0 3
      %1767 = vperm.xlu0 %1766, %v286
      %v1768 = vpop.permute.xlu0 %1767
      %1769 = vset.pattern.permute.xlu0 3
      %1770 = vperm.xlu0 %1769, %v287
      %v1771 = vpop.permute.xlu0 %1770
      %1772 = vset.pattern.permute.xlu0 3
      %1773 = vperm.xlu0 %1772, %v288
      %v1774 = vpop.permute.xlu0 %1773
      %1775 = vset.pattern.permute.xlu0 3
      %1776 = vperm.xlu0 %1775, %v289
      %v1777 = vpop.permute.xlu0 %1776
      %1778 = vset.pattern.permute.xlu0 3
      %1779 = vperm.xlu0 %1778, %v290
      %v1780 = vpop.permute.xlu0 %1779
      %1781 = vset.pattern.permute.xlu0 3
      %1782 = vperm.xlu0 %1781, %v291
      %v1783 = vpop.permute.xlu0 %1782
      %1784 = vset.pattern.permute.xlu0 3
      %1785 = vperm.xlu0 %1784, %v292
      %v1786 = vpop.permute.xlu0 %1785
      %1787 = vset.pattern.permute.xlu0 3
      %1788 = vperm.xlu0 %1787, %v293
      %v1789 = vpop.permute.xlu0 %1788
      %1790 = vset.pattern.permute.xlu0 3
      %1791 = vperm.xlu0 %1790, %v294
      %v1792 = vpop.permute.xlu0 %1791
      %1793 = vset.pattern.permute.xlu0 3
      %1794 = vperm.xlu0 %1793, %v295
      %v1795 = vpop.permute.xlu0 %1794
      %1796 = vset.pattern.permute.xlu0 3
      %1797 = vperm.xlu0 %1796, %v296
      %v1798 = vpop.permute.xlu0 %1797
      %1799 = vset.pattern.permute.xlu0 3
      %1800 = vperm.xlu0 %1799, %v297
      %v1801 = vpop.permute.xlu0 %1800
      %1802 = vset.pattern.permute.xlu0 3
      %1803 = vperm.xlu0 %1802, %v298
      %v1804 = vpop.permute.xlu0 %1803
      %1805 = vset.pattern.permute.xlu0 3
      %1806 = vperm.xlu0 %1805, %v299
      %v1807 = vpop.permute.xlu0 %1806
      %1808 = vset.pattern.permute.xlu0 3
      %1809 = vperm.xlu0 %1808, %v300
      %v1810 = vpop.permute.xlu0 %1809
      %1811 = vset.pattern.permute.xlu0 3
      %1812 = vperm.xlu0 %1811, %v301
      %v1813 = vpop.permute.xlu0 %1812
      %1814 = vset.pattern.permute.xlu0 3
      %1815 = vperm.xlu0 %1814, %v302
      %v1816 = vpop.permute.xlu0 %1815
      %1817 = vset.pattern.permute.xlu0 3
      %1818 = vperm.xlu0 %1817, %v303
      %v1819 = vpop.permute.xlu0 %1818
      %1820 = vset.pattern.permute.xlu0 3
      %1821 = vperm.xlu0 %1820, %v304
      %v1822 = vpop.permute.xlu0 %1821
      %1823 = vset.pattern.permute.xlu0 3
      %1824 = vperm.xlu0 %1823, %v305
      %v1825 = vpop.permute.xlu0 %1824
      %1826 = vset.pattern.permute.xlu0 3
      %1827 = vperm.xlu0 %1826, %v306
      %v1828 = vpop.permute.xlu0 %1827
      %1829 = vset.pattern.permute.xlu0 3
      %1830 = vperm.xlu0 %1829, %v307
      %v1831 = vpop.permute.xlu0 %1830
      %1832 = vset.pattern.permute.xlu0 3
      %1833 = vperm.xlu0 %1832, %v308
      %v1834 = vpop.permute.xlu0 %1833
      %1835 = vset.pattern.permute.xlu0 3
      %1836 = vperm.xlu0 %1835, %v309
      %v1837 = vpop.permute.xlu0 %1836
      %1838 = vset.pattern.permute.xlu0 3
      %1839 = vperm.xlu0 %1838, %v310
      %v1840 = vpop.permute.xlu0 %1839
      %1841 = vset.pattern.permute.xlu0 3
      %1842 = vperm.xlu0 %1841, %v311
      %v1843 = vpop.permute.xlu0 %1842
      %1844 = vset.pattern.permute.xlu0 3
      %1845 = vperm.xlu0 %1844, %v312
      %v1846 = vpop.permute.xlu0 %1845
      %1847 = vset.pattern.permute.xlu0 3
      %1848 = vperm.xlu0 %1847, %v313
      %v1849 = vpop.permute.xlu0 %1848
      %1850 = vset.pattern.permute.xlu0 3
      %1851 = vperm.xlu0 %1850, %v314
      %v1852 = vpop.permute.xlu0 %1851
      %vm1853 = vcmp.eq.s32.totalorder %v1663, %v380
      %vm1854 = vcmp.eq.s32.totalorder %v1666, %v380
      %vm1855 = vcmp.eq.s32.totalorder %v1669, %v380
      %vm1856 = vcmp.eq.s32.totalorder %v1672, %v380
      %vm1857 = vcmp.eq.s32.totalorder %v1675, %v380
      %vm1858 = vcmp.eq.s32.totalorder %v1678, %v380
      %vm1859 = vcmp.eq.s32.totalorder %v1681, %v380
      %vm1860 = vcmp.eq.s32.totalorder %v1684, %v380
      %vm1861 = vcmp.eq.s32.totalorder %v1687, %v380
      %vm1862 = vcmp.eq.s32.totalorder %v1690, %v380
      %vm1863 = vcmp.eq.s32.totalorder %v1693, %v380
      %vm1864 = vcmp.eq.s32.totalorder %v1696, %v380
      %vm1865 = vcmp.eq.s32.totalorder %v1699, %v380
      %vm1866 = vcmp.eq.s32.totalorder %v1702, %v380
      %vm1867 = vcmp.eq.s32.totalorder %v1705, %v380
      %vm1868 = vcmp.eq.s32.totalorder %v1708, %v380
      %vm1869 = vcmp.eq.s32.totalorder %v1711, %v380
      %vm1870 = vcmp.eq.s32.totalorder %v1714, %v380
      %vm1871 = vcmp.eq.s32.totalorder %v1717, %v380
      %vm1872 = vcmp.eq.s32.totalorder %v1720, %v380
      %vm1873 = vcmp.eq.s32.totalorder %v1723, %v380
      %vm1874 = vcmp.eq.s32.totalorder %v1726, %v380
      %vm1875 = vcmp.eq.s32.totalorder %v1729, %v380
      %vm1876 = vcmp.eq.s32.totalorder %v1732, %v380
      %vm1877 = vcmp.eq.s32.totalorder %v1735, %v380
      %vm1878 = vcmp.eq.s32.totalorder %v1738, %v380
      %vm1879 = vcmp.eq.s32.totalorder %v1741, %v380
      %vm1880 = vcmp.eq.s32.totalorder %v1744, %v380
      %vm1881 = vcmp.eq.s32.totalorder %v1747, %v380
      %vm1882 = vcmp.eq.s32.totalorder %v1750, %v380
      %vm1883 = vcmp.eq.s32.totalorder %v1753, %v380
      %vm1884 = vcmp.eq.s32.totalorder %v1756, %v380
      %vm1885 = vcmp.eq.s32.totalorder %v1759, %v380
      %vm1886 = vcmp.eq.s32.totalorder %v1762, %v380
      %vm1887 = vcmp.eq.s32.totalorder %v1765, %v380
      %vm1888 = vcmp.eq.s32.totalorder %v1768, %v380
      %vm1889 = vcmp.eq.s32.totalorder %v1771, %v380
      %vm1890 = vcmp.eq.s32.totalorder %v1774, %v380
      %vm1891 = vcmp.eq.s32.totalorder %v1777, %v380
      %vm1892 = vcmp.eq.s32.totalorder %v1780, %v380
      %vm1893 = vcmp.eq.s32.totalorder %v1783, %v380
      %vm1894 = vcmp.eq.s32.totalorder %v1786, %v380
      %vm1895 = vcmp.eq.s32.totalorder %v1789, %v380
      %vm1896 = vcmp.eq.s32.totalorder %v1792, %v380
      %vm1897 = vcmp.eq.s32.totalorder %v1795, %v380
      %vm1898 = vcmp.eq.s32.totalorder %v1798, %v380
      %vm1899 = vcmp.eq.s32.totalorder %v1801, %v380
      %vm1900 = vcmp.eq.s32.totalorder %v1804, %v380
      %vm1901 = vcmp.eq.s32.totalorder %v1807, %v380
      %vm1902 = vcmp.eq.s32.totalorder %v1810, %v380
      %vm1903 = vcmp.eq.s32.totalorder %v1813, %v380
      %vm1904 = vcmp.eq.s32.totalorder %v1816, %v380
      %vm1905 = vcmp.eq.s32.totalorder %v1819, %v380
      %vm1906 = vcmp.eq.s32.totalorder %v1822, %v380
      %vm1907 = vcmp.eq.s32.totalorder %v1825, %v380
      %vm1908 = vcmp.eq.s32.totalorder %v1828, %v380
      %vm1909 = vcmp.eq.s32.totalorder %v1831, %v380
      %vm1910 = vcmp.eq.s32.totalorder %v1834, %v380
      %vm1911 = vcmp.eq.s32.totalorder %v1837, %v380
      %vm1912 = vcmp.eq.s32.totalorder %v1840, %v380
      %vm1913 = vcmp.eq.s32.totalorder %v1843, %v380
      %vm1914 = vcmp.eq.s32.totalorder %v1846, %v380
      %vm1915 = vcmp.eq.s32.totalorder %v1849, %v380
      %vm1916 = vcmp.eq.s32.totalorder %v1852, %v380
      %v1917 = vsel %vm1853, 1, 0
      %v1918 = vsel %vm1854, 1, 0
      %v1919 = vsel %vm1855, 1, 0
      %v1920 = vsel %vm1856, 1, 0
      %v1921 = vsel %vm1857, 1, 0
      %v1922 = vsel %vm1858, 1, 0
      %v1923 = vsel %vm1859, 1, 0
      %v1924 = vsel %vm1860, 1, 0
      %v1925 = vsel %vm1861, 1, 0
      %v1926 = vsel %vm1862, 1, 0
      %v1927 = vsel %vm1863, 1, 0
      %v1928 = vsel %vm1864, 1, 0
      %v1929 = vsel %vm1865, 1, 0
      %v1930 = vsel %vm1866, 1, 0
      %v1931 = vsel %vm1867, 1, 0
      %v1932 = vsel %vm1868, 1, 0
      %v1933 = vsel %vm1869, 1, 0
      %v1934 = vsel %vm1870, 1, 0
      %v1935 = vsel %vm1871, 1, 0
      %v1936 = vsel %vm1872, 1, 0
      %v1937 = vsel %vm1873, 1, 0
      %v1938 = vsel %vm1874, 1, 0
      %v1939 = vsel %vm1875, 1, 0
      %v1940 = vsel %vm1876, 1, 0
      %v1941 = vsel %vm1877, 1, 0
      %v1942 = vsel %vm1878, 1, 0
      %v1943 = vsel %vm1879, 1, 0
      %v1944 = vsel %vm1880, 1, 0
      %v1945 = vsel %vm1881, 1, 0
      %v1946 = vsel %vm1882, 1, 0
      %v1947 = vsel %vm1883, 1, 0
      %v1948 = vsel %vm1884, 1, 0
      %v1949 = vsel %vm1885, 1, 0
      %v1950 = vsel %vm1886, 1, 0
      %v1951 = vsel %vm1887, 1, 0
      %v1952 = vsel %vm1888, 1, 0
      %v1953 = vsel %vm1889, 1, 0
      %v1954 = vsel %vm1890, 1, 0
      %v1955 = vsel %vm1891, 1, 0
      %v1956 = vsel %vm1892, 1, 0
      %v1957 = vsel %vm1893, 1, 0
      %v1958 = vsel %vm1894, 1, 0
      %v1959 = vsel %vm1895, 1, 0
      %v1960 = vsel %vm1896, 1, 0
      %v1961 = vsel %vm1897, 1, 0
      %v1962 = vsel %vm1898, 1, 0
      %v1963 = vsel %vm1899, 1, 0
      %v1964 = vsel %vm1900, 1, 0
      %v1965 = vsel %vm1901, 1, 0
      %v1966 = vsel %vm1902, 1, 0
      %v1967 = vsel %vm1903, 1, 0
      %v1968 = vsel %vm1904, 1, 0
      %v1969 = vsel %vm1905, 1, 0
      %v1970 = vsel %vm1906, 1, 0
      %v1971 = vsel %vm1907, 1, 0
      %v1972 = vsel %vm1908, 1, 0
      %v1973 = vsel %vm1909, 1, 0
      %v1974 = vsel %vm1910, 1, 0
      %v1975 = vsel %vm1911, 1, 0
      %v1976 = vsel %vm1912, 1, 0
      %v1977 = vsel %vm1913, 1, 0
      %v1978 = vsel %vm1914, 1, 0
      %v1979 = vsel %vm1915, 1, 0
      %v1980 = vsel %vm1916, 1, 0
      %v1981 = vcvt.s32.f32 %v1917
      %v1982 = vcvt.s32.f32 %v1918
      %v1983 = vcvt.s32.f32 %v1919
      %v1984 = vcvt.s32.f32 %v1920
      %v1985 = vcvt.s32.f32 %v1921
      %v1986 = vcvt.s32.f32 %v1922
      %v1987 = vcvt.s32.f32 %v1923
      %v1988 = vcvt.s32.f32 %v1924
      %v1989 = vcvt.s32.f32 %v1925
      %v1990 = vcvt.s32.f32 %v1926
      %v1991 = vcvt.s32.f32 %v1927
      %v1992 = vcvt.s32.f32 %v1928
      %v1993 = vcvt.s32.f32 %v1929
      %v1994 = vcvt.s32.f32 %v1930
      %v1995 = vcvt.s32.f32 %v1931
      %v1996 = vcvt.s32.f32 %v1932
      %v1997 = vcvt.s32.f32 %v1933
      %v1998 = vcvt.s32.f32 %v1934
      %v1999 = vcvt.s32.f32 %v1935
      %v2000 = vcvt.s32.f32 %v1936
      %v2001 = vcvt.s32.f32 %v1937
      %v2002 = vcvt.s32.f32 %v1938
      %v2003 = vcvt.s32.f32 %v1939
      %v2004 = vcvt.s32.f32 %v1940
      %v2005 = vcvt.s32.f32 %v1941
      %v2006 = vcvt.s32.f32 %v1942
      %v2007 = vcvt.s32.f32 %v1943
      %v2008 = vcvt.s32.f32 %v1944
      %v2009 = vcvt.s32.f32 %v1945
      %v2010 = vcvt.s32.f32 %v1946
      %v2011 = vcvt.s32.f32 %v1947
      %v2012 = vcvt.s32.f32 %v1948
      %v2013 = vcvt.s32.f32 %v1949
      %v2014 = vcvt.s32.f32 %v1950
      %v2015 = vcvt.s32.f32 %v1951
      %v2016 = vcvt.s32.f32 %v1952
      %v2017 = vcvt.s32.f32 %v1953
      %v2018 = vcvt.s32.f32 %v1954
      %v2019 = vcvt.s32.f32 %v1955
      %v2020 = vcvt.s32.f32 %v1956
      %v2021 = vcvt.s32.f32 %v1957
      %v2022 = vcvt.s32.f32 %v1958
      %v2023 = vcvt.s32.f32 %v1959
      %v2024 = vcvt.s32.f32 %v1960
      %v2025 = vcvt.s32.f32 %v1961
      %v2026 = vcvt.s32.f32 %v1962
      %v2027 = vcvt.s32.f32 %v1963
      %v2028 = vcvt.s32.f32 %v1964
      %v2029 = vcvt.s32.f32 %v1965
      %v2030 = vcvt.s32.f32 %v1966
      %v2031 = vcvt.s32.f32 %v1967
      %v2032 = vcvt.s32.f32 %v1968
      %v2033 = vcvt.s32.f32 %v1969
      %v2034 = vcvt.s32.f32 %v1970
      %v2035 = vcvt.s32.f32 %v1971
      %v2036 = vcvt.s32.f32 %v1972
      %v2037 = vcvt.s32.f32 %v1973
      %v2038 = vcvt.s32.f32 %v1974
      %v2039 = vcvt.s32.f32 %v1975
      %v2040 = vcvt.s32.f32 %v1976
      %v2041 = vcvt.s32.f32 %v1977
      %v2042 = vcvt.s32.f32 %v1978
      %v2043 = vcvt.s32.f32 %v1979
      %v2044 = vcvt.s32.f32 %v1980
      %v2045 = vadd.f32 %v1597, %v1981
      %v2046 = vadd.f32 %v1598, %v1982
      %v2047 = vadd.f32 %v1599, %v1983
      %v2048 = vadd.f32 %v1600, %v1984
      %v2049 = vadd.f32 %v1601, %v1985
      %v2050 = vadd.f32 %v1602, %v1986
      %v2051 = vadd.f32 %v1603, %v1987
      %v2052 = vadd.f32 %v1604, %v1988
      %v2053 = vadd.f32 %v1605, %v1989
      %v2054 = vadd.f32 %v1606, %v1990
      %v2055 = vadd.f32 %v1607, %v1991
      %v2056 = vadd.f32 %v1608, %v1992
      %v2057 = vadd.f32 %v1609, %v1993
      %v2058 = vadd.f32 %v1610, %v1994
      %v2059 = vadd.f32 %v1611, %v1995
      %v2060 = vadd.f32 %v1612, %v1996
      %v2061 = vadd.f32 %v1613, %v1997
      %v2062 = vadd.f32 %v1614, %v1998
      %v2063 = vadd.f32 %v1615, %v1999
      %v2064 = vadd.f32 %v1616, %v2000
      %v2065 = vadd.f32 %v1617, %v2001
      %v2066 = vadd.f32 %v1618, %v2002
      %v2067 = vadd.f32 %v1619, %v2003
      %v2068 = vadd.f32 %v1620, %v2004
      %v2069 = vadd.f32 %v1621, %v2005
      %v2070 = vadd.f32 %v1622, %v2006
      %v2071 = vadd.f32 %v1623, %v2007
      %v2072 = vadd.f32 %v1624, %v2008
      %v2073 = vadd.f32 %v1625, %v2009
      %v2074 = vadd.f32 %v1626, %v2010
      %v2075 = vadd.f32 %v1627, %v2011
      %v2076 = vadd.f32 %v1628, %v2012
      %v2077 = vadd.f32 %v1629, %v2013
      %v2078 = vadd.f32 %v1630, %v2014
      %v2079 = vadd.f32 %v1631, %v2015
      %v2080 = vadd.f32 %v1632, %v2016
      %v2081 = vadd.f32 %v1633, %v2017
      %v2082 = vadd.f32 %v1634, %v2018
      %v2083 = vadd.f32 %v1635, %v2019
      %v2084 = vadd.f32 %v1636, %v2020
      %v2085 = vadd.f32 %v1637, %v2021
      %v2086 = vadd.f32 %v1638, %v2022
      %v2087 = vadd.f32 %v1639, %v2023
      %v2088 = vadd.f32 %v1640, %v2024
      %v2089 = vadd.f32 %v1641, %v2025
      %v2090 = vadd.f32 %v1642, %v2026
      %v2091 = vadd.f32 %v1643, %v2027
      %v2092 = vadd.f32 %v1644, %v2028
      %v2093 = vadd.f32 %v1645, %v2029
      %v2094 = vadd.f32 %v1646, %v2030
      %v2095 = vadd.f32 %v1647, %v2031
      %v2096 = vadd.f32 %v1648, %v2032
      %v2097 = vadd.f32 %v1649, %v2033
      %v2098 = vadd.f32 %v1650, %v2034
      %v2099 = vadd.f32 %v1651, %v2035
      %v2100 = vadd.f32 %v1652, %v2036
      %v2101 = vadd.f32 %v1653, %v2037
      %v2102 = vadd.f32 %v1654, %v2038
      %v2103 = vadd.f32 %v1655, %v2039
      %v2104 = vadd.f32 %v1656, %v2040
      %v2105 = vadd.f32 %v1657, %v2041
      %v2106 = vadd.f32 %v1658, %v2042
      %v2107 = vadd.f32 %v1659, %v2043
      %v2108 = vadd.f32 %v1660, %v2044
      %2109 = vset.pattern.permute.xlu0 4
      %2110 = vperm.xlu0 %2109, %v251
      %v2111 = vpop.permute.xlu0 %2110
      %2112 = vset.pattern.permute.xlu0 4
      %2113 = vperm.xlu0 %2112, %v252
      %v2114 = vpop.permute.xlu0 %2113
      %2115 = vset.pattern.permute.xlu0 4
      %2116 = vperm.xlu0 %2115, %v253
      %v2117 = vpop.permute.xlu0 %2116
      %2118 = vset.pattern.permute.xlu0 4
      %2119 = vperm.xlu0 %2118, %v254
      %v2120 = vpop.permute.xlu0 %2119
      %2121 = vset.pattern.permute.xlu0 4
      %2122 = vperm.xlu0 %2121, %v255
      %v2123 = vpop.permute.xlu0 %2122
      %2124 = vset.pattern.permute.xlu0 4
      %2125 = vperm.xlu0 %2124, %v256
      %v2126 = vpop.permute.xlu0 %2125
      %2127 = vset.pattern.permute.xlu0 4
      %2128 = vperm.xlu0 %2127, %v257
      %v2129 = vpop.permute.xlu0 %2128
      %2130 = vset.pattern.permute.xlu0 4
      %2131 = vperm.xlu0 %2130, %v258
      %v2132 = vpop.permute.xlu0 %2131
      %2133 = vset.pattern.permute.xlu0 4
      %2134 = vperm.xlu0 %2133, %v259
      %v2135 = vpop.permute.xlu0 %2134
      %2136 = vset.pattern.permute.xlu0 4
      %2137 = vperm.xlu0 %2136, %v260
      %v2138 = vpop.permute.xlu0 %2137
      %2139 = vset.pattern.permute.xlu0 4
      %2140 = vperm.xlu0 %2139, %v261
      %v2141 = vpop.permute.xlu0 %2140
      %2142 = vset.pattern.permute.xlu0 4
      %2143 = vperm.xlu0 %2142, %v262
      %v2144 = vpop.permute.xlu0 %2143
      %2145 = vset.pattern.permute.xlu0 4
      %2146 = vperm.xlu0 %2145, %v263
      %v2147 = vpop.permute.xlu0 %2146
      %2148 = vset.pattern.permute.xlu0 4
      %2149 = vperm.xlu0 %2148, %v264
      %v2150 = vpop.permute.xlu0 %2149
      %2151 = vset.pattern.permute.xlu0 4
      %2152 = vperm.xlu0 %2151, %v265
      %v2153 = vpop.permute.xlu0 %2152
      %2154 = vset.pattern.permute.xlu0 4
      %2155 = vperm.xlu0 %2154, %v266
      %v2156 = vpop.permute.xlu0 %2155
      %2157 = vset.pattern.permute.xlu0 4
      %2158 = vperm.xlu0 %2157, %v267
      %v2159 = vpop.permute.xlu0 %2158
      %2160 = vset.pattern.permute.xlu0 4
      %2161 = vperm.xlu0 %2160, %v268
      %v2162 = vpop.permute.xlu0 %2161
      %2163 = vset.pattern.permute.xlu0 4
      %2164 = vperm.xlu0 %2163, %v269
      %v2165 = vpop.permute.xlu0 %2164
      %2166 = vset.pattern.permute.xlu0 4
      %2167 = vperm.xlu0 %2166, %v270
      %v2168 = vpop.permute.xlu0 %2167
      %2169 = vset.pattern.permute.xlu0 4
      %2170 = vperm.xlu0 %2169, %v271
      %v2171 = vpop.permute.xlu0 %2170
      %2172 = vset.pattern.permute.xlu0 4
      %2173 = vperm.xlu0 %2172, %v272
      %v2174 = vpop.permute.xlu0 %2173
      %2175 = vset.pattern.permute.xlu0 4
      %2176 = vperm.xlu0 %2175, %v273
      %v2177 = vpop.permute.xlu0 %2176
      %2178 = vset.pattern.permute.xlu0 4
      %2179 = vperm.xlu0 %2178, %v274
      %v2180 = vpop.permute.xlu0 %2179
      %2181 = vset.pattern.permute.xlu0 4
      %2182 = vperm.xlu0 %2181, %v275
      %v2183 = vpop.permute.xlu0 %2182
      %2184 = vset.pattern.permute.xlu0 4
      %2185 = vperm.xlu0 %2184, %v276
      %v2186 = vpop.permute.xlu0 %2185
      %2187 = vset.pattern.permute.xlu0 4
      %2188 = vperm.xlu0 %2187, %v277
      %v2189 = vpop.permute.xlu0 %2188
      %2190 = vset.pattern.permute.xlu0 4
      %2191 = vperm.xlu0 %2190, %v278
      %v2192 = vpop.permute.xlu0 %2191
      %2193 = vset.pattern.permute.xlu0 4
      %2194 = vperm.xlu0 %2193, %v279
      %v2195 = vpop.permute.xlu0 %2194
      %2196 = vset.pattern.permute.xlu0 4
      %2197 = vperm.xlu0 %2196, %v280
      %v2198 = vpop.permute.xlu0 %2197
      %2199 = vset.pattern.permute.xlu0 4
      %2200 = vperm.xlu0 %2199, %v281
      %v2201 = vpop.permute.xlu0 %2200
      %2202 = vset.pattern.permute.xlu0 4
      %2203 = vperm.xlu0 %2202, %v282
      %v2204 = vpop.permute.xlu0 %2203
      %2205 = vset.pattern.permute.xlu0 4
      %2206 = vperm.xlu0 %2205, %v283
      %v2207 = vpop.permute.xlu0 %2206
      %2208 = vset.pattern.permute.xlu0 4
      %2209 = vperm.xlu0 %2208, %v284
      %v2210 = vpop.permute.xlu0 %2209
      %2211 = vset.pattern.permute.xlu0 4
      %2212 = vperm.xlu0 %2211, %v285
      %v2213 = vpop.permute.xlu0 %2212
      %2214 = vset.pattern.permute.xlu0 4
      %2215 = vperm.xlu0 %2214, %v286
      %v2216 = vpop.permute.xlu0 %2215
      %2217 = vset.pattern.permute.xlu0 4
      %2218 = vperm.xlu0 %2217, %v287
      %v2219 = vpop.permute.xlu0 %2218
      %2220 = vset.pattern.permute.xlu0 4
      %2221 = vperm.xlu0 %2220, %v288
      %v2222 = vpop.permute.xlu0 %2221
      %2223 = vset.pattern.permute.xlu0 4
      %2224 = vperm.xlu0 %2223, %v289
      %v2225 = vpop.permute.xlu0 %2224
      %2226 = vset.pattern.permute.xlu0 4
      %2227 = vperm.xlu0 %2226, %v290
      %v2228 = vpop.permute.xlu0 %2227
      %2229 = vset.pattern.permute.xlu0 4
      %2230 = vperm.xlu0 %2229, %v291
      %v2231 = vpop.permute.xlu0 %2230
      %2232 = vset.pattern.permute.xlu0 4
      %2233 = vperm.xlu0 %2232, %v292
      %v2234 = vpop.permute.xlu0 %2233
      %2235 = vset.pattern.permute.xlu0 4
      %2236 = vperm.xlu0 %2235, %v293
      %v2237 = vpop.permute.xlu0 %2236
      %2238 = vset.pattern.permute.xlu0 4
      %2239 = vperm.xlu0 %2238, %v294
      %v2240 = vpop.permute.xlu0 %2239
      %2241 = vset.pattern.permute.xlu0 4
      %2242 = vperm.xlu0 %2241, %v295
      %v2243 = vpop.permute.xlu0 %2242
      %2244 = vset.pattern.permute.xlu0 4
      %2245 = vperm.xlu0 %2244, %v296
      %v2246 = vpop.permute.xlu0 %2245
      %2247 = vset.pattern.permute.xlu0 4
      %2248 = vperm.xlu0 %2247, %v297
      %v2249 = vpop.permute.xlu0 %2248
      %2250 = vset.pattern.permute.xlu0 4
      %2251 = vperm.xlu0 %2250, %v298
      %v2252 = vpop.permute.xlu0 %2251
      %2253 = vset.pattern.permute.xlu0 4
      %2254 = vperm.xlu0 %2253, %v299
      %v2255 = vpop.permute.xlu0 %2254
      %2256 = vset.pattern.permute.xlu0 4
      %2257 = vperm.xlu0 %2256, %v300
      %v2258 = vpop.permute.xlu0 %2257
      %2259 = vset.pattern.permute.xlu0 4
      %2260 = vperm.xlu0 %2259, %v301
      %v2261 = vpop.permute.xlu0 %2260
      %2262 = vset.pattern.permute.xlu0 4
      %2263 = vperm.xlu0 %2262, %v302
      %v2264 = vpop.permute.xlu0 %2263
      %2265 = vset.pattern.permute.xlu0 4
      %2266 = vperm.xlu0 %2265, %v303
      %v2267 = vpop.permute.xlu0 %2266
      %2268 = vset.pattern.permute.xlu0 4
      %2269 = vperm.xlu0 %2268, %v304
      %v2270 = vpop.permute.xlu0 %2269
      %2271 = vset.pattern.permute.xlu0 4
      %2272 = vperm.xlu0 %2271, %v305
      %v2273 = vpop.permute.xlu0 %2272
      %2274 = vset.pattern.permute.xlu0 4
      %2275 = vperm.xlu0 %2274, %v306
      %v2276 = vpop.permute.xlu0 %2275
      %2277 = vset.pattern.permute.xlu0 4
      %2278 = vperm.xlu0 %2277, %v307
      %v2279 = vpop.permute.xlu0 %2278
      %2280 = vset.pattern.permute.xlu0 4
      %2281 = vperm.xlu0 %2280, %v308
      %v2282 = vpop.permute.xlu0 %2281
      %2283 = vset.pattern.permute.xlu0 4
      %2284 = vperm.xlu0 %2283, %v309
      %v2285 = vpop.permute.xlu0 %2284
      %2286 = vset.pattern.permute.xlu0 4
      %2287 = vperm.xlu0 %2286, %v310
      %v2288 = vpop.permute.xlu0 %2287
      %2289 = vset.pattern.permute.xlu0 4
      %2290 = vperm.xlu0 %2289, %v311
      %v2291 = vpop.permute.xlu0 %2290
      %2292 = vset.pattern.permute.xlu0 4
      %2293 = vperm.xlu0 %2292, %v312
      %v2294 = vpop.permute.xlu0 %2293
      %2295 = vset.pattern.permute.xlu0 4
      %2296 = vperm.xlu0 %2295, %v313
      %v2297 = vpop.permute.xlu0 %2296
      %2298 = vset.pattern.permute.xlu0 4
      %2299 = vperm.xlu0 %2298, %v314
      %v2300 = vpop.permute.xlu0 %2299
      %vm2301 = vcmp.eq.s32.totalorder %v2111, %v380
      %vm2302 = vcmp.eq.s32.totalorder %v2114, %v380
      %vm2303 = vcmp.eq.s32.totalorder %v2117, %v380
      %vm2304 = vcmp.eq.s32.totalorder %v2120, %v380
      %vm2305 = vcmp.eq.s32.totalorder %v2123, %v380
      %vm2306 = vcmp.eq.s32.totalorder %v2126, %v380
      %vm2307 = vcmp.eq.s32.totalorder %v2129, %v380
      %vm2308 = vcmp.eq.s32.totalorder %v2132, %v380
      %vm2309 = vcmp.eq.s32.totalorder %v2135, %v380
      %vm2310 = vcmp.eq.s32.totalorder %v2138, %v380
      %vm2311 = vcmp.eq.s32.totalorder %v2141, %v380
      %vm2312 = vcmp.eq.s32.totalorder %v2144, %v380
      %vm2313 = vcmp.eq.s32.totalorder %v2147, %v380
      %vm2314 = vcmp.eq.s32.totalorder %v2150, %v380
      %vm2315 = vcmp.eq.s32.totalorder %v2153, %v380
      %vm2316 = vcmp.eq.s32.totalorder %v2156, %v380
      %vm2317 = vcmp.eq.s32.totalorder %v2159, %v380
      %vm2318 = vcmp.eq.s32.totalorder %v2162, %v380
      %vm2319 = vcmp.eq.s32.totalorder %v2165, %v380
      %vm2320 = vcmp.eq.s32.totalorder %v2168, %v380
      %vm2321 = vcmp.eq.s32.totalorder %v2171, %v380
      %vm2322 = vcmp.eq.s32.totalorder %v2174, %v380
      %vm2323 = vcmp.eq.s32.totalorder %v2177, %v380
      %vm2324 = vcmp.eq.s32.totalorder %v2180, %v380
      %vm2325 = vcmp.eq.s32.totalorder %v2183, %v380
      %vm2326 = vcmp.eq.s32.totalorder %v2186, %v380
      %vm2327 = vcmp.eq.s32.totalorder %v2189, %v380
      %vm2328 = vcmp.eq.s32.totalorder %v2192, %v380
      %vm2329 = vcmp.eq.s32.totalorder %v2195, %v380
      %vm2330 = vcmp.eq.s32.totalorder %v2198, %v380
      %vm2331 = vcmp.eq.s32.totalorder %v2201, %v380
      %vm2332 = vcmp.eq.s32.totalorder %v2204, %v380
      %vm2333 = vcmp.eq.s32.totalorder %v2207, %v380
      %vm2334 = vcmp.eq.s32.totalorder %v2210, %v380
      %vm2335 = vcmp.eq.s32.totalorder %v2213, %v380
      %vm2336 = vcmp.eq.s32.totalorder %v2216, %v380
      %vm2337 = vcmp.eq.s32.totalorder %v2219, %v380
      %vm2338 = vcmp.eq.s32.totalorder %v2222, %v380
      %vm2339 = vcmp.eq.s32.totalorder %v2225, %v380
      %vm2340 = vcmp.eq.s32.totalorder %v2228, %v380
      %vm2341 = vcmp.eq.s32.totalorder %v2231, %v380
      %vm2342 = vcmp.eq.s32.totalorder %v2234, %v380
      %vm2343 = vcmp.eq.s32.totalorder %v2237, %v380
      %vm2344 = vcmp.eq.s32.totalorder %v2240, %v380
      %vm2345 = vcmp.eq.s32.totalorder %v2243, %v380
      %vm2346 = vcmp.eq.s32.totalorder %v2246, %v380
      %vm2347 = vcmp.eq.s32.totalorder %v2249, %v380
      %vm2348 = vcmp.eq.s32.totalorder %v2252, %v380
      %vm2349 = vcmp.eq.s32.totalorder %v2255, %v380
      %vm2350 = vcmp.eq.s32.totalorder %v2258, %v380
      %vm2351 = vcmp.eq.s32.totalorder %v2261, %v380
      %vm2352 = vcmp.eq.s32.totalorder %v2264, %v380
      %vm2353 = vcmp.eq.s32.totalorder %v2267, %v380
      %vm2354 = vcmp.eq.s32.totalorder %v2270, %v380
      %vm2355 = vcmp.eq.s32.totalorder %v2273, %v380
      %vm2356 = vcmp.eq.s32.totalorder %v2276, %v380
      %vm2357 = vcmp.eq.s32.totalorder %v2279, %v380
      %vm2358 = vcmp.eq.s32.totalorder %v2282, %v380
      %vm2359 = vcmp.eq.s32.totalorder %v2285, %v380
      %vm2360 = vcmp.eq.s32.totalorder %v2288, %v380
      %vm2361 = vcmp.eq.s32.totalorder %v2291, %v380
      %vm2362 = vcmp.eq.s32.totalorder %v2294, %v380
      %vm2363 = vcmp.eq.s32.totalorder %v2297, %v380
      %vm2364 = vcmp.eq.s32.totalorder %v2300, %v380
      %v2365 = vsel %vm2301, 1, 0
      %v2366 = vsel %vm2302, 1, 0
      %v2367 = vsel %vm2303, 1, 0
      %v2368 = vsel %vm2304, 1, 0
      %v2369 = vsel %vm2305, 1, 0
      %v2370 = vsel %vm2306, 1, 0
      %v2371 = vsel %vm2307, 1, 0
      %v2372 = vsel %vm2308, 1, 0
      %v2373 = vsel %vm2309, 1, 0
      %v2374 = vsel %vm2310, 1, 0
      %v2375 = vsel %vm2311, 1, 0
      %v2376 = vsel %vm2312, 1, 0
      %v2377 = vsel %vm2313, 1, 0
      %v2378 = vsel %vm2314, 1, 0
      %v2379 = vsel %vm2315, 1, 0
      %v2380 = vsel %vm2316, 1, 0
      %v2381 = vsel %vm2317, 1, 0
      %v2382 = vsel %vm2318, 1, 0
      %v2383 = vsel %vm2319, 1, 0
      %v2384 = vsel %vm2320, 1, 0
      %v2385 = vsel %vm2321, 1, 0
      %v2386 = vsel %vm2322, 1, 0
      %v2387 = vsel %vm2323, 1, 0
      %v2388 = vsel %vm2324, 1, 0
      %v2389 = vsel %vm2325, 1, 0
      %v2390 = vsel %vm2326, 1, 0
      %v2391 = vsel %vm2327, 1, 0
      %v2392 = vsel %vm2328, 1, 0
      %v2393 = vsel %vm2329, 1, 0
      %v2394 = vsel %vm2330, 1, 0
      %v2395 = vsel %vm2331, 1, 0
      %v2396 = vsel %vm2332, 1, 0
      %v2397 = vsel %vm2333, 1, 0
      %v2398 = vsel %vm2334, 1, 0
      %v2399 = vsel %vm2335, 1, 0
      %v2400 = vsel %vm2336, 1, 0
      %v2401 = vsel %vm2337, 1, 0
      %v2402 = vsel %vm2338, 1, 0
      %v2403 = vsel %vm2339, 1, 0
      %v2404 = vsel %vm2340, 1, 0
      %v2405 = vsel %vm2341, 1, 0
      %v2406 = vsel %vm2342, 1, 0
      %v2407 = vsel %vm2343, 1, 0
      %v2408 = vsel %vm2344, 1, 0
      %v2409 = vsel %vm2345, 1, 0
      %v2410 = vsel %vm2346, 1, 0
      %v2411 = vsel %vm2347, 1, 0
      %v2412 = vsel %vm2348, 1, 0
      %v2413 = vsel %vm2349, 1, 0
      %v2414 = vsel %vm2350, 1, 0
      %v2415 = vsel %vm2351, 1, 0
      %v2416 = vsel %vm2352, 1, 0
      %v2417 = vsel %vm2353, 1, 0
      %v2418 = vsel %vm2354, 1, 0
      %v2419 = vsel %vm2355, 1, 0
      %v2420 = vsel %vm2356, 1, 0
      %v2421 = vsel %vm2357, 1, 0
      %v2422 = vsel %vm2358, 1, 0
      %v2423 = vsel %vm2359, 1, 0
      %v2424 = vsel %vm2360, 1, 0
      %v2425 = vsel %vm2361, 1, 0
      %v2426 = vsel %vm2362, 1, 0
      %v2427 = vsel %vm2363, 1, 0
      %v2428 = vsel %vm2364, 1, 0
      %v2429 = vcvt.s32.f32 %v2365
      %v2430 = vcvt.s32.f32 %v2366
      %v2431 = vcvt.s32.f32 %v2367
      %v2432 = vcvt.s32.f32 %v2368
      %v2433 = vcvt.s32.f32 %v2369
      %v2434 = vcvt.s32.f32 %v2370
      %v2435 = vcvt.s32.f32 %v2371
      %v2436 = vcvt.s32.f32 %v2372
      %v2437 = vcvt.s32.f32 %v2373
      %v2438 = vcvt.s32.f32 %v2374
      %v2439 = vcvt.s32.f32 %v2375
      %v2440 = vcvt.s32.f32 %v2376
      %v2441 = vcvt.s32.f32 %v2377
      %v2442 = vcvt.s32.f32 %v2378
      %v2443 = vcvt.s32.f32 %v2379
      %v2444 = vcvt.s32.f32 %v2380
      %v2445 = vcvt.s32.f32 %v2381
      %v2446 = vcvt.s32.f32 %v2382
      %v2447 = vcvt.s32.f32 %v2383
      %v2448 = vcvt.s32.f32 %v2384
      %v2449 = vcvt.s32.f32 %v2385
      %v2450 = vcvt.s32.f32 %v2386
      %v2451 = vcvt.s32.f32 %v2387
      %v2452 = vcvt.s32.f32 %v2388
      %v2453 = vcvt.s32.f32 %v2389
      %v2454 = vcvt.s32.f32 %v2390
      %v2455 = vcvt.s32.f32 %v2391
      %v2456 = vcvt.s32.f32 %v2392
      %v2457 = vcvt.s32.f32 %v2393
      %v2458 = vcvt.s32.f32 %v2394
      %v2459 = vcvt.s32.f32 %v2395
      %v2460 = vcvt.s32.f32 %v2396
      %v2461 = vcvt.s32.f32 %v2397
      %v2462 = vcvt.s32.f32 %v2398
      %v2463 = vcvt.s32.f32 %v2399
      %v2464 = vcvt.s32.f32 %v2400
      %v2465 = vcvt.s32.f32 %v2401
      %v2466 = vcvt.s32.f32 %v2402
      %v2467 = vcvt.s32.f32 %v2403
      %v2468 = vcvt.s32.f32 %v2404
      %v2469 = vcvt.s32.f32 %v2405
      %v2470 = vcvt.s32.f32 %v2406
      %v2471 = vcvt.s32.f32 %v2407
      %v2472 = vcvt.s32.f32 %v2408
      %v2473 = vcvt.s32.f32 %v2409
      %v2474 = vcvt.s32.f32 %v2410
      %v2475 = vcvt.s32.f32 %v2411
      %v2476 = vcvt.s32.f32 %v2412
      %v2477 = vcvt.s32.f32 %v2413
      %v2478 = vcvt.s32.f32 %v2414
      %v2479 = vcvt.s32.f32 %v2415
      %v2480 = vcvt.s32.f32 %v2416
      %v2481 = vcvt.s32.f32 %v2417
      %v2482 = vcvt.s32.f32 %v2418
      %v2483 = vcvt.s32.f32 %v2419
      %v2484 = vcvt.s32.f32 %v2420
      %v2485 = vcvt.s32.f32 %v2421
      %v2486 = vcvt.s32.f32 %v2422
      %v2487 = vcvt.s32.f32 %v2423
      %v2488 = vcvt.s32.f32 %v2424
      %v2489 = vcvt.s32.f32 %v2425
      %v2490 = vcvt.s32.f32 %v2426
      %v2491 = vcvt.s32.f32 %v2427
      %v2492 = vcvt.s32.f32 %v2428
      %v2493 = vadd.f32 %v2045, %v2429
      %v2494 = vadd.f32 %v2046, %v2430
      %v2495 = vadd.f32 %v2047, %v2431
      %v2496 = vadd.f32 %v2048, %v2432
      %v2497 = vadd.f32 %v2049, %v2433
      %v2498 = vadd.f32 %v2050, %v2434
      %v2499 = vadd.f32 %v2051, %v2435
      %v2500 = vadd.f32 %v2052, %v2436
      %v2501 = vadd.f32 %v2053, %v2437
      %v2502 = vadd.f32 %v2054, %v2438
      %v2503 = vadd.f32 %v2055, %v2439
      %v2504 = vadd.f32 %v2056, %v2440
      %v2505 = vadd.f32 %v2057, %v2441
      %v2506 = vadd.f32 %v2058, %v2442
      %v2507 = vadd.f32 %v2059, %v2443
      %v2508 = vadd.f32 %v2060, %v2444
      %v2509 = vadd.f32 %v2061, %v2445
      %v2510 = vadd.f32 %v2062, %v2446
      %v2511 = vadd.f32 %v2063, %v2447
      %v2512 = vadd.f32 %v2064, %v2448
      %v2513 = vadd.f32 %v2065, %v2449
      %v2514 = vadd.f32 %v2066, %v2450
      %v2515 = vadd.f32 %v2067, %v2451
      %v2516 = vadd.f32 %v2068, %v2452
      %v2517 = vadd.f32 %v2069, %v2453
      %v2518 = vadd.f32 %v2070, %v2454
      %v2519 = vadd.f32 %v2071, %v2455
      %v2520 = vadd.f32 %v2072, %v2456
      %v2521 = vadd.f32 %v2073, %v2457
      %v2522 = vadd.f32 %v2074, %v2458
      %v2523 = vadd.f32 %v2075, %v2459
      %v2524 = vadd.f32 %v2076, %v2460
      %v2525 = vadd.f32 %v2077, %v2461
      %v2526 = vadd.f32 %v2078, %v2462
      %v2527 = vadd.f32 %v2079, %v2463
      %v2528 = vadd.f32 %v2080, %v2464
      %v2529 = vadd.f32 %v2081, %v2465
      %v2530 = vadd.f32 %v2082, %v2466
      %v2531 = vadd.f32 %v2083, %v2467
      %v2532 = vadd.f32 %v2084, %v2468
      %v2533 = vadd.f32 %v2085, %v2469
      %v2534 = vadd.f32 %v2086, %v2470
      %v2535 = vadd.f32 %v2087, %v2471
      %v2536 = vadd.f32 %v2088, %v2472
      %v2537 = vadd.f32 %v2089, %v2473
      %v2538 = vadd.f32 %v2090, %v2474
      %v2539 = vadd.f32 %v2091, %v2475
      %v2540 = vadd.f32 %v2092, %v2476
      %v2541 = vadd.f32 %v2093, %v2477
      %v2542 = vadd.f32 %v2094, %v2478
      %v2543 = vadd.f32 %v2095, %v2479
      %v2544 = vadd.f32 %v2096, %v2480
      %v2545 = vadd.f32 %v2097, %v2481
      %v2546 = vadd.f32 %v2098, %v2482
      %v2547 = vadd.f32 %v2099, %v2483
      %v2548 = vadd.f32 %v2100, %v2484
      %v2549 = vadd.f32 %v2101, %v2485
      %v2550 = vadd.f32 %v2102, %v2486
      %v2551 = vadd.f32 %v2103, %v2487
      %v2552 = vadd.f32 %v2104, %v2488
      %v2553 = vadd.f32 %v2105, %v2489
      %v2554 = vadd.f32 %v2106, %v2490
      %v2555 = vadd.f32 %v2107, %v2491
      %v2556 = vadd.f32 %v2108, %v2492
      %2557 = vset.pattern.permute.xlu0 5
      %2558 = vperm.xlu0 %2557, %v251
      %v2559 = vpop.permute.xlu0 %2558
      %2560 = vset.pattern.permute.xlu0 5
      %2561 = vperm.xlu0 %2560, %v252
      %v2562 = vpop.permute.xlu0 %2561
      %2563 = vset.pattern.permute.xlu0 5
      %2564 = vperm.xlu0 %2563, %v253
      %v2565 = vpop.permute.xlu0 %2564
      %2566 = vset.pattern.permute.xlu0 5
      %2567 = vperm.xlu0 %2566, %v254
      %v2568 = vpop.permute.xlu0 %2567
      %2569 = vset.pattern.permute.xlu0 5
      %2570 = vperm.xlu0 %2569, %v255
      %v2571 = vpop.permute.xlu0 %2570
      %2572 = vset.pattern.permute.xlu0 5
      %2573 = vperm.xlu0 %2572, %v256
      %v2574 = vpop.permute.xlu0 %2573
      %2575 = vset.pattern.permute.xlu0 5
      %2576 = vperm.xlu0 %2575, %v257
      %v2577 = vpop.permute.xlu0 %2576
      %2578 = vset.pattern.permute.xlu0 5
      %2579 = vperm.xlu0 %2578, %v258
      %v2580 = vpop.permute.xlu0 %2579
      %2581 = vset.pattern.permute.xlu0 5
      %2582 = vperm.xlu0 %2581, %v259
      %v2583 = vpop.permute.xlu0 %2582
      %2584 = vset.pattern.permute.xlu0 5
      %2585 = vperm.xlu0 %2584, %v260
      %v2586 = vpop.permute.xlu0 %2585
      %2587 = vset.pattern.permute.xlu0 5
      %2588 = vperm.xlu0 %2587, %v261
      %v2589 = vpop.permute.xlu0 %2588
      %2590 = vset.pattern.permute.xlu0 5
      %2591 = vperm.xlu0 %2590, %v262
      %v2592 = vpop.permute.xlu0 %2591
      %2593 = vset.pattern.permute.xlu0 5
      %2594 = vperm.xlu0 %2593, %v263
      %v2595 = vpop.permute.xlu0 %2594
      %2596 = vset.pattern.permute.xlu0 5
      %2597 = vperm.xlu0 %2596, %v264
      %v2598 = vpop.permute.xlu0 %2597
      %2599 = vset.pattern.permute.xlu0 5
      %2600 = vperm.xlu0 %2599, %v265
      %v2601 = vpop.permute.xlu0 %2600
      %2602 = vset.pattern.permute.xlu0 5
      %2603 = vperm.xlu0 %2602, %v266
      %v2604 = vpop.permute.xlu0 %2603
      %2605 = vset.pattern.permute.xlu0 5
      %2606 = vperm.xlu0 %2605, %v267
      %v2607 = vpop.permute.xlu0 %2606
      %2608 = vset.pattern.permute.xlu0 5
      %2609 = vperm.xlu0 %2608, %v268
      %v2610 = vpop.permute.xlu0 %2609
      %2611 = vset.pattern.permute.xlu0 5
      %2612 = vperm.xlu0 %2611, %v269
      %v2613 = vpop.permute.xlu0 %2612
      %2614 = vset.pattern.permute.xlu0 5
      %2615 = vperm.xlu0 %2614, %v270
      %v2616 = vpop.permute.xlu0 %2615
      %2617 = vset.pattern.permute.xlu0 5
      %2618 = vperm.xlu0 %2617, %v271
      %v2619 = vpop.permute.xlu0 %2618
      %2620 = vset.pattern.permute.xlu0 5
      %2621 = vperm.xlu0 %2620, %v272
      %v2622 = vpop.permute.xlu0 %2621
      %2623 = vset.pattern.permute.xlu0 5
      %2624 = vperm.xlu0 %2623, %v273
      %v2625 = vpop.permute.xlu0 %2624
      %2626 = vset.pattern.permute.xlu0 5
      %2627 = vperm.xlu0 %2626, %v274
      %v2628 = vpop.permute.xlu0 %2627
      %2629 = vset.pattern.permute.xlu0 5
      %2630 = vperm.xlu0 %2629, %v275
      %v2631 = vpop.permute.xlu0 %2630
      %2632 = vset.pattern.permute.xlu0 5
      %2633 = vperm.xlu0 %2632, %v276
      %v2634 = vpop.permute.xlu0 %2633
      %2635 = vset.pattern.permute.xlu0 5
      %2636 = vperm.xlu0 %2635, %v277
      %v2637 = vpop.permute.xlu0 %2636
      %2638 = vset.pattern.permute.xlu0 5
      %2639 = vperm.xlu0 %2638, %v278
      %v2640 = vpop.permute.xlu0 %2639
      %2641 = vset.pattern.permute.xlu0 5
      %2642 = vperm.xlu0 %2641, %v279
      %v2643 = vpop.permute.xlu0 %2642
      %2644 = vset.pattern.permute.xlu0 5
      %2645 = vperm.xlu0 %2644, %v280
      %v2646 = vpop.permute.xlu0 %2645
      %2647 = vset.pattern.permute.xlu0 5
      %2648 = vperm.xlu0 %2647, %v281
      %v2649 = vpop.permute.xlu0 %2648
      %2650 = vset.pattern.permute.xlu0 5
      %2651 = vperm.xlu0 %2650, %v282
      %v2652 = vpop.permute.xlu0 %2651
      %2653 = vset.pattern.permute.xlu0 5
      %2654 = vperm.xlu0 %2653, %v283
      %v2655 = vpop.permute.xlu0 %2654
      %2656 = vset.pattern.permute.xlu0 5
      %2657 = vperm.xlu0 %2656, %v284
      %v2658 = vpop.permute.xlu0 %2657
      %2659 = vset.pattern.permute.xlu0 5
      %2660 = vperm.xlu0 %2659, %v285
      %v2661 = vpop.permute.xlu0 %2660
      %2662 = vset.pattern.permute.xlu0 5
      %2663 = vperm.xlu0 %2662, %v286
      %v2664 = vpop.permute.xlu0 %2663
      %2665 = vset.pattern.permute.xlu0 5
      %2666 = vperm.xlu0 %2665, %v287
      %v2667 = vpop.permute.xlu0 %2666
      %2668 = vset.pattern.permute.xlu0 5
      %2669 = vperm.xlu0 %2668, %v288
      %v2670 = vpop.permute.xlu0 %2669
      %2671 = vset.pattern.permute.xlu0 5
      %2672 = vperm.xlu0 %2671, %v289
      %v2673 = vpop.permute.xlu0 %2672
      %2674 = vset.pattern.permute.xlu0 5
      %2675 = vperm.xlu0 %2674, %v290
      %v2676 = vpop.permute.xlu0 %2675
      %2677 = vset.pattern.permute.xlu0 5
      %2678 = vperm.xlu0 %2677, %v291
      %v2679 = vpop.permute.xlu0 %2678
      %2680 = vset.pattern.permute.xlu0 5
      %2681 = vperm.xlu0 %2680, %v292
      %v2682 = vpop.permute.xlu0 %2681
      %2683 = vset.pattern.permute.xlu0 5
      %2684 = vperm.xlu0 %2683, %v293
      %v2685 = vpop.permute.xlu0 %2684
      %2686 = vset.pattern.permute.xlu0 5
      %2687 = vperm.xlu0 %2686, %v294
      %v2688 = vpop.permute.xlu0 %2687
      %2689 = vset.pattern.permute.xlu0 5
      %2690 = vperm.xlu0 %2689, %v295
      %v2691 = vpop.permute.xlu0 %2690
      %2692 = vset.pattern.permute.xlu0 5
      %2693 = vperm.xlu0 %2692, %v296
      %v2694 = vpop.permute.xlu0 %2693
      %2695 = vset.pattern.permute.xlu0 5
      %2696 = vperm.xlu0 %2695, %v297
      %v2697 = vpop.permute.xlu0 %2696
      %2698 = vset.pattern.permute.xlu0 5
      %2699 = vperm.xlu0 %2698, %v298
      %v2700 = vpop.permute.xlu0 %2699
      %2701 = vset.pattern.permute.xlu0 5
      %2702 = vperm.xlu0 %2701, %v299
      %v2703 = vpop.permute.xlu0 %2702
      %2704 = vset.pattern.permute.xlu0 5
      %2705 = vperm.xlu0 %2704, %v300
      %v2706 = vpop.permute.xlu0 %2705
      %2707 = vset.pattern.permute.xlu0 5
      %2708 = vperm.xlu0 %2707, %v301
      %v2709 = vpop.permute.xlu0 %2708
      %2710 = vset.pattern.permute.xlu0 5
      %2711 = vperm.xlu0 %2710, %v302
      %v2712 = vpop.permute.xlu0 %2711
      %2713 = vset.pattern.permute.xlu0 5
      %2714 = vperm.xlu0 %2713, %v303
      %v2715 = vpop.permute.xlu0 %2714
      %2716 = vset.pattern.permute.xlu0 5
      %2717 = vperm.xlu0 %2716, %v304
      %v2718 = vpop.permute.xlu0 %2717
      %2719 = vset.pattern.permute.xlu0 5
      %2720 = vperm.xlu0 %2719, %v305
      %v2721 = vpop.permute.xlu0 %2720
      %2722 = vset.pattern.permute.xlu0 5
      %2723 = vperm.xlu0 %2722, %v306
      %v2724 = vpop.permute.xlu0 %2723
      %2725 = vset.pattern.permute.xlu0 5
      %2726 = vperm.xlu0 %2725, %v307
      %v2727 = vpop.permute.xlu0 %2726
      %2728 = vset.pattern.permute.xlu0 5
      %2729 = vperm.xlu0 %2728, %v308
      %v2730 = vpop.permute.xlu0 %2729
      %2731 = vset.pattern.permute.xlu0 5
      %2732 = vperm.xlu0 %2731, %v309
      %v2733 = vpop.permute.xlu0 %2732
      %2734 = vset.pattern.permute.xlu0 5
      %2735 = vperm.xlu0 %2734, %v310
      %v2736 = vpop.permute.xlu0 %2735
      %2737 = vset.pattern.permute.xlu0 5
      %2738 = vperm.xlu0 %2737, %v311
      %v2739 = vpop.permute.xlu0 %2738
      %2740 = vset.pattern.permute.xlu0 5
      %2741 = vperm.xlu0 %2740, %v312
      %v2742 = vpop.permute.xlu0 %2741
      %2743 = vset.pattern.permute.xlu0 5
      %2744 = vperm.xlu0 %2743, %v313
      %v2745 = vpop.permute.xlu0 %2744
      %2746 = vset.pattern.permute.xlu0 5
      %2747 = vperm.xlu0 %2746, %v314
      %v2748 = vpop.permute.xlu0 %2747
      %vm2749 = vcmp.eq.s32.totalorder %v2559, %v380
      %vm2750 = vcmp.eq.s32.totalorder %v2562, %v380
      %vm2751 = vcmp.eq.s32.totalorder %v2565, %v380
      %vm2752 = vcmp.eq.s32.totalorder %v2568, %v380
      %vm2753 = vcmp.eq.s32.totalorder %v2571, %v380
      %vm2754 = vcmp.eq.s32.totalorder %v2574, %v380
      %vm2755 = vcmp.eq.s32.totalorder %v2577, %v380
      %vm2756 = vcmp.eq.s32.totalorder %v2580, %v380
      %vm2757 = vcmp.eq.s32.totalorder %v2583, %v380
      %vm2758 = vcmp.eq.s32.totalorder %v2586, %v380
      %vm2759 = vcmp.eq.s32.totalorder %v2589, %v380
      %vm2760 = vcmp.eq.s32.totalorder %v2592, %v380
      %vm2761 = vcmp.eq.s32.totalorder %v2595, %v380
      %vm2762 = vcmp.eq.s32.totalorder %v2598, %v380
      %vm2763 = vcmp.eq.s32.totalorder %v2601, %v380
      %vm2764 = vcmp.eq.s32.totalorder %v2604, %v380
      %vm2765 = vcmp.eq.s32.totalorder %v2607, %v380
      %vm2766 = vcmp.eq.s32.totalorder %v2610, %v380
      %vm2767 = vcmp.eq.s32.totalorder %v2613, %v380
      %vm2768 = vcmp.eq.s32.totalorder %v2616, %v380
      %vm2769 = vcmp.eq.s32.totalorder %v2619, %v380
      %vm2770 = vcmp.eq.s32.totalorder %v2622, %v380
      %vm2771 = vcmp.eq.s32.totalorder %v2625, %v380
      %vm2772 = vcmp.eq.s32.totalorder %v2628, %v380
      %vm2773 = vcmp.eq.s32.totalorder %v2631, %v380
      %vm2774 = vcmp.eq.s32.totalorder %v2634, %v380
      %vm2775 = vcmp.eq.s32.totalorder %v2637, %v380
      %vm2776 = vcmp.eq.s32.totalorder %v2640, %v380
      %vm2777 = vcmp.eq.s32.totalorder %v2643, %v380
      %vm2778 = vcmp.eq.s32.totalorder %v2646, %v380
      %vm2779 = vcmp.eq.s32.totalorder %v2649, %v380
      %vm2780 = vcmp.eq.s32.totalorder %v2652, %v380
      %vm2781 = vcmp.eq.s32.totalorder %v2655, %v380
      %vm2782 = vcmp.eq.s32.totalorder %v2658, %v380
      %vm2783 = vcmp.eq.s32.totalorder %v2661, %v380
      %vm2784 = vcmp.eq.s32.totalorder %v2664, %v380
      %vm2785 = vcmp.eq.s32.totalorder %v2667, %v380
      %vm2786 = vcmp.eq.s32.totalorder %v2670, %v380
      %vm2787 = vcmp.eq.s32.totalorder %v2673, %v380
      %vm2788 = vcmp.eq.s32.totalorder %v2676, %v380
      %vm2789 = vcmp.eq.s32.totalorder %v2679, %v380
      %vm2790 = vcmp.eq.s32.totalorder %v2682, %v380
      %vm2791 = vcmp.eq.s32.totalorder %v2685, %v380
      %vm2792 = vcmp.eq.s32.totalorder %v2688, %v380
      %vm2793 = vcmp.eq.s32.totalorder %v2691, %v380
      %vm2794 = vcmp.eq.s32.totalorder %v2694, %v380
      %vm2795 = vcmp.eq.s32.totalorder %v2697, %v380
      %vm2796 = vcmp.eq.s32.totalorder %v2700, %v380
      %vm2797 = vcmp.eq.s32.totalorder %v2703, %v380
      %vm2798 = vcmp.eq.s32.totalorder %v2706, %v380
      %vm2799 = vcmp.eq.s32.totalorder %v2709, %v380
      %vm2800 = vcmp.eq.s32.totalorder %v2712, %v380
      %vm2801 = vcmp.eq.s32.totalorder %v2715, %v380
      %vm2802 = vcmp.eq.s32.totalorder %v2718, %v380
      %vm2803 = vcmp.eq.s32.totalorder %v2721, %v380
      %vm2804 = vcmp.eq.s32.totalorder %v2724, %v380
      %vm2805 = vcmp.eq.s32.totalorder %v2727, %v380
      %vm2806 = vcmp.eq.s32.totalorder %v2730, %v380
      %vm2807 = vcmp.eq.s32.totalorder %v2733, %v380
      %vm2808 = vcmp.eq.s32.totalorder %v2736, %v380
      %vm2809 = vcmp.eq.s32.totalorder %v2739, %v380
      %vm2810 = vcmp.eq.s32.totalorder %v2742, %v380
      %vm2811 = vcmp.eq.s32.totalorder %v2745, %v380
      %vm2812 = vcmp.eq.s32.totalorder %v2748, %v380
      %v2813 = vsel %vm2749, 1, 0
      %v2814 = vsel %vm2750, 1, 0
      %v2815 = vsel %vm2751, 1, 0
      %v2816 = vsel %vm2752, 1, 0
      %v2817 = vsel %vm2753, 1, 0
      %v2818 = vsel %vm2754, 1, 0
      %v2819 = vsel %vm2755, 1, 0
      %v2820 = vsel %vm2756, 1, 0
      %v2821 = vsel %vm2757, 1, 0
      %v2822 = vsel %vm2758, 1, 0
      %v2823 = vsel %vm2759, 1, 0
      %v2824 = vsel %vm2760, 1, 0
      %v2825 = vsel %vm2761, 1, 0
      %v2826 = vsel %vm2762, 1, 0
      %v2827 = vsel %vm2763, 1, 0
      %v2828 = vsel %vm2764, 1, 0
      %v2829 = vsel %vm2765, 1, 0
      %v2830 = vsel %vm2766, 1, 0
      %v2831 = vsel %vm2767, 1, 0
      %v2832 = vsel %vm2768, 1, 0
      %v2833 = vsel %vm2769, 1, 0
      %v2834 = vsel %vm2770, 1, 0
      %v2835 = vsel %vm2771, 1, 0
      %v2836 = vsel %vm2772, 1, 0
      %v2837 = vsel %vm2773, 1, 0
      %v2838 = vsel %vm2774, 1, 0
      %v2839 = vsel %vm2775, 1, 0
      %v2840 = vsel %vm2776, 1, 0
      %v2841 = vsel %vm2777, 1, 0
      %v2842 = vsel %vm2778, 1, 0
      %v2843 = vsel %vm2779, 1, 0
      %v2844 = vsel %vm2780, 1, 0
      %v2845 = vsel %vm2781, 1, 0
      %v2846 = vsel %vm2782, 1, 0
      %v2847 = vsel %vm2783, 1, 0
      %v2848 = vsel %vm2784, 1, 0
      %v2849 = vsel %vm2785, 1, 0
      %v2850 = vsel %vm2786, 1, 0
      %v2851 = vsel %vm2787, 1, 0
      %v2852 = vsel %vm2788, 1, 0
      %v2853 = vsel %vm2789, 1, 0
      %v2854 = vsel %vm2790, 1, 0
      %v2855 = vsel %vm2791, 1, 0
      %v2856 = vsel %vm2792, 1, 0
      %v2857 = vsel %vm2793, 1, 0
      %v2858 = vsel %vm2794, 1, 0
      %v2859 = vsel %vm2795, 1, 0
      %v2860 = vsel %vm2796, 1, 0
      %v2861 = vsel %vm2797, 1, 0
      %v2862 = vsel %vm2798, 1, 0
      %v2863 = vsel %vm2799, 1, 0
      %v2864 = vsel %vm2800, 1, 0
      %v2865 = vsel %vm2801, 1, 0
      %v2866 = vsel %vm2802, 1, 0
      %v2867 = vsel %vm2803, 1, 0
      %v2868 = vsel %vm2804, 1, 0
      %v2869 = vsel %vm2805, 1, 0
      %v2870 = vsel %vm2806, 1, 0
      %v2871 = vsel %vm2807, 1, 0
      %v2872 = vsel %vm2808, 1, 0
      %v2873 = vsel %vm2809, 1, 0
      %v2874 = vsel %vm2810, 1, 0
      %v2875 = vsel %vm2811, 1, 0
      %v2876 = vsel %vm2812, 1, 0
      %v2877 = vcvt.s32.f32 %v2813
      %v2878 = vcvt.s32.f32 %v2814
      %v2879 = vcvt.s32.f32 %v2815
      %v2880 = vcvt.s32.f32 %v2816
      %v2881 = vcvt.s32.f32 %v2817
      %v2882 = vcvt.s32.f32 %v2818
      %v2883 = vcvt.s32.f32 %v2819
      %v2884 = vcvt.s32.f32 %v2820
      %v2885 = vcvt.s32.f32 %v2821
      %v2886 = vcvt.s32.f32 %v2822
      %v2887 = vcvt.s32.f32 %v2823
      %v2888 = vcvt.s32.f32 %v2824
      %v2889 = vcvt.s32.f32 %v2825
      %v2890 = vcvt.s32.f32 %v2826
      %v2891 = vcvt.s32.f32 %v2827
      %v2892 = vcvt.s32.f32 %v2828
      %v2893 = vcvt.s32.f32 %v2829
      %v2894 = vcvt.s32.f32 %v2830
      %v2895 = vcvt.s32.f32 %v2831
      %v2896 = vcvt.s32.f32 %v2832
      %v2897 = vcvt.s32.f32 %v2833
      %v2898 = vcvt.s32.f32 %v2834
      %v2899 = vcvt.s32.f32 %v2835
      %v2900 = vcvt.s32.f32 %v2836
      %v2901 = vcvt.s32.f32 %v2837
      %v2902 = vcvt.s32.f32 %v2838
      %v2903 = vcvt.s32.f32 %v2839
      %v2904 = vcvt.s32.f32 %v2840
      %v2905 = vcvt.s32.f32 %v2841
      %v2906 = vcvt.s32.f32 %v2842
      %v2907 = vcvt.s32.f32 %v2843
      %v2908 = vcvt.s32.f32 %v2844
      %v2909 = vcvt.s32.f32 %v2845
      %v2910 = vcvt.s32.f32 %v2846
      %v2911 = vcvt.s32.f32 %v2847
      %v2912 = vcvt.s32.f32 %v2848
      %v2913 = vcvt.s32.f32 %v2849
      %v2914 = vcvt.s32.f32 %v2850
      %v2915 = vcvt.s32.f32 %v2851
      %v2916 = vcvt.s32.f32 %v2852
      %v2917 = vcvt.s32.f32 %v2853
      %v2918 = vcvt.s32.f32 %v2854
      %v2919 = vcvt.s32.f32 %v2855
      %v2920 = vcvt.s32.f32 %v2856
      %v2921 = vcvt.s32.f32 %v2857
      %v2922 = vcvt.s32.f32 %v2858
      %v2923 = vcvt.s32.f32 %v2859
      %v2924 = vcvt.s32.f32 %v2860
      %v2925 = vcvt.s32.f32 %v2861
      %v2926 = vcvt.s32.f32 %v2862
      %v2927 = vcvt.s32.f32 %v2863
      %v2928 = vcvt.s32.f32 %v2864
      %v2929 = vcvt.s32.f32 %v2865
      %v2930 = vcvt.s32.f32 %v2866
      %v2931 = vcvt.s32.f32 %v2867
      %v2932 = vcvt.s32.f32 %v2868
      %v2933 = vcvt.s32.f32 %v2869
      %v2934 = vcvt.s32.f32 %v2870
      %v2935 = vcvt.s32.f32 %v2871
      %v2936 = vcvt.s32.f32 %v2872
      %v2937 = vcvt.s32.f32 %v2873
      %v2938 = vcvt.s32.f32 %v2874
      %v2939 = vcvt.s32.f32 %v2875
      %v2940 = vcvt.s32.f32 %v2876
      %v2941 = vadd.f32 %v2493, %v2877
      %v2942 = vadd.f32 %v2494, %v2878
      %v2943 = vadd.f32 %v2495, %v2879
      %v2944 = vadd.f32 %v2496, %v2880
      %v2945 = vadd.f32 %v2497, %v2881
      %v2946 = vadd.f32 %v2498, %v2882
      %v2947 = vadd.f32 %v2499, %v2883
      %v2948 = vadd.f32 %v2500, %v2884
      %v2949 = vadd.f32 %v2501, %v2885
      %v2950 = vadd.f32 %v2502, %v2886
      %v2951 = vadd.f32 %v2503, %v2887
      %v2952 = vadd.f32 %v2504, %v2888
      %v2953 = vadd.f32 %v2505, %v2889
      %v2954 = vadd.f32 %v2506, %v2890
      %v2955 = vadd.f32 %v2507, %v2891
      %v2956 = vadd.f32 %v2508, %v2892
      %v2957 = vadd.f32 %v2509, %v2893
      %v2958 = vadd.f32 %v2510, %v2894
      %v2959 = vadd.f32 %v2511, %v2895
      %v2960 = vadd.f32 %v2512, %v2896
      %v2961 = vadd.f32 %v2513, %v2897
      %v2962 = vadd.f32 %v2514, %v2898
      %v2963 = vadd.f32 %v2515, %v2899
      %v2964 = vadd.f32 %v2516, %v2900
      %v2965 = vadd.f32 %v2517, %v2901
      %v2966 = vadd.f32 %v2518, %v2902
      %v2967 = vadd.f32 %v2519, %v2903
      %v2968 = vadd.f32 %v2520, %v2904
      %v2969 = vadd.f32 %v2521, %v2905
      %v2970 = vadd.f32 %v2522, %v2906
      %v2971 = vadd.f32 %v2523, %v2907
      %v2972 = vadd.f32 %v2524, %v2908
      %v2973 = vadd.f32 %v2525, %v2909
      %v2974 = vadd.f32 %v2526, %v2910
      %v2975 = vadd.f32 %v2527, %v2911
      %v2976 = vadd.f32 %v2528, %v2912
      %v2977 = vadd.f32 %v2529, %v2913
      %v2978 = vadd.f32 %v2530, %v2914
      %v2979 = vadd.f32 %v2531, %v2915
      %v2980 = vadd.f32 %v2532, %v2916
      %v2981 = vadd.f32 %v2533, %v2917
      %v2982 = vadd.f32 %v2534, %v2918
      %v2983 = vadd.f32 %v2535, %v2919
      %v2984 = vadd.f32 %v2536, %v2920
      %v2985 = vadd.f32 %v2537, %v2921
      %v2986 = vadd.f32 %v2538, %v2922
      %v2987 = vadd.f32 %v2539, %v2923
      %v2988 = vadd.f32 %v2540, %v2924
      %v2989 = vadd.f32 %v2541, %v2925
      %v2990 = vadd.f32 %v2542, %v2926
      %v2991 = vadd.f32 %v2543, %v2927
      %v2992 = vadd.f32 %v2544, %v2928
      %v2993 = vadd.f32 %v2545, %v2929
      %v2994 = vadd.f32 %v2546, %v2930
      %v2995 = vadd.f32 %v2547, %v2931
      %v2996 = vadd.f32 %v2548, %v2932
      %v2997 = vadd.f32 %v2549, %v2933
      %v2998 = vadd.f32 %v2550, %v2934
      %v2999 = vadd.f32 %v2551, %v2935
      %v3000 = vadd.f32 %v2552, %v2936
      %v3001 = vadd.f32 %v2553, %v2937
      %v3002 = vadd.f32 %v2554, %v2938
      %v3003 = vadd.f32 %v2555, %v2939
      %v3004 = vadd.f32 %v2556, %v2940
      %3005 = vset.pattern.permute.xlu0 6
      %3006 = vperm.xlu0 %3005, %v251
      %v3007 = vpop.permute.xlu0 %3006
      %3008 = vset.pattern.permute.xlu0 6
      %3009 = vperm.xlu0 %3008, %v252
      %v3010 = vpop.permute.xlu0 %3009
      %3011 = vset.pattern.permute.xlu0 6
      %3012 = vperm.xlu0 %3011, %v253
      %v3013 = vpop.permute.xlu0 %3012
      %3014 = vset.pattern.permute.xlu0 6
      %3015 = vperm.xlu0 %3014, %v254
      %v3016 = vpop.permute.xlu0 %3015
      %3017 = vset.pattern.permute.xlu0 6
      %3018 = vperm.xlu0 %3017, %v255
      %v3019 = vpop.permute.xlu0 %3018
      %3020 = vset.pattern.permute.xlu0 6
      %3021 = vperm.xlu0 %3020, %v256
      %v3022 = vpop.permute.xlu0 %3021
      %3023 = vset.pattern.permute.xlu0 6
      %3024 = vperm.xlu0 %3023, %v257
      %v3025 = vpop.permute.xlu0 %3024
      %3026 = vset.pattern.permute.xlu0 6
      %3027 = vperm.xlu0 %3026, %v258
      %v3028 = vpop.permute.xlu0 %3027
      %3029 = vset.pattern.permute.xlu0 6
      %3030 = vperm.xlu0 %3029, %v259
      %v3031 = vpop.permute.xlu0 %3030
      %3032 = vset.pattern.permute.xlu0 6
      %3033 = vperm.xlu0 %3032, %v260
      %v3034 = vpop.permute.xlu0 %3033
      %3035 = vset.pattern.permute.xlu0 6
      %3036 = vperm.xlu0 %3035, %v261
      %v3037 = vpop.permute.xlu0 %3036
      %3038 = vset.pattern.permute.xlu0 6
      %3039 = vperm.xlu0 %3038, %v262
      %v3040 = vpop.permute.xlu0 %3039
      %3041 = vset.pattern.permute.xlu0 6
      %3042 = vperm.xlu0 %3041, %v263
      %v3043 = vpop.permute.xlu0 %3042
      %3044 = vset.pattern.permute.xlu0 6
      %3045 = vperm.xlu0 %3044, %v264
      %v3046 = vpop.permute.xlu0 %3045
      %3047 = vset.pattern.permute.xlu0 6
      %3048 = vperm.xlu0 %3047, %v265
      %v3049 = vpop.permute.xlu0 %3048
      %3050 = vset.pattern.permute.xlu0 6
      %3051 = vperm.xlu0 %3050, %v266
      %v3052 = vpop.permute.xlu0 %3051
      %3053 = vset.pattern.permute.xlu0 6
      %3054 = vperm.xlu0 %3053, %v267
      %v3055 = vpop.permute.xlu0 %3054
      %3056 = vset.pattern.permute.xlu0 6
      %3057 = vperm.xlu0 %3056, %v268
      %v3058 = vpop.permute.xlu0 %3057
      %3059 = vset.pattern.permute.xlu0 6
      %3060 = vperm.xlu0 %3059, %v269
      %v3061 = vpop.permute.xlu0 %3060
      %3062 = vset.pattern.permute.xlu0 6
      %3063 = vperm.xlu0 %3062, %v270
      %v3064 = vpop.permute.xlu0 %3063
      %3065 = vset.pattern.permute.xlu0 6
      %3066 = vperm.xlu0 %3065, %v271
      %v3067 = vpop.permute.xlu0 %3066
      %3068 = vset.pattern.permute.xlu0 6
      %3069 = vperm.xlu0 %3068, %v272
      %v3070 = vpop.permute.xlu0 %3069
      %3071 = vset.pattern.permute.xlu0 6
      %3072 = vperm.xlu0 %3071, %v273
      %v3073 = vpop.permute.xlu0 %3072
      %3074 = vset.pattern.permute.xlu0 6
      %3075 = vperm.xlu0 %3074, %v274
      %v3076 = vpop.permute.xlu0 %3075
      %3077 = vset.pattern.permute.xlu0 6
      %3078 = vperm.xlu0 %3077, %v275
      %v3079 = vpop.permute.xlu0 %3078
      %3080 = vset.pattern.permute.xlu0 6
      %3081 = vperm.xlu0 %3080, %v276
      %v3082 = vpop.permute.xlu0 %3081
      %3083 = vset.pattern.permute.xlu0 6
      %3084 = vperm.xlu0 %3083, %v277
      %v3085 = vpop.permute.xlu0 %3084
      %3086 = vset.pattern.permute.xlu0 6
      %3087 = vperm.xlu0 %3086, %v278
      %v3088 = vpop.permute.xlu0 %3087
      %3089 = vset.pattern.permute.xlu0 6
      %3090 = vperm.xlu0 %3089, %v279
      %v3091 = vpop.permute.xlu0 %3090
      %3092 = vset.pattern.permute.xlu0 6
      %3093 = vperm.xlu0 %3092, %v280
      %v3094 = vpop.permute.xlu0 %3093
      %3095 = vset.pattern.permute.xlu0 6
      %3096 = vperm.xlu0 %3095, %v281
      %v3097 = vpop.permute.xlu0 %3096
      %3098 = vset.pattern.permute.xlu0 6
      %3099 = vperm.xlu0 %3098, %v282
      %v3100 = vpop.permute.xlu0 %3099
      %3101 = vset.pattern.permute.xlu0 6
      %3102 = vperm.xlu0 %3101, %v283
      %v3103 = vpop.permute.xlu0 %3102
      %3104 = vset.pattern.permute.xlu0 6
      %3105 = vperm.xlu0 %3104, %v284
      %v3106 = vpop.permute.xlu0 %3105
      %3107 = vset.pattern.permute.xlu0 6
      %3108 = vperm.xlu0 %3107, %v285
      %v3109 = vpop.permute.xlu0 %3108
      %3110 = vset.pattern.permute.xlu0 6
      %3111 = vperm.xlu0 %3110, %v286
      %v3112 = vpop.permute.xlu0 %3111
      %3113 = vset.pattern.permute.xlu0 6
      %3114 = vperm.xlu0 %3113, %v287
      %v3115 = vpop.permute.xlu0 %3114
      %3116 = vset.pattern.permute.xlu0 6
      %3117 = vperm.xlu0 %3116, %v288
      %v3118 = vpop.permute.xlu0 %3117
      %3119 = vset.pattern.permute.xlu0 6
      %3120 = vperm.xlu0 %3119, %v289
      %v3121 = vpop.permute.xlu0 %3120
      %3122 = vset.pattern.permute.xlu0 6
      %3123 = vperm.xlu0 %3122, %v290
      %v3124 = vpop.permute.xlu0 %3123
      %3125 = vset.pattern.permute.xlu0 6
      %3126 = vperm.xlu0 %3125, %v291
      %v3127 = vpop.permute.xlu0 %3126
      %3128 = vset.pattern.permute.xlu0 6
      %3129 = vperm.xlu0 %3128, %v292
      %v3130 = vpop.permute.xlu0 %3129
      %3131 = vset.pattern.permute.xlu0 6
      %3132 = vperm.xlu0 %3131, %v293
      %v3133 = vpop.permute.xlu0 %3132
      %3134 = vset.pattern.permute.xlu0 6
      %3135 = vperm.xlu0 %3134, %v294
      %v3136 = vpop.permute.xlu0 %3135
      %3137 = vset.pattern.permute.xlu0 6
      %3138 = vperm.xlu0 %3137, %v295
      %v3139 = vpop.permute.xlu0 %3138
      %3140 = vset.pattern.permute.xlu0 6
      %3141 = vperm.xlu0 %3140, %v296
      %v3142 = vpop.permute.xlu0 %3141
      %3143 = vset.pattern.permute.xlu0 6
      %3144 = vperm.xlu0 %3143, %v297
      %v3145 = vpop.permute.xlu0 %3144
      %3146 = vset.pattern.permute.xlu0 6
      %3147 = vperm.xlu0 %3146, %v298
      %v3148 = vpop.permute.xlu0 %3147
      %3149 = vset.pattern.permute.xlu0 6
      %3150 = vperm.xlu0 %3149, %v299
      %v3151 = vpop.permute.xlu0 %3150
      %3152 = vset.pattern.permute.xlu0 6
      %3153 = vperm.xlu0 %3152, %v300
      %v3154 = vpop.permute.xlu0 %3153
      %3155 = vset.pattern.permute.xlu0 6
      %3156 = vperm.xlu0 %3155, %v301
      %v3157 = vpop.permute.xlu0 %3156
      %3158 = vset.pattern.permute.xlu0 6
      %3159 = vperm.xlu0 %3158, %v302
      %v3160 = vpop.permute.xlu0 %3159
      %3161 = vset.pattern.permute.xlu0 6
      %3162 = vperm.xlu0 %3161, %v303
      %v3163 = vpop.permute.xlu0 %3162
      %3164 = vset.pattern.permute.xlu0 6
      %3165 = vperm.xlu0 %3164, %v304
      %v3166 = vpop.permute.xlu0 %3165
      %3167 = vset.pattern.permute.xlu0 6
      %3168 = vperm.xlu0 %3167, %v305
      %v3169 = vpop.permute.xlu0 %3168
      %3170 = vset.pattern.permute.xlu0 6
      %3171 = vperm.xlu0 %3170, %v306
      %v3172 = vpop.permute.xlu0 %3171
      %3173 = vset.pattern.permute.xlu0 6
      %3174 = vperm.xlu0 %3173, %v307
      %v3175 = vpop.permute.xlu0 %3174
      %3176 = vset.pattern.permute.xlu0 6
      %3177 = vperm.xlu0 %3176, %v308
      %v3178 = vpop.permute.xlu0 %3177
      %3179 = vset.pattern.permute.xlu0 6
      %3180 = vperm.xlu0 %3179, %v309
      %v3181 = vpop.permute.xlu0 %3180
      %3182 = vset.pattern.permute.xlu0 6
      %3183 = vperm.xlu0 %3182, %v310
      %v3184 = vpop.permute.xlu0 %3183
      %3185 = vset.pattern.permute.xlu0 6
      %3186 = vperm.xlu0 %3185, %v311
      %v3187 = vpop.permute.xlu0 %3186
      %3188 = vset.pattern.permute.xlu0 6
      %3189 = vperm.xlu0 %3188, %v312
      %v3190 = vpop.permute.xlu0 %3189
      %3191 = vset.pattern.permute.xlu0 6
      %3192 = vperm.xlu0 %3191, %v313
      %v3193 = vpop.permute.xlu0 %3192
      %3194 = vset.pattern.permute.xlu0 6
      %3195 = vperm.xlu0 %3194, %v314
      %v3196 = vpop.permute.xlu0 %3195
      %vm3197 = vcmp.eq.s32.totalorder %v3007, %v380
      %vm3198 = vcmp.eq.s32.totalorder %v3010, %v380
      %vm3199 = vcmp.eq.s32.totalorder %v3013, %v380
      %vm3200 = vcmp.eq.s32.totalorder %v3016, %v380
      %vm3201 = vcmp.eq.s32.totalorder %v3019, %v380
      %vm3202 = vcmp.eq.s32.totalorder %v3022, %v380
      %vm3203 = vcmp.eq.s32.totalorder %v3025, %v380
      %vm3204 = vcmp.eq.s32.totalorder %v3028, %v380
      %vm3205 = vcmp.eq.s32.totalorder %v3031, %v380
      %vm3206 = vcmp.eq.s32.totalorder %v3034, %v380
      %vm3207 = vcmp.eq.s32.totalorder %v3037, %v380
      %vm3208 = vcmp.eq.s32.totalorder %v3040, %v380
      %vm3209 = vcmp.eq.s32.totalorder %v3043, %v380
      %vm3210 = vcmp.eq.s32.totalorder %v3046, %v380
      %vm3211 = vcmp.eq.s32.totalorder %v3049, %v380
      %vm3212 = vcmp.eq.s32.totalorder %v3052, %v380
      %vm3213 = vcmp.eq.s32.totalorder %v3055, %v380
      %vm3214 = vcmp.eq.s32.totalorder %v3058, %v380
      %vm3215 = vcmp.eq.s32.totalorder %v3061, %v380
      %vm3216 = vcmp.eq.s32.totalorder %v3064, %v380
      %vm3217 = vcmp.eq.s32.totalorder %v3067, %v380
      %vm3218 = vcmp.eq.s32.totalorder %v3070, %v380
      %vm3219 = vcmp.eq.s32.totalorder %v3073, %v380
      %vm3220 = vcmp.eq.s32.totalorder %v3076, %v380
      %vm3221 = vcmp.eq.s32.totalorder %v3079, %v380
      %vm3222 = vcmp.eq.s32.totalorder %v3082, %v380
      %vm3223 = vcmp.eq.s32.totalorder %v3085, %v380
      %vm3224 = vcmp.eq.s32.totalorder %v3088, %v380
      %vm3225 = vcmp.eq.s32.totalorder %v3091, %v380
      %vm3226 = vcmp.eq.s32.totalorder %v3094, %v380
      %vm3227 = vcmp.eq.s32.totalorder %v3097, %v380
      %vm3228 = vcmp.eq.s32.totalorder %v3100, %v380
      %vm3229 = vcmp.eq.s32.totalorder %v3103, %v380
      %vm3230 = vcmp.eq.s32.totalorder %v3106, %v380
      %vm3231 = vcmp.eq.s32.totalorder %v3109, %v380
      %vm3232 = vcmp.eq.s32.totalorder %v3112, %v380
      %vm3233 = vcmp.eq.s32.totalorder %v3115, %v380
      %vm3234 = vcmp.eq.s32.totalorder %v3118, %v380
      %vm3235 = vcmp.eq.s32.totalorder %v3121, %v380
      %vm3236 = vcmp.eq.s32.totalorder %v3124, %v380
      %vm3237 = vcmp.eq.s32.totalorder %v3127, %v380
      %vm3238 = vcmp.eq.s32.totalorder %v3130, %v380
      %vm3239 = vcmp.eq.s32.totalorder %v3133, %v380
      %vm3240 = vcmp.eq.s32.totalorder %v3136, %v380
      %vm3241 = vcmp.eq.s32.totalorder %v3139, %v380
      %vm3242 = vcmp.eq.s32.totalorder %v3142, %v380
      %vm3243 = vcmp.eq.s32.totalorder %v3145, %v380
      %vm3244 = vcmp.eq.s32.totalorder %v3148, %v380
      %vm3245 = vcmp.eq.s32.totalorder %v3151, %v380
      %vm3246 = vcmp.eq.s32.totalorder %v3154, %v380
      %vm3247 = vcmp.eq.s32.totalorder %v3157, %v380
      %vm3248 = vcmp.eq.s32.totalorder %v3160, %v380
      %vm3249 = vcmp.eq.s32.totalorder %v3163, %v380
      %vm3250 = vcmp.eq.s32.totalorder %v3166, %v380
      %vm3251 = vcmp.eq.s32.totalorder %v3169, %v380
      %vm3252 = vcmp.eq.s32.totalorder %v3172, %v380
      %vm3253 = vcmp.eq.s32.totalorder %v3175, %v380
      %vm3254 = vcmp.eq.s32.totalorder %v3178, %v380
      %vm3255 = vcmp.eq.s32.totalorder %v3181, %v380
      %vm3256 = vcmp.eq.s32.totalorder %v3184, %v380
      %vm3257 = vcmp.eq.s32.totalorder %v3187, %v380
      %vm3258 = vcmp.eq.s32.totalorder %v3190, %v380
      %vm3259 = vcmp.eq.s32.totalorder %v3193, %v380
      %vm3260 = vcmp.eq.s32.totalorder %v3196, %v380
      %v3261 = vsel %vm3197, 1, 0
      %v3262 = vsel %vm3198, 1, 0
      %v3263 = vsel %vm3199, 1, 0
      %v3264 = vsel %vm3200, 1, 0
      %v3265 = vsel %vm3201, 1, 0
      %v3266 = vsel %vm3202, 1, 0
      %v3267 = vsel %vm3203, 1, 0
      %v3268 = vsel %vm3204, 1, 0
      %v3269 = vsel %vm3205, 1, 0
      %v3270 = vsel %vm3206, 1, 0
      %v3271 = vsel %vm3207, 1, 0
      %v3272 = vsel %vm3208, 1, 0
      %v3273 = vsel %vm3209, 1, 0
      %v3274 = vsel %vm3210, 1, 0
      %v3275 = vsel %vm3211, 1, 0
      %v3276 = vsel %vm3212, 1, 0
      %v3277 = vsel %vm3213, 1, 0
      %v3278 = vsel %vm3214, 1, 0
      %v3279 = vsel %vm3215, 1, 0
      %v3280 = vsel %vm3216, 1, 0
      %v3281 = vsel %vm3217, 1, 0
      %v3282 = vsel %vm3218, 1, 0
      %v3283 = vsel %vm3219, 1, 0
      %v3284 = vsel %vm3220, 1, 0
      %v3285 = vsel %vm3221, 1, 0
      %v3286 = vsel %vm3222, 1, 0
      %v3287 = vsel %vm3223, 1, 0
      %v3288 = vsel %vm3224, 1, 0
      %v3289 = vsel %vm3225, 1, 0
      %v3290 = vsel %vm3226, 1, 0
      %v3291 = vsel %vm3227, 1, 0
      %v3292 = vsel %vm3228, 1, 0
      %v3293 = vsel %vm3229, 1, 0
      %v3294 = vsel %vm3230, 1, 0
      %v3295 = vsel %vm3231, 1, 0
      %v3296 = vsel %vm3232, 1, 0
      %v3297 = vsel %vm3233, 1, 0
      %v3298 = vsel %vm3234, 1, 0
      %v3299 = vsel %vm3235, 1, 0
      %v3300 = vsel %vm3236, 1, 0
      %v3301 = vsel %vm3237, 1, 0
      %v3302 = vsel %vm3238, 1, 0
      %v3303 = vsel %vm3239, 1, 0
      %v3304 = vsel %vm3240, 1, 0
      %v3305 = vsel %vm3241, 1, 0
      %v3306 = vsel %vm3242, 1, 0
      %v3307 = vsel %vm3243, 1, 0
      %v3308 = vsel %vm3244, 1, 0
      %v3309 = vsel %vm3245, 1, 0
      %v3310 = vsel %vm3246, 1, 0
      %v3311 = vsel %vm3247, 1, 0
      %v3312 = vsel %vm3248, 1, 0
      %v3313 = vsel %vm3249, 1, 0
      %v3314 = vsel %vm3250, 1, 0
      %v3315 = vsel %vm3251, 1, 0
      %v3316 = vsel %vm3252, 1, 0
      %v3317 = vsel %vm3253, 1, 0
      %v3318 = vsel %vm3254, 1, 0
      %v3319 = vsel %vm3255, 1, 0
      %v3320 = vsel %vm3256, 1, 0
      %v3321 = vsel %vm3257, 1, 0
      %v3322 = vsel %vm3258, 1, 0
      %v3323 = vsel %vm3259, 1, 0
      %v3324 = vsel %vm3260, 1, 0
      %v3325 = vcvt.s32.f32 %v3261
      %v3326 = vcvt.s32.f32 %v3262
      %v3327 = vcvt.s32.f32 %v3263
      %v3328 = vcvt.s32.f32 %v3264
      %v3329 = vcvt.s32.f32 %v3265
      %v3330 = vcvt.s32.f32 %v3266
      %v3331 = vcvt.s32.f32 %v3267
      %v3332 = vcvt.s32.f32 %v3268
      %v3333 = vcvt.s32.f32 %v3269
      %v3334 = vcvt.s32.f32 %v3270
      %v3335 = vcvt.s32.f32 %v3271
      %v3336 = vcvt.s32.f32 %v3272
      %v3337 = vcvt.s32.f32 %v3273
      %v3338 = vcvt.s32.f32 %v3274
      %v3339 = vcvt.s32.f32 %v3275
      %v3340 = vcvt.s32.f32 %v3276
      %v3341 = vcvt.s32.f32 %v3277
      %v3342 = vcvt.s32.f32 %v3278
      %v3343 = vcvt.s32.f32 %v3279
      %v3344 = vcvt.s32.f32 %v3280
      %v3345 = vcvt.s32.f32 %v3281
      %v3346 = vcvt.s32.f32 %v3282
      %v3347 = vcvt.s32.f32 %v3283
      %v3348 = vcvt.s32.f32 %v3284
      %v3349 = vcvt.s32.f32 %v3285
      %v3350 = vcvt.s32.f32 %v3286
      %v3351 = vcvt.s32.f32 %v3287
      %v3352 = vcvt.s32.f32 %v3288
      %v3353 = vcvt.s32.f32 %v3289
      %v3354 = vcvt.s32.f32 %v3290
      %v3355 = vcvt.s32.f32 %v3291
      %v3356 = vcvt.s32.f32 %v3292
      %v3357 = vcvt.s32.f32 %v3293
      %v3358 = vcvt.s32.f32 %v3294
      %v3359 = vcvt.s32.f32 %v3295
      %v3360 = vcvt.s32.f32 %v3296
      %v3361 = vcvt.s32.f32 %v3297
      %v3362 = vcvt.s32.f32 %v3298
      %v3363 = vcvt.s32.f32 %v3299
      %v3364 = vcvt.s32.f32 %v3300
      %v3365 = vcvt.s32.f32 %v3301
      %v3366 = vcvt.s32.f32 %v3302
      %v3367 = vcvt.s32.f32 %v3303
      %v3368 = vcvt.s32.f32 %v3304
      %v3369 = vcvt.s32.f32 %v3305
      %v3370 = vcvt.s32.f32 %v3306
      %v3371 = vcvt.s32.f32 %v3307
      %v3372 = vcvt.s32.f32 %v3308
      %v3373 = vcvt.s32.f32 %v3309
      %v3374 = vcvt.s32.f32 %v3310
      %v3375 = vcvt.s32.f32 %v3311
      %v3376 = vcvt.s32.f32 %v3312
      %v3377 = vcvt.s32.f32 %v3313
      %v3378 = vcvt.s32.f32 %v3314
      %v3379 = vcvt.s32.f32 %v3315
      %v3380 = vcvt.s32.f32 %v3316
      %v3381 = vcvt.s32.f32 %v3317
      %v3382 = vcvt.s32.f32 %v3318
      %v3383 = vcvt.s32.f32 %v3319
      %v3384 = vcvt.s32.f32 %v3320
      %v3385 = vcvt.s32.f32 %v3321
      %v3386 = vcvt.s32.f32 %v3322
      %v3387 = vcvt.s32.f32 %v3323
      %v3388 = vcvt.s32.f32 %v3324
      %v3389 = vadd.f32 %v2941, %v3325
      %v3390 = vadd.f32 %v2942, %v3326
      %v3391 = vadd.f32 %v2943, %v3327
      %v3392 = vadd.f32 %v2944, %v3328
      %v3393 = vadd.f32 %v2945, %v3329
      %v3394 = vadd.f32 %v2946, %v3330
      %v3395 = vadd.f32 %v2947, %v3331
      %v3396 = vadd.f32 %v2948, %v3332
      %v3397 = vadd.f32 %v2949, %v3333
      %v3398 = vadd.f32 %v2950, %v3334
      %v3399 = vadd.f32 %v2951, %v3335
      %v3400 = vadd.f32 %v2952, %v3336
      %v3401 = vadd.f32 %v2953, %v3337
      %v3402 = vadd.f32 %v2954, %v3338
      %v3403 = vadd.f32 %v2955, %v3339
      %v3404 = vadd.f32 %v2956, %v3340
      %v3405 = vadd.f32 %v2957, %v3341
      %v3406 = vadd.f32 %v2958, %v3342
      %v3407 = vadd.f32 %v2959, %v3343
      %v3408 = vadd.f32 %v2960, %v3344
      %v3409 = vadd.f32 %v2961, %v3345
      %v3410 = vadd.f32 %v2962, %v3346
      %v3411 = vadd.f32 %v2963, %v3347
      %v3412 = vadd.f32 %v2964, %v3348
      %v3413 = vadd.f32 %v2965, %v3349
      %v3414 = vadd.f32 %v2966, %v3350
      %v3415 = vadd.f32 %v2967, %v3351
      %v3416 = vadd.f32 %v2968, %v3352
      %v3417 = vadd.f32 %v2969, %v3353
      %v3418 = vadd.f32 %v2970, %v3354
      %v3419 = vadd.f32 %v2971, %v3355
      %v3420 = vadd.f32 %v2972, %v3356
      %v3421 = vadd.f32 %v2973, %v3357
      %v3422 = vadd.f32 %v2974, %v3358
      %v3423 = vadd.f32 %v2975, %v3359
      %v3424 = vadd.f32 %v2976, %v3360
      %v3425 = vadd.f32 %v2977, %v3361
      %v3426 = vadd.f32 %v2978, %v3362
      %v3427 = vadd.f32 %v2979, %v3363
      %v3428 = vadd.f32 %v2980, %v3364
      %v3429 = vadd.f32 %v2981, %v3365
      %v3430 = vadd.f32 %v2982, %v3366
      %v3431 = vadd.f32 %v2983, %v3367
      %v3432 = vadd.f32 %v2984, %v3368
      %v3433 = vadd.f32 %v2985, %v3369
      %v3434 = vadd.f32 %v2986, %v3370
      %v3435 = vadd.f32 %v2987, %v3371
      %v3436 = vadd.f32 %v2988, %v3372
      %v3437 = vadd.f32 %v2989, %v3373
      %v3438 = vadd.f32 %v2990, %v3374
      %v3439 = vadd.f32 %v2991, %v3375
      %v3440 = vadd.f32 %v2992, %v3376
      %v3441 = vadd.f32 %v2993, %v3377
      %v3442 = vadd.f32 %v2994, %v3378
      %v3443 = vadd.f32 %v2995, %v3379
      %v3444 = vadd.f32 %v2996, %v3380
      %v3445 = vadd.f32 %v2997, %v3381
      %v3446 = vadd.f32 %v2998, %v3382
      %v3447 = vadd.f32 %v2999, %v3383
      %v3448 = vadd.f32 %v3000, %v3384
      %v3449 = vadd.f32 %v3001, %v3385
      %v3450 = vadd.f32 %v3002, %v3386
      %v3451 = vadd.f32 %v3003, %v3387
      %v3452 = vadd.f32 %v3004, %v3388
      %3453 = vset.pattern.permute.xlu0 7
      %3454 = vperm.xlu0 %3453, %v251
      %v3455 = vpop.permute.xlu0 %3454
      %3456 = vset.pattern.permute.xlu0 7
      %3457 = vperm.xlu0 %3456, %v252
      %v3458 = vpop.permute.xlu0 %3457
      %3459 = vset.pattern.permute.xlu0 7
      %3460 = vperm.xlu0 %3459, %v253
      %v3461 = vpop.permute.xlu0 %3460
      %3462 = vset.pattern.permute.xlu0 7
      %3463 = vperm.xlu0 %3462, %v254
      %v3464 = vpop.permute.xlu0 %3463
      %3465 = vset.pattern.permute.xlu0 7
      %3466 = vperm.xlu0 %3465, %v255
      %v3467 = vpop.permute.xlu0 %3466
      %3468 = vset.pattern.permute.xlu0 7
      %3469 = vperm.xlu0 %3468, %v256
      %v3470 = vpop.permute.xlu0 %3469
      %3471 = vset.pattern.permute.xlu0 7
      %3472 = vperm.xlu0 %3471, %v257
      %v3473 = vpop.permute.xlu0 %3472
      %3474 = vset.pattern.permute.xlu0 7
      %3475 = vperm.xlu0 %3474, %v258
      %v3476 = vpop.permute.xlu0 %3475
      %3477 = vset.pattern.permute.xlu0 7
      %3478 = vperm.xlu0 %3477, %v259
      %v3479 = vpop.permute.xlu0 %3478
      %3480 = vset.pattern.permute.xlu0 7
      %3481 = vperm.xlu0 %3480, %v260
      %v3482 = vpop.permute.xlu0 %3481
      %3483 = vset.pattern.permute.xlu0 7
      %3484 = vperm.xlu0 %3483, %v261
      %v3485 = vpop.permute.xlu0 %3484
      %3486 = vset.pattern.permute.xlu0 7
      %3487 = vperm.xlu0 %3486, %v262
      %v3488 = vpop.permute.xlu0 %3487
      %3489 = vset.pattern.permute.xlu0 7
      %3490 = vperm.xlu0 %3489, %v263
      %v3491 = vpop.permute.xlu0 %3490
      %3492 = vset.pattern.permute.xlu0 7
      %3493 = vperm.xlu0 %3492, %v264
      %v3494 = vpop.permute.xlu0 %3493
      %3495 = vset.pattern.permute.xlu0 7
      %3496 = vperm.xlu0 %3495, %v265
      %v3497 = vpop.permute.xlu0 %3496
      %3498 = vset.pattern.permute.xlu0 7
      %3499 = vperm.xlu0 %3498, %v266
      %v3500 = vpop.permute.xlu0 %3499
      %3501 = vset.pattern.permute.xlu0 7
      %3502 = vperm.xlu0 %3501, %v267
      %v3503 = vpop.permute.xlu0 %3502
      %3504 = vset.pattern.permute.xlu0 7
      %3505 = vperm.xlu0 %3504, %v268
      %v3506 = vpop.permute.xlu0 %3505
      %3507 = vset.pattern.permute.xlu0 7
      %3508 = vperm.xlu0 %3507, %v269
      %v3509 = vpop.permute.xlu0 %3508
      %3510 = vset.pattern.permute.xlu0 7
      %3511 = vperm.xlu0 %3510, %v270
      %v3512 = vpop.permute.xlu0 %3511
      %3513 = vset.pattern.permute.xlu0 7
      %3514 = vperm.xlu0 %3513, %v271
      %v3515 = vpop.permute.xlu0 %3514
      %3516 = vset.pattern.permute.xlu0 7
      %3517 = vperm.xlu0 %3516, %v272
      %v3518 = vpop.permute.xlu0 %3517
      %3519 = vset.pattern.permute.xlu0 7
      %3520 = vperm.xlu0 %3519, %v273
      %v3521 = vpop.permute.xlu0 %3520
      %3522 = vset.pattern.permute.xlu0 7
      %3523 = vperm.xlu0 %3522, %v274
      %v3524 = vpop.permute.xlu0 %3523
      %3525 = vset.pattern.permute.xlu0 7
      %3526 = vperm.xlu0 %3525, %v275
      %v3527 = vpop.permute.xlu0 %3526
      %3528 = vset.pattern.permute.xlu0 7
      %3529 = vperm.xlu0 %3528, %v276
      %v3530 = vpop.permute.xlu0 %3529
      %3531 = vset.pattern.permute.xlu0 7
      %3532 = vperm.xlu0 %3531, %v277
      %v3533 = vpop.permute.xlu0 %3532
      %3534 = vset.pattern.permute.xlu0 7
      %3535 = vperm.xlu0 %3534, %v278
      %v3536 = vpop.permute.xlu0 %3535
      %3537 = vset.pattern.permute.xlu0 7
      %3538 = vperm.xlu0 %3537, %v279
      %v3539 = vpop.permute.xlu0 %3538
      %3540 = vset.pattern.permute.xlu0 7
      %3541 = vperm.xlu0 %3540, %v280
      %v3542 = vpop.permute.xlu0 %3541
      %3543 = vset.pattern.permute.xlu0 7
      %3544 = vperm.xlu0 %3543, %v281
      %v3545 = vpop.permute.xlu0 %3544
      %3546 = vset.pattern.permute.xlu0 7
      %3547 = vperm.xlu0 %3546, %v282
      %v3548 = vpop.permute.xlu0 %3547
      %3549 = vset.pattern.permute.xlu0 7
      %3550 = vperm.xlu0 %3549, %v283
      %v3551 = vpop.permute.xlu0 %3550
      %3552 = vset.pattern.permute.xlu0 7
      %3553 = vperm.xlu0 %3552, %v284
      %v3554 = vpop.permute.xlu0 %3553
      %3555 = vset.pattern.permute.xlu0 7
      %3556 = vperm.xlu0 %3555, %v285
      %v3557 = vpop.permute.xlu0 %3556
      %3558 = vset.pattern.permute.xlu0 7
      %3559 = vperm.xlu0 %3558, %v286
      %v3560 = vpop.permute.xlu0 %3559
      %3561 = vset.pattern.permute.xlu0 7
      %3562 = vperm.xlu0 %3561, %v287
      %v3563 = vpop.permute.xlu0 %3562
      %3564 = vset.pattern.permute.xlu0 7
      %3565 = vperm.xlu0 %3564, %v288
      %v3566 = vpop.permute.xlu0 %3565
      %3567 = vset.pattern.permute.xlu0 7
      %3568 = vperm.xlu0 %3567, %v289
      %v3569 = vpop.permute.xlu0 %3568
      %3570 = vset.pattern.permute.xlu0 7
      %3571 = vperm.xlu0 %3570, %v290
      %v3572 = vpop.permute.xlu0 %3571
      %3573 = vset.pattern.permute.xlu0 7
      %3574 = vperm.xlu0 %3573, %v291
      %v3575 = vpop.permute.xlu0 %3574
      %3576 = vset.pattern.permute.xlu0 7
      %3577 = vperm.xlu0 %3576, %v292
      %v3578 = vpop.permute.xlu0 %3577
      %3579 = vset.pattern.permute.xlu0 7
      %3580 = vperm.xlu0 %3579, %v293
      %v3581 = vpop.permute.xlu0 %3580
      %3582 = vset.pattern.permute.xlu0 7
      %3583 = vperm.xlu0 %3582, %v294
      %v3584 = vpop.permute.xlu0 %3583
      %3585 = vset.pattern.permute.xlu0 7
      %3586 = vperm.xlu0 %3585, %v295
      %v3587 = vpop.permute.xlu0 %3586
      %3588 = vset.pattern.permute.xlu0 7
      %3589 = vperm.xlu0 %3588, %v296
      %v3590 = vpop.permute.xlu0 %3589
      %3591 = vset.pattern.permute.xlu0 7
      %3592 = vperm.xlu0 %3591, %v297
      %v3593 = vpop.permute.xlu0 %3592
      %3594 = vset.pattern.permute.xlu0 7
      %3595 = vperm.xlu0 %3594, %v298
      %v3596 = vpop.permute.xlu0 %3595
      %3597 = vset.pattern.permute.xlu0 7
      %3598 = vperm.xlu0 %3597, %v299
      %v3599 = vpop.permute.xlu0 %3598
      %3600 = vset.pattern.permute.xlu0 7
      %3601 = vperm.xlu0 %3600, %v300
      %v3602 = vpop.permute.xlu0 %3601
      %3603 = vset.pattern.permute.xlu0 7
      %3604 = vperm.xlu0 %3603, %v301
      %v3605 = vpop.permute.xlu0 %3604
      %3606 = vset.pattern.permute.xlu0 7
      %3607 = vperm.xlu0 %3606, %v302
      %v3608 = vpop.permute.xlu0 %3607
      %3609 = vset.pattern.permute.xlu0 7
      %3610 = vperm.xlu0 %3609, %v303
      %v3611 = vpop.permute.xlu0 %3610
      %3612 = vset.pattern.permute.xlu0 7
      %3613 = vperm.xlu0 %3612, %v304
      %v3614 = vpop.permute.xlu0 %3613
      %3615 = vset.pattern.permute.xlu0 7
      %3616 = vperm.xlu0 %3615, %v305
      %v3617 = vpop.permute.xlu0 %3616
      %3618 = vset.pattern.permute.xlu0 7
      %3619 = vperm.xlu0 %3618, %v306
      %v3620 = vpop.permute.xlu0 %3619
      %3621 = vset.pattern.permute.xlu0 7
      %3622 = vperm.xlu0 %3621, %v307
      %v3623 = vpop.permute.xlu0 %3622
      %3624 = vset.pattern.permute.xlu0 7
      %3625 = vperm.xlu0 %3624, %v308
      %v3626 = vpop.permute.xlu0 %3625
      %3627 = vset.pattern.permute.xlu0 7
      %3628 = vperm.xlu0 %3627, %v309
      %v3629 = vpop.permute.xlu0 %3628
      %3630 = vset.pattern.permute.xlu0 7
      %3631 = vperm.xlu0 %3630, %v310
      %v3632 = vpop.permute.xlu0 %3631
      %3633 = vset.pattern.permute.xlu0 7
      %3634 = vperm.xlu0 %3633, %v311
      %v3635 = vpop.permute.xlu0 %3634
      %3636 = vset.pattern.permute.xlu0 7
      %3637 = vperm.xlu0 %3636, %v312
      %v3638 = vpop.permute.xlu0 %3637
      %3639 = vset.pattern.permute.xlu0 7
      %3640 = vperm.xlu0 %3639, %v313
      %v3641 = vpop.permute.xlu0 %3640
      %3642 = vset.pattern.permute.xlu0 7
      %3643 = vperm.xlu0 %3642, %v314
      %v3644 = vpop.permute.xlu0 %3643
      %vm3645 = vcmp.eq.s32.totalorder %v3455, %v380
      %vm3646 = vcmp.eq.s32.totalorder %v3458, %v380
      %vm3647 = vcmp.eq.s32.totalorder %v3461, %v380
      %vm3648 = vcmp.eq.s32.totalorder %v3464, %v380
      %vm3649 = vcmp.eq.s32.totalorder %v3467, %v380
      %vm3650 = vcmp.eq.s32.totalorder %v3470, %v380
      %vm3651 = vcmp.eq.s32.totalorder %v3473, %v380
      %vm3652 = vcmp.eq.s32.totalorder %v3476, %v380
      %vm3653 = vcmp.eq.s32.totalorder %v3479, %v380
      %vm3654 = vcmp.eq.s32.totalorder %v3482, %v380
      %vm3655 = vcmp.eq.s32.totalorder %v3485, %v380
      %vm3656 = vcmp.eq.s32.totalorder %v3488, %v380
      %vm3657 = vcmp.eq.s32.totalorder %v3491, %v380
      %vm3658 = vcmp.eq.s32.totalorder %v3494, %v380
      %vm3659 = vcmp.eq.s32.totalorder %v3497, %v380
      %vm3660 = vcmp.eq.s32.totalorder %v3500, %v380
      %vm3661 = vcmp.eq.s32.totalorder %v3503, %v380
      %vm3662 = vcmp.eq.s32.totalorder %v3506, %v380
      %vm3663 = vcmp.eq.s32.totalorder %v3509, %v380
      %vm3664 = vcmp.eq.s32.totalorder %v3512, %v380
      %vm3665 = vcmp.eq.s32.totalorder %v3515, %v380
      %vm3666 = vcmp.eq.s32.totalorder %v3518, %v380
      %vm3667 = vcmp.eq.s32.totalorder %v3521, %v380
      %vm3668 = vcmp.eq.s32.totalorder %v3524, %v380
      %vm3669 = vcmp.eq.s32.totalorder %v3527, %v380
      %vm3670 = vcmp.eq.s32.totalorder %v3530, %v380
      %vm3671 = vcmp.eq.s32.totalorder %v3533, %v380
      %vm3672 = vcmp.eq.s32.totalorder %v3536, %v380
      %vm3673 = vcmp.eq.s32.totalorder %v3539, %v380
      %vm3674 = vcmp.eq.s32.totalorder %v3542, %v380
      %vm3675 = vcmp.eq.s32.totalorder %v3545, %v380
      %vm3676 = vcmp.eq.s32.totalorder %v3548, %v380
      %vm3677 = vcmp.eq.s32.totalorder %v3551, %v380
      %vm3678 = vcmp.eq.s32.totalorder %v3554, %v380
      %vm3679 = vcmp.eq.s32.totalorder %v3557, %v380
      %vm3680 = vcmp.eq.s32.totalorder %v3560, %v380
      %vm3681 = vcmp.eq.s32.totalorder %v3563, %v380
      %vm3682 = vcmp.eq.s32.totalorder %v3566, %v380
      %vm3683 = vcmp.eq.s32.totalorder %v3569, %v380
      %vm3684 = vcmp.eq.s32.totalorder %v3572, %v380
      %vm3685 = vcmp.eq.s32.totalorder %v3575, %v380
      %vm3686 = vcmp.eq.s32.totalorder %v3578, %v380
      %vm3687 = vcmp.eq.s32.totalorder %v3581, %v380
      %vm3688 = vcmp.eq.s32.totalorder %v3584, %v380
      %vm3689 = vcmp.eq.s32.totalorder %v3587, %v380
      %vm3690 = vcmp.eq.s32.totalorder %v3590, %v380
      %vm3691 = vcmp.eq.s32.totalorder %v3593, %v380
      %vm3692 = vcmp.eq.s32.totalorder %v3596, %v380
      %vm3693 = vcmp.eq.s32.totalorder %v3599, %v380
      %vm3694 = vcmp.eq.s32.totalorder %v3602, %v380
      %vm3695 = vcmp.eq.s32.totalorder %v3605, %v380
      %vm3696 = vcmp.eq.s32.totalorder %v3608, %v380
      %vm3697 = vcmp.eq.s32.totalorder %v3611, %v380
      %vm3698 = vcmp.eq.s32.totalorder %v3614, %v380
      %vm3699 = vcmp.eq.s32.totalorder %v3617, %v380
      %vm3700 = vcmp.eq.s32.totalorder %v3620, %v380
      %vm3701 = vcmp.eq.s32.totalorder %v3623, %v380
      %vm3702 = vcmp.eq.s32.totalorder %v3626, %v380
      %vm3703 = vcmp.eq.s32.totalorder %v3629, %v380
      %vm3704 = vcmp.eq.s32.totalorder %v3632, %v380
      %vm3705 = vcmp.eq.s32.totalorder %v3635, %v380
      %vm3706 = vcmp.eq.s32.totalorder %v3638, %v380
      %vm3707 = vcmp.eq.s32.totalorder %v3641, %v380
      %vm3708 = vcmp.eq.s32.totalorder %v3644, %v380
      %v3709 = vsel %vm3645, 1, 0
      %v3710 = vsel %vm3646, 1, 0
      %v3711 = vsel %vm3647, 1, 0
      %v3712 = vsel %vm3648, 1, 0
      %v3713 = vsel %vm3649, 1, 0
      %v3714 = vsel %vm3650, 1, 0
      %v3715 = vsel %vm3651, 1, 0
      %v3716 = vsel %vm3652, 1, 0
      %v3717 = vsel %vm3653, 1, 0
      %v3718 = vsel %vm3654, 1, 0
      %v3719 = vsel %vm3655, 1, 0
      %v3720 = vsel %vm3656, 1, 0
      %v3721 = vsel %vm3657, 1, 0
      %v3722 = vsel %vm3658, 1, 0
      %v3723 = vsel %vm3659, 1, 0
      %v3724 = vsel %vm3660, 1, 0
      %v3725 = vsel %vm3661, 1, 0
      %v3726 = vsel %vm3662, 1, 0
      %v3727 = vsel %vm3663, 1, 0
      %v3728 = vsel %vm3664, 1, 0
      %v3729 = vsel %vm3665, 1, 0
      %v3730 = vsel %vm3666, 1, 0
      %v3731 = vsel %vm3667, 1, 0
      %v3732 = vsel %vm3668, 1, 0
      %v3733 = vsel %vm3669, 1, 0
      %v3734 = vsel %vm3670, 1, 0
      %v3735 = vsel %vm3671, 1, 0
      %v3736 = vsel %vm3672, 1, 0
      %v3737 = vsel %vm3673, 1, 0
      %v3738 = vsel %vm3674, 1, 0
      %v3739 = vsel %vm3675, 1, 0
      %v3740 = vsel %vm3676, 1, 0
      %v3741 = vsel %vm3677, 1, 0
      %v3742 = vsel %vm3678, 1, 0
      %v3743 = vsel %vm3679, 1, 0
      %v3744 = vsel %vm3680, 1, 0
      %v3745 = vsel %vm3681, 1, 0
      %v3746 = vsel %vm3682, 1, 0
      %v3747 = vsel %vm3683, 1, 0
      %v3748 = vsel %vm3684, 1, 0
      %v3749 = vsel %vm3685, 1, 0
      %v3750 = vsel %vm3686, 1, 0
      %v3751 = vsel %vm3687, 1, 0
      %v3752 = vsel %vm3688, 1, 0
      %v3753 = vsel %vm3689, 1, 0
      %v3754 = vsel %vm3690, 1, 0
      %v3755 = vsel %vm3691, 1, 0
      %v3756 = vsel %vm3692, 1, 0
      %v3757 = vsel %vm3693, 1, 0
      %v3758 = vsel %vm3694, 1, 0
      %v3759 = vsel %vm3695, 1, 0
      %v3760 = vsel %vm3696, 1, 0
      %v3761 = vsel %vm3697, 1, 0
      %v3762 = vsel %vm3698, 1, 0
      %v3763 = vsel %vm3699, 1, 0
      %v3764 = vsel %vm3700, 1, 0
      %v3765 = vsel %vm3701, 1, 0
      %v3766 = vsel %vm3702, 1, 0
      %v3767 = vsel %vm3703, 1, 0
      %v3768 = vsel %vm3704, 1, 0
      %v3769 = vsel %vm3705, 1, 0
      %v3770 = vsel %vm3706, 1, 0
      %v3771 = vsel %vm3707, 1, 0
      %v3772 = vsel %vm3708, 1, 0
      %v3773 = vcvt.s32.f32 %v3709
      %v3774 = vcvt.s32.f32 %v3710
      %v3775 = vcvt.s32.f32 %v3711
      %v3776 = vcvt.s32.f32 %v3712
      %v3777 = vcvt.s32.f32 %v3713
      %v3778 = vcvt.s32.f32 %v3714
      %v3779 = vcvt.s32.f32 %v3715
      %v3780 = vcvt.s32.f32 %v3716
      %v3781 = vcvt.s32.f32 %v3717
      %v3782 = vcvt.s32.f32 %v3718
      %v3783 = vcvt.s32.f32 %v3719
      %v3784 = vcvt.s32.f32 %v3720
      %v3785 = vcvt.s32.f32 %v3721
      %v3786 = vcvt.s32.f32 %v3722
      %v3787 = vcvt.s32.f32 %v3723
      %v3788 = vcvt.s32.f32 %v3724
      %v3789 = vcvt.s32.f32 %v3725
      %v3790 = vcvt.s32.f32 %v3726
      %v3791 = vcvt.s32.f32 %v3727
      %v3792 = vcvt.s32.f32 %v3728
      %v3793 = vcvt.s32.f32 %v3729
      %v3794 = vcvt.s32.f32 %v3730
      %v3795 = vcvt.s32.f32 %v3731
      %v3796 = vcvt.s32.f32 %v3732
      %v3797 = vcvt.s32.f32 %v3733
      %v3798 = vcvt.s32.f32 %v3734
      %v3799 = vcvt.s32.f32 %v3735
      %v3800 = vcvt.s32.f32 %v3736
      %v3801 = vcvt.s32.f32 %v3737
      %v3802 = vcvt.s32.f32 %v3738
      %v3803 = vcvt.s32.f32 %v3739
      %v3804 = vcvt.s32.f32 %v3740
      %v3805 = vcvt.s32.f32 %v3741
      %v3806 = vcvt.s32.f32 %v3742
      %v3807 = vcvt.s32.f32 %v3743
      %v3808 = vcvt.s32.f32 %v3744
      %v3809 = vcvt.s32.f32 %v3745
      %v3810 = vcvt.s32.f32 %v3746
      %v3811 = vcvt.s32.f32 %v3747
      %v3812 = vcvt.s32.f32 %v3748
      %v3813 = vcvt.s32.f32 %v3749
      %v3814 = vcvt.s32.f32 %v3750
      %v3815 = vcvt.s32.f32 %v3751
      %v3816 = vcvt.s32.f32 %v3752
      %v3817 = vcvt.s32.f32 %v3753
      %v3818 = vcvt.s32.f32 %v3754
      %v3819 = vcvt.s32.f32 %v3755
      %v3820 = vcvt.s32.f32 %v3756
      %v3821 = vcvt.s32.f32 %v3757
      %v3822 = vcvt.s32.f32 %v3758
      %v3823 = vcvt.s32.f32 %v3759
      %v3824 = vcvt.s32.f32 %v3760
      %v3825 = vcvt.s32.f32 %v3761
      %v3826 = vcvt.s32.f32 %v3762
      %v3827 = vcvt.s32.f32 %v3763
      %v3828 = vcvt.s32.f32 %v3764
      %v3829 = vcvt.s32.f32 %v3765
      %v3830 = vcvt.s32.f32 %v3766
      %v3831 = vcvt.s32.f32 %v3767
      %v3832 = vcvt.s32.f32 %v3768
      %v3833 = vcvt.s32.f32 %v3769
      %v3834 = vcvt.s32.f32 %v3770
      %v3835 = vcvt.s32.f32 %v3771
      %v3836 = vcvt.s32.f32 %v3772
      %v3837 = vadd.f32 %v3389, %v3773
      %v3838 = vadd.f32 %v3390, %v3774
      %v3839 = vadd.f32 %v3391, %v3775
      %v3840 = vadd.f32 %v3392, %v3776
      %v3841 = vadd.f32 %v3393, %v3777
      %v3842 = vadd.f32 %v3394, %v3778
      %v3843 = vadd.f32 %v3395, %v3779
      %v3844 = vadd.f32 %v3396, %v3780
      %v3845 = vadd.f32 %v3397, %v3781
      %v3846 = vadd.f32 %v3398, %v3782
      %v3847 = vadd.f32 %v3399, %v3783
      %v3848 = vadd.f32 %v3400, %v3784
      %v3849 = vadd.f32 %v3401, %v3785
      %v3850 = vadd.f32 %v3402, %v3786
      %v3851 = vadd.f32 %v3403, %v3787
      %v3852 = vadd.f32 %v3404, %v3788
      %v3853 = vadd.f32 %v3405, %v3789
      %v3854 = vadd.f32 %v3406, %v3790
      %v3855 = vadd.f32 %v3407, %v3791
      %v3856 = vadd.f32 %v3408, %v3792
      %v3857 = vadd.f32 %v3409, %v3793
      %v3858 = vadd.f32 %v3410, %v3794
      %v3859 = vadd.f32 %v3411, %v3795
      %v3860 = vadd.f32 %v3412, %v3796
      %v3861 = vadd.f32 %v3413, %v3797
      %v3862 = vadd.f32 %v3414, %v3798
      %v3863 = vadd.f32 %v3415, %v3799
      %v3864 = vadd.f32 %v3416, %v3800
      %v3865 = vadd.f32 %v3417, %v3801
      %v3866 = vadd.f32 %v3418, %v3802
      %v3867 = vadd.f32 %v3419, %v3803
      %v3868 = vadd.f32 %v3420, %v3804
      %v3869 = vadd.f32 %v3421, %v3805
      %v3870 = vadd.f32 %v3422, %v3806
      %v3871 = vadd.f32 %v3423, %v3807
      %v3872 = vadd.f32 %v3424, %v3808
      %v3873 = vadd.f32 %v3425, %v3809
      %v3874 = vadd.f32 %v3426, %v3810
      %v3875 = vadd.f32 %v3427, %v3811
      %v3876 = vadd.f32 %v3428, %v3812
      %v3877 = vadd.f32 %v3429, %v3813
      %v3878 = vadd.f32 %v3430, %v3814
      %v3879 = vadd.f32 %v3431, %v3815
      %v3880 = vadd.f32 %v3432, %v3816
      %v3881 = vadd.f32 %v3433, %v3817
      %v3882 = vadd.f32 %v3434, %v3818
      %v3883 = vadd.f32 %v3435, %v3819
      %v3884 = vadd.f32 %v3436, %v3820
      %v3885 = vadd.f32 %v3437, %v3821
      %v3886 = vadd.f32 %v3438, %v3822
      %v3887 = vadd.f32 %v3439, %v3823
      %v3888 = vadd.f32 %v3440, %v3824
      %v3889 = vadd.f32 %v3441, %v3825
      %v3890 = vadd.f32 %v3442, %v3826
      %v3891 = vadd.f32 %v3443, %v3827
      %v3892 = vadd.f32 %v3444, %v3828
      %v3893 = vadd.f32 %v3445, %v3829
      %v3894 = vadd.f32 %v3446, %v3830
      %v3895 = vadd.f32 %v3447, %v3831
      %v3896 = vadd.f32 %v3448, %v3832
      %v3897 = vadd.f32 %v3449, %v3833
      %v3898 = vadd.f32 %v3450, %v3834
      %v3899 = vadd.f32 %v3451, %v3835
      %v3900 = vadd.f32 %v3452, %v3836
      %v3901 = vadd.s32 %v251, 100
      %v3902 = vadd.s32 %v252, 100
      %v3903 = vadd.s32 %v253, 100
      %v3904 = vadd.s32 %v254, 100
      %v3905 = vadd.s32 %v255, 100
      %v3906 = vadd.s32 %v256, 100
      %v3907 = vadd.s32 %v257, 100
      %v3908 = vadd.s32 %v258, 100
      %v3909 = vadd.s32 %v259, 100
      %v3910 = vadd.s32 %v260, 100
      %v3911 = vadd.s32 %v261, 100
      %v3912 = vadd.s32 %v262, 100
      %v3913 = vadd.s32 %v263, 100
      %v3914 = vadd.s32 %v264, 100
      %v3915 = vadd.s32 %v265, 100
      %v3916 = vadd.s32 %v266, 100
      %v3917 = vadd.s32 %v267, 100
      %v3918 = vadd.s32 %v268, 100
      %v3919 = vadd.s32 %v269, 100
      %v3920 = vadd.s32 %v270, 100
      %v3921 = vadd.s32 %v271, 100
      %v3922 = vadd.s32 %v272, 100
      %v3923 = vadd.s32 %v273, 100
      %v3924 = vadd.s32 %v274, 100
      %v3925 = vadd.s32 %v275, 100
      %v3926 = vadd.s32 %v276, 100
      %v3927 = vadd.s32 %v277, 100
      %v3928 = vadd.s32 %v278, 100
      %v3929 = vadd.s32 %v279, 100
      %v3930 = vadd.s32 %v280, 100
      %v3931 = vadd.s32 %v281, 100
      %v3932 = vadd.s32 %v282, 100
      %v3933 = vadd.s32 %v283, 100
      %v3934 = vadd.s32 %v284, 100
      %v3935 = vadd.s32 %v285, 100
      %v3936 = vadd.s32 %v286, 100
      %v3937 = vadd.s32 %v287, 100
      %v3938 = vadd.s32 %v288, 100
      %v3939 = vadd.s32 %v289, 100
      %v3940 = vadd.s32 %v290, 100
      %v3941 = vadd.s32 %v291, 100
      %v3942 = vadd.s32 %v292, 100
      %v3943 = vadd.s32 %v293, 100
      %v3944 = vadd.s32 %v294, 100
      %v3945 = vadd.s32 %v295, 100
      %v3946 = vadd.s32 %v296, 100
      %v3947 = vadd.s32 %v297, 100
      %v3948 = vadd.s32 %v298, 100
      %v3949 = vadd.s32 %v299, 100
      %v3950 = vadd.s32 %v300, 100
      %v3951 = vadd.s32 %v301, 100
      %v3952 = vadd.s32 %v302, 100
      %v3953 = vadd.s32 %v303, 100
      %v3954 = vadd.s32 %v304, 100
      %v3955 = vadd.s32 %v305, 100
      %v3956 = vadd.s32 %v306, 100
      %v3957 = vadd.s32 %v307, 100
      %v3958 = vadd.s32 %v308, 100
      %v3959 = vadd.s32 %v309, 100
      %v3960 = vadd.s32 %v310, 100
      %v3961 = vadd.s32 %v311, 100
      %v3962 = vadd.s32 %v312, 100
      %v3963 = vadd.s32 %v313, 100
      %v3964 = vadd.s32 %v314, 100
      %3965 = vset.pattern.permute.xlu0 8
      %3966 = vperm.xlu0 %3965, %v3901
      %v3967 = vpop.permute.xlu0 %3966
      %3968 = vset.pattern.permute.xlu0 8
      %3969 = vperm.xlu0 %3968, %v3902
      %v3970 = vpop.permute.xlu0 %3969
      %3971 = vset.pattern.permute.xlu0 8
      %3972 = vperm.xlu0 %3971, %v3903
      %v3973 = vpop.permute.xlu0 %3972
      %3974 = vset.pattern.permute.xlu0 8
      %3975 = vperm.xlu0 %3974, %v3904
      %v3976 = vpop.permute.xlu0 %3975
      %3977 = vset.pattern.permute.xlu0 8
      %3978 = vperm.xlu0 %3977, %v3905
      %v3979 = vpop.permute.xlu0 %3978
      %3980 = vset.pattern.permute.xlu0 8
      %3981 = vperm.xlu0 %3980, %v3906
      %v3982 = vpop.permute.xlu0 %3981
      %3983 = vset.pattern.permute.xlu0 8
      %3984 = vperm.xlu0 %3983, %v3907
      %v3985 = vpop.permute.xlu0 %3984
      %3986 = vset.pattern.permute.xlu0 8
      %3987 = vperm.xlu0 %3986, %v3908
      %v3988 = vpop.permute.xlu0 %3987
      %3989 = vset.pattern.permute.xlu0 8
      %3990 = vperm.xlu0 %3989, %v3909
      %v3991 = vpop.permute.xlu0 %3990
      %3992 = vset.pattern.permute.xlu0 8
      %3993 = vperm.xlu0 %3992, %v3910
      %v3994 = vpop.permute.xlu0 %3993
      %3995 = vset.pattern.permute.xlu0 8
      %3996 = vperm.xlu0 %3995, %v3911
      %v3997 = vpop.permute.xlu0 %3996
      %3998 = vset.pattern.permute.xlu0 8
      %3999 = vperm.xlu0 %3998, %v3912
      %v4000 = vpop.permute.xlu0 %3999
      %4001 = vset.pattern.permute.xlu0 8
      %4002 = vperm.xlu0 %4001, %v3913
      %v4003 = vpop.permute.xlu0 %4002
      %4004 = vset.pattern.permute.xlu0 8
      %4005 = vperm.xlu0 %4004, %v3914
      %v4006 = vpop.permute.xlu0 %4005
      %4007 = vset.pattern.permute.xlu0 8
      %4008 = vperm.xlu0 %4007, %v3915
      %v4009 = vpop.permute.xlu0 %4008
      %4010 = vset.pattern.permute.xlu0 8
      %4011 = vperm.xlu0 %4010, %v3916
      %v4012 = vpop.permute.xlu0 %4011
      %4013 = vset.pattern.permute.xlu0 8
      %4014 = vperm.xlu0 %4013, %v3917
      %v4015 = vpop.permute.xlu0 %4014
      %4016 = vset.pattern.permute.xlu0 8
      %4017 = vperm.xlu0 %4016, %v3918
      %v4018 = vpop.permute.xlu0 %4017
      %4019 = vset.pattern.permute.xlu0 8
      %4020 = vperm.xlu0 %4019, %v3919
      %v4021 = vpop.permute.xlu0 %4020
      %4022 = vset.pattern.permute.xlu0 8
      %4023 = vperm.xlu0 %4022, %v3920
      %v4024 = vpop.permute.xlu0 %4023
      %4025 = vset.pattern.permute.xlu0 8
      %4026 = vperm.xlu0 %4025, %v3921
      %v4027 = vpop.permute.xlu0 %4026
      %4028 = vset.pattern.permute.xlu0 8
      %4029 = vperm.xlu0 %4028, %v3922
      %v4030 = vpop.permute.xlu0 %4029
      %4031 = vset.pattern.permute.xlu0 8
      %4032 = vperm.xlu0 %4031, %v3923
      %v4033 = vpop.permute.xlu0 %4032
      %4034 = vset.pattern.permute.xlu0 8
      %4035 = vperm.xlu0 %4034, %v3924
      %v4036 = vpop.permute.xlu0 %4035
      %4037 = vset.pattern.permute.xlu0 8
      %4038 = vperm.xlu0 %4037, %v3925
      %v4039 = vpop.permute.xlu0 %4038
      %4040 = vset.pattern.permute.xlu0 8
      %4041 = vperm.xlu0 %4040, %v3926
      %v4042 = vpop.permute.xlu0 %4041
      %4043 = vset.pattern.permute.xlu0 8
      %4044 = vperm.xlu0 %4043, %v3927
      %v4045 = vpop.permute.xlu0 %4044
      %4046 = vset.pattern.permute.xlu0 8
      %4047 = vperm.xlu0 %4046, %v3928
      %v4048 = vpop.permute.xlu0 %4047
      %4049 = vset.pattern.permute.xlu0 8
      %4050 = vperm.xlu0 %4049, %v3929
      %v4051 = vpop.permute.xlu0 %4050
      %4052 = vset.pattern.permute.xlu0 8
      %4053 = vperm.xlu0 %4052, %v3930
      %v4054 = vpop.permute.xlu0 %4053
      %4055 = vset.pattern.permute.xlu0 8
      %4056 = vperm.xlu0 %4055, %v3931
      %v4057 = vpop.permute.xlu0 %4056
      %4058 = vset.pattern.permute.xlu0 8
      %4059 = vperm.xlu0 %4058, %v3932
      %v4060 = vpop.permute.xlu0 %4059
      %4061 = vset.pattern.permute.xlu0 8
      %4062 = vperm.xlu0 %4061, %v3933
      %v4063 = vpop.permute.xlu0 %4062
      %4064 = vset.pattern.permute.xlu0 8
      %4065 = vperm.xlu0 %4064, %v3934
      %v4066 = vpop.permute.xlu0 %4065
      %4067 = vset.pattern.permute.xlu0 8
      %4068 = vperm.xlu0 %4067, %v3935
      %v4069 = vpop.permute.xlu0 %4068
      %4070 = vset.pattern.permute.xlu0 8
      %4071 = vperm.xlu0 %4070, %v3936
      %v4072 = vpop.permute.xlu0 %4071
      %4073 = vset.pattern.permute.xlu0 8
      %4074 = vperm.xlu0 %4073, %v3937
      %v4075 = vpop.permute.xlu0 %4074
      %4076 = vset.pattern.permute.xlu0 8
      %4077 = vperm.xlu0 %4076, %v3938
      %v4078 = vpop.permute.xlu0 %4077
      %4079 = vset.pattern.permute.xlu0 8
      %4080 = vperm.xlu0 %4079, %v3939
      %v4081 = vpop.permute.xlu0 %4080
      %4082 = vset.pattern.permute.xlu0 8
      %4083 = vperm.xlu0 %4082, %v3940
      %v4084 = vpop.permute.xlu0 %4083
      %4085 = vset.pattern.permute.xlu0 8
      %4086 = vperm.xlu0 %4085, %v3941
      %v4087 = vpop.permute.xlu0 %4086
      %4088 = vset.pattern.permute.xlu0 8
      %4089 = vperm.xlu0 %4088, %v3942
      %v4090 = vpop.permute.xlu0 %4089
      %4091 = vset.pattern.permute.xlu0 8
      %4092 = vperm.xlu0 %4091, %v3943
      %v4093 = vpop.permute.xlu0 %4092
      %4094 = vset.pattern.permute.xlu0 8
      %4095 = vperm.xlu0 %4094, %v3944
      %v4096 = vpop.permute.xlu0 %4095
      %4097 = vset.pattern.permute.xlu0 8
      %4098 = vperm.xlu0 %4097, %v3945
      %v4099 = vpop.permute.xlu0 %4098
      %4100 = vset.pattern.permute.xlu0 8
      %4101 = vperm.xlu0 %4100, %v3946
      %v4102 = vpop.permute.xlu0 %4101
      %4103 = vset.pattern.permute.xlu0 8
      %4104 = vperm.xlu0 %4103, %v3947
      %v4105 = vpop.permute.xlu0 %4104
      %4106 = vset.pattern.permute.xlu0 8
      %4107 = vperm.xlu0 %4106, %v3948
      %v4108 = vpop.permute.xlu0 %4107
      %4109 = vset.pattern.permute.xlu0 8
      %4110 = vperm.xlu0 %4109, %v3949
      %v4111 = vpop.permute.xlu0 %4110
      %4112 = vset.pattern.permute.xlu0 8
      %4113 = vperm.xlu0 %4112, %v3950
      %v4114 = vpop.permute.xlu0 %4113
      %4115 = vset.pattern.permute.xlu0 8
      %4116 = vperm.xlu0 %4115, %v3951
      %v4117 = vpop.permute.xlu0 %4116
      %4118 = vset.pattern.permute.xlu0 8
      %4119 = vperm.xlu0 %4118, %v3952
      %v4120 = vpop.permute.xlu0 %4119
      %4121 = vset.pattern.permute.xlu0 8
      %4122 = vperm.xlu0 %4121, %v3953
      %v4123 = vpop.permute.xlu0 %4122
      %4124 = vset.pattern.permute.xlu0 8
      %4125 = vperm.xlu0 %4124, %v3954
      %v4126 = vpop.permute.xlu0 %4125
      %4127 = vset.pattern.permute.xlu0 8
      %4128 = vperm.xlu0 %4127, %v3955
      %v4129 = vpop.permute.xlu0 %4128
      %4130 = vset.pattern.permute.xlu0 8
      %4131 = vperm.xlu0 %4130, %v3956
      %v4132 = vpop.permute.xlu0 %4131
      %4133 = vset.pattern.permute.xlu0 8
      %4134 = vperm.xlu0 %4133, %v3957
      %v4135 = vpop.permute.xlu0 %4134
      %4136 = vset.pattern.permute.xlu0 8
      %4137 = vperm.xlu0 %4136, %v3958
      %v4138 = vpop.permute.xlu0 %4137
      %4139 = vset.pattern.permute.xlu0 8
      %4140 = vperm.xlu0 %4139, %v3959
      %v4141 = vpop.permute.xlu0 %4140
      %4142 = vset.pattern.permute.xlu0 8
      %4143 = vperm.xlu0 %4142, %v3960
      %v4144 = vpop.permute.xlu0 %4143
      %4145 = vset.pattern.permute.xlu0 8
      %4146 = vperm.xlu0 %4145, %v3961
      %v4147 = vpop.permute.xlu0 %4146
      %4148 = vset.pattern.permute.xlu0 8
      %4149 = vperm.xlu0 %4148, %v3962
      %v4150 = vpop.permute.xlu0 %4149
      %4151 = vset.pattern.permute.xlu0 8
      %4152 = vperm.xlu0 %4151, %v3963
      %v4153 = vpop.permute.xlu0 %4152
      %4154 = vset.pattern.permute.xlu0 8
      %4155 = vperm.xlu0 %4154, %v3964
      %v4156 = vpop.permute.xlu0 %4155
      %vm4157 = vcmp.eq.s32.totalorder %v3967, %v380
      %vm4158 = vcmp.eq.s32.totalorder %v3970, %v380
      %vm4159 = vcmp.eq.s32.totalorder %v3973, %v380
      %vm4160 = vcmp.eq.s32.totalorder %v3976, %v380
      %vm4161 = vcmp.eq.s32.totalorder %v3979, %v380
      %vm4162 = vcmp.eq.s32.totalorder %v3982, %v380
      %vm4163 = vcmp.eq.s32.totalorder %v3985, %v380
      %vm4164 = vcmp.eq.s32.totalorder %v3988, %v380
      %vm4165 = vcmp.eq.s32.totalorder %v3991, %v380
      %vm4166 = vcmp.eq.s32.totalorder %v3994, %v380
      %vm4167 = vcmp.eq.s32.totalorder %v3997, %v380
      %vm4168 = vcmp.eq.s32.totalorder %v4000, %v380
      %vm4169 = vcmp.eq.s32.totalorder %v4003, %v380
      %vm4170 = vcmp.eq.s32.totalorder %v4006, %v380
      %vm4171 = vcmp.eq.s32.totalorder %v4009, %v380
      %vm4172 = vcmp.eq.s32.totalorder %v4012, %v380
      %vm4173 = vcmp.eq.s32.totalorder %v4015, %v380
      %vm4174 = vcmp.eq.s32.totalorder %v4018, %v380
      %vm4175 = vcmp.eq.s32.totalorder %v4021, %v380
      %vm4176 = vcmp.eq.s32.totalorder %v4024, %v380
      %vm4177 = vcmp.eq.s32.totalorder %v4027, %v380
      %vm4178 = vcmp.eq.s32.totalorder %v4030, %v380
      %vm4179 = vcmp.eq.s32.totalorder %v4033, %v380
      %vm4180 = vcmp.eq.s32.totalorder %v4036, %v380
      %vm4181 = vcmp.eq.s32.totalorder %v4039, %v380
      %vm4182 = vcmp.eq.s32.totalorder %v4042, %v380
      %vm4183 = vcmp.eq.s32.totalorder %v4045, %v380
      %vm4184 = vcmp.eq.s32.totalorder %v4048, %v380
      %vm4185 = vcmp.eq.s32.totalorder %v4051, %v380
      %vm4186 = vcmp.eq.s32.totalorder %v4054, %v380
      %vm4187 = vcmp.eq.s32.totalorder %v4057, %v380
      %vm4188 = vcmp.eq.s32.totalorder %v4060, %v380
      %vm4189 = vcmp.eq.s32.totalorder %v4063, %v380
      %vm4190 = vcmp.eq.s32.totalorder %v4066, %v380
      %vm4191 = vcmp.eq.s32.totalorder %v4069, %v380
      %vm4192 = vcmp.eq.s32.totalorder %v4072, %v380
      %vm4193 = vcmp.eq.s32.totalorder %v4075, %v380
      %vm4194 = vcmp.eq.s32.totalorder %v4078, %v380
      %vm4195 = vcmp.eq.s32.totalorder %v4081, %v380
      %vm4196 = vcmp.eq.s32.totalorder %v4084, %v380
      %vm4197 = vcmp.eq.s32.totalorder %v4087, %v380
      %vm4198 = vcmp.eq.s32.totalorder %v4090, %v380
      %vm4199 = vcmp.eq.s32.totalorder %v4093, %v380
      %vm4200 = vcmp.eq.s32.totalorder %v4096, %v380
      %vm4201 = vcmp.eq.s32.totalorder %v4099, %v380
      %vm4202 = vcmp.eq.s32.totalorder %v4102, %v380
      %vm4203 = vcmp.eq.s32.totalorder %v4105, %v380
      %vm4204 = vcmp.eq.s32.totalorder %v4108, %v380
      %vm4205 = vcmp.eq.s32.totalorder %v4111, %v380
      %vm4206 = vcmp.eq.s32.totalorder %v4114, %v380
      %vm4207 = vcmp.eq.s32.totalorder %v4117, %v380
      %vm4208 = vcmp.eq.s32.totalorder %v4120, %v380
      %vm4209 = vcmp.eq.s32.totalorder %v4123, %v380
      %vm4210 = vcmp.eq.s32.totalorder %v4126, %v380
      %vm4211 = vcmp.eq.s32.totalorder %v4129, %v380
      %vm4212 = vcmp.eq.s32.totalorder %v4132, %v380
      %vm4213 = vcmp.eq.s32.totalorder %v4135, %v380
      %vm4214 = vcmp.eq.s32.totalorder %v4138, %v380
      %vm4215 = vcmp.eq.s32.totalorder %v4141, %v380
      %vm4216 = vcmp.eq.s32.totalorder %v4144, %v380
      %vm4217 = vcmp.eq.s32.totalorder %v4147, %v380
      %vm4218 = vcmp.eq.s32.totalorder %v4150, %v380
      %vm4219 = vcmp.eq.s32.totalorder %v4153, %v380
      %vm4220 = vcmp.eq.s32.totalorder %v4156, %v380
      %v4221 = vsel %vm4157, 1, 0
      %v4222 = vsel %vm4158, 1, 0
      %v4223 = vsel %vm4159, 1, 0
      %v4224 = vsel %vm4160, 1, 0
      %v4225 = vsel %vm4161, 1, 0
      %v4226 = vsel %vm4162, 1, 0
      %v4227 = vsel %vm4163, 1, 0
      %v4228 = vsel %vm4164, 1, 0
      %v4229 = vsel %vm4165, 1, 0
      %v4230 = vsel %vm4166, 1, 0
      %v4231 = vsel %vm4167, 1, 0
      %v4232 = vsel %vm4168, 1, 0
      %v4233 = vsel %vm4169, 1, 0
      %v4234 = vsel %vm4170, 1, 0
      %v4235 = vsel %vm4171, 1, 0
      %v4236 = vsel %vm4172, 1, 0
      %v4237 = vsel %vm4173, 1, 0
      %v4238 = vsel %vm4174, 1, 0
      %v4239 = vsel %vm4175, 1, 0
      %v4240 = vsel %vm4176, 1, 0
      %v4241 = vsel %vm4177, 1, 0
      %v4242 = vsel %vm4178, 1, 0
      %v4243 = vsel %vm4179, 1, 0
      %v4244 = vsel %vm4180, 1, 0
      %v4245 = vsel %vm4181, 1, 0
      %v4246 = vsel %vm4182, 1, 0
      %v4247 = vsel %vm4183, 1, 0
      %v4248 = vsel %vm4184, 1, 0
      %v4249 = vsel %vm4185, 1, 0
      %v4250 = vsel %vm4186, 1, 0
      %v4251 = vsel %vm4187, 1, 0
      %v4252 = vsel %vm4188, 1, 0
      %v4253 = vsel %vm4189, 1, 0
      %v4254 = vsel %vm4190, 1, 0
      %v4255 = vsel %vm4191, 1, 0
      %v4256 = vsel %vm4192, 1, 0
      %v4257 = vsel %vm4193, 1, 0
      %v4258 = vsel %vm4194, 1, 0
      %v4259 = vsel %vm4195, 1, 0
      %v4260 = vsel %vm4196, 1, 0
      %v4261 = vsel %vm4197, 1, 0
      %v4262 = vsel %vm4198, 1, 0
      %v4263 = vsel %vm4199, 1, 0
      %v4264 = vsel %vm4200, 1, 0
      %v4265 = vsel %vm4201, 1, 0
      %v4266 = vsel %vm4202, 1, 0
      %v4267 = vsel %vm4203, 1, 0
      %v4268 = vsel %vm4204, 1, 0
      %v4269 = vsel %vm4205, 1, 0
      %v4270 = vsel %vm4206, 1, 0
      %v4271 = vsel %vm4207, 1, 0
      %v4272 = vsel %vm4208, 1, 0
      %v4273 = vsel %vm4209, 1, 0
      %v4274 = vsel %vm4210, 1, 0
      %v4275 = vsel %vm4211, 1, 0
      %v4276 = vsel %vm4212, 1, 0
      %v4277 = vsel %vm4213, 1, 0
      %v4278 = vsel %vm4214, 1, 0
      %v4279 = vsel %vm4215, 1, 0
      %v4280 = vsel %vm4216, 1, 0
      %v4281 = vsel %vm4217, 1, 0
      %v4282 = vsel %vm4218, 1, 0
      %v4283 = vsel %vm4219, 1, 0
      %v4284 = vsel %vm4220, 1, 0
      %v4285 = vcvt.s32.f32 %v4221
      %v4286 = vcvt.s32.f32 %v4222
      %v4287 = vcvt.s32.f32 %v4223
      %v4288 = vcvt.s32.f32 %v4224
      %v4289 = vcvt.s32.f32 %v4225
      %v4290 = vcvt.s32.f32 %v4226
      %v4291 = vcvt.s32.f32 %v4227
      %v4292 = vcvt.s32.f32 %v4228
      %v4293 = vcvt.s32.f32 %v4229
      %v4294 = vcvt.s32.f32 %v4230
      %v4295 = vcvt.s32.f32 %v4231
      %v4296 = vcvt.s32.f32 %v4232
      %v4297 = vcvt.s32.f32 %v4233
      %v4298 = vcvt.s32.f32 %v4234
      %v4299 = vcvt.s32.f32 %v4235
      %v4300 = vcvt.s32.f32 %v4236
      %v4301 = vcvt.s32.f32 %v4237
      %v4302 = vcvt.s32.f32 %v4238
      %v4303 = vcvt.s32.f32 %v4239
      %v4304 = vcvt.s32.f32 %v4240
      %v4305 = vcvt.s32.f32 %v4241
      %v4306 = vcvt.s32.f32 %v4242
      %v4307 = vcvt.s32.f32 %v4243
      %v4308 = vcvt.s32.f32 %v4244
      %v4309 = vcvt.s32.f32 %v4245
      %v4310 = vcvt.s32.f32 %v4246
      %v4311 = vcvt.s32.f32 %v4247
      %v4312 = vcvt.s32.f32 %v4248
      %v4313 = vcvt.s32.f32 %v4249
      %v4314 = vcvt.s32.f32 %v4250
      %v4315 = vcvt.s32.f32 %v4251
      %v4316 = vcvt.s32.f32 %v4252
      %v4317 = vcvt.s32.f32 %v4253
      %v4318 = vcvt.s32.f32 %v4254
      %v4319 = vcvt.s32.f32 %v4255
      %v4320 = vcvt.s32.f32 %v4256
      %v4321 = vcvt.s32.f32 %v4257
      %v4322 = vcvt.s32.f32 %v4258
      %v4323 = vcvt.s32.f32 %v4259
      %v4324 = vcvt.s32.f32 %v4260
      %v4325 = vcvt.s32.f32 %v4261
      %v4326 = vcvt.s32.f32 %v4262
      %v4327 = vcvt.s32.f32 %v4263
      %v4328 = vcvt.s32.f32 %v4264
      %v4329 = vcvt.s32.f32 %v4265
      %v4330 = vcvt.s32.f32 %v4266
      %v4331 = vcvt.s32.f32 %v4267
      %v4332 = vcvt.s32.f32 %v4268
      %v4333 = vcvt.s32.f32 %v4269
      %v4334 = vcvt.s32.f32 %v4270
      %v4335 = vcvt.s32.f32 %v4271
      %v4336 = vcvt.s32.f32 %v4272
      %v4337 = vcvt.s32.f32 %v4273
      %v4338 = vcvt.s32.f32 %v4274
      %v4339 = vcvt.s32.f32 %v4275
      %v4340 = vcvt.s32.f32 %v4276
      %v4341 = vcvt.s32.f32 %v4277
      %v4342 = vcvt.s32.f32 %v4278
      %v4343 = vcvt.s32.f32 %v4279
      %v4344 = vcvt.s32.f32 %v4280
      %v4345 = vcvt.s32.f32 %v4281
      %v4346 = vcvt.s32.f32 %v4282
      %v4347 = vcvt.s32.f32 %v4283
      %v4348 = vcvt.s32.f32 %v4284
      %v4349 = vadd.f32 %v3837, %v4285
      %v4350 = vadd.f32 %v3838, %v4286
      %v4351 = vadd.f32 %v3839, %v4287
      %v4352 = vadd.f32 %v3840, %v4288
      %v4353 = vadd.f32 %v3841, %v4289
      %v4354 = vadd.f32 %v3842, %v4290
      %v4355 = vadd.f32 %v3843, %v4291
      %v4356 = vadd.f32 %v3844, %v4292
      %v4357 = vadd.f32 %v3845, %v4293
      %v4358 = vadd.f32 %v3846, %v4294
      %v4359 = vadd.f32 %v3847, %v4295
      %v4360 = vadd.f32 %v3848, %v4296
      %v4361 = vadd.f32 %v3849, %v4297
      %v4362 = vadd.f32 %v3850, %v4298
      %v4363 = vadd.f32 %v3851, %v4299
      %v4364 = vadd.f32 %v3852, %v4300
      %v4365 = vadd.f32 %v3853, %v4301
      %v4366 = vadd.f32 %v3854, %v4302
      %v4367 = vadd.f32 %v3855, %v4303
      %v4368 = vadd.f32 %v3856, %v4304
      %v4369 = vadd.f32 %v3857, %v4305
      %v4370 = vadd.f32 %v3858, %v4306
      %v4371 = vadd.f32 %v3859, %v4307
      %v4372 = vadd.f32 %v3860, %v4308
      %v4373 = vadd.f32 %v3861, %v4309
      %v4374 = vadd.f32 %v3862, %v4310
      %v4375 = vadd.f32 %v3863, %v4311
      %v4376 = vadd.f32 %v3864, %v4312
      %v4377 = vadd.f32 %v3865, %v4313
      %v4378 = vadd.f32 %v3866, %v4314
      %v4379 = vadd.f32 %v3867, %v4315
      %v4380 = vadd.f32 %v3868, %v4316
      %v4381 = vadd.f32 %v3869, %v4317
      %v4382 = vadd.f32 %v3870, %v4318
      %v4383 = vadd.f32 %v3871, %v4319
      %v4384 = vadd.f32 %v3872, %v4320
      %v4385 = vadd.f32 %v3873, %v4321
      %v4386 = vadd.f32 %v3874, %v4322
      %v4387 = vadd.f32 %v3875, %v4323
      %v4388 = vadd.f32 %v3876, %v4324
      %v4389 = vadd.f32 %v3877, %v4325
      %v4390 = vadd.f32 %v3878, %v4326
      %v4391 = vadd.f32 %v3879, %v4327
      %v4392 = vadd.f32 %v3880, %v4328
      %v4393 = vadd.f32 %v3881, %v4329
      %v4394 = vadd.f32 %v3882, %v4330
      %v4395 = vadd.f32 %v3883, %v4331
      %v4396 = vadd.f32 %v3884, %v4332
      %v4397 = vadd.f32 %v3885, %v4333
      %v4398 = vadd.f32 %v3886, %v4334
      %v4399 = vadd.f32 %v3887, %v4335
      %v4400 = vadd.f32 %v3888, %v4336
      %v4401 = vadd.f32 %v3889, %v4337
      %v4402 = vadd.f32 %v3890, %v4338
      %v4403 = vadd.f32 %v3891, %v4339
      %v4404 = vadd.f32 %v3892, %v4340
      %v4405 = vadd.f32 %v3893, %v4341
      %v4406 = vadd.f32 %v3894, %v4342
      %v4407 = vadd.f32 %v3895, %v4343
      %v4408 = vadd.f32 %v3896, %v4344
      %v4409 = vadd.f32 %v3897, %v4345
      %v4410 = vadd.f32 %v3898, %v4346
      %v4411 = vadd.f32 %v3899, %v4347
      %v4412 = vadd.f32 %v3900, %v4348
      %v4413 = vpack.c.bf16 %v4350, %v4349
      %v4414 = vpack.c.bf16 %v4352, %v4351
      %v4415 = vpack.c.bf16 %v4354, %v4353
      %v4416 = vpack.c.bf16 %v4356, %v4355
      %v4417 = vpack.c.bf16 %v4358, %v4357
      %v4418 = vpack.c.bf16 %v4360, %v4359
      %v4419 = vpack.c.bf16 %v4362, %v4361
      %v4420 = vpack.c.bf16 %v4364, %v4363
      %v4421 = vpack.c.bf16 %v4366, %v4365
      %v4422 = vpack.c.bf16 %v4368, %v4367
      %v4423 = vpack.c.bf16 %v4370, %v4369
      %v4424 = vpack.c.bf16 %v4372, %v4371
      %v4425 = vpack.c.bf16 %v4374, %v4373
      %v4426 = vpack.c.bf16 %v4376, %v4375
      %v4427 = vpack.c.bf16 %v4378, %v4377
      %v4428 = vpack.c.bf16 %v4380, %v4379
      %v4429 = vpack.c.bf16 %v4382, %v4381
      %v4430 = vpack.c.bf16 %v4384, %v4383
      %v4431 = vpack.c.bf16 %v4386, %v4385
      %v4432 = vpack.c.bf16 %v4388, %v4387
      %v4433 = vpack.c.bf16 %v4390, %v4389
      %v4434 = vpack.c.bf16 %v4392, %v4391
      %v4435 = vpack.c.bf16 %v4394, %v4393
      %v4436 = vpack.c.bf16 %v4396, %v4395
      %v4437 = vpack.c.bf16 %v4398, %v4397
      %v4438 = vpack.c.bf16 %v4400, %v4399
      %v4439 = vpack.c.bf16 %v4402, %v4401
      %v4440 = vpack.c.bf16 %v4404, %v4403
      %v4441 = vpack.c.bf16 %v4406, %v4405
      %v4442 = vpack.c.bf16 %v4408, %v4407
      %v4443 = vpack.c.bf16 %v4410, %v4409
      %v4444 = vpack.c.bf16 %v4412, %v4411
      %v4445 = vld [vmem:[%s2] sm:$0xf]
      %v4446 = vld [vmem:[%s2 + $0x4] sm:$0xf]
      %v4447 = vld [vmem:[%s2 + $0x8] sm:$0xf]
      %v4448 = vld [vmem:[%s2 + $0xc] sm:$0xf]
      %v4449 = vld [vmem:[%s2 + $0x10] sm:$0xf]
      %v4450 = vld [vmem:[%s2 + $0x14] sm:$0xf]
      %v4451 = vld [vmem:[%s2 + $0x18] sm:$0xf]
      %v4452 = vld [vmem:[%s2 + $0x1c] sm:$0xf]
      %v4453 = vld [vmem:[%s2 + $0x20] sm:$0xf]
      %v4454 = vld [vmem:[%s2 + $0x24] sm:$0xf]
      %v4455 = vld [vmem:[%s2 + $0x28] sm:$0xf]
      %v4456 = vld [vmem:[%s2 + $0x2c] sm:$0xf]
      %v4457 = vld [vmem:[%s2 + $0x30] sm:$0xf]
      %v4458 = vld [vmem:[%s2 + $0x34] sm:$0xf]
      %v4459 = vld [vmem:[%s2 + $0x38] sm:$0xf]
      %v4475 = vunpack.c.l.b16 %v4445
      %v4476 = vunpack.c.l.b16 %v4446
      %v4477 = vunpack.c.l.b16 %v4447
      %v4478 = vunpack.c.l.b16 %v4448
      %v4479 = vunpack.c.l.b16 %v4449
      %v4480 = vunpack.c.l.b16 %v4450
      %v4481 = vunpack.c.l.b16 %v4451
      %v4482 = vunpack.c.l.b16 %v4452
      %v4483 = vunpack.c.l.b16 %v4453
      %v4484 = vunpack.c.l.b16 %v4454
      %v4485 = vunpack.c.l.b16 %v4455
      %v4486 = vunpack.c.l.b16 %v4456
      %v4487 = vunpack.c.l.b16 %v4457
      %v4488 = vunpack.c.l.b16 %v4458
      %v4489 = vunpack.c.l.b16 %v4459
      %v4490 = vpack.c.b16 %v4476, %v4475
      %v4491 = vpack.c.b16 %v4478, %v4477
      %v4492 = vpack.c.b16 %v4480, %v4479
      %v4493 = vpack.c.b16 %v4482, %v4481
      %v4494 = vpack.c.b16 %v4484, %v4483
      %v4495 = vpack.c.b16 %v4486, %v4485
      %v4496 = vpack.c.b16 %v4488, %v4487
      %v4497 = vpack.c.b16 %v4489, %v4489
      %vm4505 = vcmask 982016
      %v4507 = vsel %vm4505, %v4413, 0
      %v4510 = vsel %vm4505, %v4414, 0
      %v4513 = vsel %vm4505, %v4415, 0
      %v4516 = vsel %vm4505, %v4416, 0
      %v4519 = vsel %vm4505, %v4417, 0
      %v4522 = vsel %vm4505, %v4418, 0
      %v4525 = vsel %vm4505, %v4419, 0
      %v4528 = vsel %vm4505, %v4420, 0
      %v4531 = vsel %vm4505, %v4421, 0
      %v4534 = vsel %vm4505, %v4422, 0
      %v4537 = vsel %vm4505, %v4423, 0
      %v4540 = vsel %vm4505, %v4424, 0
      %v4543 = vsel %vm4505, %v4425, 0
      %v4546 = vsel %vm4505, %v4426, 0
      %v4549 = vsel %vm4505, %v4427, 0
      %v4552 = vsel %vm4505, %v4428, 0
      %v4555 = vsel %vm4505, %v4429, 0
      %v4558 = vsel %vm4505, %v4430, 0
      %v4561 = vsel %vm4505, %v4431, 0
      %v4564 = vsel %vm4505, %v4432, 0
      %v4567 = vsel %vm4505, %v4433, 0
      %v4570 = vsel %vm4505, %v4434, 0
      %v4573 = vsel %vm4505, %v4435, 0
      %v4576 = vsel %vm4505, %v4436, 0
      %v4579 = vsel %vm4505, %v4437, 0
      %v4582 = vsel %vm4505, %v4438, 0
      %v4585 = vsel %vm4505, %v4439, 0
      %v4588 = vsel %vm4505, %v4440, 0
      %v4591 = vsel %vm4505, %v4441, 0
      %v4594 = vsel %vm4505, %v4442, 0
      %v4597 = vsel %vm4505, %v4443, 0
      %v4600 = vsel %vm4505, %v4444, 0
      %vm4602 = vcmask 1043456
      %v4604 = vsel %vm4602, %v4497, 0
      %4606 = vmatprep.subr.bf16.mxu0 0
      %4607 = vmatpush1.bf16.msra.mxu0 %v4490
      %4608 = vmatprep.subr.bf16.mxu0 0
      %4609 = vmatpush1.bf16.msra.mxu0 %v4491
      %4610 = vmatprep.subr.bf16.mxu0 0
      %4611 = vmatpush1.bf16.msra.mxu0 %v4492
      %4612 = vmatprep.subr.bf16.mxu0 0
      %4613 = vmatpush1.bf16.msra.mxu0 %v4493
      %4614 = vmatprep.subr.bf16.mxu0 0
      %4615 = vmatpush1.bf16.msra.mxu0 %v4494
      %4616 = vmatprep.subr.bf16.mxu0 0
      %4617 = vmatpush1.bf16.msra.mxu0 %v4495
      %4618 = vmatprep.subr.bf16.mxu0 0
      %4619 = vmatpush1.bf16.msra.mxu0 %v4496
      %4620 = vmatprep.subr.bf16.mxu0 0
      %4621 = vmatpush1.bf16.msra.mxu0 %v4604
      %4622 = vmatprep.subr.bf16.mxu0 0
      %4623 = vmatpush1.bf16.msra.mxu0 0
      %4624 = vmatprep.subr.bf16.mxu0 0
      %4625 = vmatpush1.bf16.msra.mxu0 0
      %4626 = vmatprep.subr.bf16.mxu0 0
      %4627 = vmatpush1.bf16.msra.mxu0 0
      %4628 = vmatprep.subr.bf16.mxu0 0
      %4629 = vmatpush1.bf16.msra.mxu0 0
      %4630 = vmatprep.subr.bf16.mxu0 0
      %4631 = vmatpush1.bf16.msra.mxu0 0
      %4632 = vmatprep.subr.bf16.mxu0 0
      %4633 = vmatpush1.bf16.msra.mxu0 0
      %4634 = vmatprep.subr.bf16.mxu0 0
      %4635 = vmatpush1.bf16.msra.mxu0 0
      %4636 = vmatprep.subr.bf16.mxu0 0
      %4637 = vmatpush1.bf16.msra.mxu0 0
      %4638 = vmatprep.mubr.bf16.mxu0 0
      %4639 = vmatmul.mubr.bf16.gmra.mrb[0].mxu0 %v4507
      %v4640 = vpop.f32.mrb[0].mxu0
      %v4641 = vadd.f32 0.0, %v4640
      %v4642 = vpop.f32.mrb[0].mxu0
      %v4643 = vpop.f32.mrb[0].mxu0
      %v4644 = vadd.f32 0.0, %v4643
      %v4645 = vpop.f32.mrb[0].mxu0
      %4646 = vmatprep.mubr.bf16.mxu0 0
      %4647 = vmatmul.mubr.bf16.gmra.mrb[0].mxu0 %v4510
      %v4648 = vpop.f32.mrb[0].mxu0
      %v4649 = vadd.f32 0.0, %v4648
      %v4650 = vpop.f32.mrb[0].mxu0
      %v4651 = vpop.f32.mrb[0].mxu0
      %v4652 = vadd.f32 0.0, %v4651
      %v4653 = vpop.f32.mrb[0].mxu0
      %4654 = vmatprep.mubr.bf16.mxu0 0
      %4655 = vmatmul.mubr.bf16.gmra.mrb[0].mxu0 %v4513
      %v4656 = vpop.f32.mrb[0].mxu0
      %v4657 = vadd.f32 0.0, %v4656
      %v4658 = vpop.f32.mrb[0].mxu0
      %v4659 = vpop.f32.mrb[0].mxu0
      %v4660 = vadd.f32 0.0, %v4659
      %v4661 = vpop.f32.mrb[0].mxu0
      %4662 = vmatprep.mubr.bf16.mxu0 0
      %4663 = vmatmul.mubr.bf16.gmra.mrb[0].mxu0 %v4516
      %v4664 = vpop.f32.mrb[0].mxu0
      %v4665 = vadd.f32 0.0, %v4664
      %v4666 = vpop.f32.mrb[0].mxu0
      %v4667 = vpop.f32.mrb[0].mxu0
      %v4668 = vadd.f32 0.0, %v4667
      %v4669 = vpop.f32.mrb[0].mxu0
      %4670 = vmatprep.mubr.bf16.mxu0 0
      %4671 = vmatmul.mubr.bf16.gmra.mrb[0].mxu0 %v4519
      %v4672 = vpop.f32.mrb[0].mxu0
      %v4673 = vadd.f32 0.0, %v4672
      %v4674 = vpop.f32.mrb[0].mxu0
      %v4675 = vpop.f32.mrb[0].mxu0
      %v4676 = vadd.f32 0.0, %v4675
      %v4677 = vpop.f32.mrb[0].mxu0
      %4678 = vmatprep.mubr.bf16.mxu0 0
      %4679 = vmatmul.mubr.bf16.gmra.mrb[0].mxu0 %v4522
      %v4680 = vpop.f32.mrb[0].mxu0
      %v4681 = vadd.f32 0.0, %v4680
      %v4682 = vpop.f32.mrb[0].mxu0
      %v4683 = vpop.f32.mrb[0].mxu0
      %v4684 = vadd.f32 0.0, %v4683
      %v4685 = vpop.f32.mrb[0].mxu0
      %4686 = vmatprep.mubr.bf16.mxu0 0
      %4687 = vmatmul.mubr.bf16.gmra.mrb[0].mxu0 %v4525
      %v4688 = vpop.f32.mrb[0].mxu0
      %v4689 = vadd.f32 0.0, %v4688
      %v4690 = vpop.f32.mrb[0].mxu0
      %v4691 = vpop.f32.mrb[0].mxu0
      %v4692 = vadd.f32 0.0, %v4691
      %v4693 = vpop.f32.mrb[0].mxu0
      %4694 = vmatprep.mubr.bf16.mxu0 0
      %4695 = vmatmul.mubr.bf16.gmra.mrb[0].mxu0 %v4528
      %v4696 = vpop.f32.mrb[0].mxu0
      %v4697 = vadd.f32 0.0, %v4696
      %v4698 = vpop.f32.mrb[0].mxu0
      %v4699 = vpop.f32.mrb[0].mxu0
      %v4700 = vadd.f32 0.0, %v4699
      %v4701 = vpop.f32.mrb[0].mxu0
      %4702 = vmatprep.mubr.bf16.mxu0 0
      %4703 = vmatmul.mubr.bf16.gmra.mrb[0].mxu0 %v4531
      %v4704 = vpop.f32.mrb[0].mxu0
      %v4705 = vadd.f32 0.0, %v4704
      %v4706 = vpop.f32.mrb[0].mxu0
      %v4707 = vpop.f32.mrb[0].mxu0
      %v4708 = vadd.f32 0.0, %v4707
      %v4709 = vpop.f32.mrb[0].mxu0
      %4710 = vmatprep.mubr.bf16.mxu0 0
      %4711 = vmatmul.mubr.bf16.gmra.mrb[0].mxu0 %v4534
      %v4712 = vpop.f32.mrb[0].mxu0
      %v4713 = vadd.f32 0.0, %v4712
      %v4714 = vpop.f32.mrb[0].mxu0
      %v4715 = vpop.f32.mrb[0].mxu0
      %v4716 = vadd.f32 0.0, %v4715
      %v4717 = vpop.f32.mrb[0].mxu0
      %4718 = vmatprep.mubr.bf16.mxu0 0
      %4719 = vmatmul.mubr.bf16.gmra.mrb[0].mxu0 %v4537
      %v4720 = vpop.f32.mrb[0].mxu0
      %v4721 = vadd.f32 0.0, %v4720
      %v4722 = vpop.f32.mrb[0].mxu0
      %v4723 = vpop.f32.mrb[0].mxu0
      %v4724 = vadd.f32 0.0, %v4723
      %v4725 = vpop.f32.mrb[0].mxu0
      %4726 = vmatprep.mubr.bf16.mxu0 0
      %4727 = vmatmul.mubr.bf16.gmra.mrb[0].mxu0 %v4540
      %v4728 = vpop.f32.mrb[0].mxu0
      %v4729 = vadd.f32 0.0, %v4728
      %v4730 = vpop.f32.mrb[0].mxu0
      %v4731 = vpop.f32.mrb[0].mxu0
      %v4732 = vadd.f32 0.0, %v4731
      %v4733 = vpop.f32.mrb[0].mxu0
      %4734 = vmatprep.mubr.bf16.mxu0 0
      %4735 = vmatmul.mubr.bf16.gmra.mrb[0].mxu0 %v4543
      %v4736 = vpop.f32.mrb[0].mxu0
      %v4737 = vadd.f32 0.0, %v4736
      %v4738 = vpop.f32.mrb[0].mxu0
      %v4739 = vpop.f32.mrb[0].mxu0
      %v4740 = vadd.f32 0.0, %v4739
      %v4741 = vpop.f32.mrb[0].mxu0
      %4742 = vmatprep.mubr.bf16.mxu0 0
      %4743 = vmatmul.mubr.bf16.gmra.mrb[0].mxu0 %v4546
      %v4744 = vpop.f32.mrb[0].mxu0
      %v4745 = vadd.f32 0.0, %v4744
      %v4746 = vpop.f32.mrb[0].mxu0
      %v4747 = vpop.f32.mrb[0].mxu0
      %v4748 = vadd.f32 0.0, %v4747
      %v4749 = vpop.f32.mrb[0].mxu0
      %4750 = vmatprep.mubr.bf16.mxu0 0
      %4751 = vmatmul.mubr.bf16.gmra.mrb[0].mxu0 %v4549
      %v4752 = vpop.f32.mrb[0].mxu0
      %v4753 = vadd.f32 0.0, %v4752
      %v4754 = vpop.f32.mrb[0].mxu0
      %v4755 = vpop.f32.mrb[0].mxu0
      %v4756 = vadd.f32 0.0, %v4755
      %v4757 = vpop.f32.mrb[0].mxu0
      %4758 = vmatprep.mubr.bf16.mxu0 0
      %4759 = vmatmul.mubr.bf16.gmra.mrb[0].mxu0 %v4552
      %v4760 = vpop.f32.mrb[0].mxu0
      %v4761 = vadd.f32 0.0, %v4760
      %v4762 = vpop.f32.mrb[0].mxu0
      %v4763 = vpop.f32.mrb[0].mxu0
      %v4764 = vadd.f32 0.0, %v4763
      %v4765 = vpop.f32.mrb[0].mxu0
      %4766 = vmatprep.mubr.bf16.mxu0 0
      %4767 = vmatmul.mubr.bf16.gmra.mrb[0].mxu0 %v4555
      %v4768 = vpop.f32.mrb[0].mxu0
      %v4769 = vadd.f32 0.0, %v4768
      %v4770 = vpop.f32.mrb[0].mxu0
      %v4771 = vpop.f32.mrb[0].mxu0
      %v4772 = vadd.f32 0.0, %v4771
      %v4773 = vpop.f32.mrb[0].mxu0
      %4774 = vmatprep.mubr.bf16.mxu0 0
      %4775 = vmatmul.mubr.bf16.gmra.mrb[0].mxu0 %v4558
      %v4776 = vpop.f32.mrb[0].mxu0
      %v4777 = vadd.f32 0.0, %v4776
      %v4778 = vpop.f32.mrb[0].mxu0
      %v4779 = vpop.f32.mrb[0].mxu0
      %v4780 = vadd.f32 0.0, %v4779
      %v4781 = vpop.f32.mrb[0].mxu0
      %4782 = vmatprep.mubr.bf16.mxu0 0
      %4783 = vmatmul.mubr.bf16.gmra.mrb[0].mxu0 %v4561
      %v4784 = vpop.f32.mrb[0].mxu0
      %v4785 = vadd.f32 0.0, %v4784
      %v4786 = vpop.f32.mrb[0].mxu0
      %v4787 = vpop.f32.mrb[0].mxu0
      %v4788 = vadd.f32 0.0, %v4787
      %v4789 = vpop.f32.mrb[0].mxu0
      %4790 = vmatprep.mubr.bf16.mxu0 0
      %4791 = vmatmul.mubr.bf16.gmra.mrb[0].mxu0 %v4564
      %v4792 = vpop.f32.mrb[0].mxu0
      %v4793 = vadd.f32 0.0, %v4792
      %v4794 = vpop.f32.mrb[0].mxu0
      %v4795 = vpop.f32.mrb[0].mxu0
      %v4796 = vadd.f32 0.0, %v4795
      %v4797 = vpop.f32.mrb[0].mxu0
      %4798 = vmatprep.mubr.bf16.mxu0 0
      %4799 = vmatmul.mubr.bf16.gmra.mrb[0].mxu0 %v4567
      %v4800 = vpop.f32.mrb[0].mxu0
      %v4801 = vadd.f32 0.0, %v4800
      %v4802 = vpop.f32.mrb[0].mxu0
      %v4803 = vpop.f32.mrb[0].mxu0
      %v4804 = vadd.f32 0.0, %v4803
      %v4805 = vpop.f32.mrb[0].mxu0
      %4806 = vmatprep.mubr.bf16.mxu0 0
      %4807 = vmatmul.mubr.bf16.gmra.mrb[0].mxu0 %v4570
      %v4808 = vpop.f32.mrb[0].mxu0
      %v4809 = vadd.f32 0.0, %v4808
      %v4810 = vpop.f32.mrb[0].mxu0
      %v4811 = vpop.f32.mrb[0].mxu0
      %v4812 = vadd.f32 0.0, %v4811
      %v4813 = vpop.f32.mrb[0].mxu0
      %4814 = vmatprep.mubr.bf16.mxu0 0
      %4815 = vmatmul.mubr.bf16.gmra.mrb[0].mxu0 %v4573
      %v4816 = vpop.f32.mrb[0].mxu0
      %v4817 = vadd.f32 0.0, %v4816
      %v4818 = vpop.f32.mrb[0].mxu0
      %v4819 = vpop.f32.mrb[0].mxu0
      %v4820 = vadd.f32 0.0, %v4819
      %v4821 = vpop.f32.mrb[0].mxu0
      %4822 = vmatprep.mubr.bf16.mxu0 0
      %4823 = vmatmul.mubr.bf16.gmra.mrb[0].mxu0 %v4576
      %v4824 = vpop.f32.mrb[0].mxu0
      %v4825 = vadd.f32 0.0, %v4824
      %v4826 = vpop.f32.mrb[0].mxu0
      %v4827 = vpop.f32.mrb[0].mxu0
      %v4828 = vadd.f32 0.0, %v4827
      %v4829 = vpop.f32.mrb[0].mxu0
      %4830 = vmatprep.mubr.bf16.mxu0 0
      %4831 = vmatmul.mubr.bf16.gmra.mrb[0].mxu0 %v4579
      %v4832 = vpop.f32.mrb[0].mxu0
      %v4833 = vadd.f32 0.0, %v4832
      %v4834 = vpop.f32.mrb[0].mxu0
      %v4835 = vpop.f32.mrb[0].mxu0
      %v4836 = vadd.f32 0.0, %v4835
      %v4837 = vpop.f32.mrb[0].mxu0
      %4838 = vmatprep.mubr.bf16.mxu0 0
      %4839 = vmatmul.mubr.bf16.gmra.mrb[0].mxu0 %v4582
      %v4840 = vpop.f32.mrb[0].mxu0
      %v4841 = vadd.f32 0.0, %v4840
      %v4842 = vpop.f32.mrb[0].mxu0
      %v4843 = vpop.f32.mrb[0].mxu0
      %v4844 = vadd.f32 0.0, %v4843
      %v4845 = vpop.f32.mrb[0].mxu0
      %4846 = vmatprep.mubr.bf16.mxu0 0
      %4847 = vmatmul.mubr.bf16.gmra.mrb[0].mxu0 %v4585
      %v4848 = vpop.f32.mrb[0].mxu0
      %v4849 = vadd.f32 0.0, %v4848
      %v4850 = vpop.f32.mrb[0].mxu0
      %v4851 = vpop.f32.mrb[0].mxu0
      %v4852 = vadd.f32 0.0, %v4851
      %v4853 = vpop.f32.mrb[0].mxu0
      %4854 = vmatprep.mubr.bf16.mxu0 0
      %4855 = vmatmul.mubr.bf16.gmra.mrb[0].mxu0 %v4588
      %v4856 = vpop.f32.mrb[0].mxu0
      %v4857 = vadd.f32 0.0, %v4856
      %v4858 = vpop.f32.mrb[0].mxu0
      %v4859 = vpop.f32.mrb[0].mxu0
      %v4860 = vadd.f32 0.0, %v4859
      %v4861 = vpop.f32.mrb[0].mxu0
      %4862 = vmatprep.mubr.bf16.mxu0 0
      %4863 = vmatmul.mubr.bf16.gmra.mrb[0].mxu0 %v4591
      %v4864 = vpop.f32.mrb[0].mxu0
      %v4865 = vadd.f32 0.0, %v4864
      %v4866 = vpop.f32.mrb[0].mxu0
      %v4867 = vpop.f32.mrb[0].mxu0
      %v4868 = vadd.f32 0.0, %v4867
      %v4869 = vpop.f32.mrb[0].mxu0
      %4870 = vmatprep.mubr.bf16.mxu0 0
      %4871 = vmatmul.mubr.bf16.gmra.mrb[0].mxu0 %v4594
      %v4872 = vpop.f32.mrb[0].mxu0
      %v4873 = vadd.f32 0.0, %v4872
      %v4874 = vpop.f32.mrb[0].mxu0
      %v4875 = vpop.f32.mrb[0].mxu0
      %v4876 = vadd.f32 0.0, %v4875
      %v4877 = vpop.f32.mrb[0].mxu0
      %4878 = vmatprep.mubr.bf16.mxu0 0
      %4879 = vmatmul.mubr.bf16.gmra.mrb[0].mxu0 %v4597
      %v4880 = vpop.f32.mrb[0].mxu0
      %v4881 = vadd.f32 0.0, %v4880
      %v4882 = vpop.f32.mrb[0].mxu0
      %v4883 = vpop.f32.mrb[0].mxu0
      %v4884 = vadd.f32 0.0, %v4883
      %v4885 = vpop.f32.mrb[0].mxu0
      %4886 = vmatprep.mubr.bf16.mxu0 0
      %4887 = vmatmul.mubr.bf16.gmra.mrb[0].mxu0 %v4600
      %v4888 = vpop.f32.mrb[0].mxu0
      %v4889 = vadd.f32 0.0, %v4888
      %v4890 = vpop.f32.mrb[0].mxu0
      %v4891 = vpop.f32.mrb[0].mxu0
      %v4892 = vadd.f32 0.0, %v4891
      %v4893 = vpop.f32.mrb[0].mxu0
      %4894 = vdwg.mxu0
      %v4895 = vld [vmem:[%s3] sm:$0xff]
      %v4896 = vld [vmem:[%s3 + $0x8] sm:$0xff]
      %v4897 = vld [vmem:[%s3 + $0x10] sm:$0xff]
      %v4898 = vld [vmem:[%s3 + $0x18] sm:$0xff]
      %v4899 = vld [vmem:[%s3 + $0x20] sm:$0xff]
      %v4900 = vld [vmem:[%s3 + $0x28] sm:$0xff]
      %v4901 = vld [vmem:[%s3 + $0x30] sm:$0xff]
      %v4902 = vld [vmem:[%s3 + $0x38] sm:$0x1]
      %vm4903 = vcmask 465920
      %v4905 = vsel %vm4903, %v315, 0
      %v4908 = vsel %vm4903, %v316, 0
      %v4911 = vsel %vm4903, %v317, 0
      %v4914 = vsel %vm4903, %v318, 0
      %v4917 = vsel %vm4903, %v319, 0
      %v4920 = vsel %vm4903, %v320, 0
      %v4923 = vsel %vm4903, %v321, 0
      %v4926 = vsel %vm4903, %v322, 0
      %v4929 = vsel %vm4903, %v323, 0
      %v4932 = vsel %vm4903, %v324, 0
      %v4935 = vsel %vm4903, %v325, 0
      %v4938 = vsel %vm4903, %v326, 0
      %v4941 = vsel %vm4903, %v327, 0
      %v4944 = vsel %vm4903, %v328, 0
      %v4947 = vsel %vm4903, %v329, 0
      %v4950 = vsel %vm4903, %v330, 0
      %v4953 = vsel %vm4903, %v331, 0
      %v4956 = vsel %vm4903, %v332, 0
      %v4959 = vsel %vm4903, %v333, 0
      %v4962 = vsel %vm4903, %v334, 0
      %v4965 = vsel %vm4903, %v335, 0
      %v4968 = vsel %vm4903, %v336, 0
      %v4971 = vsel %vm4903, %v337, 0
      %v4974 = vsel %vm4903, %v338, 0
      %v4977 = vsel %vm4903, %v339, 0
      %v4980 = vsel %vm4903, %v340, 0
      %v4983 = vsel %vm4903, %v341, 0
      %v4986 = vsel %vm4903, %v342, 0
      %v4989 = vsel %vm4903, %v343, 0
      %v4992 = vsel %vm4903, %v344, 0
      %v4995 = vsel %vm4903, %v345, 0
      %v4998 = vsel %vm4903, %v346, 0
      %v5001 = vsel %vm4903, %v347, 0
      %v5004 = vsel %vm4903, %v348, 0
      %v5007 = vsel %vm4903, %v349, 0
      %v5010 = vsel %vm4903, %v350, 0
      %v5013 = vsel %vm4903, %v351, 0
      %v5016 = vsel %vm4903, %v352, 0
      %v5019 = vsel %vm4903, %v353, 0
      %v5022 = vsel %vm4903, %v354, 0
      %v5025 = vsel %vm4903, %v355, 0
      %v5028 = vsel %vm4903, %v356, 0
      %v5031 = vsel %vm4903, %v357, 0
      %v5034 = vsel %vm4903, %v358, 0
      %v5037 = vsel %vm4903, %v359, 0
      %v5040 = vsel %vm4903, %v360, 0
      %v5043 = vsel %vm4903, %v361, 0
      %v5046 = vsel %vm4903, %v362, 0
      %v5049 = vsel %vm4903, %v363, 0
      %v5052 = vsel %vm4903, %v364, 0
      %v5055 = vsel %vm4903, %v365, 0
      %v5058 = vsel %vm4903, %v366, 0
      %v5061 = vsel %vm4903, %v367, 0
      %v5064 = vsel %vm4903, %v368, 0
      %v5067 = vsel %vm4903, %v369, 0
      %v5070 = vsel %vm4903, %v370, 0
      %v5073 = vsel %vm4903, %v371, 0
      %v5076 = vsel %vm4903, %v372, 0
      %v5079 = vsel %vm4903, %v373, 0
      %v5082 = vsel %vm4903, %v374, 0
      %v5085 = vsel %vm4903, %v375, 0
      %v5088 = vsel %vm4903, %v376, 0
      %v5091 = vsel %vm4903, %v377, 0
      %v5094 = vsel %vm4903, %v378, 0
      %vm5096 = vcmask 1040384
      %v5098 = vsel %vm5096, %v4902, 0
      %5100 = vmatprep.subr.mxu0 0.0
      %5101 = vmatpush1.msra.mxu0 %v4895
      %5102 = vmatprep.subr.mxu0 0.0
      %5103 = vmatpush1.msra.mxu0 %v4896
      %5104 = vmatprep.subr.mxu0 0.0
      %5105 = vmatpush1.msra.mxu0 %v4897
      %5106 = vmatprep.subr.mxu0 0.0
      %5107 = vmatpush1.msra.mxu0 %v4898
      %5108 = vmatprep.subr.mxu0 0.0
      %5109 = vmatpush1.msra.mxu0 %v4899
      %5110 = vmatprep.subr.mxu0 0.0
      %5111 = vmatpush1.msra.mxu0 %v4900
      %5112 = vmatprep.subr.mxu0 0.0
      %5113 = vmatpush1.msra.mxu0 %v4901
      %5114 = vmatprep.subr.mxu0 0.0
      %5115 = vmatpush1.msra.mxu0 %v5098
      %5116 = vmatprep.subr.mxu0 0.0
      %5117 = vmatpush1.msra.mxu0 0.0
      %5118 = vmatprep.subr.mxu0 0.0
      %5119 = vmatpush1.msra.mxu0 0.0
      %5120 = vmatprep.subr.mxu0 0.0
      %5121 = vmatpush1.msra.mxu0 0.0
      %5122 = vmatprep.subr.mxu0 0.0
      %5123 = vmatpush1.msra.mxu0 0.0
      %5124 = vmatprep.subr.mxu0 0.0
      %5125 = vmatpush1.msra.mxu0 0.0
      %5126 = vmatprep.subr.mxu0 0.0
      %5127 = vmatpush1.msra.mxu0 0.0
      %5128 = vmatprep.subr.mxu0 0.0
      %5129 = vmatpush1.msra.mxu0 0.0
      %5130 = vmatprep.subr.mxu0 0.0
      %5131 = vmatpush1.msra.mxu0 0.0
      %5132 = vmatprep.subr.mxu0 0.0
      %5133 = vmatpush1.msra.mxu0 0.0
      %5134 = vmatprep.subr.mxu0 0.0
      %5135 = vmatpush1.msra.mxu0 0.0
      %5136 = vmatprep.subr.mxu0 0.0
      %5137 = vmatpush1.msra.mxu0 0.0
      %5138 = vmatprep.subr.mxu0 0.0
      %5139 = vmatpush1.msra.mxu0 0.0
      %5140 = vmatprep.subr.mxu0 0.0
      %5141 = vmatpush1.msra.mxu0 0.0
      %5142 = vmatprep.subr.mxu0 0.0
      %5143 = vmatpush1.msra.mxu0 0.0
      %5144 = vmatprep.subr.mxu0 0.0
      %5145 = vmatpush1.msra.mxu0 0.0
      %5146 = vmatprep.subr.mxu0 0.0
      %5147 = vmatpush1.msra.mxu0 0.0
      %5148 = vmatprep.subr.mxu0 0.0
      %5149 = vmatpush1.msra.mxu0 0.0
      %5150 = vmatprep.subr.mxu0 0.0
      %5151 = vmatpush1.msra.mxu0 0.0
      %5152 = vmatprep.subr.mxu0 0.0
      %5153 = vmatpush1.msra.mxu0 0.0
      %5154 = vmatprep.subr.mxu0 0.0
      %5155 = vmatpush1.msra.mxu0 0.0
      %5156 = vmatprep.subr.mxu0 0.0
      %5157 = vmatpush1.msra.mxu0 0.0
      %5158 = vmatprep.subr.mxu0 0.0
      %5159 = vmatpush1.msra.mxu0 0.0
      %5160 = vmatprep.subr.mxu0 0.0
      %5161 = vmatpush1.msra.mxu0 0.0
      %5162 = vmatprep.subr.mxu0 0.0
      %5163 = vmatpush1.msra.mxu0 0.0
      %5164 = vmatprep.mubr.f32.mxu0 0.0
      %5165 = vmatmul.mubr.f32.gmra.mrb[0].mxu0 %v4905
      %v5166 = vpop.f32.mrb[0].mxu0
      %v5167 = vadd.f32 0.0, %v5166
      %v5168 = vpop.f32.mrb[0].mxu0
      %5169 = vmatprep.mubr.f32.mxu0 0.0
      %5170 = vmatmul.mubr.f32.gmra.mrb[0].mxu0 %v4908
      %v5171 = vpop.f32.mrb[0].mxu0
      %v5172 = vadd.f32 0.0, %v5171
      %v5173 = vpop.f32.mrb[0].mxu0
      %5174 = vmatprep.mubr.f32.mxu0 0.0
      %5175 = vmatmul.mubr.f32.gmra.mrb[0].mxu0 %v4911
      %v5176 = vpop.f32.mrb[0].mxu0
      %v5177 = vadd.f32 0.0, %v5176
      %v5178 = vpop.f32.mrb[0].mxu0
      %5179 = vmatprep.mubr.f32.mxu0 0.0
      %5180 = vmatmul.mubr.f32.gmra.mrb[0].mxu0 %v4914
      %v5181 = vpop.f32.mrb[0].mxu0
      %v5182 = vadd.f32 0.0, %v5181
      %v5183 = vpop.f32.mrb[0].mxu0
      %5184 = vmatprep.mubr.f32.mxu0 0.0
      %5185 = vmatmul.mubr.f32.gmra.mrb[0].mxu0 %v4917
      %v5186 = vpop.f32.mrb[0].mxu0
      %v5187 = vadd.f32 0.0, %v5186
      %v5188 = vpop.f32.mrb[0].mxu0
      %5189 = vmatprep.mubr.f32.mxu0 0.0
      %5190 = vmatmul.mubr.f32.gmra.mrb[0].mxu0 %v4920
      %v5191 = vpop.f32.mrb[0].mxu0
      %v5192 = vadd.f32 0.0, %v5191
      %v5193 = vpop.f32.mrb[0].mxu0
      %5194 = vmatprep.mubr.f32.mxu0 0.0
      %5195 = vmatmul.mubr.f32.gmra.mrb[0].mxu0 %v4923
      %v5196 = vpop.f32.mrb[0].mxu0
      %v5197 = vadd.f32 0.0, %v5196
      %v5198 = vpop.f32.mrb[0].mxu0
      %5199 = vmatprep.mubr.f32.mxu0 0.0
      %5200 = vmatmul.mubr.f32.gmra.mrb[0].mxu0 %v4926
      %v5201 = vpop.f32.mrb[0].mxu0
      %v5202 = vadd.f32 0.0, %v5201
      %v5203 = vpop.f32.mrb[0].mxu0
      %5204 = vmatprep.mubr.f32.mxu0 0.0
      %5205 = vmatmul.mubr.f32.gmra.mrb[0].mxu0 %v4929
      %v5206 = vpop.f32.mrb[0].mxu0
      %v5207 = vadd.f32 0.0, %v5206
      %v5208 = vpop.f32.mrb[0].mxu0
      %5209 = vmatprep.mubr.f32.mxu0 0.0
      %5210 = vmatmul.mubr.f32.gmra.mrb[0].mxu0 %v4932
      %v5211 = vpop.f32.mrb[0].mxu0
      %v5212 = vadd.f32 0.0, %v5211
      %v5213 = vpop.f32.mrb[0].mxu0
      %5214 = vmatprep.mubr.f32.mxu0 0.0
      %5215 = vmatmul.mubr.f32.gmra.mrb[0].mxu0 %v4935
      %v5216 = vpop.f32.mrb[0].mxu0
      %v5217 = vadd.f32 0.0, %v5216
      %v5218 = vpop.f32.mrb[0].mxu0
      %5219 = vmatprep.mubr.f32.mxu0 0.0
      %5220 = vmatmul.mubr.f32.gmra.mrb[0].mxu0 %v4938
      %v5221 = vpop.f32.mrb[0].mxu0
      %v5222 = vadd.f32 0.0, %v5221
      %v5223 = vpop.f32.mrb[0].mxu0
      %5224 = vmatprep.mubr.f32.mxu0 0.0
      %5225 = vmatmul.mubr.f32.gmra.mrb[0].mxu0 %v4941
      %v5226 = vpop.f32.mrb[0].mxu0
      %v5227 = vadd.f32 0.0, %v5226
      %v5228 = vpop.f32.mrb[0].mxu0
      %5229 = vmatprep.mubr.f32.mxu0 0.0
      %5230 = vmatmul.mubr.f32.gmra.mrb[0].mxu0 %v4944
      %v5231 = vpop.f32.mrb[0].mxu0
      %v5232 = vadd.f32 0.0, %v5231
      %v5233 = vpop.f32.mrb[0].mxu0
      %5234 = vmatprep.mubr.f32.mxu0 0.0
      %5235 = vmatmul.mubr.f32.gmra.mrb[0].mxu0 %v4947
      %v5236 = vpop.f32.mrb[0].mxu0
      %v5237 = vadd.f32 0.0, %v5236
      %v5238 = vpop.f32.mrb[0].mxu0
      %5239 = vmatprep.mubr.f32.mxu0 0.0
      %5240 = vmatmul.mubr.f32.gmra.mrb[0].mxu0 %v4950
      %v5241 = vpop.f32.mrb[0].mxu0
      %v5242 = vadd.f32 0.0, %v5241
      %v5243 = vpop.f32.mrb[0].mxu0
      %5244 = vmatprep.mubr.f32.mxu0 0.0
      %5245 = vmatmul.mubr.f32.gmra.mrb[0].mxu0 %v4953
      %v5246 = vpop.f32.mrb[0].mxu0
      %v5247 = vadd.f32 0.0, %v5246
      %v5248 = vpop.f32.mrb[0].mxu0
      %5249 = vmatprep.mubr.f32.mxu0 0.0
      %5250 = vmatmul.mubr.f32.gmra.mrb[0].mxu0 %v4956
      %v5251 = vpop.f32.mrb[0].mxu0
      %v5252 = vadd.f32 0.0, %v5251
      %v5253 = vpop.f32.mrb[0].mxu0
      %5254 = vmatprep.mubr.f32.mxu0 0.0
      %5255 = vmatmul.mubr.f32.gmra.mrb[0].mxu0 %v4959
      %v5256 = vpop.f32.mrb[0].mxu0
      %v5257 = vadd.f32 0.0, %v5256
      %v5258 = vpop.f32.mrb[0].mxu0
      %5259 = vmatprep.mubr.f32.mxu0 0.0
      %5260 = vmatmul.mubr.f32.gmra.mrb[0].mxu0 %v4962
      %v5261 = vpop.f32.mrb[0].mxu0
      %v5262 = vadd.f32 0.0, %v5261
      %v5263 = vpop.f32.mrb[0].mxu0
      %5264 = vmatprep.mubr.f32.mxu0 0.0
      %5265 = vmatmul.mubr.f32.gmra.mrb[0].mxu0 %v4965
      %v5266 = vpop.f32.mrb[0].mxu0
      %v5267 = vadd.f32 0.0, %v5266
      %v5268 = vpop.f32.mrb[0].mxu0
      %5269 = vmatprep.mubr.f32.mxu0 0.0
      %5270 = vmatmul.mubr.f32.gmra.mrb[0].mxu0 %v4968
      %v5271 = vpop.f32.mrb[0].mxu0
      %v5272 = vadd.f32 0.0, %v5271
      %v5273 = vpop.f32.mrb[0].mxu0
      %5274 = vmatprep.mubr.f32.mxu0 0.0
      %5275 = vmatmul.mubr.f32.gmra.mrb[0].mxu0 %v4971
      %v5276 = vpop.f32.mrb[0].mxu0
      %v5277 = vadd.f32 0.0, %v5276
      %v5278 = vpop.f32.mrb[0].mxu0
      %5279 = vmatprep.mubr.f32.mxu0 0.0
      %5280 = vmatmul.mubr.f32.gmra.mrb[0].mxu0 %v4974
      %v5281 = vpop.f32.mrb[0].mxu0
      %v5282 = vadd.f32 0.0, %v5281
      %v5283 = vpop.f32.mrb[0].mxu0
      %5284 = vmatprep.mubr.f32.mxu0 0.0
      %5285 = vmatmul.mubr.f32.gmra.mrb[0].mxu0 %v4977
      %v5286 = vpop.f32.mrb[0].mxu0
      %v5287 = vadd.f32 0.0, %v5286
      %v5288 = vpop.f32.mrb[0].mxu0
      %5289 = vmatprep.mubr.f32.mxu0 0.0
      %5290 = vmatmul.mubr.f32.gmra.mrb[0].mxu0 %v4980
      %v5291 = vpop.f32.mrb[0].mxu0
      %v5292 = vadd.f32 0.0, %v5291
      %v5293 = vpop.f32.mrb[0].mxu0
      %5294 = vmatprep.mubr.f32.mxu0 0.0
      %5295 = vmatmul.mubr.f32.gmra.mrb[0].mxu0 %v4983
      %v5296 = vpop.f32.mrb[0].mxu0
      %v5297 = vadd.f32 0.0, %v5296
      %v5298 = vpop.f32.mrb[0].mxu0
      %5299 = vmatprep.mubr.f32.mxu0 0.0
      %5300 = vmatmul.mubr.f32.gmra.mrb[0].mxu0 %v4986
      %v5301 = vpop.f32.mrb[0].mxu0
      %v5302 = vadd.f32 0.0, %v5301
      %v5303 = vpop.f32.mrb[0].mxu0
      %5304 = vmatprep.mubr.f32.mxu0 0.0
      %5305 = vmatmul.mubr.f32.gmra.mrb[0].mxu0 %v4989
      %v5306 = vpop.f32.mrb[0].mxu0
      %v5307 = vadd.f32 0.0, %v5306
      %v5308 = vpop.f32.mrb[0].mxu0
      %5309 = vmatprep.mubr.f32.mxu0 0.0
      %5310 = vmatmul.mubr.f32.gmra.mrb[0].mxu0 %v4992
      %v5311 = vpop.f32.mrb[0].mxu0
      %v5312 = vadd.f32 0.0, %v5311
      %v5313 = vpop.f32.mrb[0].mxu0
      %5314 = vmatprep.mubr.f32.mxu0 0.0
      %5315 = vmatmul.mubr.f32.gmra.mrb[0].mxu0 %v4995
      %v5316 = vpop.f32.mrb[0].mxu0
      %v5317 = vadd.f32 0.0, %v5316
      %v5318 = vpop.f32.mrb[0].mxu0
      %5319 = vmatprep.mubr.f32.mxu0 0.0
      %5320 = vmatmul.mubr.f32.gmra.mrb[0].mxu0 %v4998
      %v5321 = vpop.f32.mrb[0].mxu0
      %v5322 = vadd.f32 0.0, %v5321
      %v5323 = vpop.f32.mrb[0].mxu0
      %5324 = vmatprep.mubr.f32.mxu0 0.0
      %5325 = vmatmul.mubr.f32.gmra.mrb[0].mxu0 %v5001
      %v5326 = vpop.f32.mrb[0].mxu0
      %v5327 = vadd.f32 0.0, %v5326
      %v5328 = vpop.f32.mrb[0].mxu0
      %5329 = vmatprep.mubr.f32.mxu0 0.0
      %5330 = vmatmul.mubr.f32.gmra.mrb[0].mxu0 %v5004
      %v5331 = vpop.f32.mrb[0].mxu0
      %v5332 = vadd.f32 0.0, %v5331
      %v5333 = vpop.f32.mrb[0].mxu0
      %5334 = vmatprep.mubr.f32.mxu0 0.0
      %5335 = vmatmul.mubr.f32.gmra.mrb[0].mxu0 %v5007
      %v5336 = vpop.f32.mrb[0].mxu0
      %v5337 = vadd.f32 0.0, %v5336
      %v5338 = vpop.f32.mrb[0].mxu0
      %5339 = vmatprep.mubr.f32.mxu0 0.0
      %5340 = vmatmul.mubr.f32.gmra.mrb[0].mxu0 %v5010
      %v5341 = vpop.f32.mrb[0].mxu0
      %v5342 = vadd.f32 0.0, %v5341
      %v5343 = vpop.f32.mrb[0].mxu0
      %5344 = vmatprep.mubr.f32.mxu0 0.0
      %5345 = vmatmul.mubr.f32.gmra.mrb[0].mxu0 %v5013
      %v5346 = vpop.f32.mrb[0].mxu0
      %v5347 = vadd.f32 0.0, %v5346
      %v5348 = vpop.f32.mrb[0].mxu0
      %5349 = vmatprep.mubr.f32.mxu0 0.0
      %5350 = vmatmul.mubr.f32.gmra.mrb[0].mxu0 %v5016
      %v5351 = vpop.f32.mrb[0].mxu0
      %v5352 = vadd.f32 0.0, %v5351
      %v5353 = vpop.f32.mrb[0].mxu0
      %5354 = vmatprep.mubr.f32.mxu0 0.0
      %5355 = vmatmul.mubr.f32.gmra.mrb[0].mxu0 %v5019
      %v5356 = vpop.f32.mrb[0].mxu0
      %v5357 = vadd.f32 0.0, %v5356
      %v5358 = vpop.f32.mrb[0].mxu0
      %5359 = vmatprep.mubr.f32.mxu0 0.0
      %5360 = vmatmul.mubr.f32.gmra.mrb[0].mxu0 %v5022
      %v5361 = vpop.f32.mrb[0].mxu0
      %v5362 = vadd.f32 0.0, %v5361
      %v5363 = vpop.f32.mrb[0].mxu0
      %5364 = vmatprep.mubr.f32.mxu0 0.0
      %5365 = vmatmul.mubr.f32.gmra.mrb[0].mxu0 %v5025
      %v5366 = vpop.f32.mrb[0].mxu0
      %v5367 = vadd.f32 0.0, %v5366
      %v5368 = vpop.f32.mrb[0].mxu0
      %5369 = vmatprep.mubr.f32.mxu0 0.0
      %5370 = vmatmul.mubr.f32.gmra.mrb[0].mxu0 %v5028
      %v5371 = vpop.f32.mrb[0].mxu0
      %v5372 = vadd.f32 0.0, %v5371
      %v5373 = vpop.f32.mrb[0].mxu0
      %5374 = vmatprep.mubr.f32.mxu0 0.0
      %5375 = vmatmul.mubr.f32.gmra.mrb[0].mxu0 %v5031
      %v5376 = vpop.f32.mrb[0].mxu0
      %v5377 = vadd.f32 0.0, %v5376
      %v5378 = vpop.f32.mrb[0].mxu0
      %5379 = vmatprep.mubr.f32.mxu0 0.0
      %5380 = vmatmul.mubr.f32.gmra.mrb[0].mxu0 %v5034
      %v5381 = vpop.f32.mrb[0].mxu0
      %v5382 = vadd.f32 0.0, %v5381
      %v5383 = vpop.f32.mrb[0].mxu0
      %5384 = vmatprep.mubr.f32.mxu0 0.0
      %5385 = vmatmul.mubr.f32.gmra.mrb[0].mxu0 %v5037
      %v5386 = vpop.f32.mrb[0].mxu0
      %v5387 = vadd.f32 0.0, %v5386
      %v5388 = vpop.f32.mrb[0].mxu0
      %5389 = vmatprep.mubr.f32.mxu0 0.0
      %5390 = vmatmul.mubr.f32.gmra.mrb[0].mxu0 %v5040
      %v5391 = vpop.f32.mrb[0].mxu0
      %v5392 = vadd.f32 0.0, %v5391
      %v5393 = vpop.f32.mrb[0].mxu0
      %5394 = vmatprep.mubr.f32.mxu0 0.0
      %5395 = vmatmul.mubr.f32.gmra.mrb[0].mxu0 %v5043
      %v5396 = vpop.f32.mrb[0].mxu0
      %v5397 = vadd.f32 0.0, %v5396
      %v5398 = vpop.f32.mrb[0].mxu0
      %5399 = vmatprep.mubr.f32.mxu0 0.0
      %5400 = vmatmul.mubr.f32.gmra.mrb[0].mxu0 %v5046
      %v5401 = vpop.f32.mrb[0].mxu0
      %v5402 = vadd.f32 0.0, %v5401
      %v5403 = vpop.f32.mrb[0].mxu0
      %5404 = vmatprep.mubr.f32.mxu0 0.0
      %5405 = vmatmul.mubr.f32.gmra.mrb[0].mxu0 %v5049
      %v5406 = vpop.f32.mrb[0].mxu0
      %v5407 = vadd.f32 0.0, %v5406
      %v5408 = vpop.f32.mrb[0].mxu0
      %5409 = vmatprep.mubr.f32.mxu0 0.0
      %5410 = vmatmul.mubr.f32.gmra.mrb[0].mxu0 %v5052
      %v5411 = vpop.f32.mrb[0].mxu0
      %v5412 = vadd.f32 0.0, %v5411
      %v5413 = vpop.f32.mrb[0].mxu0
      %5414 = vmatprep.mubr.f32.mxu0 0.0
      %5415 = vmatmul.mubr.f32.gmra.mrb[0].mxu0 %v5055
      %v5416 = vpop.f32.mrb[0].mxu0
      %v5417 = vadd.f32 0.0, %v5416
      %v5418 = vpop.f32.mrb[0].mxu0
      %5419 = vmatprep.mubr.f32.mxu0 0.0
      %5420 = vmatmul.mubr.f32.gmra.mrb[0].mxu0 %v5058
      %v5421 = vpop.f32.mrb[0].mxu0
      %v5422 = vadd.f32 0.0, %v5421
      %v5423 = vpop.f32.mrb[0].mxu0
      %5424 = vmatprep.mubr.f32.mxu0 0.0
      %5425 = vmatmul.mubr.f32.gmra.mrb[0].mxu0 %v5061
      %v5426 = vpop.f32.mrb[0].mxu0
      %v5427 = vadd.f32 0.0, %v5426
      %v5428 = vpop.f32.mrb[0].mxu0
      %5429 = vmatprep.mubr.f32.mxu0 0.0
      %5430 = vmatmul.mubr.f32.gmra.mrb[0].mxu0 %v5064
      %v5431 = vpop.f32.mrb[0].mxu0
      %v5432 = vadd.f32 0.0, %v5431
      %v5433 = vpop.f32.mrb[0].mxu0
      %5434 = vmatprep.mubr.f32.mxu0 0.0
      %5435 = vmatmul.mubr.f32.gmra.mrb[0].mxu0 %v5067
      %v5436 = vpop.f32.mrb[0].mxu0
      %v5437 = vadd.f32 0.0, %v5436
      %v5438 = vpop.f32.mrb[0].mxu0
      %5439 = vmatprep.mubr.f32.mxu0 0.0
      %5440 = vmatmul.mubr.f32.gmra.mrb[0].mxu0 %v5070
      %v5441 = vpop.f32.mrb[0].mxu0
      %v5442 = vadd.f32 0.0, %v5441
      %v5443 = vpop.f32.mrb[0].mxu0
      %5444 = vmatprep.mubr.f32.mxu0 0.0
      %5445 = vmatmul.mubr.f32.gmra.mrb[0].mxu0 %v5073
      %v5446 = vpop.f32.mrb[0].mxu0
      %v5447 = vadd.f32 0.0, %v5446
      %v5448 = vpop.f32.mrb[0].mxu0
      %5449 = vmatprep.mubr.f32.mxu0 0.0
      %5450 = vmatmul.mubr.f32.gmra.mrb[0].mxu0 %v5076
      %v5451 = vpop.f32.mrb[0].mxu0
      %v5452 = vadd.f32 0.0, %v5451
      %v5453 = vpop.f32.mrb[0].mxu0
      %5454 = vmatprep.mubr.f32.mxu0 0.0
      %5455 = vmatmul.mubr.f32.gmra.mrb[0].mxu0 %v5079
      %v5456 = vpop.f32.mrb[0].mxu0
      %v5457 = vadd.f32 0.0, %v5456
      %v5458 = vpop.f32.mrb[0].mxu0
      %5459 = vmatprep.mubr.f32.mxu0 0.0
      %5460 = vmatmul.mubr.f32.gmra.mrb[0].mxu0 %v5082
      %v5461 = vpop.f32.mrb[0].mxu0
      %v5462 = vadd.f32 0.0, %v5461
      %v5463 = vpop.f32.mrb[0].mxu0
      %5464 = vmatprep.mubr.f32.mxu0 0.0
      %5465 = vmatmul.mubr.f32.gmra.mrb[0].mxu0 %v5085
      %v5466 = vpop.f32.mrb[0].mxu0
      %v5467 = vadd.f32 0.0, %v5466
      %v5468 = vpop.f32.mrb[0].mxu0
      %5469 = vmatprep.mubr.f32.mxu0 0.0
      %5470 = vmatmul.mubr.f32.gmra.mrb[0].mxu0 %v5088
      %v5471 = vpop.f32.mrb[0].mxu0
      %v5472 = vadd.f32 0.0, %v5471
      %v5473 = vpop.f32.mrb[0].mxu0
      %5474 = vmatprep.mubr.f32.mxu0 0.0
      %5475 = vmatmul.mubr.f32.gmra.mrb[0].mxu0 %v5091
      %v5476 = vpop.f32.mrb[0].mxu0
      %v5477 = vadd.f32 0.0, %v5476
      %v5478 = vpop.f32.mrb[0].mxu0
      %5479 = vmatprep.mubr.f32.mxu0 0.0
      %5480 = vmatmul.mubr.f32.gmra.mrb[0].mxu0 %v5094
      %v5481 = vpop.f32.mrb[0].mxu0
      %v5482 = vadd.f32 0.0, %v5481
      %v5483 = vpop.f32.mrb[0].mxu0
      %5484 = vdwg.mxu0
      %v5485 = vrcp.pop %v315
      %v5486 = vrcp.pop %v316
      %v5487 = vrcp.pop %v317
      %v5488 = vrcp.pop %v318
      %v5489 = vrcp.pop %v319
      %v5490 = vrcp.pop %v320
      %v5491 = vrcp.pop %v321
      %v5492 = vrcp.pop %v322
      %v5493 = vrcp.pop %v323
      %v5494 = vrcp.pop %v324
      %v5495 = vrcp.pop %v325
      %v5496 = vrcp.pop %v326
      %v5497 = vrcp.pop %v327
      %v5498 = vrcp.pop %v328
      %v5499 = vrcp.pop %v329
      %v5500 = vrcp.pop %v330
      %v5501 = vrcp.pop %v331
      %v5502 = vrcp.pop %v332
      %v5503 = vrcp.pop %v333
      %v5504 = vrcp.pop %v334
      %v5505 = vrcp.pop %v335
      %v5506 = vrcp.pop %v336
      %v5507 = vrcp.pop %v337
      %v5508 = vrcp.pop %v338
      %v5509 = vrcp.pop %v339
      %v5510 = vrcp.pop %v340
      %v5511 = vrcp.pop %v341
      %v5512 = vrcp.pop %v342
      %v5513 = vrcp.pop %v343
      %v5514 = vrcp.pop %v344
      %v5515 = vrcp.pop %v345
      %v5516 = vrcp.pop %v346
      %v5517 = vrcp.pop %v347
      %v5518 = vrcp.pop %v348
      %v5519 = vrcp.pop %v349
      %v5520 = vrcp.pop %v350
      %v5521 = vrcp.pop %v351
      %v5522 = vrcp.pop %v352
      %v5523 = vrcp.pop %v353
      %v5524 = vrcp.pop %v354
      %v5525 = vrcp.pop %v355
      %v5526 = vrcp.pop %v356
      %v5527 = vrcp.pop %v357
      %v5528 = vrcp.pop %v358
      %v5529 = vrcp.pop %v359
      %v5530 = vrcp.pop %v360
      %v5531 = vrcp.pop %v361
      %v5532 = vrcp.pop %v362
      %v5533 = vrcp.pop %v363
      %v5534 = vrcp.pop %v364
      %v5535 = vrcp.pop %v365
      %v5536 = vrcp.pop %v366
      %v5537 = vrcp.pop %v367
      %v5538 = vrcp.pop %v368
      %v5539 = vrcp.pop %v369
      %v5540 = vrcp.pop %v370
      %v5541 = vrcp.pop %v371
      %v5542 = vrcp.pop %v372
      %v5543 = vrcp.pop %v373
      %v5544 = vrcp.pop %v374
      %v5545 = vrcp.pop %v375
      %v5546 = vrcp.pop %v376
      %v5547 = vrcp.pop %v377
      %v5548 = vrcp.pop %v378
      %v5549 = vadd.f32 %v4641, %v5167
      %v5550 = vadd.f32 %v4644, %v5172
      %v5551 = vadd.f32 %v4649, %v5177
      %v5552 = vadd.f32 %v4652, %v5182
      %v5553 = vadd.f32 %v4657, %v5187
      %v5554 = vadd.f32 %v4660, %v5192
      %v5555 = vadd.f32 %v4665, %v5197
      %v5556 = vadd.f32 %v4668, %v5202
      %v5557 = vadd.f32 %v4673, %v5207
      %v5558 = vadd.f32 %v4676, %v5212
      %v5559 = vadd.f32 %v4681, %v5217
      %v5560 = vadd.f32 %v4684, %v5222
      %v5561 = vadd.f32 %v4689, %v5227
      %v5562 = vadd.f32 %v4692, %v5232
      %v5563 = vadd.f32 %v4697, %v5237
      %v5564 = vadd.f32 %v4700, %v5242
      %v5565 = vadd.f32 %v4705, %v5247
      %v5566 = vadd.f32 %v4708, %v5252
      %v5567 = vadd.f32 %v4713, %v5257
      %v5568 = vadd.f32 %v4716, %v5262
      %v5569 = vadd.f32 %v4721, %v5267
      %v5570 = vadd.f32 %v4724, %v5272
      %v5571 = vadd.f32 %v4729, %v5277
      %v5572 = vadd.f32 %v4732, %v5282
      %v5573 = vadd.f32 %v4737, %v5287
      %v5574 = vadd.f32 %v4740, %v5292
      %v5575 = vadd.f32 %v4745, %v5297
      %v5576 = vadd.f32 %v4748, %v5302
      %v5577 = vadd.f32 %v4753, %v5307
      %v5578 = vadd.f32 %v4756, %v5312
      %v5579 = vadd.f32 %v4761, %v5317
      %v5580 = vadd.f32 %v4764, %v5322
      %v5581 = vadd.f32 %v4769, %v5327
      %v5582 = vadd.f32 %v4772, %v5332
      %v5583 = vadd.f32 %v4777, %v5337
      %v5584 = vadd.f32 %v4780, %v5342
      %v5585 = vadd.f32 %v4785, %v5347
      %v5586 = vadd.f32 %v4788, %v5352
      %v5587 = vadd.f32 %v4793, %v5357
      %v5588 = vadd.f32 %v4796, %v5362
      %v5589 = vadd.f32 %v4801, %v5367
      %v5590 = vadd.f32 %v4804, %v5372
      %v5591 = vadd.f32 %v4809, %v5377
      %v5592 = vadd.f32 %v4812, %v5382
      %v5593 = vadd.f32 %v4817, %v5387
      %v5594 = vadd.f32 %v4820, %v5392
      %v5595 = vadd.f32 %v4825, %v5397
      %v5596 = vadd.f32 %v4828, %v5402
      %v5597 = vadd.f32 %v4833, %v5407
      %v5598 = vadd.f32 %v4836, %v5412
      %v5599 = vadd.f32 %v4841, %v5417
      %v5600 = vadd.f32 %v4844, %v5422
      %v5601 = vadd.f32 %v4849, %v5427
      %v5602 = vadd.f32 %v4852, %v5432
      %v5603 = vadd.f32 %v4857, %v5437
      %v5604 = vadd.f32 %v4860, %v5442
      %v5605 = vadd.f32 %v4865, %v5447
      %v5606 = vadd.f32 %v4868, %v5452
      %v5607 = vadd.f32 %v4873, %v5457
      %v5608 = vadd.f32 %v4876, %v5462
      %v5609 = vadd.f32 %v4881, %v5467
      %v5610 = vadd.f32 %v4884, %v5472
      %v5611 = vadd.f32 %v4889, %v5477
      %v5612 = vadd.f32 %v4892, %v5482
      %v5613 = vmax.f32 %v5549, 0.0
      %v5614 = vmax.f32 %v5550, 0.0
      %v5615 = vmax.f32 %v5551, 0.0
      %v5616 = vmax.f32 %v5552, 0.0
      %v5617 = vmax.f32 %v5553, 0.0
      %v5618 = vmax.f32 %v5554, 0.0
      %v5619 = vmax.f32 %v5555, 0.0
      %v5620 = vmax.f32 %v5556, 0.0
      %v5621 = vmax.f32 %v5557, 0.0
      %v5622 = vmax.f32 %v5558, 0.0
      %v5623 = vmax.f32 %v5559, 0.0
      %v5624 = vmax.f32 %v5560, 0.0
      %v5625 = vmax.f32 %v5561, 0.0
      %v5626 = vmax.f32 %v5562, 0.0
      %v5627 = vmax.f32 %v5563, 0.0
      %v5628 = vmax.f32 %v5564, 0.0
      %v5629 = vmax.f32 %v5565, 0.0
      %v5630 = vmax.f32 %v5566, 0.0
      %v5631 = vmax.f32 %v5567, 0.0
      %v5632 = vmax.f32 %v5568, 0.0
      %v5633 = vmax.f32 %v5569, 0.0
      %v5634 = vmax.f32 %v5570, 0.0
      %v5635 = vmax.f32 %v5571, 0.0
      %v5636 = vmax.f32 %v5572, 0.0
      %v5637 = vmax.f32 %v5573, 0.0
      %v5638 = vmax.f32 %v5574, 0.0
      %v5639 = vmax.f32 %v5575, 0.0
      %v5640 = vmax.f32 %v5576, 0.0
      %v5641 = vmax.f32 %v5577, 0.0
      %v5642 = vmax.f32 %v5578, 0.0
      %v5643 = vmax.f32 %v5579, 0.0
      %v5644 = vmax.f32 %v5580, 0.0
      %v5645 = vmax.f32 %v5581, 0.0
      %v5646 = vmax.f32 %v5582, 0.0
      %v5647 = vmax.f32 %v5583, 0.0
      %v5648 = vmax.f32 %v5584, 0.0
      %v5649 = vmax.f32 %v5585, 0.0
      %v5650 = vmax.f32 %v5586, 0.0
      %v5651 = vmax.f32 %v5587, 0.0
      %v5652 = vmax.f32 %v5588, 0.0
      %v5653 = vmax.f32 %v5589, 0.0
      %v5654 = vmax.f32 %v5590, 0.0
      %v5655 = vmax.f32 %v5591, 0.0
      %v5656 = vmax.f32 %v5592, 0.0
      %v5657 = vmax.f32 %v5593, 0.0
      %v5658 = vmax.f32 %v5594, 0.0
      %v5659 = vmax.f32 %v5595, 0.0
      %v5660 = vmax.f32 %v5596, 0.0
      %v5661 = vmax.f32 %v5597, 0.0
      %v5662 = vmax.f32 %v5598, 0.0
      %v5663 = vmax.f32 %v5599, 0.0
      %v5664 = vmax.f32 %v5600, 0.0
      %v5665 = vmax.f32 %v5601, 0.0
      %v5666 = vmax.f32 %v5602, 0.0
      %v5667 = vmax.f32 %v5603, 0.0
      %v5668 = vmax.f32 %v5604, 0.0
      %v5669 = vmax.f32 %v5605, 0.0
      %v5670 = vmax.f32 %v5606, 0.0
      %v5671 = vmax.f32 %v5607, 0.0
      %v5672 = vmax.f32 %v5608, 0.0
      %v5673 = vmax.f32 %v5609, 0.0
      %v5674 = vmax.f32 %v5610, 0.0
      %v5675 = vmax.f32 %v5611, 0.0
      %v5676 = vmax.f32 %v5612, 0.0
      %5678 = vset.pattern.permute.xlu0 55
      %5679 = vperm.xlu0 %5678, %v5485
      %v5680 = vpop.permute.xlu0 %5679
      %5683 = vset.pattern.permute.xlu0 55
      %5684 = vperm.xlu0 %5683, %v5486
      %v5685 = vpop.permute.xlu0 %5684
      %5688 = vset.pattern.permute.xlu0 55
      %5689 = vperm.xlu0 %5688, %v5487
      %v5690 = vpop.permute.xlu0 %5689
      %5693 = vset.pattern.permute.xlu0 55
      %5694 = vperm.xlu0 %5693, %v5488
      %v5695 = vpop.permute.xlu0 %5694
      %5698 = vset.pattern.permute.xlu0 55
      %5699 = vperm.xlu0 %5698, %v5489
      %v5700 = vpop.permute.xlu0 %5699
      %5703 = vset.pattern.permute.xlu0 55
      %5704 = vperm.xlu0 %5703, %v5490
      %v5705 = vpop.permute.xlu0 %5704
      %5708 = vset.pattern.permute.xlu0 55
      %5709 = vperm.xlu0 %5708, %v5491
      %v5710 = vpop.permute.xlu0 %5709
      %5713 = vset.pattern.permute.xlu0 55
      %5714 = vperm.xlu0 %5713, %v5492
      %v5715 = vpop.permute.xlu0 %5714
      %5718 = vset.pattern.permute.xlu0 55
      %5719 = vperm.xlu0 %5718, %v5493
      %v5720 = vpop.permute.xlu0 %5719
      %5723 = vset.pattern.permute.xlu0 55
      %5724 = vperm.xlu0 %5723, %v5494
      %v5725 = vpop.permute.xlu0 %5724
      %5728 = vset.pattern.permute.xlu0 55
      %5729 = vperm.xlu0 %5728, %v5495
      %v5730 = vpop.permute.xlu0 %5729
      %5733 = vset.pattern.permute.xlu0 55
      %5734 = vperm.xlu0 %5733, %v5496
      %v5735 = vpop.permute.xlu0 %5734
      %5738 = vset.pattern.permute.xlu0 55
      %5739 = vperm.xlu0 %5738, %v5497
      %v5740 = vpop.permute.xlu0 %5739
      %5743 = vset.pattern.permute.xlu0 55
      %5744 = vperm.xlu0 %5743, %v5498
      %v5745 = vpop.permute.xlu0 %5744
      %5748 = vset.pattern.permute.xlu0 55
      %5749 = vperm.xlu0 %5748, %v5499
      %v5750 = vpop.permute.xlu0 %5749
      %5753 = vset.pattern.permute.xlu0 55
      %5754 = vperm.xlu0 %5753, %v5500
      %v5755 = vpop.permute.xlu0 %5754
      %5758 = vset.pattern.permute.xlu0 55
      %5759 = vperm.xlu0 %5758, %v5501
      %v5760 = vpop.permute.xlu0 %5759
      %5763 = vset.pattern.permute.xlu0 55
      %5764 = vperm.xlu0 %5763, %v5502
      %v5765 = vpop.permute.xlu0 %5764
      %5768 = vset.pattern.permute.xlu0 55
      %5769 = vperm.xlu0 %5768, %v5503
      %v5770 = vpop.permute.xlu0 %5769
      %5773 = vset.pattern.permute.xlu0 55
      %5774 = vperm.xlu0 %5773, %v5504
      %v5775 = vpop.permute.xlu0 %5774
      %5778 = vset.pattern.permute.xlu0 55
      %5779 = vperm.xlu0 %5778, %v5505
      %v5780 = vpop.permute.xlu0 %5779
      %5783 = vset.pattern.permute.xlu0 55
      %5784 = vperm.xlu0 %5783, %v5506
      %v5785 = vpop.permute.xlu0 %5784
      %5788 = vset.pattern.permute.xlu0 55
      %5789 = vperm.xlu0 %5788, %v5507
      %v5790 = vpop.permute.xlu0 %5789
      %5793 = vset.pattern.permute.xlu0 55
      %5794 = vperm.xlu0 %5793, %v5508
      %v5795 = vpop.permute.xlu0 %5794
      %5798 = vset.pattern.permute.xlu0 55
      %5799 = vperm.xlu0 %5798, %v5509
      %v5800 = vpop.permute.xlu0 %5799
      %5803 = vset.pattern.permute.xlu0 55
      %5804 = vperm.xlu0 %5803, %v5510
      %v5805 = vpop.permute.xlu0 %5804
      %5808 = vset.pattern.permute.xlu0 55
      %5809 = vperm.xlu0 %5808, %v5511
      %v5810 = vpop.permute.xlu0 %5809
      %5813 = vset.pattern.permute.xlu0 55
      %5814 = vperm.xlu0 %5813, %v5512
      %v5815 = vpop.permute.xlu0 %5814
      %5818 = vset.pattern.permute.xlu0 55
      %5819 = vperm.xlu0 %5818, %v5513
      %v5820 = vpop.permute.xlu0 %5819
      %5823 = vset.pattern.permute.xlu0 55
      %5824 = vperm.xlu0 %5823, %v5514
      %v5825 = vpop.permute.xlu0 %5824
      %5828 = vset.pattern.permute.xlu0 55
      %5829 = vperm.xlu0 %5828, %v5515
      %v5830 = vpop.permute.xlu0 %5829
      %5833 = vset.pattern.permute.xlu0 55
      %5834 = vperm.xlu0 %5833, %v5516
      %v5835 = vpop.permute.xlu0 %5834
      %5838 = vset.pattern.permute.xlu0 55
      %5839 = vperm.xlu0 %5838, %v5517
      %v5840 = vpop.permute.xlu0 %5839
      %5843 = vset.pattern.permute.xlu0 55
      %5844 = vperm.xlu0 %5843, %v5518
      %v5845 = vpop.permute.xlu0 %5844
      %5848 = vset.pattern.permute.xlu0 55
      %5849 = vperm.xlu0 %5848, %v5519
      %v5850 = vpop.permute.xlu0 %5849
      %5853 = vset.pattern.permute.xlu0 55
      %5854 = vperm.xlu0 %5853, %v5520
      %v5855 = vpop.permute.xlu0 %5854
      %5858 = vset.pattern.permute.xlu0 55
      %5859 = vperm.xlu0 %5858, %v5521
      %v5860 = vpop.permute.xlu0 %5859
      %5863 = vset.pattern.permute.xlu0 55
      %5864 = vperm.xlu0 %5863, %v5522
      %v5865 = vpop.permute.xlu0 %5864
      %5868 = vset.pattern.permute.xlu0 55
      %5869 = vperm.xlu0 %5868, %v5523
      %v5870 = vpop.permute.xlu0 %5869
      %5873 = vset.pattern.permute.xlu0 55
      %5874 = vperm.xlu0 %5873, %v5524
      %v5875 = vpop.permute.xlu0 %5874
      %5878 = vset.pattern.permute.xlu0 55
      %5879 = vperm.xlu0 %5878, %v5525
      %v5880 = vpop.permute.xlu0 %5879
      %5883 = vset.pattern.permute.xlu0 55
      %5884 = vperm.xlu0 %5883, %v5526
      %v5885 = vpop.permute.xlu0 %5884
      %5888 = vset.pattern.permute.xlu0 55
      %5889 = vperm.xlu0 %5888, %v5527
      %v5890 = vpop.permute.xlu0 %5889
      %5893 = vset.pattern.permute.xlu0 55
      %5894 = vperm.xlu0 %5893, %v5528
      %v5895 = vpop.permute.xlu0 %5894
      %5898 = vset.pattern.permute.xlu0 55
      %5899 = vperm.xlu0 %5898, %v5529
      %v5900 = vpop.permute.xlu0 %5899
      %5903 = vset.pattern.permute.xlu0 55
      %5904 = vperm.xlu0 %5903, %v5530
      %v5905 = vpop.permute.xlu0 %5904
      %5908 = vset.pattern.permute.xlu0 55
      %5909 = vperm.xlu0 %5908, %v5531
      %v5910 = vpop.permute.xlu0 %5909
      %5913 = vset.pattern.permute.xlu0 55
      %5914 = vperm.xlu0 %5913, %v5532
      %v5915 = vpop.permute.xlu0 %5914
      %5918 = vset.pattern.permute.xlu0 55
      %5919 = vperm.xlu0 %5918, %v5533
      %v5920 = vpop.permute.xlu0 %5919
      %5923 = vset.pattern.permute.xlu0 55
      %5924 = vperm.xlu0 %5923, %v5534
      %v5925 = vpop.permute.xlu0 %5924
      %5928 = vset.pattern.permute.xlu0 55
      %5929 = vperm.xlu0 %5928, %v5535
      %v5930 = vpop.permute.xlu0 %5929
      %5933 = vset.pattern.permute.xlu0 55
      %5934 = vperm.xlu0 %5933, %v5536
      %v5935 = vpop.permute.xlu0 %5934
      %5938 = vset.pattern.permute.xlu0 55
      %5939 = vperm.xlu0 %5938, %v5537
      %v5940 = vpop.permute.xlu0 %5939
      %5943 = vset.pattern.permute.xlu0 55
      %5944 = vperm.xlu0 %5943, %v5538
      %v5945 = vpop.permute.xlu0 %5944
      %5948 = vset.pattern.permute.xlu0 55
      %5949 = vperm.xlu0 %5948, %v5539
      %v5950 = vpop.permute.xlu0 %5949
      %5953 = vset.pattern.permute.xlu0 55
      %5954 = vperm.xlu0 %5953, %v5540
      %v5955 = vpop.permute.xlu0 %5954
      %5958 = vset.pattern.permute.xlu0 55
      %5959 = vperm.xlu0 %5958, %v5541
      %v5960 = vpop.permute.xlu0 %5959
      %5963 = vset.pattern.permute.xlu0 55
      %5964 = vperm.xlu0 %5963, %v5542
      %v5965 = vpop.permute.xlu0 %5964
      %5968 = vset.pattern.permute.xlu0 55
      %5969 = vperm.xlu0 %5968, %v5543
      %v5970 = vpop.permute.xlu0 %5969
      %5973 = vset.pattern.permute.xlu0 55
      %5974 = vperm.xlu0 %5973, %v5544
      %v5975 = vpop.permute.xlu0 %5974
      %5978 = vset.pattern.permute.xlu0 55
      %5979 = vperm.xlu0 %5978, %v5545
      %v5980 = vpop.permute.xlu0 %5979
      %5983 = vset.pattern.permute.xlu0 55
      %5984 = vperm.xlu0 %5983, %v5546
      %v5985 = vpop.permute.xlu0 %5984
      %5988 = vset.pattern.permute.xlu0 55
      %5989 = vperm.xlu0 %5988, %v5547
      %v5990 = vpop.permute.xlu0 %5989
      %5993 = vset.pattern.permute.xlu0 55
      %5994 = vperm.xlu0 %5993, %v5548
      %v5995 = vpop.permute.xlu0 %5994
      %v5997 = vmul.f32 %v4641, %v5680
      %v5998 = vmul.f32 %v4644, %v5685
      %v5999 = vmul.f32 %v4649, %v5690
      %v6000 = vmul.f32 %v4652, %v5695
      %v6001 = vmul.f32 %v4657, %v5700
      %v6002 = vmul.f32 %v4660, %v5705
      %v6003 = vmul.f32 %v4665, %v5710
      %v6004 = vmul.f32 %v4668, %v5715
      %v6005 = vmul.f32 %v4673, %v5720
      %v6006 = vmul.f32 %v4676, %v5725
      %v6007 = vmul.f32 %v4681, %v5730
      %v6008 = vmul.f32 %v4684, %v5735
      %v6009 = vmul.f32 %v4689, %v5740
      %v6010 = vmul.f32 %v4692, %v5745
      %v6011 = vmul.f32 %v4697, %v5750
      %v6012 = vmul.f32 %v4700, %v5755
      %v6013 = vmul.f32 %v4705, %v5760
      %v6014 = vmul.f32 %v4708, %v5765
      %v6015 = vmul.f32 %v4713, %v5770
      %v6016 = vmul.f32 %v4716, %v5775
      %v6017 = vmul.f32 %v4721, %v5780
      %v6018 = vmul.f32 %v4724, %v5785
      %v6019 = vmul.f32 %v4729, %v5790
      %v6020 = vmul.f32 %v4732, %v5795
      %v6021 = vmul.f32 %v4737, %v5800
      %v6022 = vmul.f32 %v4740, %v5805
      %v6023 = vmul.f32 %v4745, %v5810
      %v6024 = vmul.f32 %v4748, %v5815
      %v6025 = vmul.f32 %v4753, %v5820
      %v6026 = vmul.f32 %v4756, %v5825
      %v6027 = vmul.f32 %v4761, %v5830
      %v6028 = vmul.f32 %v4764, %v5835
      %v6029 = vmul.f32 %v4769, %v5840
      %v6030 = vmul.f32 %v4772, %v5845
      %v6031 = vmul.f32 %v4777, %v5850
      %v6032 = vmul.f32 %v4780, %v5855
      %v6033 = vmul.f32 %v4785, %v5860
      %v6034 = vmul.f32 %v4788, %v5865
      %v6035 = vmul.f32 %v4793, %v5870
      %v6036 = vmul.f32 %v4796, %v5875
      %v6037 = vmul.f32 %v4801, %v5880
      %v6038 = vmul.f32 %v4804, %v5885
      %v6039 = vmul.f32 %v4809, %v5890
      %v6040 = vmul.f32 %v4812, %v5895
      %v6041 = vmul.f32 %v4817, %v5900
      %v6042 = vmul.f32 %v4820, %v5905
      %v6043 = vmul.f32 %v4825, %v5910
      %v6044 = vmul.f32 %v4828, %v5915
      %v6045 = vmul.f32 %v4833, %v5920
      %v6046 = vmul.f32 %v4836, %v5925
      %v6047 = vmul.f32 %v4841, %v5930
      %v6048 = vmul.f32 %v4844, %v5935
      %v6049 = vmul.f32 %v4849, %v5940
      %v6050 = vmul.f32 %v4852, %v5945
      %v6051 = vmul.f32 %v4857, %v5950
      %v6052 = vmul.f32 %v4860, %v5955
      %v6053 = vmul.f32 %v4865, %v5960
      %v6054 = vmul.f32 %v4868, %v5965
      %v6055 = vmul.f32 %v4873, %v5970
      %v6056 = vmul.f32 %v4876, %v5975
      %v6057 = vmul.f32 %v4881, %v5980
      %v6058 = vmul.f32 %v4884, %v5985
      %v6059 = vmul.f32 %v4889, %v5990
      %v6060 = vmul.f32 %v4892, %v5995
      %v6061 = vadd.f32 %v5997, %v5167
      %v6062 = vadd.f32 %v5998, %v5172
      %v6063 = vadd.f32 %v5999, %v5177
      %v6064 = vadd.f32 %v6000, %v5182
      %v6065 = vadd.f32 %v6001, %v5187
      %v6066 = vadd.f32 %v6002, %v5192
      %v6067 = vadd.f32 %v6003, %v5197
      %v6068 = vadd.f32 %v6004, %v5202
      %v6069 = vadd.f32 %v6005, %v5207
      %v6070 = vadd.f32 %v6006, %v5212
      %v6071 = vadd.f32 %v6007, %v5217
      %v6072 = vadd.f32 %v6008, %v5222
      %v6073 = vadd.f32 %v6009, %v5227
      %v6074 = vadd.f32 %v6010, %v5232
      %v6075 = vadd.f32 %v6011, %v5237
      %v6076 = vadd.f32 %v6012, %v5242
      %v6077 = vadd.f32 %v6013, %v5247
      %v6078 = vadd.f32 %v6014, %v5252
      %v6079 = vadd.f32 %v6015, %v5257
      %v6080 = vadd.f32 %v6016, %v5262
      %v6081 = vadd.f32 %v6017, %v5267
      %v6082 = vadd.f32 %v6018, %v5272
      %v6083 = vadd.f32 %v6019, %v5277
      %v6084 = vadd.f32 %v6020, %v5282
      %v6085 = vadd.f32 %v6021, %v5287
      %v6086 = vadd.f32 %v6022, %v5292
      %v6087 = vadd.f32 %v6023, %v5297
      %v6088 = vadd.f32 %v6024, %v5302
      %v6089 = vadd.f32 %v6025, %v5307
      %v6090 = vadd.f32 %v6026, %v5312
      %v6091 = vadd.f32 %v6027, %v5317
      %v6092 = vadd.f32 %v6028, %v5322
      %v6093 = vadd.f32 %v6029, %v5327
      %v6094 = vadd.f32 %v6030, %v5332
      %v6095 = vadd.f32 %v6031, %v5337
      %v6096 = vadd.f32 %v6032, %v5342
      %v6097 = vadd.f32 %v6033, %v5347
      %v6098 = vadd.f32 %v6034, %v5352
      %v6099 = vadd.f32 %v6035, %v5357
      %v6100 = vadd.f32 %v6036, %v5362
      %v6101 = vadd.f32 %v6037, %v5367
      %v6102 = vadd.f32 %v6038, %v5372
      %v6103 = vadd.f32 %v6039, %v5377
      %v6104 = vadd.f32 %v6040, %v5382
      %v6105 = vadd.f32 %v6041, %v5387
      %v6106 = vadd.f32 %v6042, %v5392
      %v6107 = vadd.f32 %v6043, %v5397
      %v6108 = vadd.f32 %v6044, %v5402
      %v6109 = vadd.f32 %v6045, %v5407
      %v6110 = vadd.f32 %v6046, %v5412
      %v6111 = vadd.f32 %v6047, %v5417
      %v6112 = vadd.f32 %v6048, %v5422
      %v6113 = vadd.f32 %v6049, %v5427
      %v6114 = vadd.f32 %v6050, %v5432
      %v6115 = vadd.f32 %v6051, %v5437
      %v6116 = vadd.f32 %v6052, %v5442
      %v6117 = vadd.f32 %v6053, %v5447
      %v6118 = vadd.f32 %v6054, %v5452
      %v6119 = vadd.f32 %v6055, %v5457
      %v6120 = vadd.f32 %v6056, %v5462
      %v6121 = vadd.f32 %v6057, %v5467
      %v6122 = vadd.f32 %v6058, %v5472
      %v6123 = vadd.f32 %v6059, %v5477
      %v6124 = vadd.f32 %v6060, %v5482
      %v6125 = vsub.f32 0.0, %v6061
      %v6126 = vsub.f32 0.0, %v6062
      %v6127 = vsub.f32 0.0, %v6063
      %v6128 = vsub.f32 0.0, %v6064
      %v6129 = vsub.f32 0.0, %v6065
      %v6130 = vsub.f32 0.0, %v6066
      %v6131 = vsub.f32 0.0, %v6067
      %v6132 = vsub.f32 0.0, %v6068
      %v6133 = vsub.f32 0.0, %v6069
      %v6134 = vsub.f32 0.0, %v6070
      %v6135 = vsub.f32 0.0, %v6071
      %v6136 = vsub.f32 0.0, %v6072
      %v6137 = vsub.f32 0.0, %v6073
      %v6138 = vsub.f32 0.0, %v6074
      %v6139 = vsub.f32 0.0, %v6075
      %v6140 = vsub.f32 0.0, %v6076
      %v6141 = vsub.f32 0.0, %v6077
      %v6142 = vsub.f32 0.0, %v6078
      %v6143 = vsub.f32 0.0, %v6079
      %v6144 = vsub.f32 0.0, %v6080
      %v6145 = vsub.f32 0.0, %v6081
      %v6146 = vsub.f32 0.0, %v6082
      %v6147 = vsub.f32 0.0, %v6083
      %v6148 = vsub.f32 0.0, %v6084
      %v6149 = vsub.f32 0.0, %v6085
      %v6150 = vsub.f32 0.0, %v6086
      %v6151 = vsub.f32 0.0, %v6087
      %v6152 = vsub.f32 0.0, %v6088
      %v6153 = vsub.f32 0.0, %v6089
      %v6154 = vsub.f32 0.0, %v6090
      %v6155 = vsub.f32 0.0, %v6091
      %v6156 = vsub.f32 0.0, %v6092
      %v6157 = vsub.f32 0.0, %v6093
      %v6158 = vsub.f32 0.0, %v6094
      %v6159 = vsub.f32 0.0, %v6095
      %v6160 = vsub.f32 0.0, %v6096
      %v6161 = vsub.f32 0.0, %v6097
      %v6162 = vsub.f32 0.0, %v6098
      %v6163 = vsub.f32 0.0, %v6099
      %v6164 = vsub.f32 0.0, %v6100
      %v6165 = vsub.f32 0.0, %v6101
      %v6166 = vsub.f32 0.0, %v6102
      %v6167 = vsub.f32 0.0, %v6103
      %v6168 = vsub.f32 0.0, %v6104
      %v6169 = vsub.f32 0.0, %v6105
      %v6170 = vsub.f32 0.0, %v6106
      %v6171 = vsub.f32 0.0, %v6107
      %v6172 = vsub.f32 0.0, %v6108
      %v6173 = vsub.f32 0.0, %v6109
      %v6174 = vsub.f32 0.0, %v6110
      %v6175 = vsub.f32 0.0, %v6111
      %v6176 = vsub.f32 0.0, %v6112
      %v6177 = vsub.f32 0.0, %v6113
      %v6178 = vsub.f32 0.0, %v6114
      %v6179 = vsub.f32 0.0, %v6115
      %v6180 = vsub.f32 0.0, %v6116
      %v6181 = vsub.f32 0.0, %v6117
      %v6182 = vsub.f32 0.0, %v6118
      %v6183 = vsub.f32 0.0, %v6119
      %v6184 = vsub.f32 0.0, %v6120
      %v6185 = vsub.f32 0.0, %v6121
      %v6186 = vsub.f32 0.0, %v6122
      %v6187 = vsub.f32 0.0, %v6123
      %v6188 = vsub.f32 0.0, %v6124
      %v6189 = vmul.f32 %v6125, 1.442695
      %v6190 = vpow.pop %v6189
      %v6191 = vmul.f32 %v6126, 1.442695
      %v6192 = vpow.pop %v6191
      %v6193 = vmul.f32 %v6127, 1.442695
      %v6194 = vpow.pop %v6193
      %v6195 = vmul.f32 %v6128, 1.442695
      %v6196 = vpow.pop %v6195
      %v6197 = vmul.f32 %v6129, 1.442695
      %v6198 = vpow.pop %v6197
      %v6199 = vmul.f32 %v6130, 1.442695
      %v6200 = vpow.pop %v6199
      %v6201 = vmul.f32 %v6131, 1.442695
      %v6202 = vpow.pop %v6201
      %v6203 = vmul.f32 %v6132, 1.442695
      %v6204 = vpow.pop %v6203
      %v6205 = vmul.f32 %v6133, 1.442695
      %v6206 = vpow.pop %v6205
      %v6207 = vmul.f32 %v6134, 1.442695
      %v6208 = vpow.pop %v6207
      %v6209 = vmul.f32 %v6135, 1.442695
      %v6210 = vpow.pop %v6209
      %v6211 = vmul.f32 %v6136, 1.442695
      %v6212 = vpow.pop %v6211
      %v6213 = vmul.f32 %v6137, 1.442695
      %v6214 = vpow.pop %v6213
      %v6215 = vmul.f32 %v6138, 1.442695
      %v6216 = vpow.pop %v6215
      %v6217 = vmul.f32 %v6139, 1.442695
      %v6218 = vpow.pop %v6217
      %v6219 = vmul.f32 %v6140, 1.442695
      %v6220 = vpow.pop %v6219
      %v6221 = vmul.f32 %v6141, 1.442695
      %v6222 = vpow.pop %v6221
      %v6223 = vmul.f32 %v6142, 1.442695
      %v6224 = vpow.pop %v6223
      %v6225 = vmul.f32 %v6143, 1.442695
      %v6226 = vpow.pop %v6225
      %v6227 = vmul.f32 %v6144, 1.442695
      %v6228 = vpow.pop %v6227
      %v6229 = vmul.f32 %v6145, 1.442695
      %v6230 = vpow.pop %v6229
      %v6231 = vmul.f32 %v6146, 1.442695
      %v6232 = vpow.pop %v6231
      %v6233 = vmul.f32 %v6147, 1.442695
      %v6234 = vpow.pop %v6233
      %v6235 = vmul.f32 %v6148, 1.442695
      %v6236 = vpow.pop %v6235
      %v6237 = vmul.f32 %v6149, 1.442695
      %v6238 = vpow.pop %v6237
      %v6239 = vmul.f32 %v6150, 1.442695
      %v6240 = vpow.pop %v6239
      %v6241 = vmul.f32 %v6151, 1.442695
      %v6242 = vpow.pop %v6241
      %v6243 = vmul.f32 %v6152, 1.442695
      %v6244 = vpow.pop %v6243
      %v6245 = vmul.f32 %v6153, 1.442695
      %v6246 = vpow.pop %v6245
      %v6247 = vmul.f32 %v6154, 1.442695
      %v6248 = vpow.pop %v6247
      %v6249 = vmul.f32 %v6155, 1.442695
      %v6250 = vpow.pop %v6249
      %v6251 = vmul.f32 %v6156, 1.442695
      %v6252 = vpow.pop %v6251
      %v6253 = vmul.f32 %v6157, 1.442695
      %v6254 = vpow.pop %v6253
      %v6255 = vmul.f32 %v6158, 1.442695
      %v6256 = vpow.pop %v6255
      %v6257 = vmul.f32 %v6159, 1.442695
      %v6258 = vpow.pop %v6257
      %v6259 = vmul.f32 %v6160, 1.442695
      %v6260 = vpow.pop %v6259
      %v6261 = vmul.f32 %v6161, 1.442695
      %v6262 = vpow.pop %v6261
      %v6263 = vmul.f32 %v6162, 1.442695
      %v6264 = vpow.pop %v6263
      %v6265 = vmul.f32 %v6163, 1.442695
      %v6266 = vpow.pop %v6265
      %v6267 = vmul.f32 %v6164, 1.442695
      %v6268 = vpow.pop %v6267
      %v6269 = vmul.f32 %v6165, 1.442695
      %v6270 = vpow.pop %v6269
      %v6271 = vmul.f32 %v6166, 1.442695
      %v6272 = vpow.pop %v6271
      %v6273 = vmul.f32 %v6167, 1.442695
      %v6274 = vpow.pop %v6273
      %v6275 = vmul.f32 %v6168, 1.442695
      %v6276 = vpow.pop %v6275
      %v6277 = vmul.f32 %v6169, 1.442695
      %v6278 = vpow.pop %v6277
      %v6279 = vmul.f32 %v6170, 1.442695
      %v6280 = vpow.pop %v6279
      %v6281 = vmul.f32 %v6171, 1.442695
      %v6282 = vpow.pop %v6281
      %v6283 = vmul.f32 %v6172, 1.442695
      %v6284 = vpow.pop %v6283
      %v6285 = vmul.f32 %v6173, 1.442695
      %v6286 = vpow.pop %v6285
      %v6287 = vmul.f32 %v6174, 1.442695
      %v6288 = vpow.pop %v6287
      %v6289 = vmul.f32 %v6175, 1.442695
      %v6290 = vpow.pop %v6289
      %v6291 = vmul.f32 %v6176, 1.442695
      %v6292 = vpow.pop %v6291
      %v6293 = vmul.f32 %v6177, 1.442695
      %v6294 = vpow.pop %v6293
      %v6295 = vmul.f32 %v6178, 1.442695
      %v6296 = vpow.pop %v6295
      %v6297 = vmul.f32 %v6179, 1.442695
      %v6298 = vpow.pop %v6297
      %v6299 = vmul.f32 %v6180, 1.442695
      %v6300 = vpow.pop %v6299
      %v6301 = vmul.f32 %v6181, 1.442695
      %v6302 = vpow.pop %v6301
      %v6303 = vmul.f32 %v6182, 1.442695
      %v6304 = vpow.pop %v6303
      %v6305 = vmul.f32 %v6183, 1.442695
      %v6306 = vpow.pop %v6305
      %v6307 = vmul.f32 %v6184, 1.442695
      %v6308 = vpow.pop %v6307
      %v6309 = vmul.f32 %v6185, 1.442695
      %v6310 = vpow.pop %v6309
      %v6311 = vmul.f32 %v6186, 1.442695
      %v6312 = vpow.pop %v6311
      %v6313 = vmul.f32 %v6187, 1.442695
      %v6314 = vpow.pop %v6313
      %v6315 = vmul.f32 %v6188, 1.442695
      %v6316 = vpow.pop %v6315
      %v6317 = vadd.f32 %v6190, 1.0
      %v6318 = vadd.f32 %v6192, 1.0
      %v6319 = vadd.f32 %v6194, 1.0
      %v6320 = vadd.f32 %v6196, 1.0
      %v6321 = vadd.f32 %v6198, 1.0
      %v6322 = vadd.f32 %v6200, 1.0
      %v6323 = vadd.f32 %v6202, 1.0
      %v6324 = vadd.f32 %v6204, 1.0
      %v6325 = vadd.f32 %v6206, 1.0
      %v6326 = vadd.f32 %v6208, 1.0
      %v6327 = vadd.f32 %v6210, 1.0
      %v6328 = vadd.f32 %v6212, 1.0
      %v6329 = vadd.f32 %v6214, 1.0
      %v6330 = vadd.f32 %v6216, 1.0
      %v6331 = vadd.f32 %v6218, 1.0
      %v6332 = vadd.f32 %v6220, 1.0
      %v6333 = vadd.f32 %v6222, 1.0
      %v6334 = vadd.f32 %v6224, 1.0
      %v6335 = vadd.f32 %v6226, 1.0
      %v6336 = vadd.f32 %v6228, 1.0
      %v6337 = vadd.f32 %v6230, 1.0
      %v6338 = vadd.f32 %v6232, 1.0
      %v6339 = vadd.f32 %v6234, 1.0
      %v6340 = vadd.f32 %v6236, 1.0
      %v6341 = vadd.f32 %v6238, 1.0
      %v6342 = vadd.f32 %v6240, 1.0
      %v6343 = vadd.f32 %v6242, 1.0
      %v6344 = vadd.f32 %v6244, 1.0
      %v6345 = vadd.f32 %v6246, 1.0
      %v6346 = vadd.f32 %v6248, 1.0
      %v6347 = vadd.f32 %v6250, 1.0
      %v6348 = vadd.f32 %v6252, 1.0
      %v6349 = vadd.f32 %v6254, 1.0
      %v6350 = vadd.f32 %v6256, 1.0
      %v6351 = vadd.f32 %v6258, 1.0
      %v6352 = vadd.f32 %v6260, 1.0
      %v6353 = vadd.f32 %v6262, 1.0
      %v6354 = vadd.f32 %v6264, 1.0
      %v6355 = vadd.f32 %v6266, 1.0
      %v6356 = vadd.f32 %v6268, 1.0
      %v6357 = vadd.f32 %v6270, 1.0
      %v6358 = vadd.f32 %v6272, 1.0
      %v6359 = vadd.f32 %v6274, 1.0
      %v6360 = vadd.f32 %v6276, 1.0
      %v6361 = vadd.f32 %v6278, 1.0
      %v6362 = vadd.f32 %v6280, 1.0
      %v6363 = vadd.f32 %v6282, 1.0
      %v6364 = vadd.f32 %v6284, 1.0
      %v6365 = vadd.f32 %v6286, 1.0
      %v6366 = vadd.f32 %v6288, 1.0
      %v6367 = vadd.f32 %v6290, 1.0
      %v6368 = vadd.f32 %v6292, 1.0
      %v6369 = vadd.f32 %v6294, 1.0
      %v6370 = vadd.f32 %v6296, 1.0
      %v6371 = vadd.f32 %v6298, 1.0
      %v6372 = vadd.f32 %v6300, 1.0
      %v6373 = vadd.f32 %v6302, 1.0
      %v6374 = vadd.f32 %v6304, 1.0
      %v6375 = vadd.f32 %v6306, 1.0
      %v6376 = vadd.f32 %v6308, 1.0
      %v6377 = vadd.f32 %v6310, 1.0
      %v6378 = vadd.f32 %v6312, 1.0
      %v6379 = vadd.f32 %v6314, 1.0
      %v6380 = vadd.f32 %v6316, 1.0
      %v6381 = vrcp.pop %v6317
      %v6382 = vmul.f32 1.0, %v6381
      %v6383 = vrcp.pop %v6318
      %v6384 = vmul.f32 1.0, %v6383
      %v6385 = vrcp.pop %v6319
      %v6386 = vmul.f32 1.0, %v6385
      %v6387 = vrcp.pop %v6320
      %v6388 = vmul.f32 1.0, %v6387
      %v6389 = vrcp.pop %v6321
      %v6390 = vmul.f32 1.0, %v6389
      %v6391 = vrcp.pop %v6322
      %v6392 = vmul.f32 1.0, %v6391
      %v6393 = vrcp.pop %v6323
      %v6394 = vmul.f32 1.0, %v6393
      %v6395 = vrcp.pop %v6324
      %v6396 = vmul.f32 1.0, %v6395
      %v6397 = vrcp.pop %v6325
      %v6398 = vmul.f32 1.0, %v6397
      %v6399 = vrcp.pop %v6326
      %v6400 = vmul.f32 1.0, %v6399
      %v6401 = vrcp.pop %v6327
      %v6402 = vmul.f32 1.0, %v6401
      %v6403 = vrcp.pop %v6328
      %v6404 = vmul.f32 1.0, %v6403
      %v6405 = vrcp.pop %v6329
      %v6406 = vmul.f32 1.0, %v6405
      %v6407 = vrcp.pop %v6330
      %v6408 = vmul.f32 1.0, %v6407
      %v6409 = vrcp.pop %v6331
      %v6410 = vmul.f32 1.0, %v6409
      %v6411 = vrcp.pop %v6332
      %v6412 = vmul.f32 1.0, %v6411
      %v6413 = vrcp.pop %v6333
      %v6414 = vmul.f32 1.0, %v6413
      %v6415 = vrcp.pop %v6334
      %v6416 = vmul.f32 1.0, %v6415
      %v6417 = vrcp.pop %v6335
      %v6418 = vmul.f32 1.0, %v6417
      %v6419 = vrcp.pop %v6336
      %v6420 = vmul.f32 1.0, %v6419
      %v6421 = vrcp.pop %v6337
      %v6422 = vmul.f32 1.0, %v6421
      %v6423 = vrcp.pop %v6338
      %v6424 = vmul.f32 1.0, %v6423
      %v6425 = vrcp.pop %v6339
      %v6426 = vmul.f32 1.0, %v6425
      %v6427 = vrcp.pop %v6340
      %v6428 = vmul.f32 1.0, %v6427
      %v6429 = vrcp.pop %v6341
      %v6430 = vmul.f32 1.0, %v6429
      %v6431 = vrcp.pop %v6342
      %v6432 = vmul.f32 1.0, %v6431
      %v6433 = vrcp.pop %v6343
      %v6434 = vmul.f32 1.0, %v6433
      %v6435 = vrcp.pop %v6344
      %v6436 = vmul.f32 1.0, %v6435
      %v6437 = vrcp.pop %v6345
      %v6438 = vmul.f32 1.0, %v6437
      %v6439 = vrcp.pop %v6346
      %v6440 = vmul.f32 1.0, %v6439
      %v6441 = vrcp.pop %v6347
      %v6442 = vmul.f32 1.0, %v6441
      %v6443 = vrcp.pop %v6348
      %v6444 = vmul.f32 1.0, %v6443
      %v6445 = vrcp.pop %v6349
      %v6446 = vmul.f32 1.0, %v6445
      %v6447 = vrcp.pop %v6350
      %v6448 = vmul.f32 1.0, %v6447
      %v6449 = vrcp.pop %v6351
      %v6450 = vmul.f32 1.0, %v6449
      %v6451 = vrcp.pop %v6352
      %v6452 = vmul.f32 1.0, %v6451
      %v6453 = vrcp.pop %v6353
      %v6454 = vmul.f32 1.0, %v6453
      %v6455 = vrcp.pop %v6354
      %v6456 = vmul.f32 1.0, %v6455
      %v6457 = vrcp.pop %v6355
      %v6458 = vmul.f32 1.0, %v6457
      %v6459 = vrcp.pop %v6356
      %v6460 = vmul.f32 1.0, %v6459
      %v6461 = vrcp.pop %v6357
      %v6462 = vmul.f32 1.0, %v6461
      %v6463 = vrcp.pop %v6358
      %v6464 = vmul.f32 1.0, %v6463
      %v6465 = vrcp.pop %v6359
      %v6466 = vmul.f32 1.0, %v6465
      %v6467 = vrcp.pop %v6360
      %v6468 = vmul.f32 1.0, %v6467
      %v6469 = vrcp.pop %v6361
      %v6470 = vmul.f32 1.0, %v6469
      %v6471 = vrcp.pop %v6362
      %v6472 = vmul.f32 1.0, %v6471
      %v6473 = vrcp.pop %v6363
      %v6474 = vmul.f32 1.0, %v6473
      %v6475 = vrcp.pop %v6364
      %v6476 = vmul.f32 1.0, %v6475
      %v6477 = vrcp.pop %v6365
      %v6478 = vmul.f32 1.0, %v6477
      %v6479 = vrcp.pop %v6366
      %v6480 = vmul.f32 1.0, %v6479
      %v6481 = vrcp.pop %v6367
      %v6482 = vmul.f32 1.0, %v6481
      %v6483 = vrcp.pop %v6368
      %v6484 = vmul.f32 1.0, %v6483
      %v6485 = vrcp.pop %v6369
      %v6486 = vmul.f32 1.0, %v6485
      %v6487 = vrcp.pop %v6370
      %v6488 = vmul.f32 1.0, %v6487
      %v6489 = vrcp.pop %v6371
      %v6490 = vmul.f32 1.0, %v6489
      %v6491 = vrcp.pop %v6372
      %v6492 = vmul.f32 1.0, %v6491
      %v6493 = vrcp.pop %v6373
      %v6494 = vmul.f32 1.0, %v6493
      %v6495 = vrcp.pop %v6374
      %v6496 = vmul.f32 1.0, %v6495
      %v6497 = vrcp.pop %v6375
      %v6498 = vmul.f32 1.0, %v6497
      %v6499 = vrcp.pop %v6376
      %v6500 = vmul.f32 1.0, %v6499
      %v6501 = vrcp.pop %v6377
      %v6502 = vmul.f32 1.0, %v6501
      %v6503 = vrcp.pop %v6378
      %v6504 = vmul.f32 1.0, %v6503
      %v6505 = vrcp.pop %v6379
      %v6506 = vmul.f32 1.0, %v6505
      %v6507 = vrcp.pop %v6380
      %v6508 = vmul.f32 1.0, %v6507
      %v6509 = vld [vmem:[%s4] sm:$0xff]
      %v6510 = vld [vmem:[%s4 + $0x8] sm:$0xff]
      %v6511 = vld [vmem:[%s4 + $0x10] sm:$0xff]
      %v6512 = vld [vmem:[%s4 + $0x18] sm:$0xff]
      %v6513 = vld [vmem:[%s4 + $0x20] sm:$0xff]
      %v6514 = vld [vmem:[%s4 + $0x28] sm:$0x1]
      %v6515 = vlaneseq
      %v6516 = vshrl.u32 %v6515, 7
      %v6517 = vsub.s32 0, %v6516
      %v6518 = vrot.slane %v6514, %v6517
      %vm6519 = vcmask 326656
      %v6521 = vsel %vm6519, %v5613, 0
      %v6524 = vsel %vm6519, %v5614, 0
      %v6527 = vsel %vm6519, %v5615, 0
      %v6530 = vsel %vm6519, %v5616, 0
      %v6533 = vsel %vm6519, %v5617, 0
      %v6536 = vsel %vm6519, %v5618, 0
      %v6539 = vsel %vm6519, %v5619, 0
      %v6542 = vsel %vm6519, %v5620, 0
      %v6545 = vsel %vm6519, %v5621, 0
      %v6548 = vsel %vm6519, %v5622, 0
      %v6551 = vsel %vm6519, %v5623, 0
      %v6554 = vsel %vm6519, %v5624, 0
      %v6557 = vsel %vm6519, %v5625, 0
      %v6560 = vsel %vm6519, %v5626, 0
      %v6563 = vsel %vm6519, %v5627, 0
      %v6566 = vsel %vm6519, %v5628, 0
      %v6569 = vsel %vm6519, %v5629, 0
      %v6572 = vsel %vm6519, %v5630, 0
      %v6575 = vsel %vm6519, %v5631, 0
      %v6578 = vsel %vm6519, %v5632, 0
      %v6581 = vsel %vm6519, %v5633, 0
      %v6584 = vsel %vm6519, %v5634, 0
      %v6587 = vsel %vm6519, %v5635, 0
      %v6590 = vsel %vm6519, %v5636, 0
      %v6593 = vsel %vm6519, %v5637, 0
      %v6596 = vsel %vm6519, %v5638, 0
      %v6599 = vsel %vm6519, %v5639, 0
      %v6602 = vsel %vm6519, %v5640, 0
      %v6605 = vsel %vm6519, %v5641, 0
      %v6608 = vsel %vm6519, %v5642, 0
      %v6611 = vsel %vm6519, %v5643, 0
      %v6614 = vsel %vm6519, %v5644, 0
      %v6617 = vsel %vm6519, %v5645, 0
      %v6620 = vsel %vm6519, %v5646, 0
      %v6623 = vsel %vm6519, %v5647, 0
      %v6626 = vsel %vm6519, %v5648, 0
      %v6629 = vsel %vm6519, %v5649, 0
      %v6632 = vsel %vm6519, %v5650, 0
      %v6635 = vsel %vm6519, %v5651, 0
      %v6638 = vsel %vm6519, %v5652, 0
      %v6641 = vsel %vm6519, %v5653, 0
      %v6644 = vsel %vm6519, %v5654, 0
      %v6647 = vsel %vm6519, %v5655, 0
      %v6650 = vsel %vm6519, %v5656, 0
      %v6653 = vsel %vm6519, %v5657, 0
      %v6656 = vsel %vm6519, %v5658, 0
      %v6659 = vsel %vm6519, %v5659, 0
      %v6662 = vsel %vm6519, %v5660, 0
      %v6665 = vsel %vm6519, %v5661, 0
      %v6668 = vsel %vm6519, %v5662, 0
      %v6671 = vsel %vm6519, %v5663, 0
      %v6674 = vsel %vm6519, %v5664, 0
      %v6677 = vsel %vm6519, %v5665, 0
      %v6680 = vsel %vm6519, %v5666, 0
      %v6683 = vsel %vm6519, %v5667, 0
      %v6686 = vsel %vm6519, %v5668, 0
      %v6689 = vsel %vm6519, %v5669, 0
      %v6692 = vsel %vm6519, %v5670, 0
      %v6695 = vsel %vm6519, %v5671, 0
      %v6698 = vsel %vm6519, %v5672, 0
      %v6701 = vsel %vm6519, %v5673, 0
      %v6704 = vsel %vm6519, %v5674, 0
      %v6707 = vsel %vm6519, %v5675, 0
      %v6710 = vsel %vm6519, %v5676, 0
      %6712 = vmatprep.subr.mxu0 0.0
      %6713 = vmatpush1.msra.mxu0 %v6509
      %6714 = vmatprep.subr.mxu0 0.0
      %6715 = vmatpush1.msra.mxu0 %v6510
      %6716 = vmatprep.subr.mxu0 0.0
      %6717 = vmatpush1.msra.mxu0 %v6511
      %6718 = vmatprep.subr.mxu0 0.0
      %6719 = vmatpush1.msra.mxu0 %v6512
      %6720 = vmatprep.subr.mxu0 0.0
      %6721 = vmatpush1.msra.mxu0 %v6513
      %6722 = vmatprep.subr.mxu0 0.0
      %6723 = vmatpush1.msra.mxu0 0.0
      %6724 = vmatprep.subr.mxu0 0.0
      %6725 = vmatpush1.msra.mxu0 0.0
      %6726 = vmatprep.subr.mxu0 0.0
      %6727 = vmatpush1.msra.mxu0 0.0
      %6728 = vmatprep.subr.mxu0 0.0
      %6729 = vmatpush1.msra.mxu0 0.0
      %6730 = vmatprep.subr.mxu0 0.0
      %6731 = vmatpush1.msra.mxu0 0.0
      %6732 = vmatprep.subr.mxu0 0.0
      %6733 = vmatpush1.msra.mxu0 0.0
      %6734 = vmatprep.subr.mxu0 0.0
      %6735 = vmatpush1.msra.mxu0 0.0
      %6736 = vmatprep.subr.mxu0 0.0
      %6737 = vmatpush1.msra.mxu0 0.0
      %6738 = vmatprep.subr.mxu0 0.0
      %6739 = vmatpush1.msra.mxu0 0.0
      %6740 = vmatprep.subr.mxu0 0.0
      %6741 = vmatpush1.msra.mxu0 0.0
      %6742 = vmatprep.subr.mxu0 0.0
      %6743 = vmatpush1.msra.mxu0 0.0
      %6744 = vmatprep.subr.mxu0 0.0
      %6745 = vmatpush1.msra.mxu0 0.0
      %6746 = vmatprep.subr.mxu0 0.0
      %6747 = vmatpush1.msra.mxu0 0.0
      %6748 = vmatprep.subr.mxu0 0.0
      %6749 = vmatpush1.msra.mxu0 0.0
      %6750 = vmatprep.subr.mxu0 0.0
      %6751 = vmatpush1.msra.mxu0 0.0
      %6752 = vmatprep.subr.mxu0 0.0
      %6753 = vmatpush1.msra.mxu0 0.0
      %6754 = vmatprep.subr.mxu0 0.0
      %6755 = vmatpush1.msra.mxu0 0.0
      %6756 = vmatprep.subr.mxu0 0.0
      %6757 = vmatpush1.msra.mxu0 0.0
      %6758 = vmatprep.subr.mxu0 0.0
      %6759 = vmatpush1.msra.mxu0 0.0
      %6760 = vmatprep.subr.mxu0 0.0
      %6761 = vmatpush1.msra.mxu0 0.0
      %6762 = vmatprep.subr.mxu0 0.0
      %6763 = vmatpush1.msra.mxu0 0.0
      %6764 = vmatprep.subr.mxu0 0.0
      %6765 = vmatpush1.msra.mxu0 0.0
      %6766 = vmatprep.subr.mxu0 0.0
      %6767 = vmatpush1.msra.mxu0 0.0
      %6768 = vmatprep.subr.mxu0 0.0
      %6769 = vmatpush1.msra.mxu0 0.0
      %6770 = vmatprep.subr.mxu0 0.0
      %6771 = vmatpush1.msra.mxu0 0.0
      %6772 = vmatprep.subr.mxu0 0.0
      %6773 = vmatpush1.msra.mxu0 0.0
      %6774 = vmatprep.subr.mxu0 0.0
      %6775 = vmatpush1.msra.mxu0 0.0
      %6776 = vmatprep.mubr.f32.mxu0 0.0
      %6777 = vmatmul.mubr.f32.gmra.mrb[0].mxu0 %v6521
      %v6778 = vpop.f32.mrb[0].mxu0
      %v6779 = vadd.f32 %v6518, %v6778
      %v6780 = vpop.f32.mrb[0].mxu0
      %6781 = vmatprep.mubr.f32.mxu0 0.0
      %6782 = vmatmul.mubr.f32.gmra.mrb[0].mxu0 %v6524
      %v6783 = vpop.f32.mrb[0].mxu0
      %v6784 = vadd.f32 %v6518, %v6783
      %v6785 = vpop.f32.mrb[0].mxu0
      %6786 = vmatprep.mubr.f32.mxu0 0.0
      %6787 = vmatmul.mubr.f32.gmra.mrb[0].mxu0 %v6527
      %v6788 = vpop.f32.mrb[0].mxu0
      %v6789 = vadd.f32 %v6518, %v6788
      %v6790 = vpop.f32.mrb[0].mxu0
      %6791 = vmatprep.mubr.f32.mxu0 0.0
      %6792 = vmatmul.mubr.f32.gmra.mrb[0].mxu0 %v6530
      %v6793 = vpop.f32.mrb[0].mxu0
      %v6794 = vadd.f32 %v6518, %v6793
      %v6795 = vpop.f32.mrb[0].mxu0
      %6796 = vmatprep.mubr.f32.mxu0 0.0
      %6797 = vmatmul.mubr.f32.gmra.mrb[0].mxu0 %v6533
      %v6798 = vpop.f32.mrb[0].mxu0
      %v6799 = vadd.f32 %v6518, %v6798
      %v6800 = vpop.f32.mrb[0].mxu0
      %6801 = vmatprep.mubr.f32.mxu0 0.0
      %6802 = vmatmul.mubr.f32.gmra.mrb[0].mxu0 %v6536
      %v6803 = vpop.f32.mrb[0].mxu0
      %v6804 = vadd.f32 %v6518, %v6803
      %v6805 = vpop.f32.mrb[0].mxu0
      %6806 = vmatprep.mubr.f32.mxu0 0.0
      %6807 = vmatmul.mubr.f32.gmra.mrb[0].mxu0 %v6539
      %v6808 = vpop.f32.mrb[0].mxu0
      %v6809 = vadd.f32 %v6518, %v6808
      %v6810 = vpop.f32.mrb[0].mxu0
      %6811 = vmatprep.mubr.f32.mxu0 0.0
      %6812 = vmatmul.mubr.f32.gmra.mrb[0].mxu0 %v6542
      %v6813 = vpop.f32.mrb[0].mxu0
      %v6814 = vadd.f32 %v6518, %v6813
      %v6815 = vpop.f32.mrb[0].mxu0
      %6816 = vmatprep.mubr.f32.mxu0 0.0
      %6817 = vmatmul.mubr.f32.gmra.mrb[0].mxu0 %v6545
      %v6818 = vpop.f32.mrb[0].mxu0
      %v6819 = vadd.f32 %v6518, %v6818
      %v6820 = vpop.f32.mrb[0].mxu0
      %6821 = vmatprep.mubr.f32.mxu0 0.0
      %6822 = vmatmul.mubr.f32.gmra.mrb[0].mxu0 %v6548
      %v6823 = vpop.f32.mrb[0].mxu0
      %v6824 = vadd.f32 %v6518, %v6823
      %v6825 = vpop.f32.mrb[0].mxu0
      %6826 = vmatprep.mubr.f32.mxu0 0.0
      %6827 = vmatmul.mubr.f32.gmra.mrb[0].mxu0 %v6551
      %v6828 = vpop.f32.mrb[0].mxu0
      %v6829 = vadd.f32 %v6518, %v6828
      %v6830 = vpop.f32.mrb[0].mxu0
      %6831 = vmatprep.mubr.f32.mxu0 0.0
      %6832 = vmatmul.mubr.f32.gmra.mrb[0].mxu0 %v6554
      %v6833 = vpop.f32.mrb[0].mxu0
      %v6834 = vadd.f32 %v6518, %v6833
      %v6835 = vpop.f32.mrb[0].mxu0
      %6836 = vmatprep.mubr.f32.mxu0 0.0
      %6837 = vmatmul.mubr.f32.gmra.mrb[0].mxu0 %v6557
      %v6838 = vpop.f32.mrb[0].mxu0
      %v6839 = vadd.f32 %v6518, %v6838
      %v6840 = vpop.f32.mrb[0].mxu0
      %6841 = vmatprep.mubr.f32.mxu0 0.0
      %6842 = vmatmul.mubr.f32.gmra.mrb[0].mxu0 %v6560
      %v6843 = vpop.f32.mrb[0].mxu0
      %v6844 = vadd.f32 %v6518, %v6843
      %v6845 = vpop.f32.mrb[0].mxu0
      %6846 = vmatprep.mubr.f32.mxu0 0.0
      %6847 = vmatmul.mubr.f32.gmra.mrb[0].mxu0 %v6563
      %v6848 = vpop.f32.mrb[0].mxu0
      %v6849 = vadd.f32 %v6518, %v6848
      %v6850 = vpop.f32.mrb[0].mxu0
      %6851 = vmatprep.mubr.f32.mxu0 0.0
      %6852 = vmatmul.mubr.f32.gmra.mrb[0].mxu0 %v6566
      %v6853 = vpop.f32.mrb[0].mxu0
      %v6854 = vadd.f32 %v6518, %v6853
      %v6855 = vpop.f32.mrb[0].mxu0
      %6856 = vmatprep.mubr.f32.mxu0 0.0
      %6857 = vmatmul.mubr.f32.gmra.mrb[0].mxu0 %v6569
      %v6858 = vpop.f32.mrb[0].mxu0
      %v6859 = vadd.f32 %v6518, %v6858
      %v6860 = vpop.f32.mrb[0].mxu0
      %6861 = vmatprep.mubr.f32.mxu0 0.0
      %6862 = vmatmul.mubr.f32.gmra.mrb[0].mxu0 %v6572
      %v6863 = vpop.f32.mrb[0].mxu0
      %v6864 = vadd.f32 %v6518, %v6863
      %v6865 = vpop.f32.mrb[0].mxu0
      %6866 = vmatprep.mubr.f32.mxu0 0.0
      %6867 = vmatmul.mubr.f32.gmra.mrb[0].mxu0 %v6575
      %v6868 = vpop.f32.mrb[0].mxu0
      %v6869 = vadd.f32 %v6518, %v6868
      %v6870 = vpop.f32.mrb[0].mxu0
      %6871 = vmatprep.mubr.f32.mxu0 0.0
      %6872 = vmatmul.mubr.f32.gmra.mrb[0].mxu0 %v6578
      %v6873 = vpop.f32.mrb[0].mxu0
      %v6874 = vadd.f32 %v6518, %v6873
      %v6875 = vpop.f32.mrb[0].mxu0
      %6876 = vmatprep.mubr.f32.mxu0 0.0
      %6877 = vmatmul.mubr.f32.gmra.mrb[0].mxu0 %v6581
      %v6878 = vpop.f32.mrb[0].mxu0
      %v6879 = vadd.f32 %v6518, %v6878
      %v6880 = vpop.f32.mrb[0].mxu0
      %6881 = vmatprep.mubr.f32.mxu0 0.0
      %6882 = vmatmul.mubr.f32.gmra.mrb[0].mxu0 %v6584
      %v6883 = vpop.f32.mrb[0].mxu0
      %v6884 = vadd.f32 %v6518, %v6883
      %v6885 = vpop.f32.mrb[0].mxu0
      %6886 = vmatprep.mubr.f32.mxu0 0.0
      %6887 = vmatmul.mubr.f32.gmra.mrb[0].mxu0 %v6587
      %v6888 = vpop.f32.mrb[0].mxu0
      %v6889 = vadd.f32 %v6518, %v6888
      %v6890 = vpop.f32.mrb[0].mxu0
      %6891 = vmatprep.mubr.f32.mxu0 0.0
      %6892 = vmatmul.mubr.f32.gmra.mrb[0].mxu0 %v6590
      %v6893 = vpop.f32.mrb[0].mxu0
      %v6894 = vadd.f32 %v6518, %v6893
      %v6895 = vpop.f32.mrb[0].mxu0
      %6896 = vmatprep.mubr.f32.mxu0 0.0
      %6897 = vmatmul.mubr.f32.gmra.mrb[0].mxu0 %v6593
      %v6898 = vpop.f32.mrb[0].mxu0
      %v6899 = vadd.f32 %v6518, %v6898
      %v6900 = vpop.f32.mrb[0].mxu0
      %6901 = vmatprep.mubr.f32.mxu0 0.0
      %6902 = vmatmul.mubr.f32.gmra.mrb[0].mxu0 %v6596
      %v6903 = vpop.f32.mrb[0].mxu0
      %v6904 = vadd.f32 %v6518, %v6903
      %v6905 = vpop.f32.mrb[0].mxu0
      %6906 = vmatprep.mubr.f32.mxu0 0.0
      %6907 = vmatmul.mubr.f32.gmra.mrb[0].mxu0 %v6599
      %v6908 = vpop.f32.mrb[0].mxu0
      %v6909 = vadd.f32 %v6518, %v6908
      %v6910 = vpop.f32.mrb[0].mxu0
      %6911 = vmatprep.mubr.f32.mxu0 0.0
      %6912 = vmatmul.mubr.f32.gmra.mrb[0].mxu0 %v6602
      %v6913 = vpop.f32.mrb[0].mxu0
      %v6914 = vadd.f32 %v6518, %v6913
      %v6915 = vpop.f32.mrb[0].mxu0
      %6916 = vmatprep.mubr.f32.mxu0 0.0
      %6917 = vmatmul.mubr.f32.gmra.mrb[0].mxu0 %v6605
      %v6918 = vpop.f32.mrb[0].mxu0
      %v6919 = vadd.f32 %v6518, %v6918
      %v6920 = vpop.f32.mrb[0].mxu0
      %6921 = vmatprep.mubr.f32.mxu0 0.0
      %6922 = vmatmul.mubr.f32.gmra.mrb[0].mxu0 %v6608
      %v6923 = vpop.f32.mrb[0].mxu0
      %v6924 = vadd.f32 %v6518, %v6923
      %v6925 = vpop.f32.mrb[0].mxu0
      %6926 = vmatprep.mubr.f32.mxu0 0.0
      %6927 = vmatmul.mubr.f32.gmra.mrb[0].mxu0 %v6611
      %v6928 = vpop.f32.mrb[0].mxu0
      %v6929 = vadd.f32 %v6518, %v6928
      %v6930 = vpop.f32.mrb[0].mxu0
      %6931 = vmatprep.mubr.f32.mxu0 0.0
      %6932 = vmatmul.mubr.f32.gmra.mrb[0].mxu0 %v6614
      %v6933 = vpop.f32.mrb[0].mxu0
      %v6934 = vadd.f32 %v6518, %v6933
      %v6935 = vpop.f32.mrb[0].mxu0
      %6936 = vmatprep.mubr.f32.mxu0 0.0
      %6937 = vmatmul.mubr.f32.gmra.mrb[0].mxu0 %v6617
      %v6938 = vpop.f32.mrb[0].mxu0
      %v6939 = vadd.f32 %v6518, %v6938
      %v6940 = vpop.f32.mrb[0].mxu0
      %6941 = vmatprep.mubr.f32.mxu0 0.0
      %6942 = vmatmul.mubr.f32.gmra.mrb[0].mxu0 %v6620
      %v6943 = vpop.f32.mrb[0].mxu0
      %v6944 = vadd.f32 %v6518, %v6943
      %v6945 = vpop.f32.mrb[0].mxu0
      %6946 = vmatprep.mubr.f32.mxu0 0.0
      %6947 = vmatmul.mubr.f32.gmra.mrb[0].mxu0 %v6623
      %v6948 = vpop.f32.mrb[0].mxu0
      %v6949 = vadd.f32 %v6518, %v6948
      %v6950 = vpop.f32.mrb[0].mxu0
      %6951 = vmatprep.mubr.f32.mxu0 0.0
      %6952 = vmatmul.mubr.f32.gmra.mrb[0].mxu0 %v6626
      %v6953 = vpop.f32.mrb[0].mxu0
      %v6954 = vadd.f32 %v6518, %v6953
      %v6955 = vpop.f32.mrb[0].mxu0
      %6956 = vmatprep.mubr.f32.mxu0 0.0
      %6957 = vmatmul.mubr.f32.gmra.mrb[0].mxu0 %v6629
      %v6958 = vpop.f32.mrb[0].mxu0
      %v6959 = vadd.f32 %v6518, %v6958
      %v6960 = vpop.f32.mrb[0].mxu0
      %6961 = vmatprep.mubr.f32.mxu0 0.0
      %6962 = vmatmul.mubr.f32.gmra.mrb[0].mxu0 %v6632
      %v6963 = vpop.f32.mrb[0].mxu0
      %v6964 = vadd.f32 %v6518, %v6963
      %v6965 = vpop.f32.mrb[0].mxu0
      %6966 = vmatprep.mubr.f32.mxu0 0.0
      %6967 = vmatmul.mubr.f32.gmra.mrb[0].mxu0 %v6635
      %v6968 = vpop.f32.mrb[0].mxu0
      %v6969 = vadd.f32 %v6518, %v6968
      %v6970 = vpop.f32.mrb[0].mxu0
      %6971 = vmatprep.mubr.f32.mxu0 0.0
      %6972 = vmatmul.mubr.f32.gmra.mrb[0].mxu0 %v6638
      %v6973 = vpop.f32.mrb[0].mxu0
      %v6974 = vadd.f32 %v6518, %v6973
      %v6975 = vpop.f32.mrb[0].mxu0
      %6976 = vmatprep.mubr.f32.mxu0 0.0
      %6977 = vmatmul.mubr.f32.gmra.mrb[0].mxu0 %v6641
      %v6978 = vpop.f32.mrb[0].mxu0
      %v6979 = vadd.f32 %v6518, %v6978
      %v6980 = vpop.f32.mrb[0].mxu0
      %6981 = vmatprep.mubr.f32.mxu0 0.0
      %6982 = vmatmul.mubr.f32.gmra.mrb[0].mxu0 %v6644
      %v6983 = vpop.f32.mrb[0].mxu0
      %v6984 = vadd.f32 %v6518, %v6983
      %v6985 = vpop.f32.mrb[0].mxu0
      %6986 = vmatprep.mubr.f32.mxu0 0.0
      %6987 = vmatmul.mubr.f32.gmra.mrb[0].mxu0 %v6647
      %v6988 = vpop.f32.mrb[0].mxu0
      %v6989 = vadd.f32 %v6518, %v6988
      %v6990 = vpop.f32.mrb[0].mxu0
      %6991 = vmatprep.mubr.f32.mxu0 0.0
      %6992 = vmatmul.mubr.f32.gmra.mrb[0].mxu0 %v6650
      %v6993 = vpop.f32.mrb[0].mxu0
      %v6994 = vadd.f32 %v6518, %v6993
      %v6995 = vpop.f32.mrb[0].mxu0
      %6996 = vmatprep.mubr.f32.mxu0 0.0
      %6997 = vmatmul.mubr.f32.gmra.mrb[0].mxu0 %v6653
      %v6998 = vpop.f32.mrb[0].mxu0
      %v6999 = vadd.f32 %v6518, %v6998
      %v7000 = vpop.f32.mrb[0].mxu0
      %7001 = vmatprep.mubr.f32.mxu0 0.0
      %7002 = vmatmul.mubr.f32.gmra.mrb[0].mxu0 %v6656
      %v7003 = vpop.f32.mrb[0].mxu0
      %v7004 = vadd.f32 %v6518, %v7003
      %v7005 = vpop.f32.mrb[0].mxu0
      %7006 = vmatprep.mubr.f32.mxu0 0.0
      %7007 = vmatmul.mubr.f32.gmra.mrb[0].mxu0 %v6659
      %v7008 = vpop.f32.mrb[0].mxu0
      %v7009 = vadd.f32 %v6518, %v7008
      %v7010 = vpop.f32.mrb[0].mxu0
      %7011 = vmatprep.mubr.f32.mxu0 0.0
      %7012 = vmatmul.mubr.f32.gmra.mrb[0].mxu0 %v6662
      %v7013 = vpop.f32.mrb[0].mxu0
      %v7014 = vadd.f32 %v6518, %v7013
      %v7015 = vpop.f32.mrb[0].mxu0
      %7016 = vmatprep.mubr.f32.mxu0 0.0
      %7017 = vmatmul.mubr.f32.gmra.mrb[0].mxu0 %v6665
      %v7018 = vpop.f32.mrb[0].mxu0
      %v7019 = vadd.f32 %v6518, %v7018
      %v7020 = vpop.f32.mrb[0].mxu0
      %7021 = vmatprep.mubr.f32.mxu0 0.0
      %7022 = vmatmul.mubr.f32.gmra.mrb[0].mxu0 %v6668
      %v7023 = vpop.f32.mrb[0].mxu0
      %v7024 = vadd.f32 %v6518, %v7023
      %v7025 = vpop.f32.mrb[0].mxu0
      %7026 = vmatprep.mubr.f32.mxu0 0.0
      %7027 = vmatmul.mubr.f32.gmra.mrb[0].mxu0 %v6671
      %v7028 = vpop.f32.mrb[0].mxu0
      %v7029 = vadd.f32 %v6518, %v7028
      %v7030 = vpop.f32.mrb[0].mxu0
      %7031 = vmatprep.mubr.f32.mxu0 0.0
      %7032 = vmatmul.mubr.f32.gmra.mrb[0].mxu0 %v6674
      %v7033 = vpop.f32.mrb[0].mxu0
      %v7034 = vadd.f32 %v6518, %v7033
      %v7035 = vpop.f32.mrb[0].mxu0
      %7036 = vmatprep.mubr.f32.mxu0 0.0
      %7037 = vmatmul.mubr.f32.gmra.mrb[0].mxu0 %v6677
      %v7038 = vpop.f32.mrb[0].mxu0
      %v7039 = vadd.f32 %v6518, %v7038
      %v7040 = vpop.f32.mrb[0].mxu0
      %7041 = vmatprep.mubr.f32.mxu0 0.0
      %7042 = vmatmul.mubr.f32.gmra.mrb[0].mxu0 %v6680
      %v7043 = vpop.f32.mrb[0].mxu0
      %v7044 = vadd.f32 %v6518, %v7043
      %v7045 = vpop.f32.mrb[0].mxu0
      %7046 = vmatprep.mubr.f32.mxu0 0.0
      %7047 = vmatmul.mubr.f32.gmra.mrb[0].mxu0 %v6683
      %v7048 = vpop.f32.mrb[0].mxu0
      %v7049 = vadd.f32 %v6518, %v7048
      %v7050 = vpop.f32.mrb[0].mxu0
      %7051 = vmatprep.mubr.f32.mxu0 0.0
      %7052 = vmatmul.mubr.f32.gmra.mrb[0].mxu0 %v6686
      %v7053 = vpop.f32.mrb[0].mxu0
      %v7054 = vadd.f32 %v6518, %v7053
      %v7055 = vpop.f32.mrb[0].mxu0
      %7056 = vmatprep.mubr.f32.mxu0 0.0
      %7057 = vmatmul.mubr.f32.gmra.mrb[0].mxu0 %v6689
      %v7058 = vpop.f32.mrb[0].mxu0
      %v7059 = vadd.f32 %v6518, %v7058
      %v7060 = vpop.f32.mrb[0].mxu0
      %7061 = vmatprep.mubr.f32.mxu0 0.0
      %7062 = vmatmul.mubr.f32.gmra.mrb[0].mxu0 %v6692
      %v7063 = vpop.f32.mrb[0].mxu0
      %v7064 = vadd.f32 %v6518, %v7063
      %v7065 = vpop.f32.mrb[0].mxu0
      %7066 = vmatprep.mubr.f32.mxu0 0.0
      %7067 = vmatmul.mubr.f32.gmra.mrb[0].mxu0 %v6695
      %v7068 = vpop.f32.mrb[0].mxu0
      %v7069 = vadd.f32 %v6518, %v7068
      %v7070 = vpop.f32.mrb[0].mxu0
      %7071 = vmatprep.mubr.f32.mxu0 0.0
      %7072 = vmatmul.mubr.f32.gmra.mrb[0].mxu0 %v6698
      %v7073 = vpop.f32.mrb[0].mxu0
      %v7074 = vadd.f32 %v6518, %v7073
      %v7075 = vpop.f32.mrb[0].mxu0
      %7076 = vmatprep.mubr.f32.mxu0 0.0
      %7077 = vmatmul.mubr.f32.gmra.mrb[0].mxu0 %v6701
      %v7078 = vpop.f32.mrb[0].mxu0
      %v7079 = vadd.f32 %v6518, %v7078
      %v7080 = vpop.f32.mrb[0].mxu0
      %7081 = vmatprep.mubr.f32.mxu0 0.0
      %7082 = vmatmul.mubr.f32.gmra.mrb[0].mxu0 %v6704
      %v7083 = vpop.f32.mrb[0].mxu0
      %v7084 = vadd.f32 %v6518, %v7083
      %v7085 = vpop.f32.mrb[0].mxu0
      %7086 = vmatprep.mubr.f32.mxu0 0.0
      %7087 = vmatmul.mubr.f32.gmra.mrb[0].mxu0 %v6707
      %v7088 = vpop.f32.mrb[0].mxu0
      %v7089 = vadd.f32 %v6518, %v7088
      %v7090 = vpop.f32.mrb[0].mxu0
      %7091 = vmatprep.mubr.f32.mxu0 0.0
      %7092 = vmatmul.mubr.f32.gmra.mrb[0].mxu0 %v6710
      %v7093 = vpop.f32.mrb[0].mxu0
      %v7094 = vadd.f32 %v6518, %v7093
      %v7095 = vpop.f32.mrb[0].mxu0
      %7096 = vdwg.mxu0
      %v7097 = vmax.f32 %v6779, 0.0
      %v7098 = vmax.f32 %v6784, 0.0
      %v7099 = vmax.f32 %v6789, 0.0
      %v7100 = vmax.f32 %v6794, 0.0
      %v7101 = vmax.f32 %v6799, 0.0
      %v7102 = vmax.f32 %v6804, 0.0
      %v7103 = vmax.f32 %v6809, 0.0
      %v7104 = vmax.f32 %v6814, 0.0
      %v7105 = vmax.f32 %v6819, 0.0
      %v7106 = vmax.f32 %v6824, 0.0
      %v7107 = vmax.f32 %v6829, 0.0
      %v7108 = vmax.f32 %v6834, 0.0
      %v7109 = vmax.f32 %v6839, 0.0
      %v7110 = vmax.f32 %v6844, 0.0
      %v7111 = vmax.f32 %v6849, 0.0
      %v7112 = vmax.f32 %v6854, 0.0
      %v7113 = vmax.f32 %v6859, 0.0
      %v7114 = vmax.f32 %v6864, 0.0
      %v7115 = vmax.f32 %v6869, 0.0
      %v7116 = vmax.f32 %v6874, 0.0
      %v7117 = vmax.f32 %v6879, 0.0
      %v7118 = vmax.f32 %v6884, 0.0
      %v7119 = vmax.f32 %v6889, 0.0
      %v7120 = vmax.f32 %v6894, 0.0
      %v7121 = vmax.f32 %v6899, 0.0
      %v7122 = vmax.f32 %v6904, 0.0
      %v7123 = vmax.f32 %v6909, 0.0
      %v7124 = vmax.f32 %v6914, 0.0
      %v7125 = vmax.f32 %v6919, 0.0
      %v7126 = vmax.f32 %v6924, 0.0
      %v7127 = vmax.f32 %v6929, 0.0
      %v7128 = vmax.f32 %v6934, 0.0
      %v7129 = vmax.f32 %v6939, 0.0
      %v7130 = vmax.f32 %v6944, 0.0
      %v7131 = vmax.f32 %v6949, 0.0
      %v7132 = vmax.f32 %v6954, 0.0
      %v7133 = vmax.f32 %v6959, 0.0
      %v7134 = vmax.f32 %v6964, 0.0
      %v7135 = vmax.f32 %v6969, 0.0
      %v7136 = vmax.f32 %v6974, 0.0
      %v7137 = vmax.f32 %v6979, 0.0
      %v7138 = vmax.f32 %v6984, 0.0
      %v7139 = vmax.f32 %v6989, 0.0
      %v7140 = vmax.f32 %v6994, 0.0
      %v7141 = vmax.f32 %v6999, 0.0
      %v7142 = vmax.f32 %v7004, 0.0
      %v7143 = vmax.f32 %v7009, 0.0
      %v7144 = vmax.f32 %v7014, 0.0
      %v7145 = vmax.f32 %v7019, 0.0
      %v7146 = vmax.f32 %v7024, 0.0
      %v7147 = vmax.f32 %v7029, 0.0
      %v7148 = vmax.f32 %v7034, 0.0
      %v7149 = vmax.f32 %v7039, 0.0
      %v7150 = vmax.f32 %v7044, 0.0
      %v7151 = vmax.f32 %v7049, 0.0
      %v7152 = vmax.f32 %v7054, 0.0
      %v7153 = vmax.f32 %v7059, 0.0
      %v7154 = vmax.f32 %v7064, 0.0
      %v7155 = vmax.f32 %v7069, 0.0
      %v7156 = vmax.f32 %v7074, 0.0
      %v7157 = vmax.f32 %v7079, 0.0
      %v7158 = vmax.f32 %v7084, 0.0
      %v7159 = vmax.f32 %v7089, 0.0
      %v7160 = vmax.f32 %v7094, 0.0
      %7225 = vrot.lane.b32.xlu0 %v6382, 125
      %v7226 = vpop.permute.xlu0 %7225
      %7227 = vrot.lane.b32.xlu0 %v6384, 125
      %v7228 = vpop.permute.xlu0 %7227
      %7229 = vrot.lane.b32.xlu0 %v6386, 125
      %v7230 = vpop.permute.xlu0 %7229
      %7231 = vrot.lane.b32.xlu0 %v6388, 125
      %v7232 = vpop.permute.xlu0 %7231
      %7233 = vrot.lane.b32.xlu0 %v6390, 125
      %v7234 = vpop.permute.xlu0 %7233
      %7235 = vrot.lane.b32.xlu0 %v6392, 125
      %v7236 = vpop.permute.xlu0 %7235
      %7237 = vrot.lane.b32.xlu0 %v6394, 125
      %v7238 = vpop.permute.xlu0 %7237
      %7239 = vrot.lane.b32.xlu0 %v6396, 125
      %v7240 = vpop.permute.xlu0 %7239
      %7241 = vrot.lane.b32.xlu0 %v6398, 125
      %v7242 = vpop.permute.xlu0 %7241
      %7243 = vrot.lane.b32.xlu0 %v6400, 125
      %v7244 = vpop.permute.xlu0 %7243
      %7245 = vrot.lane.b32.xlu0 %v6402, 125
      %v7246 = vpop.permute.xlu0 %7245
      %7247 = vrot.lane.b32.xlu0 %v6404, 125
      %v7248 = vpop.permute.xlu0 %7247
      %7249 = vrot.lane.b32.xlu0 %v6406, 125
      %v7250 = vpop.permute.xlu0 %7249
      %7251 = vrot.lane.b32.xlu0 %v6408, 125
      %v7252 = vpop.permute.xlu0 %7251
      %7253 = vrot.lane.b32.xlu0 %v6410, 125
      %v7254 = vpop.permute.xlu0 %7253
      %7255 = vrot.lane.b32.xlu0 %v6412, 125
      %v7256 = vpop.permute.xlu0 %7255
      %7257 = vrot.lane.b32.xlu0 %v6414, 125
      %v7258 = vpop.permute.xlu0 %7257
      %7259 = vrot.lane.b32.xlu0 %v6416, 125
      %v7260 = vpop.permute.xlu0 %7259
      %7261 = vrot.lane.b32.xlu0 %v6418, 125
      %v7262 = vpop.permute.xlu0 %7261
      %7263 = vrot.lane.b32.xlu0 %v6420, 125
      %v7264 = vpop.permute.xlu0 %7263
      %7265 = vrot.lane.b32.xlu0 %v6422, 125
      %v7266 = vpop.permute.xlu0 %7265
      %7267 = vrot.lane.b32.xlu0 %v6424, 125
      %v7268 = vpop.permute.xlu0 %7267
      %7269 = vrot.lane.b32.xlu0 %v6426, 125
      %v7270 = vpop.permute.xlu0 %7269
      %7271 = vrot.lane.b32.xlu0 %v6428, 125
      %v7272 = vpop.permute.xlu0 %7271
      %7273 = vrot.lane.b32.xlu0 %v6430, 125
      %v7274 = vpop.permute.xlu0 %7273
      %7275 = vrot.lane.b32.xlu0 %v6432, 125
      %v7276 = vpop.permute.xlu0 %7275
      %7277 = vrot.lane.b32.xlu0 %v6434, 125
      %v7278 = vpop.permute.xlu0 %7277
      %7279 = vrot.lane.b32.xlu0 %v6436, 125
      %v7280 = vpop.permute.xlu0 %7279
      %7281 = vrot.lane.b32.xlu0 %v6438, 125
      %v7282 = vpop.permute.xlu0 %7281
      %7283 = vrot.lane.b32.xlu0 %v6440, 125
      %v7284 = vpop.permute.xlu0 %7283
      %7285 = vrot.lane.b32.xlu0 %v6442, 125
      %v7286 = vpop.permute.xlu0 %7285
      %7287 = vrot.lane.b32.xlu0 %v6444, 125
      %v7288 = vpop.permute.xlu0 %7287
      %7289 = vrot.lane.b32.xlu0 %v6446, 125
      %v7290 = vpop.permute.xlu0 %7289
      %7291 = vrot.lane.b32.xlu0 %v6448, 125
      %v7292 = vpop.permute.xlu0 %7291
      %7293 = vrot.lane.b32.xlu0 %v6450, 125
      %v7294 = vpop.permute.xlu0 %7293
      %7295 = vrot.lane.b32.xlu0 %v6452, 125
      %v7296 = vpop.permute.xlu0 %7295
      %7297 = vrot.lane.b32.xlu0 %v6454, 125
      %v7298 = vpop.permute.xlu0 %7297
      %7299 = vrot.lane.b32.xlu0 %v6456, 125
      %v7300 = vpop.permute.xlu0 %7299
      %7301 = vrot.lane.b32.xlu0 %v6458, 125
      %v7302 = vpop.permute.xlu0 %7301
      %7303 = vrot.lane.b32.xlu0 %v6460, 125
      %v7304 = vpop.permute.xlu0 %7303
      %7305 = vrot.lane.b32.xlu0 %v6462, 125
      %v7306 = vpop.permute.xlu0 %7305
      %7307 = vrot.lane.b32.xlu0 %v6464, 125
      %v7308 = vpop.permute.xlu0 %7307
      %7309 = vrot.lane.b32.xlu0 %v6466, 125
      %v7310 = vpop.permute.xlu0 %7309
      %7311 = vrot.lane.b32.xlu0 %v6468, 125
      %v7312 = vpop.permute.xlu0 %7311
      %7313 = vrot.lane.b32.xlu0 %v6470, 125
      %v7314 = vpop.permute.xlu0 %7313
      %7315 = vrot.lane.b32.xlu0 %v6472, 125
      %v7316 = vpop.permute.xlu0 %7315
      %7317 = vrot.lane.b32.xlu0 %v6474, 125
      %v7318 = vpop.permute.xlu0 %7317
      %7319 = vrot.lane.b32.xlu0 %v6476, 125
      %v7320 = vpop.permute.xlu0 %7319
      %7321 = vrot.lane.b32.xlu0 %v6478, 125
      %v7322 = vpop.permute.xlu0 %7321
      %7323 = vrot.lane.b32.xlu0 %v6480, 125
      %v7324 = vpop.permute.xlu0 %7323
      %7325 = vrot.lane.b32.xlu0 %v6482, 125
      %v7326 = vpop.permute.xlu0 %7325
      %7327 = vrot.lane.b32.xlu0 %v6484, 125
      %v7328 = vpop.permute.xlu0 %7327
      %7329 = vrot.lane.b32.xlu0 %v6486, 125
      %v7330 = vpop.permute.xlu0 %7329
      %7331 = vrot.lane.b32.xlu0 %v6488, 125
      %v7332 = vpop.permute.xlu0 %7331
      %7333 = vrot.lane.b32.xlu0 %v6490, 125
      %v7334 = vpop.permute.xlu0 %7333
      %7335 = vrot.lane.b32.xlu0 %v6492, 125
      %v7336 = vpop.permute.xlu0 %7335
      %7337 = vrot.lane.b32.xlu0 %v6494, 125
      %v7338 = vpop.permute.xlu0 %7337
      %7339 = vrot.lane.b32.xlu0 %v6496, 125
      %v7340 = vpop.permute.xlu0 %7339
      %7341 = vrot.lane.b32.xlu0 %v6498, 125
      %v7342 = vpop.permute.xlu0 %7341
      %7343 = vrot.lane.b32.xlu0 %v6500, 125
      %v7344 = vpop.permute.xlu0 %7343
      %7345 = vrot.lane.b32.xlu0 %v6502, 125
      %v7346 = vpop.permute.xlu0 %7345
      %7347 = vrot.lane.b32.xlu0 %v6504, 125
      %v7348 = vpop.permute.xlu0 %7347
      %7349 = vrot.lane.b32.xlu0 %v6506, 125
      %v7350 = vpop.permute.xlu0 %7349
      %7351 = vrot.lane.b32.xlu0 %v6508, 125
      %v7352 = vpop.permute.xlu0 %7351
      %v7417 = vadd.f32 %v6382, %v7226
      %v7418 = vadd.f32 %v6384, %v7228
      %v7419 = vadd.f32 %v6386, %v7230
      %v7420 = vadd.f32 %v6388, %v7232
      %v7421 = vadd.f32 %v6390, %v7234
      %v7422 = vadd.f32 %v6392, %v7236
      %v7423 = vadd.f32 %v6394, %v7238
      %v7424 = vadd.f32 %v6396, %v7240
      %v7425 = vadd.f32 %v6398, %v7242
      %v7426 = vadd.f32 %v6400, %v7244
      %v7427 = vadd.f32 %v6402, %v7246
      %v7428 = vadd.f32 %v6404, %v7248
      %v7429 = vadd.f32 %v6406, %v7250
      %v7430 = vadd.f32 %v6408, %v7252
      %v7431 = vadd.f32 %v6410, %v7254
      %v7432 = vadd.f32 %v6412, %v7256
      %v7433 = vadd.f32 %v6414, %v7258
      %v7434 = vadd.f32 %v6416, %v7260
      %v7435 = vadd.f32 %v6418, %v7262
      %v7436 = vadd.f32 %v6420, %v7264
      %v7437 = vadd.f32 %v6422, %v7266
      %v7438 = vadd.f32 %v6424, %v7268
      %v7439 = vadd.f32 %v6426, %v7270
      %v7440 = vadd.f32 %v6428, %v7272
      %v7441 = vadd.f32 %v6430, %v7274
      %v7442 = vadd.f32 %v6432, %v7276
      %v7443 = vadd.f32 %v6434, %v7278
      %v7444 = vadd.f32 %v6436, %v7280
      %v7445 = vadd.f32 %v6438, %v7282
      %v7446 = vadd.f32 %v6440, %v7284
      %v7447 = vadd.f32 %v6442, %v7286
      %v7448 = vadd.f32 %v6444, %v7288
      %v7449 = vadd.f32 %v6446, %v7290
      %v7450 = vadd.f32 %v6448, %v7292
      %v7451 = vadd.f32 %v6450, %v7294
      %v7452 = vadd.f32 %v6452, %v7296
      %v7453 = vadd.f32 %v6454, %v7298
      %v7454 = vadd.f32 %v6456, %v7300
      %v7455 = vadd.f32 %v6458, %v7302
      %v7456 = vadd.f32 %v6460, %v7304
      %v7457 = vadd.f32 %v6462, %v7306
      %v7458 = vadd.f32 %v6464, %v7308
      %v7459 = vadd.f32 %v6466, %v7310
      %v7460 = vadd.f32 %v6468, %v7312
      %v7461 = vadd.f32 %v6470, %v7314
      %v7462 = vadd.f32 %v6472, %v7316
      %v7463 = vadd.f32 %v6474, %v7318
      %v7464 = vadd.f32 %v6476, %v7320
      %v7465 = vadd.f32 %v6478, %v7322
      %v7466 = vadd.f32 %v6480, %v7324
      %v7467 = vadd.f32 %v6482, %v7326
      %v7468 = vadd.f32 %v6484, %v7328
      %v7469 = vadd.f32 %v6486, %v7330
      %v7470 = vadd.f32 %v6488, %v7332
      %v7471 = vadd.f32 %v6490, %v7334
      %v7472 = vadd.f32 %v6492, %v7336
      %v7473 = vadd.f32 %v6494, %v7338
      %v7474 = vadd.f32 %v6496, %v7340
      %v7475 = vadd.f32 %v6498, %v7342
      %v7476 = vadd.f32 %v6500, %v7344
      %v7477 = vadd.f32 %v6502, %v7346
      %v7478 = vadd.f32 %v6504, %v7348
      %v7479 = vadd.f32 %v6506, %v7350
      %v7480 = vadd.f32 %v6508, %v7352
      %7481 = vrot.lane.b32.xlu0 %v6382, 122
      %v7482 = vpop.permute.xlu0 %7481
      %7483 = vrot.lane.b32.xlu0 %v6384, 122
      %v7484 = vpop.permute.xlu0 %7483
      %7485 = vrot.lane.b32.xlu0 %v6386, 122
      %v7486 = vpop.permute.xlu0 %7485
      %7487 = vrot.lane.b32.xlu0 %v6388, 122
      %v7488 = vpop.permute.xlu0 %7487
      %7489 = vrot.lane.b32.xlu0 %v6390, 122
      %v7490 = vpop.permute.xlu0 %7489
      %7491 = vrot.lane.b32.xlu0 %v6392, 122
      %v7492 = vpop.permute.xlu0 %7491
      %7493 = vrot.lane.b32.xlu0 %v6394, 122
      %v7494 = vpop.permute.xlu0 %7493
      %7495 = vrot.lane.b32.xlu0 %v6396, 122
      %v7496 = vpop.permute.xlu0 %7495
      %7497 = vrot.lane.b32.xlu0 %v6398, 122
      %v7498 = vpop.permute.xlu0 %7497
      %7499 = vrot.lane.b32.xlu0 %v6400, 122
      %v7500 = vpop.permute.xlu0 %7499
      %7501 = vrot.lane.b32.xlu0 %v6402, 122
      %v7502 = vpop.permute.xlu0 %7501
      %7503 = vrot.lane.b32.xlu0 %v6404, 122
      %v7504 = vpop.permute.xlu0 %7503
      %7505 = vrot.lane.b32.xlu0 %v6406, 122
      %v7506 = vpop.permute.xlu0 %7505
      %7507 = vrot.lane.b32.xlu0 %v6408, 122
      %v7508 = vpop.permute.xlu0 %7507
      %7509 = vrot.lane.b32.xlu0 %v6410, 122
      %v7510 = vpop.permute.xlu0 %7509
      %7511 = vrot.lane.b32.xlu0 %v6412, 122
      %v7512 = vpop.permute.xlu0 %7511
      %7513 = vrot.lane.b32.xlu0 %v6414, 122
      %v7514 = vpop.permute.xlu0 %7513
      %7515 = vrot.lane.b32.xlu0 %v6416, 122
      %v7516 = vpop.permute.xlu0 %7515
      %7517 = vrot.lane.b32.xlu0 %v6418, 122
      %v7518 = vpop.permute.xlu0 %7517
      %7519 = vrot.lane.b32.xlu0 %v6420, 122
      %v7520 = vpop.permute.xlu0 %7519
      %7521 = vrot.lane.b32.xlu0 %v6422, 122
      %v7522 = vpop.permute.xlu0 %7521
      %7523 = vrot.lane.b32.xlu0 %v6424, 122
      %v7524 = vpop.permute.xlu0 %7523
      %7525 = vrot.lane.b32.xlu0 %v6426, 122
      %v7526 = vpop.permute.xlu0 %7525
      %7527 = vrot.lane.b32.xlu0 %v6428, 122
      %v7528 = vpop.permute.xlu0 %7527
      %7529 = vrot.lane.b32.xlu0 %v6430, 122
      %v7530 = vpop.permute.xlu0 %7529
      %7531 = vrot.lane.b32.xlu0 %v6432, 122
      %v7532 = vpop.permute.xlu0 %7531
      %7533 = vrot.lane.b32.xlu0 %v6434, 122
      %v7534 = vpop.permute.xlu0 %7533
      %7535 = vrot.lane.b32.xlu0 %v6436, 122
      %v7536 = vpop.permute.xlu0 %7535
      %7537 = vrot.lane.b32.xlu0 %v6438, 122
      %v7538 = vpop.permute.xlu0 %7537
      %7539 = vrot.lane.b32.xlu0 %v6440, 122
      %v7540 = vpop.permute.xlu0 %7539
      %7541 = vrot.lane.b32.xlu0 %v6442, 122
      %v7542 = vpop.permute.xlu0 %7541
      %7543 = vrot.lane.b32.xlu0 %v6444, 122
      %v7544 = vpop.permute.xlu0 %7543
      %7545 = vrot.lane.b32.xlu0 %v6446, 122
      %v7546 = vpop.permute.xlu0 %7545
      %7547 = vrot.lane.b32.xlu0 %v6448, 122
      %v7548 = vpop.permute.xlu0 %7547
      %7549 = vrot.lane.b32.xlu0 %v6450, 122
      %v7550 = vpop.permute.xlu0 %7549
      %7551 = vrot.lane.b32.xlu0 %v6452, 122
      %v7552 = vpop.permute.xlu0 %7551
      %7553 = vrot.lane.b32.xlu0 %v6454, 122
      %v7554 = vpop.permute.xlu0 %7553
      %7555 = vrot.lane.b32.xlu0 %v6456, 122
      %v7556 = vpop.permute.xlu0 %7555
      %7557 = vrot.lane.b32.xlu0 %v6458, 122
      %v7558 = vpop.permute.xlu0 %7557
      %7559 = vrot.lane.b32.xlu0 %v6460, 122
      %v7560 = vpop.permute.xlu0 %7559
      %7561 = vrot.lane.b32.xlu0 %v6462, 122
      %v7562 = vpop.permute.xlu0 %7561
      %7563 = vrot.lane.b32.xlu0 %v6464, 122
      %v7564 = vpop.permute.xlu0 %7563
      %7565 = vrot.lane.b32.xlu0 %v6466, 122
      %v7566 = vpop.permute.xlu0 %7565
      %7567 = vrot.lane.b32.xlu0 %v6468, 122
      %v7568 = vpop.permute.xlu0 %7567
      %7569 = vrot.lane.b32.xlu0 %v6470, 122
      %v7570 = vpop.permute.xlu0 %7569
      %7571 = vrot.lane.b32.xlu0 %v6472, 122
      %v7572 = vpop.permute.xlu0 %7571
      %7573 = vrot.lane.b32.xlu0 %v6474, 122
      %v7574 = vpop.permute.xlu0 %7573
      %7575 = vrot.lane.b32.xlu0 %v6476, 122
      %v7576 = vpop.permute.xlu0 %7575
      %7577 = vrot.lane.b32.xlu0 %v6478, 122
      %v7578 = vpop.permute.xlu0 %7577
      %7579 = vrot.lane.b32.xlu0 %v6480, 122
      %v7580 = vpop.permute.xlu0 %7579
      %7581 = vrot.lane.b32.xlu0 %v6482, 122
      %v7582 = vpop.permute.xlu0 %7581
      %7583 = vrot.lane.b32.xlu0 %v6484, 122
      %v7584 = vpop.permute.xlu0 %7583
      %7585 = vrot.lane.b32.xlu0 %v6486, 122
      %v7586 = vpop.permute.xlu0 %7585
      %7587 = vrot.lane.b32.xlu0 %v6488, 122
      %v7588 = vpop.permute.xlu0 %7587
      %7589 = vrot.lane.b32.xlu0 %v6490, 122
      %v7590 = vpop.permute.xlu0 %7589
      %7591 = vrot.lane.b32.xlu0 %v6492, 122
      %v7592 = vpop.permute.xlu0 %7591
      %7593 = vrot.lane.b32.xlu0 %v6494, 122
      %v7594 = vpop.permute.xlu0 %7593
      %7595 = vrot.lane.b32.xlu0 %v6496, 122
      %v7596 = vpop.permute.xlu0 %7595
      %7597 = vrot.lane.b32.xlu0 %v6498, 122
      %v7598 = vpop.permute.xlu0 %7597
      %7599 = vrot.lane.b32.xlu0 %v6500, 122
      %v7600 = vpop.permute.xlu0 %7599
      %7601 = vrot.lane.b32.xlu0 %v6502, 122
      %v7602 = vpop.permute.xlu0 %7601
      %7603 = vrot.lane.b32.xlu0 %v6504, 122
      %v7604 = vpop.permute.xlu0 %7603
      %7605 = vrot.lane.b32.xlu0 %v6506, 122
      %v7606 = vpop.permute.xlu0 %7605
      %7607 = vrot.lane.b32.xlu0 %v6508, 122
      %v7608 = vpop.permute.xlu0 %7607
      %v7673 = vadd.f32 %v7417, %v7482
      %v7674 = vadd.f32 %v7418, %v7484
      %v7675 = vadd.f32 %v7419, %v7486
      %v7676 = vadd.f32 %v7420, %v7488
      %v7677 = vadd.f32 %v7421, %v7490
      %v7678 = vadd.f32 %v7422, %v7492
      %v7679 = vadd.f32 %v7423, %v7494
      %v7680 = vadd.f32 %v7424, %v7496
      %v7681 = vadd.f32 %v7425, %v7498
      %v7682 = vadd.f32 %v7426, %v7500
      %v7683 = vadd.f32 %v7427, %v7502
      %v7684 = vadd.f32 %v7428, %v7504
      %v7685 = vadd.f32 %v7429, %v7506
      %v7686 = vadd.f32 %v7430, %v7508
      %v7687 = vadd.f32 %v7431, %v7510
      %v7688 = vadd.f32 %v7432, %v7512
      %v7689 = vadd.f32 %v7433, %v7514
      %v7690 = vadd.f32 %v7434, %v7516
      %v7691 = vadd.f32 %v7435, %v7518
      %v7692 = vadd.f32 %v7436, %v7520
      %v7693 = vadd.f32 %v7437, %v7522
      %v7694 = vadd.f32 %v7438, %v7524
      %v7695 = vadd.f32 %v7439, %v7526
      %v7696 = vadd.f32 %v7440, %v7528
      %v7697 = vadd.f32 %v7441, %v7530
      %v7698 = vadd.f32 %v7442, %v7532
      %v7699 = vadd.f32 %v7443, %v7534
      %v7700 = vadd.f32 %v7444, %v7536
      %v7701 = vadd.f32 %v7445, %v7538
      %v7702 = vadd.f32 %v7446, %v7540
      %v7703 = vadd.f32 %v7447, %v7542
      %v7704 = vadd.f32 %v7448, %v7544
      %v7705 = vadd.f32 %v7449, %v7546
      %v7706 = vadd.f32 %v7450, %v7548
      %v7707 = vadd.f32 %v7451, %v7550
      %v7708 = vadd.f32 %v7452, %v7552
      %v7709 = vadd.f32 %v7453, %v7554
      %v7710 = vadd.f32 %v7454, %v7556
      %v7711 = vadd.f32 %v7455, %v7558
      %v7712 = vadd.f32 %v7456, %v7560
      %v7713 = vadd.f32 %v7457, %v7562
      %v7714 = vadd.f32 %v7458, %v7564
      %v7715 = vadd.f32 %v7459, %v7566
      %v7716 = vadd.f32 %v7460, %v7568
      %v7717 = vadd.f32 %v7461, %v7570
      %v7718 = vadd.f32 %v7462, %v7572
      %v7719 = vadd.f32 %v7463, %v7574
      %v7720 = vadd.f32 %v7464, %v7576
      %v7721 = vadd.f32 %v7465, %v7578
      %v7722 = vadd.f32 %v7466, %v7580
      %v7723 = vadd.f32 %v7467, %v7582
      %v7724 = vadd.f32 %v7468, %v7584
      %v7725 = vadd.f32 %v7469, %v7586
      %v7726 = vadd.f32 %v7470, %v7588
      %v7727 = vadd.f32 %v7471, %v7590
      %v7728 = vadd.f32 %v7472, %v7592
      %v7729 = vadd.f32 %v7473, %v7594
      %v7730 = vadd.f32 %v7474, %v7596
      %v7731 = vadd.f32 %v7475, %v7598
      %v7732 = vadd.f32 %v7476, %v7600
      %v7733 = vadd.f32 %v7477, %v7602
      %v7734 = vadd.f32 %v7478, %v7604
      %v7735 = vadd.f32 %v7479, %v7606
      %v7736 = vadd.f32 %v7480, %v7608
      %7801 = vrot.lane.b32.xlu0 %v7097, 40
      %v7802 = vpop.permute.xlu0 %7801
      %7803 = vrot.lane.b32.xlu0 %v7098, 40
      %v7804 = vpop.permute.xlu0 %7803
      %7805 = vrot.lane.b32.xlu0 %v7099, 40
      %v7806 = vpop.permute.xlu0 %7805
      %7807 = vrot.lane.b32.xlu0 %v7100, 40
      %v7808 = vpop.permute.xlu0 %7807
      %7809 = vrot.lane.b32.xlu0 %v7101, 40
      %v7810 = vpop.permute.xlu0 %7809
      %7811 = vrot.lane.b32.xlu0 %v7102, 40
      %v7812 = vpop.permute.xlu0 %7811
      %7813 = vrot.lane.b32.xlu0 %v7103, 40
      %v7814 = vpop.permute.xlu0 %7813
      %7815 = vrot.lane.b32.xlu0 %v7104, 40
      %v7816 = vpop.permute.xlu0 %7815
      %7817 = vrot.lane.b32.xlu0 %v7105, 40
      %v7818 = vpop.permute.xlu0 %7817
      %7819 = vrot.lane.b32.xlu0 %v7106, 40
      %v7820 = vpop.permute.xlu0 %7819
      %7821 = vrot.lane.b32.xlu0 %v7107, 40
      %v7822 = vpop.permute.xlu0 %7821
      %7823 = vrot.lane.b32.xlu0 %v7108, 40
      %v7824 = vpop.permute.xlu0 %7823
      %7825 = vrot.lane.b32.xlu0 %v7109, 40
      %v7826 = vpop.permute.xlu0 %7825
      %7827 = vrot.lane.b32.xlu0 %v7110, 40
      %v7828 = vpop.permute.xlu0 %7827
      %7829 = vrot.lane.b32.xlu0 %v7111, 40
      %v7830 = vpop.permute.xlu0 %7829
      %7831 = vrot.lane.b32.xlu0 %v7112, 40
      %v7832 = vpop.permute.xlu0 %7831
      %7833 = vrot.lane.b32.xlu0 %v7113, 40
      %v7834 = vpop.permute.xlu0 %7833
      %7835 = vrot.lane.b32.xlu0 %v7114, 40
      %v7836 = vpop.permute.xlu0 %7835
      %7837 = vrot.lane.b32.xlu0 %v7115, 40
      %v7838 = vpop.permute.xlu0 %7837
      %7839 = vrot.lane.b32.xlu0 %v7116, 40
      %v7840 = vpop.permute.xlu0 %7839
      %7841 = vrot.lane.b32.xlu0 %v7117, 40
      %v7842 = vpop.permute.xlu0 %7841
      %7843 = vrot.lane.b32.xlu0 %v7118, 40
      %v7844 = vpop.permute.xlu0 %7843
      %7845 = vrot.lane.b32.xlu0 %v7119, 40
      %v7846 = vpop.permute.xlu0 %7845
      %7847 = vrot.lane.b32.xlu0 %v7120, 40
      %v7848 = vpop.permute.xlu0 %7847
      %7849 = vrot.lane.b32.xlu0 %v7121, 40
      %v7850 = vpop.permute.xlu0 %7849
      %7851 = vrot.lane.b32.xlu0 %v7122, 40
      %v7852 = vpop.permute.xlu0 %7851
      %7853 = vrot.lane.b32.xlu0 %v7123, 40
      %v7854 = vpop.permute.xlu0 %7853
      %7855 = vrot.lane.b32.xlu0 %v7124, 40
      %v7856 = vpop.permute.xlu0 %7855
      %7857 = vrot.lane.b32.xlu0 %v7125, 40
      %v7858 = vpop.permute.xlu0 %7857
      %7859 = vrot.lane.b32.xlu0 %v7126, 40
      %v7860 = vpop.permute.xlu0 %7859
      %7861 = vrot.lane.b32.xlu0 %v7127, 40
      %v7862 = vpop.permute.xlu0 %7861
      %7863 = vrot.lane.b32.xlu0 %v7128, 40
      %v7864 = vpop.permute.xlu0 %7863
      %7865 = vrot.lane.b32.xlu0 %v7129, 40
      %v7866 = vpop.permute.xlu0 %7865
      %7867 = vrot.lane.b32.xlu0 %v7130, 40
      %v7868 = vpop.permute.xlu0 %7867
      %7869 = vrot.lane.b32.xlu0 %v7131, 40
      %v7870 = vpop.permute.xlu0 %7869
      %7871 = vrot.lane.b32.xlu0 %v7132, 40
      %v7872 = vpop.permute.xlu0 %7871
      %7873 = vrot.lane.b32.xlu0 %v7133, 40
      %v7874 = vpop.permute.xlu0 %7873
      %7875 = vrot.lane.b32.xlu0 %v7134, 40
      %v7876 = vpop.permute.xlu0 %7875
      %7877 = vrot.lane.b32.xlu0 %v7135, 40
      %v7878 = vpop.permute.xlu0 %7877
      %7879 = vrot.lane.b32.xlu0 %v7136, 40
      %v7880 = vpop.permute.xlu0 %7879
      %7881 = vrot.lane.b32.xlu0 %v7137, 40
      %v7882 = vpop.permute.xlu0 %7881
      %7883 = vrot.lane.b32.xlu0 %v7138, 40
      %v7884 = vpop.permute.xlu0 %7883
      %7885 = vrot.lane.b32.xlu0 %v7139, 40
      %v7886 = vpop.permute.xlu0 %7885
      %7887 = vrot.lane.b32.xlu0 %v7140, 40
      %v7888 = vpop.permute.xlu0 %7887
      %7889 = vrot.lane.b32.xlu0 %v7141, 40
      %v7890 = vpop.permute.xlu0 %7889
      %7891 = vrot.lane.b32.xlu0 %v7142, 40
      %v7892 = vpop.permute.xlu0 %7891
      %7893 = vrot.lane.b32.xlu0 %v7143, 40
      %v7894 = vpop.permute.xlu0 %7893
      %7895 = vrot.lane.b32.xlu0 %v7144, 40
      %v7896 = vpop.permute.xlu0 %7895
      %7897 = vrot.lane.b32.xlu0 %v7145, 40
      %v7898 = vpop.permute.xlu0 %7897
      %7899 = vrot.lane.b32.xlu0 %v7146, 40
      %v7900 = vpop.permute.xlu0 %7899
      %7901 = vrot.lane.b32.xlu0 %v7147, 40
      %v7902 = vpop.permute.xlu0 %7901
      %7903 = vrot.lane.b32.xlu0 %v7148, 40
      %v7904 = vpop.permute.xlu0 %7903
      %7905 = vrot.lane.b32.xlu0 %v7149, 40
      %v7906 = vpop.permute.xlu0 %7905
      %7907 = vrot.lane.b32.xlu0 %v7150, 40
      %v7908 = vpop.permute.xlu0 %7907
      %7909 = vrot.lane.b32.xlu0 %v7151, 40
      %v7910 = vpop.permute.xlu0 %7909
      %7911 = vrot.lane.b32.xlu0 %v7152, 40
      %v7912 = vpop.permute.xlu0 %7911
      %7913 = vrot.lane.b32.xlu0 %v7153, 40
      %v7914 = vpop.permute.xlu0 %7913
      %7915 = vrot.lane.b32.xlu0 %v7154, 40
      %v7916 = vpop.permute.xlu0 %7915
      %7917 = vrot.lane.b32.xlu0 %v7155, 40
      %v7918 = vpop.permute.xlu0 %7917
      %7919 = vrot.lane.b32.xlu0 %v7156, 40
      %v7920 = vpop.permute.xlu0 %7919
      %7921 = vrot.lane.b32.xlu0 %v7157, 40
      %v7922 = vpop.permute.xlu0 %7921
      %7923 = vrot.lane.b32.xlu0 %v7158, 40
      %v7924 = vpop.permute.xlu0 %7923
      %7925 = vrot.lane.b32.xlu0 %v7159, 40
      %v7926 = vpop.permute.xlu0 %7925
      %7927 = vrot.lane.b32.xlu0 %v7160, 40
      %v7928 = vpop.permute.xlu0 %7927
      %v7993 = vmul.f32 %v7673, %v7802
      %v7994 = vmul.f32 %v7674, %v7804
      %v7995 = vmul.f32 %v7675, %v7806
      %v7996 = vmul.f32 %v7676, %v7808
      %v7997 = vmul.f32 %v7677, %v7810
      %v7998 = vmul.f32 %v7678, %v7812
      %v7999 = vmul.f32 %v7679, %v7814
      %v8000 = vmul.f32 %v7680, %v7816
      %v8001 = vmul.f32 %v7681, %v7818
      %v8002 = vmul.f32 %v7682, %v7820
      %v8003 = vmul.f32 %v7683, %v7822
      %v8004 = vmul.f32 %v7684, %v7824
      %v8005 = vmul.f32 %v7685, %v7826
      %v8006 = vmul.f32 %v7686, %v7828
      %v8007 = vmul.f32 %v7687, %v7830
      %v8008 = vmul.f32 %v7688, %v7832
      %v8009 = vmul.f32 %v7689, %v7834
      %v8010 = vmul.f32 %v7690, %v7836
      %v8011 = vmul.f32 %v7691, %v7838
      %v8012 = vmul.f32 %v7692, %v7840
      %v8013 = vmul.f32 %v7693, %v7842
      %v8014 = vmul.f32 %v7694, %v7844
      %v8015 = vmul.f32 %v7695, %v7846
      %v8016 = vmul.f32 %v7696, %v7848
      %v8017 = vmul.f32 %v7697, %v7850
      %v8018 = vmul.f32 %v7698, %v7852
      %v8019 = vmul.f32 %v7699, %v7854
      %v8020 = vmul.f32 %v7700, %v7856
      %v8021 = vmul.f32 %v7701, %v7858
      %v8022 = vmul.f32 %v7702, %v7860
      %v8023 = vmul.f32 %v7703, %v7862
      %v8024 = vmul.f32 %v7704, %v7864
      %v8025 = vmul.f32 %v7705, %v7866
      %v8026 = vmul.f32 %v7706, %v7868
      %v8027 = vmul.f32 %v7707, %v7870
      %v8028 = vmul.f32 %v7708, %v7872
      %v8029 = vmul.f32 %v7709, %v7874
      %v8030 = vmul.f32 %v7710, %v7876
      %v8031 = vmul.f32 %v7711, %v7878
      %v8032 = vmul.f32 %v7712, %v7880
      %v8033 = vmul.f32 %v7713, %v7882
      %v8034 = vmul.f32 %v7714, %v7884
      %v8035 = vmul.f32 %v7715, %v7886
      %v8036 = vmul.f32 %v7716, %v7888
      %v8037 = vmul.f32 %v7717, %v7890
      %v8038 = vmul.f32 %v7718, %v7892
      %v8039 = vmul.f32 %v7719, %v7894
      %v8040 = vmul.f32 %v7720, %v7896
      %v8041 = vmul.f32 %v7721, %v7898
      %v8042 = vmul.f32 %v7722, %v7900
      %v8043 = vmul.f32 %v7723, %v7902
      %v8044 = vmul.f32 %v7724, %v7904
      %v8045 = vmul.f32 %v7725, %v7906
      %v8046 = vmul.f32 %v7726, %v7908
      %v8047 = vmul.f32 %v7727, %v7910
      %v8048 = vmul.f32 %v7728, %v7912
      %v8049 = vmul.f32 %v7729, %v7914
      %v8050 = vmul.f32 %v7730, %v7916
      %v8051 = vmul.f32 %v7731, %v7918
      %v8052 = vmul.f32 %v7732, %v7920
      %v8053 = vmul.f32 %v7733, %v7922
      %v8054 = vmul.f32 %v7734, %v7924
      %v8055 = vmul.f32 %v7735, %v7926
      %v8056 = vmul.f32 %v7736, %v7928
      %8121 = vrot.lane.b32.xlu0 %v7993, 88
      %v8122 = vpop.permute.xlu0 %8121
      %8123 = vrot.lane.b32.xlu0 %v7994, 88
      %v8124 = vpop.permute.xlu0 %8123
      %8125 = vrot.lane.b32.xlu0 %v7995, 88
      %v8126 = vpop.permute.xlu0 %8125
      %8127 = vrot.lane.b32.xlu0 %v7996, 88
      %v8128 = vpop.permute.xlu0 %8127
      %8129 = vrot.lane.b32.xlu0 %v7997, 88
      %v8130 = vpop.permute.xlu0 %8129
      %8131 = vrot.lane.b32.xlu0 %v7998, 88
      %v8132 = vpop.permute.xlu0 %8131
      %8133 = vrot.lane.b32.xlu0 %v7999, 88
      %v8134 = vpop.permute.xlu0 %8133
      %8135 = vrot.lane.b32.xlu0 %v8000, 88
      %v8136 = vpop.permute.xlu0 %8135
      %8137 = vrot.lane.b32.xlu0 %v8001, 88
      %v8138 = vpop.permute.xlu0 %8137
      %8139 = vrot.lane.b32.xlu0 %v8002, 88
      %v8140 = vpop.permute.xlu0 %8139
      %8141 = vrot.lane.b32.xlu0 %v8003, 88
      %v8142 = vpop.permute.xlu0 %8141
      %8143 = vrot.lane.b32.xlu0 %v8004, 88
      %v8144 = vpop.permute.xlu0 %8143
      %8145 = vrot.lane.b32.xlu0 %v8005, 88
      %v8146 = vpop.permute.xlu0 %8145
      %8147 = vrot.lane.b32.xlu0 %v8006, 88
      %v8148 = vpop.permute.xlu0 %8147
      %8149 = vrot.lane.b32.xlu0 %v8007, 88
      %v8150 = vpop.permute.xlu0 %8149
      %8151 = vrot.lane.b32.xlu0 %v8008, 88
      %v8152 = vpop.permute.xlu0 %8151
      %8153 = vrot.lane.b32.xlu0 %v8009, 88
      %v8154 = vpop.permute.xlu0 %8153
      %8155 = vrot.lane.b32.xlu0 %v8010, 88
      %v8156 = vpop.permute.xlu0 %8155
      %8157 = vrot.lane.b32.xlu0 %v8011, 88
      %v8158 = vpop.permute.xlu0 %8157
      %8159 = vrot.lane.b32.xlu0 %v8012, 88
      %v8160 = vpop.permute.xlu0 %8159
      %8161 = vrot.lane.b32.xlu0 %v8013, 88
      %v8162 = vpop.permute.xlu0 %8161
      %8163 = vrot.lane.b32.xlu0 %v8014, 88
      %v8164 = vpop.permute.xlu0 %8163
      %8165 = vrot.lane.b32.xlu0 %v8015, 88
      %v8166 = vpop.permute.xlu0 %8165
      %8167 = vrot.lane.b32.xlu0 %v8016, 88
      %v8168 = vpop.permute.xlu0 %8167
      %8169 = vrot.lane.b32.xlu0 %v8017, 88
      %v8170 = vpop.permute.xlu0 %8169
      %8171 = vrot.lane.b32.xlu0 %v8018, 88
      %v8172 = vpop.permute.xlu0 %8171
      %8173 = vrot.lane.b32.xlu0 %v8019, 88
      %v8174 = vpop.permute.xlu0 %8173
      %8175 = vrot.lane.b32.xlu0 %v8020, 88
      %v8176 = vpop.permute.xlu0 %8175
      %8177 = vrot.lane.b32.xlu0 %v8021, 88
      %v8178 = vpop.permute.xlu0 %8177
      %8179 = vrot.lane.b32.xlu0 %v8022, 88
      %v8180 = vpop.permute.xlu0 %8179
      %8181 = vrot.lane.b32.xlu0 %v8023, 88
      %v8182 = vpop.permute.xlu0 %8181
      %8183 = vrot.lane.b32.xlu0 %v8024, 88
      %v8184 = vpop.permute.xlu0 %8183
      %8185 = vrot.lane.b32.xlu0 %v8025, 88
      %v8186 = vpop.permute.xlu0 %8185
      %8187 = vrot.lane.b32.xlu0 %v8026, 88
      %v8188 = vpop.permute.xlu0 %8187
      %8189 = vrot.lane.b32.xlu0 %v8027, 88
      %v8190 = vpop.permute.xlu0 %8189
      %8191 = vrot.lane.b32.xlu0 %v8028, 88
      %v8192 = vpop.permute.xlu0 %8191
      %8193 = vrot.lane.b32.xlu0 %v8029, 88
      %v8194 = vpop.permute.xlu0 %8193
      %8195 = vrot.lane.b32.xlu0 %v8030, 88
      %v8196 = vpop.permute.xlu0 %8195
      %8197 = vrot.lane.b32.xlu0 %v8031, 88
      %v8198 = vpop.permute.xlu0 %8197
      %8199 = vrot.lane.b32.xlu0 %v8032, 88
      %v8200 = vpop.permute.xlu0 %8199
      %8201 = vrot.lane.b32.xlu0 %v8033, 88
      %v8202 = vpop.permute.xlu0 %8201
      %8203 = vrot.lane.b32.xlu0 %v8034, 88
      %v8204 = vpop.permute.xlu0 %8203
      %8205 = vrot.lane.b32.xlu0 %v8035, 88
      %v8206 = vpop.permute.xlu0 %8205
      %8207 = vrot.lane.b32.xlu0 %v8036, 88
      %v8208 = vpop.permute.xlu0 %8207
      %8209 = vrot.lane.b32.xlu0 %v8037, 88
      %v8210 = vpop.permute.xlu0 %8209
      %8211 = vrot.lane.b32.xlu0 %v8038, 88
      %v8212 = vpop.permute.xlu0 %8211
      %8213 = vrot.lane.b32.xlu0 %v8039, 88
      %v8214 = vpop.permute.xlu0 %8213
      %8215 = vrot.lane.b32.xlu0 %v8040, 88
      %v8216 = vpop.permute.xlu0 %8215
      %8217 = vrot.lane.b32.xlu0 %v8041, 88
      %v8218 = vpop.permute.xlu0 %8217
      %8219 = vrot.lane.b32.xlu0 %v8042, 88
      %v8220 = vpop.permute.xlu0 %8219
      %8221 = vrot.lane.b32.xlu0 %v8043, 88
      %v8222 = vpop.permute.xlu0 %8221
      %8223 = vrot.lane.b32.xlu0 %v8044, 88
      %v8224 = vpop.permute.xlu0 %8223
      %8225 = vrot.lane.b32.xlu0 %v8045, 88
      %v8226 = vpop.permute.xlu0 %8225
      %8227 = vrot.lane.b32.xlu0 %v8046, 88
      %v8228 = vpop.permute.xlu0 %8227
      %8229 = vrot.lane.b32.xlu0 %v8047, 88
      %v8230 = vpop.permute.xlu0 %8229
      %8231 = vrot.lane.b32.xlu0 %v8048, 88
      %v8232 = vpop.permute.xlu0 %8231
      %8233 = vrot.lane.b32.xlu0 %v8049, 88
      %v8234 = vpop.permute.xlu0 %8233
      %8235 = vrot.lane.b32.xlu0 %v8050, 88
      %v8236 = vpop.permute.xlu0 %8235
      %8237 = vrot.lane.b32.xlu0 %v8051, 88
      %v8238 = vpop.permute.xlu0 %8237
      %8239 = vrot.lane.b32.xlu0 %v8052, 88
      %v8240 = vpop.permute.xlu0 %8239
      %8241 = vrot.lane.b32.xlu0 %v8053, 88
      %v8242 = vpop.permute.xlu0 %8241
      %8243 = vrot.lane.b32.xlu0 %v8054, 88
      %v8244 = vpop.permute.xlu0 %8243
      %8245 = vrot.lane.b32.xlu0 %v8055, 88
      %v8246 = vpop.permute.xlu0 %8245
      %8247 = vrot.lane.b32.xlu0 %v8056, 88
      %v8248 = vpop.permute.xlu0 %8247
      %vm8313 = vcmask 23552
      %8314 = vst.msk [vmem:[%s248] sm:$0xff] %vm8313, %v8122
      %8315 = vst.msk [vmem:[%s248 + $0x8] sm:$0xff] %vm8313, %v8124
      %8316 = vst.msk [vmem:[%s248 + $0x10] sm:$0xff] %vm8313, %v8126
      %8317 = vst.msk [vmem:[%s248 + $0x18] sm:$0xff] %vm8313, %v8128
      %8318 = vst.msk [vmem:[%s248 + $0x20] sm:$0xff] %vm8313, %v8130
      %8319 = vst.msk [vmem:[%s248 + $0x28] sm:$0xff] %vm8313, %v8132
      %8320 = vst.msk [vmem:[%s248 + $0x30] sm:$0xff] %vm8313, %v8134
      %8321 = vst.msk [vmem:[%s248 + $0x38] sm:$0xff] %vm8313, %v8136
      %8322 = vst.msk [vmem:[%s248 + $0x40] sm:$0xff] %vm8313, %v8138
      %8323 = vst.msk [vmem:[%s248 + $0x48] sm:$0xff] %vm8313, %v8140
      %8324 = vst.msk [vmem:[%s248 + $0x50] sm:$0xff] %vm8313, %v8142
      %8325 = vst.msk [vmem:[%s248 + $0x58] sm:$0xff] %vm8313, %v8144
      %8326 = vst.msk [vmem:[%s248 + $0x60] sm:$0xff] %vm8313, %v8146
      %8327 = vst.msk [vmem:[%s248 + $0x68] sm:$0xff] %vm8313, %v8148
      %8328 = vst.msk [vmem:[%s248 + $0x70] sm:$0xff] %vm8313, %v8150
      %8329 = vst.msk [vmem:[%s248 + $0x78] sm:$0xff] %vm8313, %v8152
      %8330 = vst.msk [vmem:[%s248 + $0x80] sm:$0xff] %vm8313, %v8154
      %8331 = vst.msk [vmem:[%s248 + $0x88] sm:$0xff] %vm8313, %v8156
      %8332 = vst.msk [vmem:[%s248 + $0x90] sm:$0xff] %vm8313, %v8158
      %8333 = vst.msk [vmem:[%s248 + $0x98] sm:$0xff] %vm8313, %v8160
      %8334 = vst.msk [vmem:[%s248 + $0xa0] sm:$0xff] %vm8313, %v8162
      %8335 = vst.msk [vmem:[%s248 + $0xa8] sm:$0xff] %vm8313, %v8164
      %8336 = vst.msk [vmem:[%s248 + $0xb0] sm:$0xff] %vm8313, %v8166
      %8337 = vst.msk [vmem:[%s248 + $0xb8] sm:$0xff] %vm8313, %v8168
      %8338 = vst.msk [vmem:[%s248 + $0xc0] sm:$0xff] %vm8313, %v8170
      %8339 = vst.msk [vmem:[%s248 + $0xc8] sm:$0xff] %vm8313, %v8172
      %8340 = vst.msk [vmem:[%s248 + $0xd0] sm:$0xff] %vm8313, %v8174
      %8341 = vst.msk [vmem:[%s248 + $0xd8] sm:$0xff] %vm8313, %v8176
      %8342 = vst.msk [vmem:[%s248 + $0xe0] sm:$0xff] %vm8313, %v8178
      %8343 = vst.msk [vmem:[%s248 + $0xe8] sm:$0xff] %vm8313, %v8180
      %8344 = vst.msk [vmem:[%s248 + $0xf0] sm:$0xff] %vm8313, %v8182
      %8345 = vst.msk [vmem:[%s248 + $0xf8] sm:$0xff] %vm8313, %v8184
      %8346 = vst.msk [vmem:[%s248 + $0x100] sm:$0xff] %vm8313, %v8186
      %8347 = vst.msk [vmem:[%s248 + $0x108] sm:$0xff] %vm8313, %v8188
      %8348 = vst.msk [vmem:[%s248 + $0x110] sm:$0xff] %vm8313, %v8190
      %8349 = vst.msk [vmem:[%s248 + $0x118] sm:$0xff] %vm8313, %v8192
      %8350 = vst.msk [vmem:[%s248 + $0x120] sm:$0xff] %vm8313, %v8194
      %8351 = vst.msk [vmem:[%s248 + $0x128] sm:$0xff] %vm8313, %v8196
      %8352 = vst.msk [vmem:[%s248 + $0x130] sm:$0xff] %vm8313, %v8198
      %8353 = vst.msk [vmem:[%s248 + $0x138] sm:$0xff] %vm8313, %v8200
      %8354 = vst.msk [vmem:[%s248 + $0x140] sm:$0xff] %vm8313, %v8202
      %8355 = vst.msk [vmem:[%s248 + $0x148] sm:$0xff] %vm8313, %v8204
      %8356 = vst.msk [vmem:[%s248 + $0x150] sm:$0xff] %vm8313, %v8206
      %8357 = vst.msk [vmem:[%s248 + $0x158] sm:$0xff] %vm8313, %v8208
      %8358 = vst.msk [vmem:[%s248 + $0x160] sm:$0xff] %vm8313, %v8210
      %8359 = vst.msk [vmem:[%s248 + $0x168] sm:$0xff] %vm8313, %v8212
      %8360 = vst.msk [vmem:[%s248 + $0x170] sm:$0xff] %vm8313, %v8214
      %8361 = vst.msk [vmem:[%s248 + $0x178] sm:$0xff] %vm8313, %v8216
      %8362 = vst.msk [vmem:[%s248 + $0x180] sm:$0xff] %vm8313, %v8218
      %8363 = vst.msk [vmem:[%s248 + $0x188] sm:$0xff] %vm8313, %v8220
      %8364 = vst.msk [vmem:[%s248 + $0x190] sm:$0xff] %vm8313, %v8222
      %8365 = vst.msk [vmem:[%s248 + $0x198] sm:$0xff] %vm8313, %v8224
      %8366 = vst.msk [vmem:[%s248 + $0x1a0] sm:$0xff] %vm8313, %v8226
      %8367 = vst.msk [vmem:[%s248 + $0x1a8] sm:$0xff] %vm8313, %v8228
      %8368 = vst.msk [vmem:[%s248 + $0x1b0] sm:$0xff] %vm8313, %v8230
      %8369 = vst.msk [vmem:[%s248 + $0x1b8] sm:$0xff] %vm8313, %v8232
      %8370 = vst.msk [vmem:[%s248 + $0x1c0] sm:$0xff] %vm8313, %v8234
      %8371 = vst.msk [vmem:[%s248 + $0x1c8] sm:$0xff] %vm8313, %v8236
      %8372 = vst.msk [vmem:[%s248 + $0x1d0] sm:$0xff] %vm8313, %v8238
      %8373 = vst.msk [vmem:[%s248 + $0x1d8] sm:$0xff] %vm8313, %v8240
      %8374 = vst.msk [vmem:[%s248 + $0x1e0] sm:$0xff] %vm8313, %v8242
      %8375 = vst.msk [vmem:[%s248 + $0x1e8] sm:$0xff] %vm8313, %v8244
      %8376 = vst.msk [vmem:[%s248 + $0x1f0] sm:$0xff] %vm8313, %v8246
      %8377 = vst.msk [vmem:[%s248 + $0x1f8] sm:$0xff] %vm8313, %v8248
      %s8378 = smul.u32 64, %s16
      %p8379 = scmp.lt.s32.totalorder %s8378, 127
      %s8380 = scalar_select %p8379, %s8378, 127
      %s8381 = smul.addr %s8380, 8
      %s8382 = scalar_lea.vmem %s5, %s8381
      // Predicated region
      $region41: #{tpu_custom_call.1} parent=39 // pred_check
        %p8383 = pneg %p149
      $region42: #{tpu_custom_call.1} parent=39 // pred_check_branch
        %8385 = sbr.rel (%p8383) target = $region44
      $region43: #{tpu_custom_call.1} parent=39 // pred_region
        %s8386 = smul.u32 64, %s16
      $region44: #{tpu_custom_call.1} parent=39 // pred_fallthru
        _
    $region40: #{tpu_custom_call.1} parent=5 // pred_fallthru
      _
    %p8387 = scmp.le.s32.totalorder 2, %s11
    // Predicated region
    $region45: #{tpu_custom_call.1} parent=5 // pred_check
      %p8388 = pneg %p8387
    $region46: #{tpu_custom_call.1} parent=5 // pred_check_branch
      %8390 = sbr.rel (%p8388) target = $region48
    $region47: #{tpu_custom_call.1} parent=5 // pred_region
      %s8391 = ssub.s32 %s11, 2
      // Predicated region
      $region49: #{tpu_custom_call.1} parent=47 // pred_check
        %p8392 = pneg %p155
      $region50: #{tpu_custom_call.1} parent=47 // pred_check_branch
        %8394 = sbr.rel (%p8392) target = $region52
      $region51: #{tpu_custom_call.1} parent=47 // pred_region
        %s8395 = smul.u32 64, %s17
        %p8396 = scmp.lt.s32.totalorder %s8395, 127
        %s8397 = scalar_select %p8396, %s8395, 127
        %s8398 = smul.addr %s8397, 8
        %s8399 = scalar_lea.vmem %s5, %s8398
      $region52: #{tpu_custom_call.1} parent=47 // pred_fallthru
        _
    $region48: #{tpu_custom_call.1} parent=5 // pred_fallthru
      _
  $region6: #{tpu_custom_call.1} parent=0 // loop_footer
    %s15 = sadd.s32 1, %s11
  $region7: #{tpu_custom_call.1} parent=0 // loop_footer_branch
    %10 = sbr.rel target = $region3
  $region8: #{tpu_custom_call.1} parent=0 // loop_exit
    _

</llo_original>
